<compile_context>
chip_gen: v7x
topology: tpu7x:2x2x1
jax: 0.10.0
libtpu: 0.0.40
codegen_flags: <defaults>
</compile_context>

<pallas_src>
import functools

import jax
import jax.numpy as jnp
from jax.experimental import pallas as pl
from jax.experimental.pallas import tpu as pltpu


def _round_up(a, b):
    return (a + b - 1) // b * b


# -----------------------------------------------------------------------------
# Fused conv(5x5, valid) + bias + ReLU + maxpool(2x2) kernel.
# Grid = (batch,).  lhs is a per-image im2col slab whose rows are ordered
# (dh, dw, pooled_pos) with each (dh, dw) block padded to Qp (multiple of 8)
# rows, so pooling = max over four contiguous sublane-aligned slices.
# -----------------------------------------------------------------------------
def _conv_mm_pool_kernel(lhs_ref, w_ref, b_ref, o_ref, *, qp):
    # Single MXU matmul per image: (4*Qp, Kp) @ (Kp, Cout), f32 accumulation.
    y = jnp.dot(lhs_ref[0], w_ref[...], preferred_element_type=jnp.float32)
    # 2x2 max-pool on register values (aligned static slices, no scratch).
    p = jnp.maximum(jnp.maximum(y[:qp], y[qp:2 * qp]),
                    jnp.maximum(y[2 * qp:3 * qp], y[3 * qp:]))
    # f32 epilogue: bias + ReLU, then bf16 for the next layer.
    o_ref[0] = jnp.maximum(p + b_ref[...], 0.0).astype(o_ref.dtype)


def conv_mm_pool(lhs, w, b, qp):
    """lhs: (N, 4*Qp, Kp) bf16 im2col; w: (Kp, Cout) bf16; b: (1, Cout) f32
       -> (N, Qp, Cout) bf16 (pooled + bias + ReLU; rows >= PH*PW are padding)."""
    n, rows, kp = lhs.shape
    cout = w.shape[1]
    kernel = functools.partial(_conv_mm_pool_kernel, qp=qp)
    return pl.pallas_call(
        kernel,
        out_shape=jax.ShapeDtypeStruct((n, qp, cout), jnp.bfloat16),
        grid=(n,),
        in_specs=[
            pl.BlockSpec((1, rows, kp), lambda i: (i, 0, 0)),
            pl.BlockSpec((kp, cout), lambda i: (0, 0)),
            pl.BlockSpec((1, cout), lambda i: (0, 0)),
        ],
        out_specs=pl.BlockSpec((1, qp, cout), lambda i: (i, 0, 0)),
        compiler_params=pltpu.CompilerParams(
            dimension_semantics=("parallel",)),
    )(lhs, w, b)


# -----------------------------------------------------------------------------
# Wrapper-side im2col (layout plumbing, done by XLA inside the jit).
# Rows ordered (dh, dw, ph*PW+pw) with the pooled-pos axis padded to a multiple
# of 8 and the contraction dim padded to a multiple of 128 (lane-dense).
# Handles odd conv-output sizes by flooring (matches torch MaxPool2d(2,2)).
# -----------------------------------------------------------------------------
def _im2col_pooled(x, k):
    n, h, w, c = x.shape
    oh, ow = h - k + 1, w - k + 1
    ph, pw = oh // 2, ow // 2
    q = ph * pw
    qp = _round_up(q, 8)          # sublane-aligned pooling blocks
    kd = k * k * c
    kp = _round_up(kd, 128)       # lane-dense contraction dim
    taps = [x[:, kh:kh + 2 * ph, kw:kw + 2 * pw, :]
            for kh in range(k) for kw in range(k)]            # (N,2PH,2PW,C) each
    p = jnp.stack(taps, axis=3)                               # (N,2PH,2PW,k*k,C)
    p = p.reshape(n, ph, 2, pw, 2, kd)
    p = jnp.transpose(p, (0, 2, 4, 1, 3, 5))                  # (N,dh,dw,PH,PW,K)
    p = p.reshape(n, 2, 2, q, kd)
    p = jnp.pad(p, ((0, 0), (0, 0), (0, 0), (0, qp - q), (0, kp - kd)))
    return p.reshape(n, 4 * qp, kp), ph, pw, qp


# -----------------------------------------------------------------------------
# Fused fc1+ReLU -> fc2+ReLU -> fc3 kernel.  Grid over M (batch) tiles only;
# all weights resident in VMEM, intermediates never touch HBM.  fc3 padded to
# 128 output lanes (lane-dense store); f32 accumulation and f32 epilogues.
# -----------------------------------------------------------------------------
def _fc_head_kernel(x_ref, w1_ref, b1_ref, w2_ref, b2_ref, w3_ref, b3_ref, o_ref):
    h = jnp.dot(x_ref[...], w1_ref[...], preferred_element_type=jnp.float32)
    h = jnp.maximum(h + b1_ref[...], 0.0).astype(jnp.bfloat16)
    h = jnp.dot(h, w2_ref[...], preferred_element_type=jnp.float32)
    h = jnp.maximum(h + b2_ref[...], 0.0).astype(jnp.bfloat16)
    h = jnp.dot(h, w3_ref[...], preferred_element_type=jnp.float32)
    o_ref[...] = (h + b3_ref[...]).astype(o_ref.dtype)


def fc_head(x, p):
    m, kdim = x.shape
    n1 = p["fc1_w"].shape[1]
    n2 = p["fc2_w"].shape[1]
    n3 = p["fc3_w"].shape[1]          # 128 (padded classes)
    # v7x has 2 TensorCores; keep the parallel grid axis at extent >= 2 when
    # the batch allows it.  Tiny batches fall back to a single step.
    if m <= 8:
        tm = 8
    elif m <= 512:
        tm = _round_up(m, 16) // 2
    else:
        tm = 256
    m_pad = _round_up(m, tm)
    if m_pad != m:
        x = jnp.pad(x, ((0, m_pad - m), (0, 0)))
    return pl.pallas_call(
        _fc_head_kernel,
        out_shape=jax.ShapeDtypeStruct((m_pad, n3), jnp.float32),
        grid=(m_pad // tm,),
        in_specs=[
            pl.BlockSpec((tm, kdim), lambda i: (i, 0)),
            pl.BlockSpec((kdim, n1), lambda i: (0, 0)),
            pl.BlockSpec((1, n1), lambda i: (0, 0)),
            pl.BlockSpec((n1, n2), lambda i: (0, 0)),
            pl.BlockSpec((1, n2), lambda i: (0, 0)),
            pl.BlockSpec((n2, n3), lambda i: (0, 0)),
            pl.BlockSpec((1, n3), lambda i: (0, 0)),
        ],
        out_specs=pl.BlockSpec((tm, n3), lambda i: (i, 0)),
        compiler_params=pltpu.CompilerParams(dimension_semantics=("parallel",)),
    )(x, p["fc1_w"], p["fc1_b"], p["fc2_w"], p["fc2_b"], p["fc3_w"], p["fc3_b"])


# -----------------------------------------------------------------------------
# Parameters: PyTorch-layout init, then a ONE-TIME layout/dtype conversion
# (kept outside the per-call jit path).
# -----------------------------------------------------------------------------
def init_torch_params(key, channels, classes):
    ks = jax.random.split(key, 10)

    def u(k, shape, fan_in):
        bound = 1.0 / (fan_in ** 0.5)
        return jax.random.uniform(k, shape, jnp.float32, -bound, bound)

    return {
        "conv1_w": u(ks[0], (128, channels, 5, 5), channels * 25),
        "conv1_b": u(ks[1], (128,), channels * 25),
        "conv2_w": u(ks[2], (256, 128, 5, 5), 128 * 25),
        "conv2_b": u(ks[3], (256,), 128 * 25),
        "fc1_w": u(ks[4], (256, 256 * 5 * 5), 256 * 5 * 5),   # torch (out, in)
        "fc1_b": u(ks[5], (256,), 256 * 5 * 5),
        "fc2_w": u(ks[6], (128, 256), 256),
        "fc2_b": u(ks[7], (128,), 256),
        "fc3_w": u(ks[8], (classes, 128), 128),
        "fc3_b": u(ks[9], (classes,), 128),
    }


def prepare_params(p, classes):
    def conv_w(w):  # (Cout, Cin, kh, kw) -> (round_up(kh*kw*Cin,128), Cout) bf16
        cout, cin, kh, kw = w.shape
        kd = kh * kw * cin
        w = jnp.transpose(w, (2, 3, 1, 0)).reshape(kd, cout)  # (kh,kw,cin) K order
        w = jnp.pad(w, ((0, _round_up(kd, 128) - kd), (0, 0)))
        return w.astype(jnp.bfloat16)

    # fc1: reorder input-feature axis from torch (C,H,W) to (H,W,C) so NHWC
    # activations flatten directly; store as (K, N).
    w1 = p["fc1_w"].reshape(256, 256, 5, 5)                    # (out, C, H, W)
    w1 = jnp.transpose(w1, (2, 3, 1, 0)).reshape(5 * 5 * 256, 256)
    # fc3: pad outputs to 128 lanes (zeros), slice back in the wrapper.
    w3 = jnp.zeros((128, 128), jnp.float32).at[:, :classes].set(p["fc3_w"].T)
    b3 = jnp.zeros((128,), jnp.float32).at[:classes].set(p["fc3_b"])
    return {
        "conv1_w": conv_w(p["conv1_w"]),
        "conv1_b": p["conv1_b"].reshape(1, -1).astype(jnp.float32),
        "conv2_w": conv_w(p["conv2_w"]),
        "conv2_b": p["conv2_b"].reshape(1, -1).astype(jnp.float32),
        "fc1_w": w1.astype(jnp.bfloat16),
        "fc1_b": p["fc1_b"].reshape(1, -1).astype(jnp.float32),
        "fc2_w": p["fc2_w"].T.astype(jnp.bfloat16),
        "fc2_b": p["fc2_b"].reshape(1, -1).astype(jnp.float32),
        "fc3_w": w3.astype(jnp.bfloat16),
        "fc3_b": b3.reshape(1, -1),
    }


# -----------------------------------------------------------------------------
# Forward pass (mirrors ClassifierNet.forward)
# -----------------------------------------------------------------------------
@functools.partial(jax.jit, static_argnames=("classes",))
def classifier_net_forward(x_nchw, params, *, classes):
    n = x_nchw.shape[0]
    # NCHW -> NHWC, bf16 activations (f32 accumulation inside kernels)
    x = jnp.transpose(x_nchw, (0, 2, 3, 1)).astype(jnp.bfloat16)

    # conv1 + ReLU + pool: one (800, 128) x (128, 128) matmul per image
    lhs1, ph1, pw1, qp1 = _im2col_pooled(x, 5)
    y1 = conv_mm_pool(lhs1, params["conv1_w"], params["conv1_b"], qp1)
    y1 = y1[:, :ph1 * pw1, :].reshape(n, ph1, pw1, -1)          # (N,14,14,128)

    # conv2 + ReLU + pool: one (128, 3200) x (3200, 256) matmul per image
    lhs2, ph2, pw2, qp2 = _im2col_pooled(y1, 5)
    y2 = conv_mm_pool(lhs2, params["conv2_w"], params["conv2_b"], qp2)
    y2 = y2[:, :ph2 * pw2, :].reshape(n, -1)                    # (N, 6400) HWC order

    out = fc_head(y2, params)                                   # (M_pad, 128) f32
    return out[:n, :classes]


if __name__ == "__main__":
    # fc1 = Linear(256*5*5, 256) forces 32x32 spatial (32->28->14->10->5).
    batch, channels, classes = 2, 3, 10
    key = jax.random.PRNGKey(0)
    k_x, k_p = jax.random.split(key)
    x = jax.random.normal(k_x, (batch, channels, 32, 32), jnp.float32)
    params = prepare_params(init_torch_params(k_p, channels, classes), classes)

    out = classifier_net_forward(x, params, classes=classes)
    out = jax.block_until_ready(out)
    assert out.shape == (batch, classes), out.shape
    assert bool(jnp.all(jnp.isfinite(out)))
    print("KERNEL_OK")
</pallas_src>

<mosaic_0001>
module attributes {stable_mosaic.version = 11 : i64} {
  func.func @_conv_mm_pool_kernel(%arg0: i32, %arg1: memref<1x800x128xbf16, #tpu.memory_space<vmem>>, %arg2: memref<128x128xbf16, #tpu.memory_space<vmem>>, %arg3: memref<1x128xf32, #tpu.memory_space<vmem>>, %arg4: memref<1x200x128xbf16, #tpu.memory_space<vmem>>) attributes {dimension_semantics = [#tpu.dimension_semantics<parallel>], iteration_bounds = array<i64: 2>, scalar_prefetch = 0 : i64, scratch_operands = 0 : i64, tpu.core_type = #tpu.core_type<tc>, window_params = [{transform_indices = @transform_0, window_bounds = array<i64: 1, 800, 128>}, {pipeline_mode = #tpu.pipeline_mode<synchronous>, transform_indices = @transform_1, window_bounds = array<i64: 128, 128>}, {pipeline_mode = #tpu.pipeline_mode<synchronous>, transform_indices = @transform_2, window_bounds = array<i64: 1, 128>}, {transform_indices = @transform_3, window_bounds = array<i64: 1, 200, 128>}]} {
    %c0 = arith.constant 0 : index
    %c0_0 = arith.constant 0 : index
    %c0_1 = arith.constant 0 : index
    %0 = vector.load %arg1[%c0, %c0_0, %c0_1] : memref<1x800x128xbf16, #tpu.memory_space<vmem>>, vector<1x800x128xbf16>
    %1 = vector.shape_cast %0 : vector<1x800x128xbf16> to vector<800x128xbf16>
    %c0_2 = arith.constant 0 : index
    %c0_3 = arith.constant 0 : index
    %2 = vector.load %arg2[%c0_2, %c0_3] : memref<128x128xbf16, #tpu.memory_space<vmem>>, vector<128x128xbf16>
    %cst = arith.constant dense<0.000000e+00> : vector<800x128xf32>
    %3 = tpu.matmul %1, %2, %cst {dimension_numbers = #tpu.dot_dimension_numbers<[1], [0], [0], [1], [0, 0, 1, 1], [], []>} : vector<800x128xbf16>, vector<128x128xbf16>, vector<800x128xf32> -> vector<800x128xf32>
    %4 = vector.extract_strided_slice %3 {offsets = [0, 0], sizes = [200, 128], strides = [1, 1]} : vector<800x128xf32> to vector<200x128xf32>
    %5 = vector.extract_strided_slice %3 {offsets = [200, 0], sizes = [200, 128], strides = [1, 1]} : vector<800x128xf32> to vector<200x128xf32>
    %6 = arith.maximumf %4, %5 : vector<200x128xf32>
    %7 = vector.extract_strided_slice %3 {offsets = [400, 0], sizes = [200, 128], strides = [1, 1]} : vector<800x128xf32> to vector<200x128xf32>
    %8 = vector.extract_strided_slice %3 {offsets = [600, 0], sizes = [200, 128], strides = [1, 1]} : vector<800x128xf32> to vector<200x128xf32>
    %9 = arith.maximumf %7, %8 : vector<200x128xf32>
    %10 = arith.maximumf %6, %9 : vector<200x128xf32>
    %c0_4 = arith.constant 0 : index
    %c0_5 = arith.constant 0 : index
    %11 = vector.load %arg3[%c0_4, %c0_5] : memref<1x128xf32, #tpu.memory_space<vmem>>, vector<1x128xf32>
    %12 = vector.broadcast %11 : vector<1x128xf32> to vector<200x128xf32>
    %13 = arith.addf %10, %12 : vector<200x128xf32>
    %cst_6 = arith.constant 0.000000e+00 : f32
    %14 = vector.broadcast %cst_6 : f32 to vector<200x128xf32>
    %15 = arith.maximumf %13, %14 : vector<200x128xf32>
    %16 = arith.truncf %15 : vector<200x128xf32> to vector<200x128xbf16>
    %c0_7 = arith.constant 0 : index
    %c0_8 = arith.constant 0 : index
    %c0_9 = arith.constant 0 : index
    %17 = vector.load %arg4[%c0_7, %c0_8, %c0_9] : memref<1x200x128xbf16, #tpu.memory_space<vmem>>, vector<1x200x128xbf16>
    %18 = vector.shape_cast %17 : vector<1x200x128xbf16> to vector<200x128xbf16>
    %19 = vector.shape_cast %16 : vector<200x128xbf16> to vector<1x200x128xbf16>
    tpu.vector_store %arg4[%c0_7, %c0_8, %c0_9], %19 {strides = array<i32>} : memref<1x200x128xbf16, #tpu.memory_space<vmem>>, vector<1x200x128xbf16>,
    return
  }
  func.func @transform_0(%arg0: i32) -> (i32, i32, i32) {
    %c0_i32 = arith.constant 0 : i32
    %c0_i32_0 = arith.constant 0 : i32
    %c0_i32_1 = arith.constant 0 : i32
    return %arg0, %c0_i32, %c0_i32_0 : i32, i32, i32
  }
  func.func @transform_1(%arg0: i32) -> (i32, i32) {
    %c0_i32 = arith.constant 0 : i32
    %c0_i32_0 = arith.constant 0 : i32
    %c0_i32_1 = arith.constant 0 : i32
    return %c0_i32, %c0_i32_0 : i32, i32
  }
  func.func @transform_2(%arg0: i32) -> (i32, i32) {
    %c0_i32 = arith.constant 0 : i32
    %c0_i32_0 = arith.constant 0 : i32
    %c0_i32_1 = arith.constant 0 : i32
    return %c0_i32, %c0_i32_0 : i32, i32
  }
  func.func @transform_3(%arg0: i32) -> (i32, i32, i32) {
    %c0_i32 = arith.constant 0 : i32
    %c0_i32_0 = arith.constant 0 : i32
    %c0_i32_1 = arith.constant 0 : i32
    return %arg0, %c0_i32, %c0_i32_0 : i32, i32, i32
  }
}

module attributes {stable_mosaic.version = 11 : i64} {
  func.func @_conv_mm_pool_kernel(%arg0: i32, %arg1: memref<1x128x3200xbf16, #tpu.memory_space<vmem>>, %arg2: memref<3200x256xbf16, #tpu.memory_space<vmem>>, %arg3: memref<1x256xf32, #tpu.memory_space<vmem>>, %arg4: memref<1x32x256xbf16, #tpu.memory_space<vmem>>) attributes {dimension_semantics = [#tpu.dimension_semantics<parallel>], iteration_bounds = array<i64: 2>, scalar_prefetch = 0 : i64, scratch_operands = 0 : i64, tpu.core_type = #tpu.core_type<tc>, window_params = [{transform_indices = @transform_0, window_bounds = array<i64: 1, 128, 3200>}, {pipeline_mode = #tpu.pipeline_mode<synchronous>, transform_indices = @transform_1, window_bounds = array<i64: 3200, 256>}, {pipeline_mode = #tpu.pipeline_mode<synchronous>, transform_indices = @transform_2, window_bounds = array<i64: 1, 256>}, {transform_indices = @transform_3, window_bounds = array<i64: 1, 32, 256>}]} {
    %c0 = arith.constant 0 : index
    %c0_0 = arith.constant 0 : index
    %c0_1 = arith.constant 0 : index
    %0 = vector.load %arg1[%c0, %c0_0, %c0_1] : memref<1x128x3200xbf16, #tpu.memory_space<vmem>>, vector<1x128x3200xbf16>
    %1 = vector.shape_cast %0 : vector<1x128x3200xbf16> to vector<128x3200xbf16>
    %c0_2 = arith.constant 0 : index
    %c0_3 = arith.constant 0 : index
    %2 = vector.load %arg2[%c0_2, %c0_3] : memref<3200x256xbf16, #tpu.memory_space<vmem>>, vector<3200x256xbf16>
    %cst = arith.constant dense<0.000000e+00> : vector<128x256xf32>
    %3 = tpu.matmul %1, %2, %cst {dimension_numbers = #tpu.dot_dimension_numbers<[1], [0], [0], [1], [0, 0, 1, 1], [], []>} : vector<128x3200xbf16>, vector<3200x256xbf16>, vector<128x256xf32> -> vector<128x256xf32>
    %4 = vector.extract_strided_slice %3 {offsets = [0, 0], sizes = [32, 256], strides = [1, 1]} : vector<128x256xf32> to vector<32x256xf32>
    %5 = vector.extract_strided_slice %3 {offsets = [32, 0], sizes = [32, 256], strides = [1, 1]} : vector<128x256xf32> to vector<32x256xf32>
    %6 = arith.maximumf %4, %5 : vector<32x256xf32>
    %7 = vector.extract_strided_slice %3 {offsets = [64, 0], sizes = [32, 256], strides = [1, 1]} : vector<128x256xf32> to vector<32x256xf32>
    %8 = vector.extract_strided_slice %3 {offsets = [96, 0], sizes = [32, 256], strides = [1, 1]} : vector<128x256xf32> to vector<32x256xf32>
    %9 = arith.maximumf %7, %8 : vector<32x256xf32>
    %10 = arith.maximumf %6, %9 : vector<32x256xf32>
    %c0_4 = arith.constant 0 : index
    %c0_5 = arith.constant 0 : index
    %11 = vector.load %arg3[%c0_4, %c0_5] : memref<1x256xf32, #tpu.memory_space<vmem>>, vector<1x256xf32>
    %12 = vector.broadcast %11 : vector<1x256xf32> to vector<32x256xf32>
    %13 = arith.addf %10, %12 : vector<32x256xf32>
    %cst_6 = arith.constant 0.000000e+00 : f32
    %14 = vector.broadcast %cst_6 : f32 to vector<32x256xf32>
    %15 = arith.maximumf %13, %14 : vector<32x256xf32>
    %16 = arith.truncf %15 : vector<32x256xf32> to vector<32x256xbf16>
    %c0_7 = arith.constant 0 : index
    %c0_8 = arith.constant 0 : index
    %c0_9 = arith.constant 0 : index
    %17 = vector.load %arg4[%c0_7, %c0_8, %c0_9] : memref<1x32x256xbf16, #tpu.memory_space<vmem>>, vector<1x32x256xbf16>
    %18 = vector.shape_cast %17 : vector<1x32x256xbf16> to vector<32x256xbf16>
    %19 = vector.shape_cast %16 : vector<32x256xbf16> to vector<1x32x256xbf16>
    tpu.vector_store %arg4[%c0_7, %c0_8, %c0_9], %19 {strides = array<i32>} : memref<1x32x256xbf16, #tpu.memory_space<vmem>>, vector<1x32x256xbf16>,
    return
  }
  func.func @transform_0(%arg0: i32) -> (i32, i32, i32) {
    %c0_i32 = arith.constant 0 : i32
    %c0_i32_0 = arith.constant 0 : i32
    %c0_i32_1 = arith.constant 0 : i32
    return %arg0, %c0_i32, %c0_i32_0 : i32, i32, i32
  }
  func.func @transform_1(%arg0: i32) -> (i32, i32) {
    %c0_i32 = arith.constant 0 : i32
    %c0_i32_0 = arith.constant 0 : i32
    %c0_i32_1 = arith.constant 0 : i32
    return %c0_i32, %c0_i32_0 : i32, i32
  }
  func.func @transform_2(%arg0: i32) -> (i32, i32) {
    %c0_i32 = arith.constant 0 : i32
    %c0_i32_0 = arith.constant 0 : i32
    %c0_i32_1 = arith.constant 0 : i32
    return %c0_i32, %c0_i32_0 : i32, i32
  }
  func.func @transform_3(%arg0: i32) -> (i32, i32, i32) {
    %c0_i32 = arith.constant 0 : i32
    %c0_i32_0 = arith.constant 0 : i32
    %c0_i32_1 = arith.constant 0 : i32
    return %arg0, %c0_i32, %c0_i32_0 : i32, i32, i32
  }
}

module attributes {stable_mosaic.version = 11 : i64} {
  func.func @_fc_head_kernel(%arg0: i32, %arg1: memref<8x6400xbf16, #tpu.memory_space<vmem>>, %arg2: memref<6400x256xbf16, #tpu.memory_space<vmem>>, %arg3: memref<1x256xf32, #tpu.memory_space<vmem>>, %arg4: memref<256x128xbf16, #tpu.memory_space<vmem>>, %arg5: memref<1x128xf32, #tpu.memory_space<vmem>>, %arg6: memref<128x128xbf16, #tpu.memory_space<vmem>>, %arg7: memref<1x128xf32, #tpu.memory_space<vmem>>, %arg8: memref<8x128xf32, #tpu.memory_space<vmem>>) attributes {dimension_semantics = [#tpu.dimension_semantics<parallel>], iteration_bounds = array<i64: 1>, scalar_prefetch = 0 : i64, scratch_operands = 0 : i64, tpu.core_type = #tpu.core_type<tc>, window_params = [{transform_indices = @transform_0, window_bounds = array<i64: 8, 6400>}, {pipeline_mode = #tpu.pipeline_mode<synchronous>, transform_indices = @transform_1, window_bounds = array<i64: 6400, 256>}, {pipeline_mode = #tpu.pipeline_mode<synchronous>, transform_indices = @transform_2, window_bounds = array<i64: 1, 256>}, {pipeline_mode = #tpu.pipeline_mode<synchronous>, transform_indices = @transform_3, window_bounds = array<i64: 256, 128>}, {pipeline_mode = #tpu.pipeline_mode<synchronous>, transform_indices = @transform_4, window_bounds = array<i64: 1, 128>}, {pipeline_mode = #tpu.pipeline_mode<synchronous>, transform_indices = @transform_5, window_bounds = array<i64: 128, 128>}, {pipeline_mode = #tpu.pipeline_mode<synchronous>, transform_indices = @transform_6, window_bounds = array<i64: 1, 128>}, {transform_indices = @transform_7, window_bounds = array<i64: 8, 128>}]} {
    %c0 = arith.constant 0 : index
    %c0_0 = arith.constant 0 : index
    %0 = vector.load %arg1[%c0, %c0_0] : memref<8x6400xbf16, #tpu.memory_space<vmem>>, vector<8x6400xbf16>
    %c0_1 = arith.constant 0 : index
    %c0_2 = arith.constant 0 : index
    %1 = vector.load %arg2[%c0_1, %c0_2] : memref<6400x256xbf16, #tpu.memory_space<vmem>>, vector<6400x256xbf16>
    %cst = arith.constant dense<0.000000e+00> : vector<8x256xf32>
    %2 = tpu.matmul %0, %1, %cst {dimension_numbers = #tpu.dot_dimension_numbers<[1], [0], [0], [1], [0, 0, 1, 1], [], []>} : vector<8x6400xbf16>, vector<6400x256xbf16>, vector<8x256xf32> -> vector<8x256xf32>
    %c0_3 = arith.constant 0 : index
    %c0_4 = arith.constant 0 : index
    %3 = vector.load %arg3[%c0_3, %c0_4] : memref<1x256xf32, #tpu.memory_space<vmem>>, vector<1x256xf32>
    %4 = vector.broadcast %3 : vector<1x256xf32> to vector<8x256xf32>
    %5 = arith.addf %2, %4 : vector<8x256xf32>
    %cst_5 = arith.constant 0.000000e+00 : f32
    %6 = vector.broadcast %cst_5 : f32 to vector<8x256xf32>
    %7 = arith.maximumf %5, %6 : vector<8x256xf32>
    %8 = arith.truncf %7 : vector<8x256xf32> to vector<8x256xbf16>
    %c0_6 = arith.constant 0 : index
    %c0_7 = arith.constant 0 : index
    %9 = vector.load %arg4[%c0_6, %c0_7] : memref<256x128xbf16, #tpu.memory_space<vmem>>, vector<256x128xbf16>
    %cst_8 = arith.constant dense<0.000000e+00> : vector<8x128xf32>
    %10 = tpu.matmul %8, %9, %cst_8 {dimension_numbers = #tpu.dot_dimension_numbers<[1], [0], [0], [1], [0, 0, 1, 1], [], []>} : vector<8x256xbf16>, vector<256x128xbf16>, vector<8x128xf32> -> vector<8x128xf32>
    %c0_9 = arith.constant 0 : index
    %c0_10 = arith.constant 0 : index
    %11 = vector.load %arg5[%c0_9, %c0_10] : memref<1x128xf32, #tpu.memory_space<vmem>>, vector<1x128xf32>
    %12 = vector.broadcast %11 : vector<1x128xf32> to vector<8x128xf32>
    %13 = arith.addf %10, %12 : vector<8x128xf32>
    %cst_11 = arith.constant 0.000000e+00 : f32
    %14 = vector.broadcast %cst_11 : f32 to vector<8x128xf32>
    %15 = arith.maximumf %13, %14 : vector<8x128xf32>
    %16 = arith.truncf %15 : vector<8x128xf32> to vector<8x128xbf16>
    %c0_12 = arith.constant 0 : index
    %c0_13 = arith.constant 0 : index
    %17 = vector.load %arg6[%c0_12, %c0_13] : memref<128x128xbf16, #tpu.memory_space<vmem>>, vector<128x128xbf16>
    %cst_14 = arith.constant dense<0.000000e+00> : vector<8x128xf32>
    %18 = tpu.matmul %16, %17, %cst_14 {dimension_numbers = #tpu.dot_dimension_numbers<[1], [0], [0], [1], [0, 0, 1, 1], [], []>} : vector<8x128xbf16>, vector<128x128xbf16>, vector<8x128xf32> -> vector<8x128xf32>
    %c0_15 = arith.constant 0 : index
    %c0_16 = arith.constant 0 : index
    %19 = vector.load %arg7[%c0_15, %c0_16] : memref<1x128xf32, #tpu.memory_space<vmem>>, vector<1x128xf32>
    %20 = vector.broadcast %19 : vector<1x128xf32> to vector<8x128xf32>
    %21 = arith.addf %18, %20 : vector<8x128xf32>
    %c0_17 = arith.constant 0 : index
    %c0_18 = arith.constant 0 : index
    %22 = vector.load %arg8[%c0_17, %c0_18] : memref<8x128xf32, #tpu.memory_space<vmem>>, vector<8x128xf32>
    tpu.vector_store %arg8[%c0_17, %c0_18], %21 {strides = array<i32>} : memref<8x128xf32, #tpu.memory_space<vmem>>, vector<8x128xf32>,
    return
  }
  func.func @transform_0(%arg0: i32) -> (i32, i32) {
    %c0_i32 = arith.constant 0 : i32
    %c0_i32_0 = arith.constant 0 : i32
    return %arg0, %c0_i32 : i32, i32
  }
  func.func @transform_1(%arg0: i32) -> (i32, i32) {
    %c0_i32 = arith.constant 0 : i32
    %c0_i32_0 = arith.constant 0 : i32
    %c0_i32_1 = arith.constant 0 : i32
    return %c0_i32, %c0_i32_0 : i32, i32
  }
  func.func @transform_2(%arg0: i32) -> (i32, i32) {
    %c0_i32 = arith.constant 0 : i32
    %c0_i32_0 = arith.constant 0 : i32
    %c0_i32_1 = arith.constant 0 : i32
    return %c0_i32, %c0_i32_0 : i32, i32
  }
  func.func @transform_3(%arg0: i32) -> (i32, i32) {
    %c0_i32 = arith.constant 0 : i32
    %c0_i32_0 = arith.constant 0 : i32
    %c0_i32_1 = arith.constant 0 : i32
    return %c0_i32, %c0_i32_0 : i32, i32
  }
  func.func @transform_4(%arg0: i32) -> (i32, i32) {
    %c0_i32 = arith.constant 0 : i32
    %c0_i32_0 = arith.constant 0 : i32
    %c0_i32_1 = arith.constant 0 : i32
    return %c0_i32, %c0_i32_0 : i32, i32
  }
  func.func @transform_5(%arg0: i32) -> (i32, i32) {
    %c0_i32 = arith.constant 0 : i32
    %c0_i32_0 = arith.constant 0 : i32
    %c0_i32_1 = arith.constant 0 : i32
    return %c0_i32, %c0_i32_0 : i32, i32
  }
  func.func @transform_6(%arg0: i32) -> (i32, i32) {
    %c0_i32 = arith.constant 0 : i32
    %c0_i32_0 = arith.constant 0 : i32
    %c0_i32_1 = arith.constant 0 : i32
    return %c0_i32, %c0_i32_0 : i32, i32
  }
  func.func @transform_7(%arg0: i32) -> (i32, i32) {
    %c0_i32 = arith.constant 0 : i32
    %c0_i32_0 = arith.constant 0 : i32
    return %arg0, %c0_i32 : i32, i32
  }
}

</mosaic_0001>

<llo_original>
// kernel: classifier_net_forward.3
$region0: #{classifier_net_forward.3}
  #allocation0 [shape = 'u32[]', space=smem, size = 0x4, offset = 0x4, fixed_abs, tag = 'smem constant byte address 0x4 - core index']
  #allocation1 [shape = 'u32[144,128]{1,0:T(1,128)}', space=vmem, size = 0x12000, scoped, tag = 'internal scratch']
  %s0 = inlined_call_operand.vmem [shape: bf16[2,800,128], index: 0, kind: input, shape index: {}]
  %s1 = inlined_call_operand.vmem [shape: bf16[128,128], index: 1, kind: input, shape index: {}]
  %s2 = inlined_call_operand.vmem [shape: f32[1,128], index: 2, kind: input, shape index: {}]
  %s3 = inlined_call_operand.vmem [shape: bf16[2,200,128], index: 3, kind: output, shape index: {}]
  %s4 = sld [smem:[#allocation0]]
  $region45: #{classifier_net_forward.3} parent=0
    _
  %s6 = ssub.s32 1, %s4
  %s7 = scalar_select 0, %s6, %s4
  loop: start=0, step=1, limit=4
  $region2: #{classifier_net_forward.3} parent=0 // loop_pre_header
    _
  $region3: #{classifier_net_forward.3} parent=0 // loop_header
    %s9 = sphi 0, %s13
    %p10 = scmp.ge.s32.totalorder %s9, 4
    %s19 = sphi 0, %s21
    %s22 = sphi 0, %s19
    %s23 = sphi 0, %s22
    %s39 = sphi 0, %s23
    %s43 = sphi 0, %s43
    %s45 = sphi 0, %s43
    %s46 = sphi 0, %s45
    %s60 = sphi 0, %s46
    %s64 = sphi 0, %s64
    %s66 = sphi 0, %s64
    %s67 = sphi 0, %s66
    %s81 = sphi 0, %s67
    %s87 = sphi 0, %s89
    %s90 = sphi 0, %s87
    %s91 = sphi 0, %s90
    %s107 = sphi 0, %s91
  $region4: #{classifier_net_forward.3} parent=0 // loop_header_branch
    %12 = sbr.rel (%p10) target = $region8
  $region5: #{classifier_net_forward.3} parent=0 // loop_body
    %s14 = ssub.s32 %s9, 1
    %s15 = ssub.s32 %s9, 2
    %s16 = sadd.s32 %s9, 1
    %s17 = ssub.s32 %s9, %s16
    %p18 = scmp.eq.s32.totalorder %s17, 0
    %s20 = sadd.s32 %s19, 1
    %s21 = scalar_select %p18, %s19, %s20
    %p24 = pneg %p18
    %p25 = scmp.eq.s32.totalorder %s9, 1
    %p26 = por %p24, %p25
    %p27 = scmp.ne.s32.totalorder %s19, %s22
    %p28 = scmp.eq.s32.totalorder %s9, 0
    %p29 = por %p27, %p28
    %p30 = scmp.ne.s32.totalorder %s19, %s22
    %p31 = scmp.eq.s32.totalorder %s14, 1
    %p32 = por %p30, %p31
    %p33 = scmp.ne.s32.totalorder %s22, %s23
    %p34 = scmp.eq.s32.totalorder %s14, 0
    %p35 = por %p33, %p34
    %p36 = scmp.ne.s32.totalorder %s22, %s23
    %p37 = scmp.eq.s32.totalorder %s15, 1
    %p38 = por %p36, %p37
    %p40 = scmp.ne.s32.totalorder %s23, %s39
    %p41 = scmp.eq.s32.totalorder %s15, 0
    %p42 = por %p40, %p41
    %s44 = sadd.s32 %s43, 1
    %p47 = scmp.eq.s32.totalorder %s9, 1
    %p48 = scmp.ne.s32.totalorder %s43, %s45
    %p49 = scmp.eq.s32.totalorder %s9, 0
    %p50 = por %p48, %p49
    %p51 = scmp.ne.s32.totalorder %s43, %s45
    %p52 = scmp.eq.s32.totalorder %s14, 1
    %p53 = por %p51, %p52
    %p54 = scmp.ne.s32.totalorder %s45, %s46
    %p55 = scmp.eq.s32.totalorder %s14, 0
    %p56 = por %p54, %p55
    %p57 = scmp.ne.s32.totalorder %s45, %s46
    %p58 = scmp.eq.s32.totalorder %s15, 1
    %p59 = por %p57, %p58
    %p61 = scmp.ne.s32.totalorder %s46, %s60
    %p62 = scmp.eq.s32.totalorder %s15, 0
    %p63 = por %p61, %p62
    %s65 = sadd.s32 %s64, 1
    %p68 = scmp.eq.s32.totalorder %s9, 1
    %p69 = scmp.ne.s32.totalorder %s64, %s66
    %p70 = scmp.eq.s32.totalorder %s9, 0
    %p71 = por %p69, %p70
    %p72 = scmp.ne.s32.totalorder %s64, %s66
    %p73 = scmp.eq.s32.totalorder %s14, 1
    %p74 = por %p72, %p73
    %p75 = scmp.ne.s32.totalorder %s66, %s67
    %p76 = scmp.eq.s32.totalorder %s14, 0
    %p77 = por %p75, %p76
    %p78 = scmp.ne.s32.totalorder %s66, %s67
    %p79 = scmp.eq.s32.totalorder %s15, 1
    %p80 = por %p78, %p79
    %p82 = scmp.ne.s32.totalorder %s67, %s81
    %p83 = scmp.eq.s32.totalorder %s15, 0
    %p84 = por %p82, %p83
    %s85 = ssub.s32 %s9, %s16
    %p86 = scmp.eq.s32.totalorder %s85, 0
    %s88 = sadd.s32 %s87, 1
    %s89 = scalar_select %p86, %s87, %s88
    %p92 = pneg %p86
    %p93 = scmp.eq.s32.totalorder %s9, 1
    %p94 = por %p92, %p93
    %p95 = scmp.ne.s32.totalorder %s87, %s90
    %p96 = scmp.eq.s32.totalorder %s9, 0
    %p97 = por %p95, %p96
    %p98 = scmp.ne.s32.totalorder %s87, %s90
    %p99 = scmp.eq.s32.totalorder %s14, 1
    %p100 = por %p98, %p99
    %p101 = scmp.ne.s32.totalorder %s90, %s91
    %p102 = scmp.eq.s32.totalorder %s14, 0
    %p103 = por %p101, %p102
    %p104 = scmp.ne.s32.totalorder %s90, %s91
    %p105 = scmp.eq.s32.totalorder %s15, 1
    %p106 = por %p104, %p105
    %p108 = scmp.ne.s32.totalorder %s91, %s107
    %p109 = scmp.eq.s32.totalorder %s15, 0
    %p110 = por %p108, %p109
    %p111 = scmp.le.s32.totalorder 1, %s9
    %p112 = scmp.lt.s32.totalorder %s9, 3
    %p113 = pnand %p111, %p112
    %p114 = pneg %p113
    // Predicated region
    $region9: #{classifier_net_forward.3} parent=5 // pred_check
      _
    $region10: #{classifier_net_forward.3} parent=5 // pred_check_branch
      %116 = sbr.rel (%p113) target = $region12
    $region11: #{classifier_net_forward.3} parent=5 // pred_region
      %s117 = ssub.s32 %s9, 1
      // Predicated region
      $region13: #{classifier_net_forward.3} parent=11 // pred_check
        %p118 = pneg %p56
      $region14: #{classifier_net_forward.3} parent=11 // pred_check_branch
        %120 = sbr.rel (%p118) target = $region16
      $region15: #{classifier_net_forward.3} parent=11 // pred_region
        _
      $region16: #{classifier_net_forward.3} parent=11 // pred_fallthru
        _
      // Predicated region
      $region17: #{classifier_net_forward.3} parent=11 // pred_check
        %p121 = pneg %p77
      $region18: #{classifier_net_forward.3} parent=11 // pred_check_branch
        %123 = sbr.rel (%p121) target = $region20
      $region19: #{classifier_net_forward.3} parent=11 // pred_region
        _
      $region20: #{classifier_net_forward.3} parent=11 // pred_fallthru
        _
    $region12: #{classifier_net_forward.3} parent=5 // pred_fallthru
      _
    %p124 = scmp.lt.s32.totalorder %s9, 2
    // Predicated region
    $region21: #{classifier_net_forward.3} parent=5 // pred_check
      %p125 = pneg %p124
    $region22: #{classifier_net_forward.3} parent=5 // pred_check_branch
      %127 = sbr.rel (%p125) target = $region24
    $region23: #{classifier_net_forward.3} parent=5 // pred_region
      // Predicated region
      $region25: #{classifier_net_forward.3} parent=23 // pred_check
        %p128 = pneg %p29
      $region26: #{classifier_net_forward.3} parent=23 // pred_check_branch
        %130 = sbr.rel (%p128) target = $region28
      $region27: #{classifier_net_forward.3} parent=23 // pred_region
        %p131 = scmp.lt.s32.totalorder %s9, 1
        %s132 = scalar_select %p131, %s9, 1
        %s133 = smul.addr %s132, 100
        %s134 = smul.addr %s133, 4
        %s135 = scalar_lea.vmem %s0, %s134
      $region28: #{classifier_net_forward.3} parent=23 // pred_fallthru
        _
    $region24: #{classifier_net_forward.3} parent=5 // pred_fallthru
      _
    %p136 = scmp.le.s32.totalorder 1, %s9
    %p137 = scmp.lt.s32.totalorder %s9, 3
    %p138 = pnand %p136, %p137
    %p139 = pneg %p138
    // Predicated region
    $region29: #{classifier_net_forward.3} parent=5 // pred_check
      _
    $region30: #{classifier_net_forward.3} parent=5 // pred_check_branch
      %141 = sbr.rel (%p138) target = $region32
    $region31: #{classifier_net_forward.3} parent=5 // pred_region
      %s142 = ssub.s32 %s9, 1
      %p143 = scmp.lt.s32.totalorder %s14, 1
      %s144 = scalar_select %p143, %s14, 1
      %s145 = smul.addr %s144, 100
      %s146 = smul.addr %s145, 4
      %s147 = scalar_lea.vmem %s0, %s146
      %p148 = pneg %p35
      %p149 = pneg %p32
      %p150 = pneg %p56
      %p151 = pneg %p53
      %p152 = pneg %p77
      %p153 = pneg %p74
      %p154 = pneg %p103
      %p155 = pneg %p100
      %p156 = scmp.lt.s32.totalorder %s14, 1
      %s157 = scalar_select %p156, %s14, 1
      %s158 = smul.addr %s157, 25
      %s159 = smul.addr %s158, 4
      %s160 = scalar_lea.vmem %s3, %s159
      %p161 = scmp.lt.s32.totalorder %s14, 1
      %s162 = scalar_select %p161, %s14, 1
      %s163 = smul.addr %s162, 100
      %s164 = smul.addr %s163, 4
      %s165 = scalar_lea.vmem %s0, %s164
      %p166 = scmp.lt.s32.totalorder %s14, 1
      %s167 = scalar_select %p166, %s14, 1
      %s168 = smul.addr %s167, 25
      %s169 = smul.addr %s168, 4
      %s170 = scalar_lea.vmem %s3, %s169
      %v172 = vld [vmem:[%s165] sm:$0xf]
      %v173 = vld [vmem:[%s165 + $0x4] sm:$0xf]
      %v174 = vld [vmem:[%s165 + $0x8] sm:$0xf]
      %v175 = vld [vmem:[%s165 + $0xc] sm:$0xf]
      %v176 = vld [vmem:[%s165 + $0x10] sm:$0xf]
      %v177 = vld [vmem:[%s165 + $0x14] sm:$0xf]
      %v178 = vld [vmem:[%s165 + $0x18] sm:$0xf]
      %v179 = vld [vmem:[%s165 + $0x1c] sm:$0xf]
      %v180 = vld [vmem:[%s165 + $0x20] sm:$0xf]
      %v181 = vld [vmem:[%s165 + $0x24] sm:$0xf]
      %v182 = vld [vmem:[%s165 + $0x28] sm:$0xf]
      %v183 = vld [vmem:[%s165 + $0x2c] sm:$0xf]
      %v184 = vld [vmem:[%s165 + $0x30] sm:$0xf]
      %v185 = vld [vmem:[%s165 + $0x34] sm:$0xf]
      %v186 = vld [vmem:[%s165 + $0x38] sm:$0xf]
      %v187 = vld [vmem:[%s165 + $0x3c] sm:$0xf]
      %v188 = vld [vmem:[%s165 + $0x40] sm:$0xf]
      %v189 = vld [vmem:[%s165 + $0x44] sm:$0xf]
      %v190 = vld [vmem:[%s165 + $0x48] sm:$0xf]
      %v191 = vld [vmem:[%s165 + $0x4c] sm:$0xf]
      %v192 = vld [vmem:[%s165 + $0x50] sm:$0xf]
      %v193 = vld [vmem:[%s165 + $0x54] sm:$0xf]
      %v194 = vld [vmem:[%s165 + $0x58] sm:$0xf]
      %v195 = vld [vmem:[%s165 + $0x5c] sm:$0xf]
      %v196 = vld [vmem:[%s165 + $0x60] sm:$0xf]
      %v197 = vld [vmem:[%s165 + $0x64] sm:$0xf]
      %v198 = vld [vmem:[%s165 + $0x68] sm:$0xf]
      %v199 = vld [vmem:[%s165 + $0x6c] sm:$0xf]
      %v200 = vld [vmem:[%s165 + $0x70] sm:$0xf]
      %v201 = vld [vmem:[%s165 + $0x74] sm:$0xf]
      %v202 = vld [vmem:[%s165 + $0x78] sm:$0xf]
      %v203 = vld [vmem:[%s165 + $0x7c] sm:$0xf]
      %v204 = vld [vmem:[%s165 + $0x80] sm:$0xf]
      %v205 = vld [vmem:[%s165 + $0x84] sm:$0xf]
      %v206 = vld [vmem:[%s165 + $0x88] sm:$0xf]
      %v207 = vld [vmem:[%s165 + $0x8c] sm:$0xf]
      %v208 = vld [vmem:[%s165 + $0x90] sm:$0xf]
      %v209 = vld [vmem:[%s165 + $0x94] sm:$0xf]
      %v210 = vld [vmem:[%s165 + $0x98] sm:$0xf]
      %v211 = vld [vmem:[%s165 + $0x9c] sm:$0xf]
      %v212 = vld [vmem:[%s165 + $0xa0] sm:$0xf]
      %v213 = vld [vmem:[%s165 + $0xa4] sm:$0xf]
      %v214 = vld [vmem:[%s165 + $0xa8] sm:$0xf]
      %v215 = vld [vmem:[%s165 + $0xac] sm:$0xf]
      %v216 = vld [vmem:[%s165 + $0xb0] sm:$0xf]
      %v217 = vld [vmem:[%s165 + $0xb4] sm:$0xf]
      %v218 = vld [vmem:[%s165 + $0xb8] sm:$0xf]
      %v219 = vld [vmem:[%s165 + $0xbc] sm:$0xf]
      %v220 = vld [vmem:[%s165 + $0xc0] sm:$0xf]
      %v221 = vld [vmem:[%s165 + $0xc4] sm:$0xf]
      %v222 = vld [vmem:[%s165 + $0xc8] sm:$0xf]
      %v223 = vld [vmem:[%s165 + $0xcc] sm:$0xf]
      %v224 = vld [vmem:[%s165 + $0xd0] sm:$0xf]
      %v225 = vld [vmem:[%s165 + $0xd4] sm:$0xf]
      %v226 = vld [vmem:[%s165 + $0xd8] sm:$0xf]
      %v227 = vld [vmem:[%s165 + $0xdc] sm:$0xf]
      %v228 = vld [vmem:[%s165 + $0xe0] sm:$0xf]
      %v229 = vld [vmem:[%s165 + $0xe4] sm:$0xf]
      %v230 = vld [vmem:[%s165 + $0xe8] sm:$0xf]
      %v231 = vld [vmem:[%s165 + $0xec] sm:$0xf]
      %v232 = vld [vmem:[%s165 + $0xf0] sm:$0xf]
      %v233 = vld [vmem:[%s165 + $0xf4] sm:$0xf]
      %v234 = vld [vmem:[%s165 + $0xf8] sm:$0xf]
      %v235 = vld [vmem:[%s165 + $0xfc] sm:$0xf]
      %v236 = vld [vmem:[%s165 + $0x100] sm:$0xf]
      %v237 = vld [vmem:[%s165 + $0x104] sm:$0xf]
      %v238 = vld [vmem:[%s165 + $0x108] sm:$0xf]
      %v239 = vld [vmem:[%s165 + $0x10c] sm:$0xf]
      %v240 = vld [vmem:[%s165 + $0x110] sm:$0xf]
      %v241 = vld [vmem:[%s165 + $0x114] sm:$0xf]
      %v242 = vld [vmem:[%s165 + $0x118] sm:$0xf]
      %v243 = vld [vmem:[%s165 + $0x11c] sm:$0xf]
      %v244 = vld [vmem:[%s165 + $0x120] sm:$0xf]
      %v245 = vld [vmem:[%s165 + $0x124] sm:$0xf]
      %v246 = vld [vmem:[%s165 + $0x128] sm:$0xf]
      %v247 = vld [vmem:[%s165 + $0x12c] sm:$0xf]
      %v248 = vld [vmem:[%s165 + $0x130] sm:$0xf]
      %v249 = vld [vmem:[%s165 + $0x134] sm:$0xf]
      %v250 = vld [vmem:[%s165 + $0x138] sm:$0xf]
      %v251 = vld [vmem:[%s165 + $0x13c] sm:$0xf]
      %v252 = vld [vmem:[%s165 + $0x140] sm:$0xf]
      %v253 = vld [vmem:[%s165 + $0x144] sm:$0xf]
      %v254 = vld [vmem:[%s165 + $0x148] sm:$0xf]
      %v255 = vld [vmem:[%s165 + $0x14c] sm:$0xf]
      %v256 = vld [vmem:[%s165 + $0x150] sm:$0xf]
      %v257 = vld [vmem:[%s165 + $0x154] sm:$0xf]
      %v258 = vld [vmem:[%s165 + $0x158] sm:$0xf]
      %v259 = vld [vmem:[%s165 + $0x15c] sm:$0xf]
      %v260 = vld [vmem:[%s165 + $0x160] sm:$0xf]
      %v261 = vld [vmem:[%s165 + $0x164] sm:$0xf]
      %v262 = vld [vmem:[%s165 + $0x168] sm:$0xf]
      %v263 = vld [vmem:[%s165 + $0x16c] sm:$0xf]
      %v264 = vld [vmem:[%s165 + $0x170] sm:$0xf]
      %v265 = vld [vmem:[%s165 + $0x174] sm:$0xf]
      %v266 = vld [vmem:[%s165 + $0x178] sm:$0xf]
      %v267 = vld [vmem:[%s165 + $0x17c] sm:$0xf]
      %v268 = vld [vmem:[%s165 + $0x180] sm:$0xf]
      %v269 = vld [vmem:[%s165 + $0x184] sm:$0xf]
      %v270 = vld [vmem:[%s165 + $0x188] sm:$0xf]
      %v271 = vld [vmem:[%s165 + $0x18c] sm:$0xf]
      %v272 = vld [vmem:[%s1] sm:$0xf]
      %v273 = vld [vmem:[%s1 + $0x4] sm:$0xf]
      %v274 = vld [vmem:[%s1 + $0x8] sm:$0xf]
      %v275 = vld [vmem:[%s1 + $0xc] sm:$0xf]
      %v276 = vld [vmem:[%s1 + $0x10] sm:$0xf]
      %v277 = vld [vmem:[%s1 + $0x14] sm:$0xf]
      %v278 = vld [vmem:[%s1 + $0x18] sm:$0xf]
      %v279 = vld [vmem:[%s1 + $0x1c] sm:$0xf]
      %v280 = vld [vmem:[%s1 + $0x20] sm:$0xf]
      %v281 = vld [vmem:[%s1 + $0x24] sm:$0xf]
      %v282 = vld [vmem:[%s1 + $0x28] sm:$0xf]
      %v283 = vld [vmem:[%s1 + $0x2c] sm:$0xf]
      %v284 = vld [vmem:[%s1 + $0x30] sm:$0xf]
      %v285 = vld [vmem:[%s1 + $0x34] sm:$0xf]
      %v286 = vld [vmem:[%s1 + $0x38] sm:$0xf]
      %v287 = vld [vmem:[%s1 + $0x3c] sm:$0xf]
      %v388 = vunpack.c.l.b16 %v172
      %v389 = vunpack.c.l.b16 %v173
      %v390 = vunpack.c.l.b16 %v174
      %v391 = vunpack.c.l.b16 %v175
      %v392 = vunpack.c.l.b16 %v176
      %v393 = vunpack.c.l.b16 %v177
      %v394 = vunpack.c.l.b16 %v178
      %v395 = vunpack.c.l.b16 %v179
      %v396 = vunpack.c.l.b16 %v180
      %v397 = vunpack.c.l.b16 %v181
      %v398 = vunpack.c.l.b16 %v182
      %v399 = vunpack.c.l.b16 %v183
      %v400 = vunpack.c.l.b16 %v184
      %v401 = vunpack.c.l.b16 %v185
      %v402 = vunpack.c.l.b16 %v186
      %v403 = vunpack.c.l.b16 %v187
      %v404 = vunpack.c.l.b16 %v188
      %v405 = vunpack.c.l.b16 %v189
      %v406 = vunpack.c.l.b16 %v190
      %v407 = vunpack.c.l.b16 %v191
      %v408 = vunpack.c.l.b16 %v192
      %v409 = vunpack.c.l.b16 %v193
      %v410 = vunpack.c.l.b16 %v194
      %v411 = vunpack.c.l.b16 %v195
      %v412 = vunpack.c.l.b16 %v196
      %v413 = vunpack.c.l.b16 %v197
      %v414 = vunpack.c.l.b16 %v198
      %v415 = vunpack.c.l.b16 %v199
      %v416 = vunpack.c.l.b16 %v200
      %v417 = vunpack.c.l.b16 %v201
      %v418 = vunpack.c.l.b16 %v202
      %v419 = vunpack.c.l.b16 %v203
      %v420 = vunpack.c.l.b16 %v204
      %v421 = vunpack.c.l.b16 %v205
      %v422 = vunpack.c.l.b16 %v206
      %v423 = vunpack.c.l.b16 %v207
      %v424 = vunpack.c.l.b16 %v208
      %v425 = vunpack.c.l.b16 %v209
      %v426 = vunpack.c.l.b16 %v210
      %v427 = vunpack.c.l.b16 %v211
      %v428 = vunpack.c.l.b16 %v212
      %v429 = vunpack.c.l.b16 %v213
      %v430 = vunpack.c.l.b16 %v214
      %v431 = vunpack.c.l.b16 %v215
      %v432 = vunpack.c.l.b16 %v216
      %v433 = vunpack.c.l.b16 %v217
      %v434 = vunpack.c.l.b16 %v218
      %v435 = vunpack.c.l.b16 %v219
      %v436 = vunpack.c.l.b16 %v220
      %v437 = vunpack.c.l.b16 %v221
      %v438 = vunpack.c.l.b16 %v222
      %v439 = vunpack.c.l.b16 %v223
      %v440 = vunpack.c.l.b16 %v224
      %v441 = vunpack.c.l.b16 %v225
      %v442 = vunpack.c.l.b16 %v226
      %v443 = vunpack.c.l.b16 %v227
      %v444 = vunpack.c.l.b16 %v228
      %v445 = vunpack.c.l.b16 %v229
      %v446 = vunpack.c.l.b16 %v230
      %v447 = vunpack.c.l.b16 %v231
      %v448 = vunpack.c.l.b16 %v232
      %v449 = vunpack.c.l.b16 %v233
      %v450 = vunpack.c.l.b16 %v234
      %v451 = vunpack.c.l.b16 %v235
      %v452 = vunpack.c.l.b16 %v236
      %v453 = vunpack.c.l.b16 %v237
      %v454 = vunpack.c.l.b16 %v238
      %v455 = vunpack.c.l.b16 %v239
      %v456 = vunpack.c.l.b16 %v240
      %v457 = vunpack.c.l.b16 %v241
      %v458 = vunpack.c.l.b16 %v242
      %v459 = vunpack.c.l.b16 %v243
      %v460 = vunpack.c.l.b16 %v244
      %v461 = vunpack.c.l.b16 %v245
      %v462 = vunpack.c.l.b16 %v246
      %v463 = vunpack.c.l.b16 %v247
      %v464 = vunpack.c.l.b16 %v248
      %v465 = vunpack.c.l.b16 %v249
      %v466 = vunpack.c.l.b16 %v250
      %v467 = vunpack.c.l.b16 %v251
      %v468 = vunpack.c.l.b16 %v252
      %v469 = vunpack.c.l.b16 %v253
      %v470 = vunpack.c.l.b16 %v254
      %v471 = vunpack.c.l.b16 %v255
      %v472 = vunpack.c.l.b16 %v256
      %v473 = vunpack.c.l.b16 %v257
      %v474 = vunpack.c.l.b16 %v258
      %v475 = vunpack.c.l.b16 %v259
      %v476 = vunpack.c.l.b16 %v260
      %v477 = vunpack.c.l.b16 %v261
      %v478 = vunpack.c.l.b16 %v262
      %v479 = vunpack.c.l.b16 %v263
      %v480 = vunpack.c.l.b16 %v264
      %v481 = vunpack.c.l.b16 %v265
      %v482 = vunpack.c.l.b16 %v266
      %v483 = vunpack.c.l.b16 %v267
      %v484 = vunpack.c.l.b16 %v268
      %v485 = vunpack.c.l.b16 %v269
      %v486 = vunpack.c.l.b16 %v270
      %v487 = vunpack.c.l.b16 %v271
      %v488 = vpack.c.b16 %v389, %v388
      %v489 = vpack.c.b16 %v391, %v390
      %v490 = vpack.c.b16 %v393, %v392
      %v491 = vpack.c.b16 %v395, %v394
      %v492 = vpack.c.b16 %v397, %v396
      %v493 = vpack.c.b16 %v399, %v398
      %v494 = vpack.c.b16 %v401, %v400
      %v495 = vpack.c.b16 %v403, %v402
      %v496 = vpack.c.b16 %v405, %v404
      %v497 = vpack.c.b16 %v407, %v406
      %v498 = vpack.c.b16 %v409, %v408
      %v499 = vpack.c.b16 %v411, %v410
      %v500 = vpack.c.b16 %v413, %v412
      %v501 = vpack.c.b16 %v415, %v414
      %v502 = vpack.c.b16 %v417, %v416
      %v503 = vpack.c.b16 %v419, %v418
      %v504 = vpack.c.b16 %v421, %v420
      %v505 = vpack.c.b16 %v423, %v422
      %v506 = vpack.c.b16 %v425, %v424
      %v507 = vpack.c.b16 %v427, %v426
      %v508 = vpack.c.b16 %v429, %v428
      %v509 = vpack.c.b16 %v431, %v430
      %v510 = vpack.c.b16 %v433, %v432
      %v511 = vpack.c.b16 %v435, %v434
      %v512 = vpack.c.b16 %v437, %v436
      %v513 = vpack.c.b16 %v439, %v438
      %v514 = vpack.c.b16 %v441, %v440
      %v515 = vpack.c.b16 %v443, %v442
      %v516 = vpack.c.b16 %v445, %v444
      %v517 = vpack.c.b16 %v447, %v446
      %v518 = vpack.c.b16 %v449, %v448
      %v519 = vpack.c.b16 %v451, %v450
      %v520 = vpack.c.b16 %v453, %v452
      %v521 = vpack.c.b16 %v455, %v454
      %v522 = vpack.c.b16 %v457, %v456
      %v523 = vpack.c.b16 %v459, %v458
      %v524 = vpack.c.b16 %v461, %v460
      %v525 = vpack.c.b16 %v463, %v462
      %v526 = vpack.c.b16 %v465, %v464
      %v527 = vpack.c.b16 %v467, %v466
      %v528 = vpack.c.b16 %v469, %v468
      %v529 = vpack.c.b16 %v471, %v470
      %v530 = vpack.c.b16 %v473, %v472
      %v531 = vpack.c.b16 %v475, %v474
      %v532 = vpack.c.b16 %v477, %v476
      %v533 = vpack.c.b16 %v479, %v478
      %v534 = vpack.c.b16 %v481, %v480
      %v535 = vpack.c.b16 %v483, %v482
      %v536 = vpack.c.b16 %v485, %v484
      %v537 = vpack.c.b16 %v487, %v486
      %v604 = vunpack.c.l.b16 %v272
      %v605 = vunpack.c.l.b16 %v273
      %v606 = vunpack.c.l.b16 %v274
      %v607 = vunpack.c.l.b16 %v275
      %v608 = vunpack.c.l.b16 %v276
      %v609 = vunpack.c.l.b16 %v277
      %v610 = vunpack.c.l.b16 %v278
      %v611 = vunpack.c.l.b16 %v279
      %v612 = vunpack.c.l.b16 %v280
      %v613 = vunpack.c.l.b16 %v281
      %v614 = vunpack.c.l.b16 %v282
      %v615 = vunpack.c.l.b16 %v283
      %v616 = vunpack.c.l.b16 %v284
      %v617 = vunpack.c.l.b16 %v285
      %v618 = vunpack.c.l.b16 %v286
      %v619 = vunpack.c.l.b16 %v287
      %v620 = vpack.c.b16 %v605, %v604
      %v621 = vpack.c.b16 %v607, %v606
      %v622 = vpack.c.b16 %v609, %v608
      %v623 = vpack.c.b16 %v611, %v610
      %v624 = vpack.c.b16 %v613, %v612
      %v625 = vpack.c.b16 %v615, %v614
      %v626 = vpack.c.b16 %v617, %v616
      %v627 = vpack.c.b16 %v619, %v618
      %636 = vmatprep.subr.bf16.mxu0 0
      %637 = vmatpush1.bf16.msra.mxu0 %v620
      %638 = vmatprep.subr.bf16.mxu0 0
      %639 = vmatpush1.bf16.msra.mxu0 %v621
      %640 = vmatprep.subr.bf16.mxu0 0
      %641 = vmatpush1.bf16.msra.mxu0 %v622
      %642 = vmatprep.subr.bf16.mxu0 0
      %643 = vmatpush1.bf16.msra.mxu0 %v623
      %644 = vmatprep.subr.bf16.mxu0 0
      %645 = vmatpush1.bf16.msra.mxu0 %v624
      %646 = vmatprep.subr.bf16.mxu0 0
      %647 = vmatpush1.bf16.msra.mxu0 %v625
      %648 = vmatprep.subr.bf16.mxu0 0
      %649 = vmatpush1.bf16.msra.mxu0 %v626
      %650 = vmatprep.subr.bf16.mxu0 0
      %651 = vmatpush1.bf16.msra.mxu0 %v627
      %652 = vmatprep.subr.bf16.mxu0 0
      %653 = vmatpush1.bf16.msra.mxu0 0
      %654 = vmatprep.subr.bf16.mxu0 0
      %655 = vmatpush1.bf16.msra.mxu0 0
      %656 = vmatprep.subr.bf16.mxu0 0
      %657 = vmatpush1.bf16.msra.mxu0 0
      %658 = vmatprep.subr.bf16.mxu0 0
      %659 = vmatpush1.bf16.msra.mxu0 0
      %660 = vmatprep.subr.bf16.mxu0 0
      %661 = vmatpush1.bf16.msra.mxu0 0
      %662 = vmatprep.subr.bf16.mxu0 0
      %663 = vmatpush1.bf16.msra.mxu0 0
      %664 = vmatprep.subr.bf16.mxu0 0
      %665 = vmatpush1.bf16.msra.mxu0 0
      %666 = vmatprep.subr.bf16.mxu0 0
      %667 = vmatpush1.bf16.msra.mxu0 0
      %668 = vmatprep.mubr.bf16.mxu0 0
      %669 = vmatmul.mubr.bf16.gmra.mrb[0].mxu0 %v488
      %v670 = vpop.f32.mrb[0].mxu0
      %v671 = vadd.f32 0.0, %v670
      %v672 = vpop.f32.mrb[0].mxu0
      %v673 = vpop.f32.mrb[0].mxu0
      %v674 = vadd.f32 0.0, %v673
      %v675 = vpop.f32.mrb[0].mxu0
      %676 = vmatprep.mubr.bf16.mxu0 0
      %677 = vmatmul.mubr.bf16.gmra.mrb[0].mxu0 %v489
      %v678 = vpop.f32.mrb[0].mxu0
      %v679 = vadd.f32 0.0, %v678
      %v680 = vpop.f32.mrb[0].mxu0
      %v681 = vpop.f32.mrb[0].mxu0
      %v682 = vadd.f32 0.0, %v681
      %v683 = vpop.f32.mrb[0].mxu0
      %684 = vmatprep.mubr.bf16.mxu0 0
      %685 = vmatmul.mubr.bf16.gmra.mrb[0].mxu0 %v490
      %v686 = vpop.f32.mrb[0].mxu0
      %v687 = vadd.f32 0.0, %v686
      %v688 = vpop.f32.mrb[0].mxu0
      %v689 = vpop.f32.mrb[0].mxu0
      %v690 = vadd.f32 0.0, %v689
      %v691 = vpop.f32.mrb[0].mxu0
      %692 = vmatprep.mubr.bf16.mxu0 0
      %693 = vmatmul.mubr.bf16.gmra.mrb[0].mxu0 %v491
      %v694 = vpop.f32.mrb[0].mxu0
      %v695 = vadd.f32 0.0, %v694
      %v696 = vpop.f32.mrb[0].mxu0
      %v697 = vpop.f32.mrb[0].mxu0
      %v698 = vadd.f32 0.0, %v697
      %v699 = vpop.f32.mrb[0].mxu0
      %700 = vmatprep.mubr.bf16.mxu0 0
      %701 = vmatmul.mubr.bf16.gmra.mrb[0].mxu0 %v492
      %v702 = vpop.f32.mrb[0].mxu0
      %v703 = vadd.f32 0.0, %v702
      %v704 = vpop.f32.mrb[0].mxu0
      %v705 = vpop.f32.mrb[0].mxu0
      %v706 = vadd.f32 0.0, %v705
      %v707 = vpop.f32.mrb[0].mxu0
      %708 = vmatprep.mubr.bf16.mxu0 0
      %709 = vmatmul.mubr.bf16.gmra.mrb[0].mxu0 %v493
      %v710 = vpop.f32.mrb[0].mxu0
      %v711 = vadd.f32 0.0, %v710
      %v712 = vpop.f32.mrb[0].mxu0
      %v713 = vpop.f32.mrb[0].mxu0
      %v714 = vadd.f32 0.0, %v713
      %v715 = vpop.f32.mrb[0].mxu0
      %716 = vmatprep.mubr.bf16.mxu0 0
      %717 = vmatmul.mubr.bf16.gmra.mrb[0].mxu0 %v494
      %v718 = vpop.f32.mrb[0].mxu0
      %v719 = vadd.f32 0.0, %v718
      %v720 = vpop.f32.mrb[0].mxu0
      %v721 = vpop.f32.mrb[0].mxu0
      %v722 = vadd.f32 0.0, %v721
      %v723 = vpop.f32.mrb[0].mxu0
      %724 = vmatprep.mubr.bf16.mxu0 0
      %725 = vmatmul.mubr.bf16.gmra.mrb[0].mxu0 %v495
      %v726 = vpop.f32.mrb[0].mxu0
      %v727 = vadd.f32 0.0, %v726
      %v728 = vpop.f32.mrb[0].mxu0
      %v729 = vpop.f32.mrb[0].mxu0
      %v730 = vadd.f32 0.0, %v729
      %v731 = vpop.f32.mrb[0].mxu0
      %732 = vmatprep.mubr.bf16.mxu0 0
      %733 = vmatmul.mubr.bf16.gmra.mrb[0].mxu0 %v496
      %v734 = vpop.f32.mrb[0].mxu0
      %v735 = vadd.f32 0.0, %v734
      %v736 = vpop.f32.mrb[0].mxu0
      %v737 = vpop.f32.mrb[0].mxu0
      %v738 = vadd.f32 0.0, %v737
      %v739 = vpop.f32.mrb[0].mxu0
      %740 = vmatprep.mubr.bf16.mxu0 0
      %741 = vmatmul.mubr.bf16.gmra.mrb[0].mxu0 %v497
      %v742 = vpop.f32.mrb[0].mxu0
      %v743 = vadd.f32 0.0, %v742
      %v744 = vpop.f32.mrb[0].mxu0
      %v745 = vpop.f32.mrb[0].mxu0
      %v746 = vadd.f32 0.0, %v745
      %v747 = vpop.f32.mrb[0].mxu0
      %748 = vmatprep.mubr.bf16.mxu0 0
      %749 = vmatmul.mubr.bf16.gmra.mrb[0].mxu0 %v498
      %v750 = vpop.f32.mrb[0].mxu0
      %v751 = vadd.f32 0.0, %v750
      %v752 = vpop.f32.mrb[0].mxu0
      %v753 = vpop.f32.mrb[0].mxu0
      %v754 = vadd.f32 0.0, %v753
      %v755 = vpop.f32.mrb[0].mxu0
      %756 = vmatprep.mubr.bf16.mxu0 0
      %757 = vmatmul.mubr.bf16.gmra.mrb[0].mxu0 %v499
      %v758 = vpop.f32.mrb[0].mxu0
      %v759 = vadd.f32 0.0, %v758
      %v760 = vpop.f32.mrb[0].mxu0
      %v761 = vpop.f32.mrb[0].mxu0
      %v762 = vadd.f32 0.0, %v761
      %v763 = vpop.f32.mrb[0].mxu0
      %764 = vmatprep.mubr.bf16.mxu0 0
      %765 = vmatmul.mubr.bf16.gmra.mrb[0].mxu0 %v500
      %v766 = vpop.f32.mrb[0].mxu0
      %v767 = vadd.f32 0.0, %v766
      %v768 = vpop.f32.mrb[0].mxu0
      %v769 = vpop.f32.mrb[0].mxu0
      %v770 = vadd.f32 0.0, %v769
      %v771 = vpop.f32.mrb[0].mxu0
      %772 = vmatprep.mubr.bf16.mxu0 0
      %773 = vmatmul.mubr.bf16.gmra.mrb[0].mxu0 %v501
      %v774 = vpop.f32.mrb[0].mxu0
      %v775 = vadd.f32 0.0, %v774
      %v776 = vpop.f32.mrb[0].mxu0
      %v777 = vpop.f32.mrb[0].mxu0
      %v778 = vadd.f32 0.0, %v777
      %v779 = vpop.f32.mrb[0].mxu0
      %780 = vmatprep.mubr.bf16.mxu0 0
      %781 = vmatmul.mubr.bf16.gmra.mrb[0].mxu0 %v502
      %v782 = vpop.f32.mrb[0].mxu0
      %v783 = vadd.f32 0.0, %v782
      %v784 = vpop.f32.mrb[0].mxu0
      %v785 = vpop.f32.mrb[0].mxu0
      %v786 = vadd.f32 0.0, %v785
      %v787 = vpop.f32.mrb[0].mxu0
      %788 = vmatprep.mubr.bf16.mxu0 0
      %789 = vmatmul.mubr.bf16.gmra.mrb[0].mxu0 %v503
      %v790 = vpop.f32.mrb[0].mxu0
      %v791 = vadd.f32 0.0, %v790
      %v792 = vpop.f32.mrb[0].mxu0
      %v793 = vpop.f32.mrb[0].mxu0
      %v794 = vadd.f32 0.0, %v793
      %v795 = vpop.f32.mrb[0].mxu0
      %796 = vmatprep.mubr.bf16.mxu0 0
      %797 = vmatmul.mubr.bf16.gmra.mrb[0].mxu0 %v504
      %v798 = vpop.f32.mrb[0].mxu0
      %v799 = vadd.f32 0.0, %v798
      %v800 = vpop.f32.mrb[0].mxu0
      %v801 = vpop.f32.mrb[0].mxu0
      %v802 = vadd.f32 0.0, %v801
      %v803 = vpop.f32.mrb[0].mxu0
      %804 = vmatprep.mubr.bf16.mxu0 0
      %805 = vmatmul.mubr.bf16.gmra.mrb[0].mxu0 %v505
      %v806 = vpop.f32.mrb[0].mxu0
      %v807 = vadd.f32 0.0, %v806
      %v808 = vpop.f32.mrb[0].mxu0
      %v809 = vpop.f32.mrb[0].mxu0
      %v810 = vadd.f32 0.0, %v809
      %v811 = vpop.f32.mrb[0].mxu0
      %812 = vmatprep.mubr.bf16.mxu0 0
      %813 = vmatmul.mubr.bf16.gmra.mrb[0].mxu0 %v506
      %v814 = vpop.f32.mrb[0].mxu0
      %v815 = vadd.f32 0.0, %v814
      %v816 = vpop.f32.mrb[0].mxu0
      %v817 = vpop.f32.mrb[0].mxu0
      %v818 = vadd.f32 0.0, %v817
      %v819 = vpop.f32.mrb[0].mxu0
      %820 = vmatprep.mubr.bf16.mxu0 0
      %821 = vmatmul.mubr.bf16.gmra.mrb[0].mxu0 %v507
      %v822 = vpop.f32.mrb[0].mxu0
      %v823 = vadd.f32 0.0, %v822
      %v824 = vpop.f32.mrb[0].mxu0
      %v825 = vpop.f32.mrb[0].mxu0
      %v826 = vadd.f32 0.0, %v825
      %v827 = vpop.f32.mrb[0].mxu0
      %828 = vmatprep.mubr.bf16.mxu0 0
      %829 = vmatmul.mubr.bf16.gmra.mrb[0].mxu0 %v508
      %v830 = vpop.f32.mrb[0].mxu0
      %v831 = vadd.f32 0.0, %v830
      %v832 = vpop.f32.mrb[0].mxu0
      %v833 = vpop.f32.mrb[0].mxu0
      %v834 = vadd.f32 0.0, %v833
      %v835 = vpop.f32.mrb[0].mxu0
      %836 = vmatprep.mubr.bf16.mxu0 0
      %837 = vmatmul.mubr.bf16.gmra.mrb[0].mxu0 %v509
      %v838 = vpop.f32.mrb[0].mxu0
      %v839 = vadd.f32 0.0, %v838
      %v840 = vpop.f32.mrb[0].mxu0
      %v841 = vpop.f32.mrb[0].mxu0
      %v842 = vadd.f32 0.0, %v841
      %v843 = vpop.f32.mrb[0].mxu0
      %844 = vmatprep.mubr.bf16.mxu0 0
      %845 = vmatmul.mubr.bf16.gmra.mrb[0].mxu0 %v510
      %v846 = vpop.f32.mrb[0].mxu0
      %v847 = vadd.f32 0.0, %v846
      %v848 = vpop.f32.mrb[0].mxu0
      %v849 = vpop.f32.mrb[0].mxu0
      %v850 = vadd.f32 0.0, %v849
      %v851 = vpop.f32.mrb[0].mxu0
      %852 = vmatprep.mubr.bf16.mxu0 0
      %853 = vmatmul.mubr.bf16.gmra.mrb[0].mxu0 %v511
      %v854 = vpop.f32.mrb[0].mxu0
      %v855 = vadd.f32 0.0, %v854
      %v856 = vpop.f32.mrb[0].mxu0
      %v857 = vpop.f32.mrb[0].mxu0
      %v858 = vadd.f32 0.0, %v857
      %v859 = vpop.f32.mrb[0].mxu0
      %860 = vmatprep.mubr.bf16.mxu0 0
      %861 = vmatmul.mubr.bf16.gmra.mrb[0].mxu0 %v512
      %v862 = vpop.f32.mrb[0].mxu0
      %v863 = vadd.f32 0.0, %v862
      %v864 = vpop.f32.mrb[0].mxu0
      %v865 = vpop.f32.mrb[0].mxu0
      %v866 = vadd.f32 0.0, %v865
      %v867 = vpop.f32.mrb[0].mxu0
      %868 = vmatprep.mubr.bf16.mxu0 0
      %869 = vmatmul.mubr.bf16.gmra.mrb[0].mxu0 %v513
      %v870 = vpop.f32.mrb[0].mxu0
      %v871 = vadd.f32 0.0, %v870
      %v872 = vpop.f32.mrb[0].mxu0
      %v873 = vpop.f32.mrb[0].mxu0
      %v874 = vadd.f32 0.0, %v873
      %v875 = vpop.f32.mrb[0].mxu0
      %876 = vmatprep.mubr.bf16.mxu0 0
      %877 = vmatmul.mubr.bf16.gmra.mrb[0].mxu0 %v514
      %v878 = vpop.f32.mrb[0].mxu0
      %v879 = vadd.f32 0.0, %v878
      %v880 = vpop.f32.mrb[0].mxu0
      %v881 = vpop.f32.mrb[0].mxu0
      %v882 = vadd.f32 0.0, %v881
      %v883 = vpop.f32.mrb[0].mxu0
      %884 = vmatprep.mubr.bf16.mxu0 0
      %885 = vmatmul.mubr.bf16.gmra.mrb[0].mxu0 %v515
      %v886 = vpop.f32.mrb[0].mxu0
      %v887 = vadd.f32 0.0, %v886
      %v888 = vpop.f32.mrb[0].mxu0
      %v889 = vpop.f32.mrb[0].mxu0
      %v890 = vadd.f32 0.0, %v889
      %v891 = vpop.f32.mrb[0].mxu0
      %892 = vmatprep.mubr.bf16.mxu0 0
      %893 = vmatmul.mubr.bf16.gmra.mrb[0].mxu0 %v516
      %v894 = vpop.f32.mrb[0].mxu0
      %v895 = vadd.f32 0.0, %v894
      %v896 = vpop.f32.mrb[0].mxu0
      %v897 = vpop.f32.mrb[0].mxu0
      %v898 = vadd.f32 0.0, %v897
      %v899 = vpop.f32.mrb[0].mxu0
      %900 = vmatprep.mubr.bf16.mxu0 0
      %901 = vmatmul.mubr.bf16.gmra.mrb[0].mxu0 %v517
      %v902 = vpop.f32.mrb[0].mxu0
      %v903 = vadd.f32 0.0, %v902
      %v904 = vpop.f32.mrb[0].mxu0
      %v905 = vpop.f32.mrb[0].mxu0
      %v906 = vadd.f32 0.0, %v905
      %v907 = vpop.f32.mrb[0].mxu0
      %908 = vmatprep.mubr.bf16.mxu0 0
      %909 = vmatmul.mubr.bf16.gmra.mrb[0].mxu0 %v518
      %v910 = vpop.f32.mrb[0].mxu0
      %v911 = vadd.f32 0.0, %v910
      %v912 = vpop.f32.mrb[0].mxu0
      %v913 = vpop.f32.mrb[0].mxu0
      %v914 = vadd.f32 0.0, %v913
      %v915 = vpop.f32.mrb[0].mxu0
      %916 = vmatprep.mubr.bf16.mxu0 0
      %917 = vmatmul.mubr.bf16.gmra.mrb[0].mxu0 %v519
      %v918 = vpop.f32.mrb[0].mxu0
      %v919 = vadd.f32 0.0, %v918
      %v920 = vpop.f32.mrb[0].mxu0
      %v921 = vpop.f32.mrb[0].mxu0
      %v922 = vadd.f32 0.0, %v921
      %v923 = vpop.f32.mrb[0].mxu0
      %924 = vmatprep.mubr.bf16.mxu0 0
      %925 = vmatmul.mubr.bf16.gmra.mrb[0].mxu0 %v520
      %v926 = vpop.f32.mrb[0].mxu0
      %v927 = vadd.f32 0.0, %v926
      %v928 = vpop.f32.mrb[0].mxu0
      %v929 = vpop.f32.mrb[0].mxu0
      %v930 = vadd.f32 0.0, %v929
      %v931 = vpop.f32.mrb[0].mxu0
      %932 = vmatprep.mubr.bf16.mxu0 0
      %933 = vmatmul.mubr.bf16.gmra.mrb[0].mxu0 %v521
      %v934 = vpop.f32.mrb[0].mxu0
      %v935 = vadd.f32 0.0, %v934
      %v936 = vpop.f32.mrb[0].mxu0
      %v937 = vpop.f32.mrb[0].mxu0
      %v938 = vadd.f32 0.0, %v937
      %v939 = vpop.f32.mrb[0].mxu0
      %940 = vmatprep.mubr.bf16.mxu0 0
      %941 = vmatmul.mubr.bf16.gmra.mrb[0].mxu0 %v522
      %v942 = vpop.f32.mrb[0].mxu0
      %v943 = vadd.f32 0.0, %v942
      %v944 = vpop.f32.mrb[0].mxu0
      %v945 = vpop.f32.mrb[0].mxu0
      %v946 = vadd.f32 0.0, %v945
      %v947 = vpop.f32.mrb[0].mxu0
      %948 = vmatprep.mubr.bf16.mxu0 0
      %949 = vmatmul.mubr.bf16.gmra.mrb[0].mxu0 %v523
      %v950 = vpop.f32.mrb[0].mxu0
      %v951 = vadd.f32 0.0, %v950
      %v952 = vpop.f32.mrb[0].mxu0
      %v953 = vpop.f32.mrb[0].mxu0
      %v954 = vadd.f32 0.0, %v953
      %v955 = vpop.f32.mrb[0].mxu0
      %956 = vmatprep.mubr.bf16.mxu0 0
      %957 = vmatmul.mubr.bf16.gmra.mrb[0].mxu0 %v524
      %v958 = vpop.f32.mrb[0].mxu0
      %v959 = vadd.f32 0.0, %v958
      %v960 = vpop.f32.mrb[0].mxu0
      %v961 = vpop.f32.mrb[0].mxu0
      %v962 = vadd.f32 0.0, %v961
      %v963 = vpop.f32.mrb[0].mxu0
      %964 = vmatprep.mubr.bf16.mxu0 0
      %965 = vmatmul.mubr.bf16.gmra.mrb[0].mxu0 %v525
      %v966 = vpop.f32.mrb[0].mxu0
      %v967 = vadd.f32 0.0, %v966
      %v968 = vpop.f32.mrb[0].mxu0
      %v969 = vpop.f32.mrb[0].mxu0
      %v970 = vadd.f32 0.0, %v969
      %v971 = vpop.f32.mrb[0].mxu0
      %972 = vmatprep.mubr.bf16.mxu0 0
      %973 = vmatmul.mubr.bf16.gmra.mrb[0].mxu0 %v526
      %v974 = vpop.f32.mrb[0].mxu0
      %v975 = vadd.f32 0.0, %v974
      %v976 = vpop.f32.mrb[0].mxu0
      %v977 = vpop.f32.mrb[0].mxu0
      %v978 = vadd.f32 0.0, %v977
      %v979 = vpop.f32.mrb[0].mxu0
      %980 = vmatprep.mubr.bf16.mxu0 0
      %981 = vmatmul.mubr.bf16.gmra.mrb[0].mxu0 %v527
      %v982 = vpop.f32.mrb[0].mxu0
      %v983 = vadd.f32 0.0, %v982
      %v984 = vpop.f32.mrb[0].mxu0
      %v985 = vpop.f32.mrb[0].mxu0
      %v986 = vadd.f32 0.0, %v985
      %v987 = vpop.f32.mrb[0].mxu0
      %988 = vmatprep.mubr.bf16.mxu0 0
      %989 = vmatmul.mubr.bf16.gmra.mrb[0].mxu0 %v528
      %v990 = vpop.f32.mrb[0].mxu0
      %v991 = vadd.f32 0.0, %v990
      %v992 = vpop.f32.mrb[0].mxu0
      %v993 = vpop.f32.mrb[0].mxu0
      %v994 = vadd.f32 0.0, %v993
      %v995 = vpop.f32.mrb[0].mxu0
      %996 = vmatprep.mubr.bf16.mxu0 0
      %997 = vmatmul.mubr.bf16.gmra.mrb[0].mxu0 %v529
      %v998 = vpop.f32.mrb[0].mxu0
      %v999 = vadd.f32 0.0, %v998
      %v1000 = vpop.f32.mrb[0].mxu0
      %v1001 = vpop.f32.mrb[0].mxu0
      %v1002 = vadd.f32 0.0, %v1001
      %v1003 = vpop.f32.mrb[0].mxu0
      %1004 = vmatprep.mubr.bf16.mxu0 0
      %1005 = vmatmul.mubr.bf16.gmra.mrb[0].mxu0 %v530
      %v1006 = vpop.f32.mrb[0].mxu0
      %v1007 = vadd.f32 0.0, %v1006
      %v1008 = vpop.f32.mrb[0].mxu0
      %v1009 = vpop.f32.mrb[0].mxu0
      %v1010 = vadd.f32 0.0, %v1009
      %v1011 = vpop.f32.mrb[0].mxu0
      %1012 = vmatprep.mubr.bf16.mxu0 0
      %1013 = vmatmul.mubr.bf16.gmra.mrb[0].mxu0 %v531
      %v1014 = vpop.f32.mrb[0].mxu0
      %v1015 = vadd.f32 0.0, %v1014
      %v1016 = vpop.f32.mrb[0].mxu0
      %v1017 = vpop.f32.mrb[0].mxu0
      %v1018 = vadd.f32 0.0, %v1017
      %v1019 = vpop.f32.mrb[0].mxu0
      %1020 = vmatprep.mubr.bf16.mxu0 0
      %1021 = vmatmul.mubr.bf16.gmra.mrb[0].mxu0 %v532
      %v1022 = vpop.f32.mrb[0].mxu0
      %v1023 = vadd.f32 0.0, %v1022
      %v1024 = vpop.f32.mrb[0].mxu0
      %v1025 = vpop.f32.mrb[0].mxu0
      %v1026 = vadd.f32 0.0, %v1025
      %v1027 = vpop.f32.mrb[0].mxu0
      %1028 = vmatprep.mubr.bf16.mxu0 0
      %1029 = vmatmul.mubr.bf16.gmra.mrb[0].mxu0 %v533
      %v1030 = vpop.f32.mrb[0].mxu0
      %v1031 = vadd.f32 0.0, %v1030
      %v1032 = vpop.f32.mrb[0].mxu0
      %v1033 = vpop.f32.mrb[0].mxu0
      %v1034 = vadd.f32 0.0, %v1033
      %v1035 = vpop.f32.mrb[0].mxu0
      %1036 = vmatprep.mubr.bf16.mxu0 0
      %1037 = vmatmul.mubr.bf16.gmra.mrb[0].mxu0 %v534
      %v1038 = vpop.f32.mrb[0].mxu0
      %v1039 = vadd.f32 0.0, %v1038
      %v1040 = vpop.f32.mrb[0].mxu0
      %v1041 = vpop.f32.mrb[0].mxu0
      %v1042 = vadd.f32 0.0, %v1041
      %v1043 = vpop.f32.mrb[0].mxu0
      %1044 = vmatprep.mubr.bf16.mxu0 0
      %1045 = vmatmul.mubr.bf16.gmra.mrb[0].mxu0 %v535
      %v1046 = vpop.f32.mrb[0].mxu0
      %v1047 = vadd.f32 0.0, %v1046
      %v1048 = vpop.f32.mrb[0].mxu0
      %v1049 = vpop.f32.mrb[0].mxu0
      %v1050 = vadd.f32 0.0, %v1049
      %v1051 = vpop.f32.mrb[0].mxu0
      %1052 = vmatprep.mubr.bf16.mxu0 0
      %1053 = vmatmul.mubr.bf16.gmra.mrb[0].mxu0 %v536
      %v1054 = vpop.f32.mrb[0].mxu0
      %v1055 = vadd.f32 0.0, %v1054
      %v1056 = vpop.f32.mrb[0].mxu0
      %v1057 = vpop.f32.mrb[0].mxu0
      %v1058 = vadd.f32 0.0, %v1057
      %v1059 = vpop.f32.mrb[0].mxu0
      %1060 = vmatprep.mubr.bf16.mxu0 0
      %1061 = vmatmul.mubr.bf16.gmra.mrb[0].mxu0 %v537
      %v1062 = vpop.f32.mrb[0].mxu0
      %v1063 = vadd.f32 0.0, %v1062
      %v1064 = vpop.f32.mrb[0].mxu0
      %v1065 = vpop.f32.mrb[0].mxu0
      %v1066 = vadd.f32 0.0, %v1065
      %v1067 = vpop.f32.mrb[0].mxu0
      %1068 = vdwg.mxu0
      %v1069 = vmax.f32 %v671, %v770
      %v1070 = vmax.f32 %v674, %v775
      %v1071 = vmax.f32 %v679, %v778
      %v1072 = vmax.f32 %v682, %v783
      %v1073 = vmax.f32 %v687, %v786
      %v1074 = vmax.f32 %v690, %v791
      %v1075 = vmax.f32 %v695, %v794
      %v1076 = vmax.f32 %v698, %v799
      %v1077 = vmax.f32 %v703, %v802
      %v1078 = vmax.f32 %v706, %v807
      %v1079 = vmax.f32 %v711, %v810
      %v1080 = vmax.f32 %v714, %v815
      %v1081 = vmax.f32 %v719, %v818
      %v1082 = vmax.f32 %v722, %v823
      %v1083 = vmax.f32 %v727, %v826
      %v1084 = vmax.f32 %v730, %v831
      %v1085 = vmax.f32 %v735, %v834
      %v1086 = vmax.f32 %v738, %v839
      %v1087 = vmax.f32 %v743, %v842
      %v1088 = vmax.f32 %v746, %v847
      %v1089 = vmax.f32 %v751, %v850
      %v1090 = vmax.f32 %v754, %v855
      %v1091 = vmax.f32 %v759, %v858
      %v1092 = vmax.f32 %v762, %v863
      %v1093 = vmax.f32 %v767, %v866
      %v1094 = vmax.f32 %v871, %v970
      %v1095 = vmax.f32 %v874, %v975
      %v1096 = vmax.f32 %v879, %v978
      %v1097 = vmax.f32 %v882, %v983
      %v1098 = vmax.f32 %v887, %v986
      %v1099 = vmax.f32 %v890, %v991
      %v1100 = vmax.f32 %v895, %v994
      %v1101 = vmax.f32 %v898, %v999
      %v1102 = vmax.f32 %v903, %v1002
      %v1103 = vmax.f32 %v906, %v1007
      %v1104 = vmax.f32 %v911, %v1010
      %v1105 = vmax.f32 %v914, %v1015
      %v1106 = vmax.f32 %v919, %v1018
      %v1107 = vmax.f32 %v922, %v1023
      %v1108 = vmax.f32 %v927, %v1026
      %v1109 = vmax.f32 %v930, %v1031
      %v1110 = vmax.f32 %v935, %v1034
      %v1111 = vmax.f32 %v938, %v1039
      %v1112 = vmax.f32 %v943, %v1042
      %v1113 = vmax.f32 %v946, %v1047
      %v1114 = vmax.f32 %v951, %v1050
      %v1115 = vmax.f32 %v954, %v1055
      %v1116 = vmax.f32 %v959, %v1058
      %v1117 = vmax.f32 %v962, %v1063
      %v1118 = vmax.f32 %v967, %v1066
      %v1119 = vmax.f32 %v1069, %v1094
      %v1120 = vmax.f32 %v1070, %v1095
      %v1121 = vmax.f32 %v1071, %v1096
      %v1122 = vmax.f32 %v1072, %v1097
      %v1123 = vmax.f32 %v1073, %v1098
      %v1124 = vmax.f32 %v1074, %v1099
      %v1125 = vmax.f32 %v1075, %v1100
      %v1126 = vmax.f32 %v1076, %v1101
      %v1127 = vmax.f32 %v1077, %v1102
      %v1128 = vmax.f32 %v1078, %v1103
      %v1129 = vmax.f32 %v1079, %v1104
      %v1130 = vmax.f32 %v1080, %v1105
      %v1131 = vmax.f32 %v1081, %v1106
      %v1132 = vmax.f32 %v1082, %v1107
      %v1133 = vmax.f32 %v1083, %v1108
      %v1134 = vmax.f32 %v1084, %v1109
      %v1135 = vmax.f32 %v1085, %v1110
      %v1136 = vmax.f32 %v1086, %v1111
      %v1137 = vmax.f32 %v1087, %v1112
      %v1138 = vmax.f32 %v1088, %v1113
      %v1139 = vmax.f32 %v1089, %v1114
      %v1140 = vmax.f32 %v1090, %v1115
      %v1141 = vmax.f32 %v1091, %v1116
      %v1142 = vmax.f32 %v1092, %v1117
      %v1143 = vmax.f32 %v1093, %v1118
      %v1144 = vld [vmem:[%s2] sm:$0x1]
      %v1146 = vlaneseq
      %v1147 = vshrl.u32 %v1146, 7
      %v1148 = vsub.s32 0, %v1147
      %v1149 = vrot.slane %v1144, %v1148
      %v1151 = vadd.f32 %v1119, %v1149
      %v1152 = vadd.f32 %v1120, %v1149
      %v1153 = vadd.f32 %v1121, %v1149
      %v1154 = vadd.f32 %v1122, %v1149
      %v1155 = vadd.f32 %v1123, %v1149
      %v1156 = vadd.f32 %v1124, %v1149
      %v1157 = vadd.f32 %v1125, %v1149
      %v1158 = vadd.f32 %v1126, %v1149
      %v1159 = vadd.f32 %v1127, %v1149
      %v1160 = vadd.f32 %v1128, %v1149
      %v1161 = vadd.f32 %v1129, %v1149
      %v1162 = vadd.f32 %v1130, %v1149
      %v1163 = vadd.f32 %v1131, %v1149
      %v1164 = vadd.f32 %v1132, %v1149
      %v1165 = vadd.f32 %v1133, %v1149
      %v1166 = vadd.f32 %v1134, %v1149
      %v1167 = vadd.f32 %v1135, %v1149
      %v1168 = vadd.f32 %v1136, %v1149
      %v1169 = vadd.f32 %v1137, %v1149
      %v1170 = vadd.f32 %v1138, %v1149
      %v1171 = vadd.f32 %v1139, %v1149
      %v1172 = vadd.f32 %v1140, %v1149
      %v1173 = vadd.f32 %v1141, %v1149
      %v1174 = vadd.f32 %v1142, %v1149
      %v1175 = vadd.f32 %v1143, %v1149
      %v1176 = vmax.f32 %v1151, 0.0
      %v1177 = vmax.f32 %v1152, 0.0
      %v1178 = vmax.f32 %v1153, 0.0
      %v1179 = vmax.f32 %v1154, 0.0
      %v1180 = vmax.f32 %v1155, 0.0
      %v1181 = vmax.f32 %v1156, 0.0
      %v1182 = vmax.f32 %v1157, 0.0
      %v1183 = vmax.f32 %v1158, 0.0
      %v1184 = vmax.f32 %v1159, 0.0
      %v1185 = vmax.f32 %v1160, 0.0
      %v1186 = vmax.f32 %v1161, 0.0
      %v1187 = vmax.f32 %v1162, 0.0
      %v1188 = vmax.f32 %v1163, 0.0
      %v1189 = vmax.f32 %v1164, 0.0
      %v1190 = vmax.f32 %v1165, 0.0
      %v1191 = vmax.f32 %v1166, 0.0
      %v1192 = vmax.f32 %v1167, 0.0
      %v1193 = vmax.f32 %v1168, 0.0
      %v1194 = vmax.f32 %v1169, 0.0
      %v1195 = vmax.f32 %v1170, 0.0
      %v1196 = vmax.f32 %v1171, 0.0
      %v1197 = vmax.f32 %v1172, 0.0
      %v1198 = vmax.f32 %v1173, 0.0
      %v1199 = vmax.f32 %v1174, 0.0
      %v1200 = vmax.f32 %v1175, 0.0
      %v1201 = vpack.c.bf16 %v1177, %v1176
      %v1202 = vpack.c.bf16 %v1179, %v1178
      %v1203 = vpack.c.bf16 %v1181, %v1180
      %v1204 = vpack.c.bf16 %v1183, %v1182
      %v1205 = vpack.c.bf16 %v1185, %v1184
      %v1206 = vpack.c.bf16 %v1187, %v1186
      %v1207 = vpack.c.bf16 %v1189, %v1188
      %v1208 = vpack.c.bf16 %v1191, %v1190
      %v1209 = vpack.c.bf16 %v1193, %v1192
      %v1210 = vpack.c.bf16 %v1195, %v1194
      %v1211 = vpack.c.bf16 %v1197, %v1196
      %v1212 = vpack.c.bf16 %v1199, %v1198
      %v1213 = vpack.c.bf16 %v1200, %v1200
      %v1227 = vunpack.c.l.b16 %v1201
      %v1228 = vunpack.c.h.b16 %v1201
      %v1229 = vunpack.c.l.b16 %v1202
      %v1230 = vunpack.c.h.b16 %v1202
      %v1231 = vunpack.c.l.b16 %v1203
      %v1232 = vunpack.c.h.b16 %v1203
      %v1233 = vunpack.c.l.b16 %v1204
      %v1234 = vunpack.c.h.b16 %v1204
      %v1235 = vunpack.c.l.b16 %v1205
      %v1236 = vunpack.c.h.b16 %v1205
      %v1237 = vunpack.c.l.b16 %v1206
      %v1238 = vunpack.c.h.b16 %v1206
      %v1239 = vunpack.c.l.b16 %v1207
      %v1240 = vunpack.c.h.b16 %v1207
      %v1241 = vunpack.c.l.b16 %v1208
      %v1242 = vunpack.c.h.b16 %v1208
      %v1243 = vunpack.c.l.b16 %v1209
      %v1244 = vunpack.c.h.b16 %v1209
      %v1245 = vunpack.c.l.b16 %v1210
      %v1246 = vunpack.c.h.b16 %v1210
      %v1247 = vunpack.c.l.b16 %v1211
      %v1248 = vunpack.c.h.b16 %v1211
      %v1249 = vunpack.c.l.b16 %v1212
      %v1250 = vunpack.c.h.b16 %v1212
      %v1251 = vunpack.c.l.b16 %v1213
      %v1252 = vpack.c.b16 %v1227, %v1227
      %v1253 = vpack.c.b16 %v1228, %v1228
      %v1254 = vpack.c.b16 %v1229, %v1229
      %v1255 = vpack.c.b16 %v1230, %v1230
      %v1256 = vpack.c.b16 %v1231, %v1231
      %v1257 = vpack.c.b16 %v1232, %v1232
      %v1258 = vpack.c.b16 %v1233, %v1233
      %v1259 = vpack.c.b16 %v1234, %v1234
      %v1260 = vpack.c.b16 %v1235, %v1235
      %v1261 = vpack.c.b16 %v1236, %v1236
      %v1262 = vpack.c.b16 %v1237, %v1237
      %v1263 = vpack.c.b16 %v1238, %v1238
      %v1264 = vpack.c.b16 %v1239, %v1239
      %v1265 = vpack.c.b16 %v1240, %v1240
      %v1266 = vpack.c.b16 %v1241, %v1241
      %v1267 = vpack.c.b16 %v1242, %v1242
      %v1268 = vpack.c.b16 %v1243, %v1243
      %v1269 = vpack.c.b16 %v1244, %v1244
      %v1270 = vpack.c.b16 %v1245, %v1245
      %v1271 = vpack.c.b16 %v1246, %v1246
      %v1272 = vpack.c.b16 %v1247, %v1247
      %v1273 = vpack.c.b16 %v1248, %v1248
      %v1274 = vpack.c.b16 %v1249, %v1249
      %v1275 = vpack.c.b16 %v1250, %v1250
      %v1276 = vpack.c.b16 %v1251, %v1251
      %1302 = vst [vmem:[%s170] sm:$0xf] %v1252
      %1303 = vst [vmem:[%s170 + $0x4] sm:$0xf] %v1253
      %1304 = vst [vmem:[%s170 + $0x8] sm:$0xf] %v1254
      %1305 = vst [vmem:[%s170 + $0xc] sm:$0xf] %v1255
      %1306 = vst [vmem:[%s170 + $0x10] sm:$0xf] %v1256
      %1307 = vst [vmem:[%s170 + $0x14] sm:$0xf] %v1257
      %1308 = vst [vmem:[%s170 + $0x18] sm:$0xf] %v1258
      %1309 = vst [vmem:[%s170 + $0x1c] sm:$0xf] %v1259
      %1310 = vst [vmem:[%s170 + $0x20] sm:$0xf] %v1260
      %1311 = vst [vmem:[%s170 + $0x24] sm:$0xf] %v1261
      %1312 = vst [vmem:[%s170 + $0x28] sm:$0xf] %v1262
      %1313 = vst [vmem:[%s170 + $0x2c] sm:$0xf] %v1263
      %1314 = vst [vmem:[%s170 + $0x30] sm:$0xf] %v1264
      %1315 = vst [vmem:[%s170 + $0x34] sm:$0xf] %v1265
      %1316 = vst [vmem:[%s170 + $0x38] sm:$0xf] %v1266
      %1317 = vst [vmem:[%s170 + $0x3c] sm:$0xf] %v1267
      %1318 = vst [vmem:[%s170 + $0x40] sm:$0xf] %v1268
      %1319 = vst [vmem:[%s170 + $0x44] sm:$0xf] %v1269
      %1320 = vst [vmem:[%s170 + $0x48] sm:$0xf] %v1270
      %1321 = vst [vmem:[%s170 + $0x4c] sm:$0xf] %v1271
      %1322 = vst [vmem:[%s170 + $0x50] sm:$0xf] %v1272
      %1323 = vst [vmem:[%s170 + $0x54] sm:$0xf] %v1273
      %1324 = vst [vmem:[%s170 + $0x58] sm:$0xf] %v1274
      %1325 = vst [vmem:[%s170 + $0x5c] sm:$0xf] %v1275
      %1326 = vst [vmem:[%s170 + $0x60] sm:$0xf] %v1276
      %p1327 = scmp.lt.s32.totalorder %s14, 1
      %s1328 = scalar_select %p1327, %s14, 1
      %s1329 = smul.addr %s1328, 25
      %s1330 = smul.addr %s1329, 4
      %s1331 = scalar_lea.vmem %s3, %s1330
      // Predicated region
      $region33: #{classifier_net_forward.3} parent=31 // pred_check
        %p1332 = pneg %p100
      $region34: #{classifier_net_forward.3} parent=31 // pred_check_branch
        %1334 = sbr.rel (%p1332) target = $region36
      $region35: #{classifier_net_forward.3} parent=31 // pred_region
        _
      $region36: #{classifier_net_forward.3} parent=31 // pred_fallthru
        _
    $region32: #{classifier_net_forward.3} parent=5 // pred_fallthru
      _
    %p1335 = scmp.le.s32.totalorder 2, %s9
    // Predicated region
    $region37: #{classifier_net_forward.3} parent=5 // pred_check
      %p1336 = pneg %p1335
    $region38: #{classifier_net_forward.3} parent=5 // pred_check_branch
      %1338 = sbr.rel (%p1336) target = $region40
    $region39: #{classifier_net_forward.3} parent=5 // pred_region
      %s1339 = ssub.s32 %s9, 2
      // Predicated region
      $region41: #{classifier_net_forward.3} parent=39 // pred_check
        %p1340 = pneg %p106
      $region42: #{classifier_net_forward.3} parent=39 // pred_check_branch
        %1342 = sbr.rel (%p1340) target = $region44
      $region43: #{classifier_net_forward.3} parent=39 // pred_region
        %p1343 = scmp.lt.s32.totalorder %s15, 1
        %s1344 = scalar_select %p1343, %s15, 1
        %s1345 = smul.addr %s1344, 25
        %s1346 = smul.addr %s1345, 4
        %s1347 = scalar_lea.vmem %s3, %s1346
      $region44: #{classifier_net_forward.3} parent=39 // pred_fallthru
        _
    $region40: #{classifier_net_forward.3} parent=5 // pred_fallthru
      _
  $region6: #{classifier_net_forward.3} parent=0 // loop_footer
    %s13 = sadd.s32 1, %s9
  $region7: #{classifier_net_forward.3} parent=0 // loop_footer_branch
    %8 = sbr.rel target = $region3
  $region8: #{classifier_net_forward.3} parent=0 // loop_exit
    _

// kernel: classifier_net_forward.4
$region0: #{classifier_net_forward.4}
  #allocation0 [shape = 'u32[]', space=smem, size = 0x4, offset = 0x4, fixed_abs, tag = 'smem constant byte address 0x4 - core index']
  #allocation1 [shape = 'u32[144,128]{1,0:T(1,128)}', space=vmem, size = 0x12000, scoped, tag = 'internal scratch']
  %s0 = inlined_call_operand.vmem [shape: bf16[2,128,3200], index: 0, kind: input, shape index: {}]
  %s1 = inlined_call_operand.vmem [shape: bf16[3200,256], index: 1, kind: input, shape index: {}]
  %s2 = inlined_call_operand.vmem [shape: f32[1,256], index: 2, kind: input, shape index: {}]
  %s3 = inlined_call_operand.vmem [shape: bf16[2,32,256], index: 3, kind: output, shape index: {}]
  %s4 = sld [smem:[#allocation0]]
  $region45: #{classifier_net_forward.4} parent=0
    _
  %s6 = ssub.s32 1, %s4
  %s7 = scalar_select 0, %s6, %s4
  loop: start=0, step=1, limit=4
  $region2: #{classifier_net_forward.4} parent=0 // loop_pre_header
    _
  $region3: #{classifier_net_forward.4} parent=0 // loop_header
    %s9 = sphi 0, %s13
    %p10 = scmp.ge.s32.totalorder %s9, 4
    %s19 = sphi 0, %s21
    %s22 = sphi 0, %s19
    %s23 = sphi 0, %s22
    %s39 = sphi 0, %s23
    %s43 = sphi 0, %s43
    %s45 = sphi 0, %s43
    %s46 = sphi 0, %s45
    %s60 = sphi 0, %s46
    %s64 = sphi 0, %s64
    %s66 = sphi 0, %s64
    %s67 = sphi 0, %s66
    %s81 = sphi 0, %s67
    %s87 = sphi 0, %s89
    %s90 = sphi 0, %s87
    %s91 = sphi 0, %s90
    %s107 = sphi 0, %s91
  $region4: #{classifier_net_forward.4} parent=0 // loop_header_branch
    %12 = sbr.rel (%p10) target = $region8
  $region5: #{classifier_net_forward.4} parent=0 // loop_body
    %s14 = ssub.s32 %s9, 1
    %s15 = ssub.s32 %s9, 2
    %s16 = sadd.s32 %s9, 1
    %s17 = ssub.s32 %s9, %s16
    %p18 = scmp.eq.s32.totalorder %s17, 0
    %s20 = sadd.s32 %s19, 1
    %s21 = scalar_select %p18, %s19, %s20
    %p24 = pneg %p18
    %p25 = scmp.eq.s32.totalorder %s9, 1
    %p26 = por %p24, %p25
    %p27 = scmp.ne.s32.totalorder %s19, %s22
    %p28 = scmp.eq.s32.totalorder %s9, 0
    %p29 = por %p27, %p28
    %p30 = scmp.ne.s32.totalorder %s19, %s22
    %p31 = scmp.eq.s32.totalorder %s14, 1
    %p32 = por %p30, %p31
    %p33 = scmp.ne.s32.totalorder %s22, %s23
    %p34 = scmp.eq.s32.totalorder %s14, 0
    %p35 = por %p33, %p34
    %p36 = scmp.ne.s32.totalorder %s22, %s23
    %p37 = scmp.eq.s32.totalorder %s15, 1
    %p38 = por %p36, %p37
    %p40 = scmp.ne.s32.totalorder %s23, %s39
    %p41 = scmp.eq.s32.totalorder %s15, 0
    %p42 = por %p40, %p41
    %s44 = sadd.s32 %s43, 1
    %p47 = scmp.eq.s32.totalorder %s9, 1
    %p48 = scmp.ne.s32.totalorder %s43, %s45
    %p49 = scmp.eq.s32.totalorder %s9, 0
    %p50 = por %p48, %p49
    %p51 = scmp.ne.s32.totalorder %s43, %s45
    %p52 = scmp.eq.s32.totalorder %s14, 1
    %p53 = por %p51, %p52
    %p54 = scmp.ne.s32.totalorder %s45, %s46
    %p55 = scmp.eq.s32.totalorder %s14, 0
    %p56 = por %p54, %p55
    %p57 = scmp.ne.s32.totalorder %s45, %s46
    %p58 = scmp.eq.s32.totalorder %s15, 1
    %p59 = por %p57, %p58
    %p61 = scmp.ne.s32.totalorder %s46, %s60
    %p62 = scmp.eq.s32.totalorder %s15, 0
    %p63 = por %p61, %p62
    %s65 = sadd.s32 %s64, 1
    %p68 = scmp.eq.s32.totalorder %s9, 1
    %p69 = scmp.ne.s32.totalorder %s64, %s66
    %p70 = scmp.eq.s32.totalorder %s9, 0
    %p71 = por %p69, %p70
    %p72 = scmp.ne.s32.totalorder %s64, %s66
    %p73 = scmp.eq.s32.totalorder %s14, 1
    %p74 = por %p72, %p73
    %p75 = scmp.ne.s32.totalorder %s66, %s67
    %p76 = scmp.eq.s32.totalorder %s14, 0
    %p77 = por %p75, %p76
    %p78 = scmp.ne.s32.totalorder %s66, %s67
    %p79 = scmp.eq.s32.totalorder %s15, 1
    %p80 = por %p78, %p79
    %p82 = scmp.ne.s32.totalorder %s67, %s81
    %p83 = scmp.eq.s32.totalorder %s15, 0
    %p84 = por %p82, %p83
    %s85 = ssub.s32 %s9, %s16
    %p86 = scmp.eq.s32.totalorder %s85, 0
    %s88 = sadd.s32 %s87, 1
    %s89 = scalar_select %p86, %s87, %s88
    %p92 = pneg %p86
    %p93 = scmp.eq.s32.totalorder %s9, 1
    %p94 = por %p92, %p93
    %p95 = scmp.ne.s32.totalorder %s87, %s90
    %p96 = scmp.eq.s32.totalorder %s9, 0
    %p97 = por %p95, %p96
    %p98 = scmp.ne.s32.totalorder %s87, %s90
    %p99 = scmp.eq.s32.totalorder %s14, 1
    %p100 = por %p98, %p99
    %p101 = scmp.ne.s32.totalorder %s90, %s91
    %p102 = scmp.eq.s32.totalorder %s14, 0
    %p103 = por %p101, %p102
    %p104 = scmp.ne.s32.totalorder %s90, %s91
    %p105 = scmp.eq.s32.totalorder %s15, 1
    %p106 = por %p104, %p105
    %p108 = scmp.ne.s32.totalorder %s91, %s107
    %p109 = scmp.eq.s32.totalorder %s15, 0
    %p110 = por %p108, %p109
    %p111 = scmp.le.s32.totalorder 1, %s9
    %p112 = scmp.lt.s32.totalorder %s9, 3
    %p113 = pnand %p111, %p112
    %p114 = pneg %p113
    // Predicated region
    $region9: #{classifier_net_forward.4} parent=5 // pred_check
      _
    $region10: #{classifier_net_forward.4} parent=5 // pred_check_branch
      %116 = sbr.rel (%p113) target = $region12
    $region11: #{classifier_net_forward.4} parent=5 // pred_region
      %s117 = ssub.s32 %s9, 1
      // Predicated region
      $region13: #{classifier_net_forward.4} parent=11 // pred_check
        %p118 = pneg %p56
      $region14: #{classifier_net_forward.4} parent=11 // pred_check_branch
        %120 = sbr.rel (%p118) target = $region16
      $region15: #{classifier_net_forward.4} parent=11 // pred_region
        _
      $region16: #{classifier_net_forward.4} parent=11 // pred_fallthru
        _
      // Predicated region
      $region17: #{classifier_net_forward.4} parent=11 // pred_check
        %p121 = pneg %p77
      $region18: #{classifier_net_forward.4} parent=11 // pred_check_branch
        %123 = sbr.rel (%p121) target = $region20
      $region19: #{classifier_net_forward.4} parent=11 // pred_region
        _
      $region20: #{classifier_net_forward.4} parent=11 // pred_fallthru
        _
    $region12: #{classifier_net_forward.4} parent=5 // pred_fallthru
      _
    %p124 = scmp.lt.s32.totalorder %s9, 2
    // Predicated region
    $region21: #{classifier_net_forward.4} parent=5 // pred_check
      %p125 = pneg %p124
    $region22: #{classifier_net_forward.4} parent=5 // pred_check_branch
      %127 = sbr.rel (%p125) target = $region24
    $region23: #{classifier_net_forward.4} parent=5 // pred_region
      // Predicated region
      $region25: #{classifier_net_forward.4} parent=23 // pred_check
        %p128 = pneg %p29
      $region26: #{classifier_net_forward.4} parent=23 // pred_check_branch
        %130 = sbr.rel (%p128) target = $region28
      $region27: #{classifier_net_forward.4} parent=23 // pred_region
        %p131 = scmp.lt.s32.totalorder %s9, 1
        %s132 = scalar_select %p131, %s9, 1
        %s133 = smul.addr %s132, 400
        %s134 = smul.addr %s133, 4
        %s135 = scalar_lea.vmem %s0, %s134
      $region28: #{classifier_net_forward.4} parent=23 // pred_fallthru
        _
    $region24: #{classifier_net_forward.4} parent=5 // pred_fallthru
      _
    %p136 = scmp.le.s32.totalorder 1, %s9
    %p137 = scmp.lt.s32.totalorder %s9, 3
    %p138 = pnand %p136, %p137
    %p139 = pneg %p138
    // Predicated region
    $region29: #{classifier_net_forward.4} parent=5 // pred_check
      _
    $region30: #{classifier_net_forward.4} parent=5 // pred_check_branch
      %141 = sbr.rel (%p138) target = $region32
    $region31: #{classifier_net_forward.4} parent=5 // pred_region
      %s142 = ssub.s32 %s9, 1
      %p143 = scmp.lt.s32.totalorder %s14, 1
      %s144 = scalar_select %p143, %s14, 1
      %s145 = smul.addr %s144, 400
      %s146 = smul.addr %s145, 4
      %s147 = scalar_lea.vmem %s0, %s146
      %p148 = pneg %p35
      %p149 = pneg %p32
      %p150 = pneg %p56
      %p151 = pneg %p53
      %p152 = pneg %p77
      %p153 = pneg %p74
      %p154 = pneg %p103
      %p155 = pneg %p100
      %p156 = scmp.lt.s32.totalorder %s14, 1
      %s157 = scalar_select %p156, %s14, 1
      %s158 = smul.addr %s157, 8
      %s159 = smul.addr %s158, 4
      %s160 = scalar_lea.vmem %s3, %s159
      %p161 = scmp.lt.s32.totalorder %s14, 1
      %s162 = scalar_select %p161, %s14, 1
      %s163 = smul.addr %s162, 400
      %s164 = smul.addr %s163, 4
      %s165 = scalar_lea.vmem %s0, %s164
      %p166 = scmp.lt.s32.totalorder %s14, 1
      %s167 = scalar_select %p166, %s14, 1
      %s168 = smul.addr %s167, 8
      %s169 = smul.addr %s168, 4
      %s170 = scalar_lea.vmem %s3, %s169
      %v172 = vld [vmem:[%s165] sm:$0xff]
      %v173 = vld [vmem:[%s165 + $0x8] sm:$0xff]
      %v174 = vld [vmem:[%s165 + $0x10] sm:$0xff]
      %v175 = vld [vmem:[%s165 + $0x18] sm:$0xff]
      %v176 = vld [vmem:[%s165 + $0x20] sm:$0xff]
      %v177 = vld [vmem:[%s165 + $0x28] sm:$0xff]
      %v178 = vld [vmem:[%s165 + $0x30] sm:$0xff]
      %v179 = vld [vmem:[%s165 + $0x38] sm:$0xff]
      %v180 = vld [vmem:[%s165 + $0x40] sm:$0xff]
      %v181 = vld [vmem:[%s165 + $0x48] sm:$0xff]
      %v182 = vld [vmem:[%s165 + $0x50] sm:$0xff]
      %v183 = vld [vmem:[%s165 + $0x58] sm:$0xff]
      %v184 = vld [vmem:[%s165 + $0x60] sm:$0xf]
      %v185 = vld [vmem:[%s165 + $0x64] sm:$0xff]
      %v186 = vld [vmem:[%s165 + $0x6c] sm:$0xff]
      %v187 = vld [vmem:[%s165 + $0x74] sm:$0xff]
      %v188 = vld [vmem:[%s165 + $0x7c] sm:$0xff]
      %v189 = vld [vmem:[%s165 + $0x84] sm:$0xff]
      %v190 = vld [vmem:[%s165 + $0x8c] sm:$0xff]
      %v191 = vld [vmem:[%s165 + $0x94] sm:$0xff]
      %v192 = vld [vmem:[%s165 + $0x9c] sm:$0xff]
      %v193 = vld [vmem:[%s165 + $0xa4] sm:$0xff]
      %v194 = vld [vmem:[%s165 + $0xac] sm:$0xff]
      %v195 = vld [vmem:[%s165 + $0xb4] sm:$0xff]
      %v196 = vld [vmem:[%s165 + $0xbc] sm:$0xff]
      %v197 = vld [vmem:[%s165 + $0xc4] sm:$0xf]
      %v198 = vld [vmem:[%s165 + $0xc8] sm:$0xff]
      %v199 = vld [vmem:[%s165 + $0xd0] sm:$0xff]
      %v200 = vld [vmem:[%s165 + $0xd8] sm:$0xff]
      %v201 = vld [vmem:[%s165 + $0xe0] sm:$0xff]
      %v202 = vld [vmem:[%s165 + $0xe8] sm:$0xff]
      %v203 = vld [vmem:[%s165 + $0xf0] sm:$0xff]
      %v204 = vld [vmem:[%s165 + $0xf8] sm:$0xff]
      %v205 = vld [vmem:[%s165 + $0x100] sm:$0xff]
      %v206 = vld [vmem:[%s165 + $0x108] sm:$0xff]
      %v207 = vld [vmem:[%s165 + $0x110] sm:$0xff]
      %v208 = vld [vmem:[%s165 + $0x118] sm:$0xff]
      %v209 = vld [vmem:[%s165 + $0x120] sm:$0xff]
      %v210 = vld [vmem:[%s165 + $0x128] sm:$0xf]
      %v211 = vld [vmem:[%s165 + $0x12c] sm:$0xff]
      %v212 = vld [vmem:[%s165 + $0x134] sm:$0xff]
      %v213 = vld [vmem:[%s165 + $0x13c] sm:$0xff]
      %v214 = vld [vmem:[%s165 + $0x144] sm:$0xff]
      %v215 = vld [vmem:[%s165 + $0x14c] sm:$0xff]
      %v216 = vld [vmem:[%s165 + $0x154] sm:$0xff]
      %v217 = vld [vmem:[%s165 + $0x15c] sm:$0xff]
      %v218 = vld [vmem:[%s165 + $0x164] sm:$0xff]
      %v219 = vld [vmem:[%s165 + $0x16c] sm:$0xff]
      %v220 = vld [vmem:[%s165 + $0x174] sm:$0xff]
      %v221 = vld [vmem:[%s165 + $0x17c] sm:$0xff]
      %v222 = vld [vmem:[%s165 + $0x184] sm:$0xff]
      %v223 = vld [vmem:[%s165 + $0x18c] sm:$0xf]
      %v224 = vld [vmem:[%s165 + $0x190] sm:$0xff]
      %v225 = vld [vmem:[%s165 + $0x198] sm:$0xff]
      %v226 = vld [vmem:[%s165 + $0x1a0] sm:$0xff]
      %v227 = vld [vmem:[%s165 + $0x1a8] sm:$0xff]
      %v228 = vld [vmem:[%s165 + $0x1b0] sm:$0xff]
      %v229 = vld [vmem:[%s165 + $0x1b8] sm:$0xff]
      %v230 = vld [vmem:[%s165 + $0x1c0] sm:$0xff]
      %v231 = vld [vmem:[%s165 + $0x1c8] sm:$0xff]
      %v232 = vld [vmem:[%s165 + $0x1d0] sm:$0xff]
      %v233 = vld [vmem:[%s165 + $0x1d8] sm:$0xff]
      %v234 = vld [vmem:[%s165 + $0x1e0] sm:$0xff]
      %v235 = vld [vmem:[%s165 + $0x1e8] sm:$0xff]
      %v236 = vld [vmem:[%s165 + $0x1f0] sm:$0xf]
      %v237 = vld [vmem:[%s165 + $0x1f4] sm:$0xff]
      %v238 = vld [vmem:[%s165 + $0x1fc] sm:$0xff]
      %v239 = vld [vmem:[%s165 + $0x204] sm:$0xff]
      %v240 = vld [vmem:[%s165 + $0x20c] sm:$0xff]
      %v241 = vld [vmem:[%s165 + $0x214] sm:$0xff]
      %v242 = vld [vmem:[%s165 + $0x21c] sm:$0xff]
      %v243 = vld [vmem:[%s165 + $0x224] sm:$0xff]
      %v244 = vld [vmem:[%s165 + $0x22c] sm:$0xff]
      %v245 = vld [vmem:[%s165 + $0x234] sm:$0xff]
      %v246 = vld [vmem:[%s165 + $0x23c] sm:$0xff]
      %v247 = vld [vmem:[%s165 + $0x244] sm:$0xff]
      %v248 = vld [vmem:[%s165 + $0x24c] sm:$0xff]
      %v249 = vld [vmem:[%s165 + $0x254] sm:$0xf]
      %v250 = vld [vmem:[%s165 + $0x258] sm:$0xff]
      %v251 = vld [vmem:[%s165 + $0x260] sm:$0xff]
      %v252 = vld [vmem:[%s165 + $0x268] sm:$0xff]
      %v253 = vld [vmem:[%s165 + $0x270] sm:$0xff]
      %v254 = vld [vmem:[%s165 + $0x278] sm:$0xff]
      %v255 = vld [vmem:[%s165 + $0x280] sm:$0xff]
      %v256 = vld [vmem:[%s165 + $0x288] sm:$0xff]
      %v257 = vld [vmem:[%s165 + $0x290] sm:$0xff]
      %v258 = vld [vmem:[%s165 + $0x298] sm:$0xff]
      %v259 = vld [vmem:[%s165 + $0x2a0] sm:$0xff]
      %v260 = vld [vmem:[%s165 + $0x2a8] sm:$0xff]
      %v261 = vld [vmem:[%s165 + $0x2b0] sm:$0xff]
      %v262 = vld [vmem:[%s165 + $0x2b8] sm:$0xf]
      %v263 = vld [vmem:[%s165 + $0x2bc] sm:$0xff]
      %v264 = vld [vmem:[%s165 + $0x2c4] sm:$0xff]
      %v265 = vld [vmem:[%s165 + $0x2cc] sm:$0xff]
      %v266 = vld [vmem:[%s165 + $0x2d4] sm:$0xff]
      %v267 = vld [vmem:[%s165 + $0x2dc] sm:$0xff]
      %v268 = vld [vmem:[%s165 + $0x2e4] sm:$0xff]
      %v269 = vld [vmem:[%s165 + $0x2ec] sm:$0xff]
      %v270 = vld [vmem:[%s165 + $0x2f4] sm:$0xff]
      %v271 = vld [vmem:[%s165 + $0x2fc] sm:$0xff]
      %v272 = vld [vmem:[%s165 + $0x304] sm:$0xff]
      %v273 = vld [vmem:[%s165 + $0x30c] sm:$0xff]
      %v274 = vld [vmem:[%s165 + $0x314] sm:$0xff]
      %v275 = vld [vmem:[%s165 + $0x31c] sm:$0xf]
      %v276 = vld [vmem:[%s165 + $0x320] sm:$0xff]
      %v277 = vld [vmem:[%s165 + $0x328] sm:$0xff]
      %v278 = vld [vmem:[%s165 + $0x330] sm:$0xff]
      %v279 = vld [vmem:[%s165 + $0x338] sm:$0xff]
      %v280 = vld [vmem:[%s165 + $0x340] sm:$0xff]
      %v281 = vld [vmem:[%s165 + $0x348] sm:$0xff]
      %v282 = vld [vmem:[%s165 + $0x350] sm:$0xff]
      %v283 = vld [vmem:[%s165 + $0x358] sm:$0xff]
      %v284 = vld [vmem:[%s165 + $0x360] sm:$0xff]
      %v285 = vld [vmem:[%s165 + $0x368] sm:$0xff]
      %v286 = vld [vmem:[%s165 + $0x370] sm:$0xff]
      %v287 = vld [vmem:[%s165 + $0x378] sm:$0xff]
      %v288 = vld [vmem:[%s165 + $0x380] sm:$0xf]
      %v289 = vld [vmem:[%s165 + $0x384] sm:$0xff]
      %v290 = vld [vmem:[%s165 + $0x38c] sm:$0xff]
      %v291 = vld [vmem:[%s165 + $0x394] sm:$0xff]
      %v292 = vld [vmem:[%s165 + $0x39c] sm:$0xff]
      %v293 = vld [vmem:[%s165 + $0x3a4] sm:$0xff]
      %v294 = vld [vmem:[%s165 + $0x3ac] sm:$0xff]
      %v295 = vld [vmem:[%s165 + $0x3b4] sm:$0xff]
      %v296 = vld [vmem:[%s165 + $0x3bc] sm:$0xff]
      %v297 = vld [vmem:[%s165 + $0x3c4] sm:$0xff]
      %v298 = vld [vmem:[%s165 + $0x3cc] sm:$0xff]
      %v299 = vld [vmem:[%s165 + $0x3d4] sm:$0xff]
      %v300 = vld [vmem:[%s165 + $0x3dc] sm:$0xff]
      %v301 = vld [vmem:[%s165 + $0x3e4] sm:$0xf]
      %v302 = vld [vmem:[%s165 + $0x3e8] sm:$0xff]
      %v303 = vld [vmem:[%s165 + $0x3f0] sm:$0xff]
      %v304 = vld [vmem:[%s165 + $0x3f8] sm:$0xff]
      %v305 = vld [vmem:[%s165 + $0x400] sm:$0xff]
      %v306 = vld [vmem:[%s165 + $0x408] sm:$0xff]
      %v307 = vld [vmem:[%s165 + $0x410] sm:$0xff]
      %v308 = vld [vmem:[%s165 + $0x418] sm:$0xff]
      %v309 = vld [vmem:[%s165 + $0x420] sm:$0xff]
      %v310 = vld [vmem:[%s165 + $0x428] sm:$0xff]
      %v311 = vld [vmem:[%s165 + $0x430] sm:$0xff]
      %v312 = vld [vmem:[%s165 + $0x438] sm:$0xff]
      %v313 = vld [vmem:[%s165 + $0x440] sm:$0xff]
      %v314 = vld [vmem:[%s165 + $0x448] sm:$0xf]
      %v315 = vld [vmem:[%s165 + $0x44c] sm:$0xff]
      %v316 = vld [vmem:[%s165 + $0x454] sm:$0xff]
      %v317 = vld [vmem:[%s165 + $0x45c] sm:$0xff]
      %v318 = vld [vmem:[%s165 + $0x464] sm:$0xff]
      %v319 = vld [vmem:[%s165 + $0x46c] sm:$0xff]
      %v320 = vld [vmem:[%s165 + $0x474] sm:$0xff]
      %v321 = vld [vmem:[%s165 + $0x47c] sm:$0xff]
      %v322 = vld [vmem:[%s165 + $0x484] sm:$0xff]
      %v323 = vld [vmem:[%s165 + $0x48c] sm:$0xff]
      %v324 = vld [vmem:[%s165 + $0x494] sm:$0xff]
      %v325 = vld [vmem:[%s165 + $0x49c] sm:$0xff]
      %v326 = vld [vmem:[%s165 + $0x4a4] sm:$0xff]
      %v327 = vld [vmem:[%s165 + $0x4ac] sm:$0xf]
      %v328 = vld [vmem:[%s165 + $0x4b0] sm:$0xff]
      %v329 = vld [vmem:[%s165 + $0x4b8] sm:$0xff]
      %v330 = vld [vmem:[%s165 + $0x4c0] sm:$0xff]
      %v331 = vld [vmem:[%s165 + $0x4c8] sm:$0xff]
      %v332 = vld [vmem:[%s165 + $0x4d0] sm:$0xff]
      %v333 = vld [vmem:[%s165 + $0x4d8] sm:$0xff]
      %v334 = vld [vmem:[%s165 + $0x4e0] sm:$0xff]
      %v335 = vld [vmem:[%s165 + $0x4e8] sm:$0xff]
      %v336 = vld [vmem:[%s165 + $0x4f0] sm:$0xff]
      %v337 = vld [vmem:[%s165 + $0x4f8] sm:$0xff]
      %v338 = vld [vmem:[%s165 + $0x500] sm:$0xff]
      %v339 = vld [vmem:[%s165 + $0x508] sm:$0xff]
      %v340 = vld [vmem:[%s165 + $0x510] sm:$0xf]
      %v341 = vld [vmem:[%s165 + $0x514] sm:$0xff]
      %v342 = vld [vmem:[%s165 + $0x51c] sm:$0xff]
      %v343 = vld [vmem:[%s165 + $0x524] sm:$0xff]
      %v344 = vld [vmem:[%s165 + $0x52c] sm:$0xff]
      %v345 = vld [vmem:[%s165 + $0x534] sm:$0xff]
      %v346 = vld [vmem:[%s165 + $0x53c] sm:$0xff]
      %v347 = vld [vmem:[%s165 + $0x544] sm:$0xff]
      %v348 = vld [vmem:[%s165 + $0x54c] sm:$0xff]
      %v349 = vld [vmem:[%s165 + $0x554] sm:$0xff]
      %v350 = vld [vmem:[%s165 + $0x55c] sm:$0xff]
      %v351 = vld [vmem:[%s165 + $0x564] sm:$0xff]
      %v352 = vld [vmem:[%s165 + $0x56c] sm:$0xff]
      %v353 = vld [vmem:[%s165 + $0x574] sm:$0xf]
      %v354 = vld [vmem:[%s165 + $0x578] sm:$0xff]
      %v355 = vld [vmem:[%s165 + $0x580] sm:$0xff]
      %v356 = vld [vmem:[%s165 + $0x588] sm:$0xff]
      %v357 = vld [vmem:[%s165 + $0x590] sm:$0xff]
      %v358 = vld [vmem:[%s165 + $0x598] sm:$0xff]
      %v359 = vld [vmem:[%s165 + $0x5a0] sm:$0xff]
      %v360 = vld [vmem:[%s165 + $0x5a8] sm:$0xff]
      %v361 = vld [vmem:[%s165 + $0x5b0] sm:$0xff]
      %v362 = vld [vmem:[%s165 + $0x5b8] sm:$0xff]
      %v363 = vld [vmem:[%s165 + $0x5c0] sm:$0xff]
      %v364 = vld [vmem:[%s165 + $0x5c8] sm:$0xff]
      %v365 = vld [vmem:[%s165 + $0x5d0] sm:$0xff]
      %v366 = vld [vmem:[%s165 + $0x5d8] sm:$0xf]
      %v367 = vld [vmem:[%s165 + $0x5dc] sm:$0xff]
      %v368 = vld [vmem:[%s165 + $0x5e4] sm:$0xff]
      %v369 = vld [vmem:[%s165 + $0x5ec] sm:$0xff]
      %v370 = vld [vmem:[%s165 + $0x5f4] sm:$0xff]
      %v371 = vld [vmem:[%s165 + $0x5fc] sm:$0xff]
      %v372 = vld [vmem:[%s165 + $0x604] sm:$0xff]
      %v373 = vld [vmem:[%s165 + $0x60c] sm:$0xff]
      %v374 = vld [vmem:[%s165 + $0x614] sm:$0xff]
      %v375 = vld [vmem:[%s165 + $0x61c] sm:$0xff]
      %v376 = vld [vmem:[%s165 + $0x624] sm:$0xff]
      %v377 = vld [vmem:[%s165 + $0x62c] sm:$0xff]
      %v378 = vld [vmem:[%s165 + $0x634] sm:$0xff]
      %v379 = vld [vmem:[%s165 + $0x63c] sm:$0xf]
      %v380 = vld [vmem:[%s1] sm:$0xff]
      %v381 = vld [vmem:[%s1 + $0x8] sm:$0xff]
      %v382 = vld [vmem:[%s1 + $0x10] sm:$0xff]
      %v383 = vld [vmem:[%s1 + $0x18] sm:$0xff]
      %v384 = vld [vmem:[%s1 + $0x20] sm:$0xff]
      %v385 = vld [vmem:[%s1 + $0x28] sm:$0xff]
      %v386 = vld [vmem:[%s1 + $0x30] sm:$0xff]
      %v387 = vld [vmem:[%s1 + $0x38] sm:$0xff]
      %v388 = vld [vmem:[%s1 + $0x40] sm:$0xff]
      %v389 = vld [vmem:[%s1 + $0x48] sm:$0xff]
      %v390 = vld [vmem:[%s1 + $0x50] sm:$0xff]
      %v391 = vld [vmem:[%s1 + $0x58] sm:$0xff]
      %v392 = vld [vmem:[%s1 + $0x60] sm:$0xff]
      %v393 = vld [vmem:[%s1 + $0x68] sm:$0xff]
      %v394 = vld [vmem:[%s1 + $0x70] sm:$0xff]
      %v395 = vld [vmem:[%s1 + $0x78] sm:$0xff]
      %v396 = vld [vmem:[%s1 + $0x80] sm:$0xff]
      %v397 = vld [vmem:[%s1 + $0x88] sm:$0xff]
      %v398 = vld [vmem:[%s1 + $0x90] sm:$0xff]
      %v399 = vld [vmem:[%s1 + $0x98] sm:$0xff]
      %v400 = vld [vmem:[%s1 + $0xa0] sm:$0xff]
      %v401 = vld [vmem:[%s1 + $0xa8] sm:$0xff]
      %v402 = vld [vmem:[%s1 + $0xb0] sm:$0xff]
      %v403 = vld [vmem:[%s1 + $0xb8] sm:$0xff]
      %v404 = vld [vmem:[%s1 + $0xc0] sm:$0xff]
      %v405 = vld [vmem:[%s1 + $0xc8] sm:$0xff]
      %v406 = vld [vmem:[%s1 + $0xd0] sm:$0xff]
      %v407 = vld [vmem:[%s1 + $0xd8] sm:$0xff]
      %v408 = vld [vmem:[%s1 + $0xe0] sm:$0xff]
      %v409 = vld [vmem:[%s1 + $0xe8] sm:$0xff]
      %v410 = vld [vmem:[%s1 + $0xf0] sm:$0xff]
      %v411 = vld [vmem:[%s1 + $0xf8] sm:$0xff]
      %v412 = vld [vmem:[%s1 + $0x100] sm:$0xff]
      %v413 = vld [vmem:[%s1 + $0x108] sm:$0xff]
      %v414 = vld [vmem:[%s1 + $0x110] sm:$0xff]
      %v415 = vld [vmem:[%s1 + $0x118] sm:$0xff]
      %v416 = vld [vmem:[%s1 + $0x120] sm:$0xff]
      %v417 = vld [vmem:[%s1 + $0x128] sm:$0xff]
      %v418 = vld [vmem:[%s1 + $0x130] sm:$0xff]
      %v419 = vld [vmem:[%s1 + $0x138] sm:$0xff]
      %v420 = vld [vmem:[%s1 + $0x140] sm:$0xff]
      %v421 = vld [vmem:[%s1 + $0x148] sm:$0xff]
      %v422 = vld [vmem:[%s1 + $0x150] sm:$0xff]
      %v423 = vld [vmem:[%s1 + $0x158] sm:$0xff]
      %v424 = vld [vmem:[%s1 + $0x160] sm:$0xff]
      %v425 = vld [vmem:[%s1 + $0x168] sm:$0xff]
      %v426 = vld [vmem:[%s1 + $0x170] sm:$0xff]
      %v427 = vld [vmem:[%s1 + $0x178] sm:$0xff]
      %v428 = vld [vmem:[%s1 + $0x180] sm:$0xff]
      %v429 = vld [vmem:[%s1 + $0x188] sm:$0xff]
      %v430 = vld [vmem:[%s1 + $0x190] sm:$0xff]
      %v431 = vld [vmem:[%s1 + $0x198] sm:$0xff]
      %v432 = vld [vmem:[%s1 + $0x1a0] sm:$0xff]
      %v433 = vld [vmem:[%s1 + $0x1a8] sm:$0xff]
      %v434 = vld [vmem:[%s1 + $0x1b0] sm:$0xff]
      %v435 = vld [vmem:[%s1 + $0x1b8] sm:$0xff]
      %v436 = vld [vmem:[%s1 + $0x1c0] sm:$0xff]
      %v437 = vld [vmem:[%s1 + $0x1c8] sm:$0xff]
      %v438 = vld [vmem:[%s1 + $0x1d0] sm:$0xff]
      %v439 = vld [vmem:[%s1 + $0x1d8] sm:$0xff]
      %v440 = vld [vmem:[%s1 + $0x1e0] sm:$0xff]
      %v441 = vld [vmem:[%s1 + $0x1e8] sm:$0xff]
      %v442 = vld [vmem:[%s1 + $0x1f0] sm:$0xff]
      %v443 = vld [vmem:[%s1 + $0x1f8] sm:$0xff]
      %v444 = vld [vmem:[%s1 + $0x200] sm:$0xff]
      %v445 = vld [vmem:[%s1 + $0x208] sm:$0xff]
      %v446 = vld [vmem:[%s1 + $0x210] sm:$0xff]
      %v447 = vld [vmem:[%s1 + $0x218] sm:$0xff]
      %v448 = vld [vmem:[%s1 + $0x220] sm:$0xff]
      %v449 = vld [vmem:[%s1 + $0x228] sm:$0xff]
      %v450 = vld [vmem:[%s1 + $0x230] sm:$0xff]
      %v451 = vld [vmem:[%s1 + $0x238] sm:$0xff]
      %v452 = vld [vmem:[%s1 + $0x240] sm:$0xff]
      %v453 = vld [vmem:[%s1 + $0x248] sm:$0xff]
      %v454 = vld [vmem:[%s1 + $0x250] sm:$0xff]
      %v455 = vld [vmem:[%s1 + $0x258] sm:$0xff]
      %v456 = vld [vmem:[%s1 + $0x260] sm:$0xff]
      %v457 = vld [vmem:[%s1 + $0x268] sm:$0xff]
      %v458 = vld [vmem:[%s1 + $0x270] sm:$0xff]
      %v459 = vld [vmem:[%s1 + $0x278] sm:$0xff]
      %v460 = vld [vmem:[%s1 + $0x280] sm:$0xff]
      %v461 = vld [vmem:[%s1 + $0x288] sm:$0xff]
      %v462 = vld [vmem:[%s1 + $0x290] sm:$0xff]
      %v463 = vld [vmem:[%s1 + $0x298] sm:$0xff]
      %v464 = vld [vmem:[%s1 + $0x2a0] sm:$0xff]
      %v465 = vld [vmem:[%s1 + $0x2a8] sm:$0xff]
      %v466 = vld [vmem:[%s1 + $0x2b0] sm:$0xff]
      %v467 = vld [vmem:[%s1 + $0x2b8] sm:$0xff]
      %v468 = vld [vmem:[%s1 + $0x2c0] sm:$0xff]
      %v469 = vld [vmem:[%s1 + $0x2c8] sm:$0xff]
      %v470 = vld [vmem:[%s1 + $0x2d0] sm:$0xff]
      %v471 = vld [vmem:[%s1 + $0x2d8] sm:$0xff]
      %v472 = vld [vmem:[%s1 + $0x2e0] sm:$0xff]
      %v473 = vld [vmem:[%s1 + $0x2e8] sm:$0xff]
      %v474 = vld [vmem:[%s1 + $0x2f0] sm:$0xff]
      %v475 = vld [vmem:[%s1 + $0x2f8] sm:$0xff]
      %v476 = vld [vmem:[%s1 + $0x300] sm:$0xff]
      %v477 = vld [vmem:[%s1 + $0x308] sm:$0xff]
      %v478 = vld [vmem:[%s1 + $0x310] sm:$0xff]
      %v479 = vld [vmem:[%s1 + $0x318] sm:$0xff]
      %v480 = vld [vmem:[%s1 + $0x320] sm:$0xff]
      %v481 = vld [vmem:[%s1 + $0x328] sm:$0xff]
      %v482 = vld [vmem:[%s1 + $0x330] sm:$0xff]
      %v483 = vld [vmem:[%s1 + $0x338] sm:$0xff]
      %v484 = vld [vmem:[%s1 + $0x340] sm:$0xff]
      %v485 = vld [vmem:[%s1 + $0x348] sm:$0xff]
      %v486 = vld [vmem:[%s1 + $0x350] sm:$0xff]
      %v487 = vld [vmem:[%s1 + $0x358] sm:$0xff]
      %v488 = vld [vmem:[%s1 + $0x360] sm:$0xff]
      %v489 = vld [vmem:[%s1 + $0x368] sm:$0xff]
      %v490 = vld [vmem:[%s1 + $0x370] sm:$0xff]
      %v491 = vld [vmem:[%s1 + $0x378] sm:$0xff]
      %v492 = vld [vmem:[%s1 + $0x380] sm:$0xff]
      %v493 = vld [vmem:[%s1 + $0x388] sm:$0xff]
      %v494 = vld [vmem:[%s1 + $0x390] sm:$0xff]
      %v495 = vld [vmem:[%s1 + $0x398] sm:$0xff]
      %v496 = vld [vmem:[%s1 + $0x3a0] sm:$0xff]
      %v497 = vld [vmem:[%s1 + $0x3a8] sm:$0xff]
      %v498 = vld [vmem:[%s1 + $0x3b0] sm:$0xff]
      %v499 = vld [vmem:[%s1 + $0x3b8] sm:$0xff]
      %v500 = vld [vmem:[%s1 + $0x3c0] sm:$0xff]
      %v501 = vld [vmem:[%s1 + $0x3c8] sm:$0xff]
      %v502 = vld [vmem:[%s1 + $0x3d0] sm:$0xff]
      %v503 = vld [vmem:[%s1 + $0x3d8] sm:$0xff]
      %v504 = vld [vmem:[%s1 + $0x3e0] sm:$0xff]
      %v505 = vld [vmem:[%s1 + $0x3e8] sm:$0xff]
      %v506 = vld [vmem:[%s1 + $0x3f0] sm:$0xff]
      %v507 = vld [vmem:[%s1 + $0x3f8] sm:$0xff]
      %v508 = vld [vmem:[%s1 + $0x400] sm:$0xff]
      %v509 = vld [vmem:[%s1 + $0x408] sm:$0xff]
      %v510 = vld [vmem:[%s1 + $0x410] sm:$0xff]
      %v511 = vld [vmem:[%s1 + $0x418] sm:$0xff]
      %v512 = vld [vmem:[%s1 + $0x420] sm:$0xff]
      %v513 = vld [vmem:[%s1 + $0x428] sm:$0xff]
      %v514 = vld [vmem:[%s1 + $0x430] sm:$0xff]
      %v515 = vld [vmem:[%s1 + $0x438] sm:$0xff]
      %v516 = vld [vmem:[%s1 + $0x440] sm:$0xff]
      %v517 = vld [vmem:[%s1 + $0x448] sm:$0xff]
      %v518 = vld [vmem:[%s1 + $0x450] sm:$0xff]
      %v519 = vld [vmem:[%s1 + $0x458] sm:$0xff]
      %v520 = vld [vmem:[%s1 + $0x460] sm:$0xff]
      %v521 = vld [vmem:[%s1 + $0x468] sm:$0xff]
      %v522 = vld [vmem:[%s1 + $0x470] sm:$0xff]
      %v523 = vld [vmem:[%s1 + $0x478] sm:$0xff]
      %v524 = vld [vmem:[%s1 + $0x480] sm:$0xff]
      %v525 = vld [vmem:[%s1 + $0x488] sm:$0xff]
      %v526 = vld [vmem:[%s1 + $0x490] sm:$0xff]
      %v527 = vld [vmem:[%s1 + $0x498] sm:$0xff]
      %v528 = vld [vmem:[%s1 + $0x4a0] sm:$0xff]
      %v529 = vld [vmem:[%s1 + $0x4a8] sm:$0xff]
      %v530 = vld [vmem:[%s1 + $0x4b0] sm:$0xff]
      %v531 = vld [vmem:[%s1 + $0x4b8] sm:$0xff]
      %v532 = vld [vmem:[%s1 + $0x4c0] sm:$0xff]
      %v533 = vld [vmem:[%s1 + $0x4c8] sm:$0xff]
      %v534 = vld [vmem:[%s1 + $0x4d0] sm:$0xff]
      %v535 = vld [vmem:[%s1 + $0x4d8] sm:$0xff]
      %v536 = vld [vmem:[%s1 + $0x4e0] sm:$0xff]
      %v537 = vld [vmem:[%s1 + $0x4e8] sm:$0xff]
      %v538 = vld [vmem:[%s1 + $0x4f0] sm:$0xff]
      %v539 = vld [vmem:[%s1 + $0x4f8] sm:$0xff]
      %v540 = vld [vmem:[%s1 + $0x500] sm:$0xff]
      %v541 = vld [vmem:[%s1 + $0x508] sm:$0xff]
      %v542 = vld [vmem:[%s1 + $0x510] sm:$0xff]
      %v543 = vld [vmem:[%s1 + $0x518] sm:$0xff]
      %v544 = vld [vmem:[%s1 + $0x520] sm:$0xff]
      %v545 = vld [vmem:[%s1 + $0x528] sm:$0xff]
      %v546 = vld [vmem:[%s1 + $0x530] sm:$0xff]
      %v547 = vld [vmem:[%s1 + $0x538] sm:$0xff]
      %v548 = vld [vmem:[%s1 + $0x540] sm:$0xff]
      %v549 = vld [vmem:[%s1 + $0x548] sm:$0xff]
      %v550 = vld [vmem:[%s1 + $0x550] sm:$0xff]
      %v551 = vld [vmem:[%s1 + $0x558] sm:$0xff]
      %v552 = vld [vmem:[%s1 + $0x560] sm:$0xff]
      %v553 = vld [vmem:[%s1 + $0x568] sm:$0xff]
      %v554 = vld [vmem:[%s1 + $0x570] sm:$0xff]
      %v555 = vld [vmem:[%s1 + $0x578] sm:$0xff]
      %v556 = vld [vmem:[%s1 + $0x580] sm:$0xff]
      %v557 = vld [vmem:[%s1 + $0x588] sm:$0xff]
      %v558 = vld [vmem:[%s1 + $0x590] sm:$0xff]
      %v559 = vld [vmem:[%s1 + $0x598] sm:$0xff]
      %v560 = vld [vmem:[%s1 + $0x5a0] sm:$0xff]
      %v561 = vld [vmem:[%s1 + $0x5a8] sm:$0xff]
      %v562 = vld [vmem:[%s1 + $0x5b0] sm:$0xff]
      %v563 = vld [vmem:[%s1 + $0x5b8] sm:$0xff]
      %v564 = vld [vmem:[%s1 + $0x5c0] sm:$0xff]
      %v565 = vld [vmem:[%s1 + $0x5c8] sm:$0xff]
      %v566 = vld [vmem:[%s1 + $0x5d0] sm:$0xff]
      %v567 = vld [vmem:[%s1 + $0x5d8] sm:$0xff]
      %v568 = vld [vmem:[%s1 + $0x5e0] sm:$0xff]
      %v569 = vld [vmem:[%s1 + $0x5e8] sm:$0xff]
      %v570 = vld [vmem:[%s1 + $0x5f0] sm:$0xff]
      %v571 = vld [vmem:[%s1 + $0x5f8] sm:$0xff]
      %v572 = vld [vmem:[%s1 + $0x600] sm:$0xff]
      %v573 = vld [vmem:[%s1 + $0x608] sm:$0xff]
      %v574 = vld [vmem:[%s1 + $0x610] sm:$0xff]
      %v575 = vld [vmem:[%s1 + $0x618] sm:$0xff]
      %v576 = vld [vmem:[%s1 + $0x620] sm:$0xff]
      %v577 = vld [vmem:[%s1 + $0x628] sm:$0xff]
      %v578 = vld [vmem:[%s1 + $0x630] sm:$0xff]
      %v579 = vld [vmem:[%s1 + $0x638] sm:$0xff]
      %v580 = vld [vmem:[%s1 + $0x640] sm:$0xff]
      %v581 = vld [vmem:[%s1 + $0x648] sm:$0xff]
      %v582 = vld [vmem:[%s1 + $0x650] sm:$0xff]
      %v583 = vld [vmem:[%s1 + $0x658] sm:$0xff]
      %v584 = vld [vmem:[%s1 + $0x660] sm:$0xff]
      %v585 = vld [vmem:[%s1 + $0x668] sm:$0xff]
      %v586 = vld [vmem:[%s1 + $0x670] sm:$0xff]
      %v587 = vld [vmem:[%s1 + $0x678] sm:$0xff]
      %v588 = vld [vmem:[%s1 + $0x680] sm:$0xff]
      %v589 = vld [vmem:[%s1 + $0x688] sm:$0xff]
      %v590 = vld [vmem:[%s1 + $0x690] sm:$0xff]
      %v591 = vld [vmem:[%s1 + $0x698] sm:$0xff]
      %v592 = vld [vmem:[%s1 + $0x6a0] sm:$0xff]
      %v593 = vld [vmem:[%s1 + $0x6a8] sm:$0xff]
      %v594 = vld [vmem:[%s1 + $0x6b0] sm:$0xff]
      %v595 = vld [vmem:[%s1 + $0x6b8] sm:$0xff]
      %v596 = vld [vmem:[%s1 + $0x6c0] sm:$0xff]
      %v597 = vld [vmem:[%s1 + $0x6c8] sm:$0xff]
      %v598 = vld [vmem:[%s1 + $0x6d0] sm:$0xff]
      %v599 = vld [vmem:[%s1 + $0x6d8] sm:$0xff]
      %v600 = vld [vmem:[%s1 + $0x6e0] sm:$0xff]
      %v601 = vld [vmem:[%s1 + $0x6e8] sm:$0xff]
      %v602 = vld [vmem:[%s1 + $0x6f0] sm:$0xff]
      %v603 = vld [vmem:[%s1 + $0x6f8] sm:$0xff]
      %v604 = vld [vmem:[%s1 + $0x700] sm:$0xff]
      %v605 = vld [vmem:[%s1 + $0x708] sm:$0xff]
      %v606 = vld [vmem:[%s1 + $0x710] sm:$0xff]
      %v607 = vld [vmem:[%s1 + $0x718] sm:$0xff]
      %v608 = vld [vmem:[%s1 + $0x720] sm:$0xff]
      %v609 = vld [vmem:[%s1 + $0x728] sm:$0xff]
      %v610 = vld [vmem:[%s1 + $0x730] sm:$0xff]
      %v611 = vld [vmem:[%s1 + $0x738] sm:$0xff]
      %v612 = vld [vmem:[%s1 + $0x740] sm:$0xff]
      %v613 = vld [vmem:[%s1 + $0x748] sm:$0xff]
      %v614 = vld [vmem:[%s1 + $0x750] sm:$0xff]
      %v615 = vld [vmem:[%s1 + $0x758] sm:$0xff]
      %v616 = vld [vmem:[%s1 + $0x760] sm:$0xff]
      %v617 = vld [vmem:[%s1 + $0x768] sm:$0xff]
      %v618 = vld [vmem:[%s1 + $0x770] sm:$0xff]
      %v619 = vld [vmem:[%s1 + $0x778] sm:$0xff]
      %v620 = vld [vmem:[%s1 + $0x780] sm:$0xff]
      %v621 = vld [vmem:[%s1 + $0x788] sm:$0xff]
      %v622 = vld [vmem:[%s1 + $0x790] sm:$0xff]
      %v623 = vld [vmem:[%s1 + $0x798] sm:$0xff]
      %v624 = vld [vmem:[%s1 + $0x7a0] sm:$0xff]
      %v625 = vld [vmem:[%s1 + $0x7a8] sm:$0xff]
      %v626 = vld [vmem:[%s1 + $0x7b0] sm:$0xff]
      %v627 = vld [vmem:[%s1 + $0x7b8] sm:$0xff]
      %v628 = vld [vmem:[%s1 + $0x7c0] sm:$0xff]
      %v629 = vld [vmem:[%s1 + $0x7c8] sm:$0xff]
      %v630 = vld [vmem:[%s1 + $0x7d0] sm:$0xff]
      %v631 = vld [vmem:[%s1 + $0x7d8] sm:$0xff]
      %v632 = vld [vmem:[%s1 + $0x7e0] sm:$0xff]
      %v633 = vld [vmem:[%s1 + $0x7e8] sm:$0xff]
      %v634 = vld [vmem:[%s1 + $0x7f0] sm:$0xff]
      %v635 = vld [vmem:[%s1 + $0x7f8] sm:$0xff]
      %v636 = vld [vmem:[%s1 + $0x800] sm:$0xff]
      %v637 = vld [vmem:[%s1 + $0x808] sm:$0xff]
      %v638 = vld [vmem:[%s1 + $0x810] sm:$0xff]
      %v639 = vld [vmem:[%s1 + $0x818] sm:$0xff]
      %v640 = vld [vmem:[%s1 + $0x820] sm:$0xff]
      %v641 = vld [vmem:[%s1 + $0x828] sm:$0xff]
      %v642 = vld [vmem:[%s1 + $0x830] sm:$0xff]
      %v643 = vld [vmem:[%s1 + $0x838] sm:$0xff]
      %v644 = vld [vmem:[%s1 + $0x840] sm:$0xff]
      %v645 = vld [vmem:[%s1 + $0x848] sm:$0xff]
      %v646 = vld [vmem:[%s1 + $0x850] sm:$0xff]
      %v647 = vld [vmem:[%s1 + $0x858] sm:$0xff]
      %v648 = vld [vmem:[%s1 + $0x860] sm:$0xff]
      %v649 = vld [vmem:[%s1 + $0x868] sm:$0xff]
      %v650 = vld [vmem:[%s1 + $0x870] sm:$0xff]
      %v651 = vld [vmem:[%s1 + $0x878] sm:$0xff]
      %v652 = vld [vmem:[%s1 + $0x880] sm:$0xff]
      %v653 = vld [vmem:[%s1 + $0x888] sm:$0xff]
      %v654 = vld [vmem:[%s1 + $0x890] sm:$0xff]
      %v655 = vld [vmem:[%s1 + $0x898] sm:$0xff]
      %v656 = vld [vmem:[%s1 + $0x8a0] sm:$0xff]
      %v657 = vld [vmem:[%s1 + $0x8a8] sm:$0xff]
      %v658 = vld [vmem:[%s1 + $0x8b0] sm:$0xff]
      %v659 = vld [vmem:[%s1 + $0x8b8] sm:$0xff]
      %v660 = vld [vmem:[%s1 + $0x8c0] sm:$0xff]
      %v661 = vld [vmem:[%s1 + $0x8c8] sm:$0xff]
      %v662 = vld [vmem:[%s1 + $0x8d0] sm:$0xff]
      %v663 = vld [vmem:[%s1 + $0x8d8] sm:$0xff]
      %v664 = vld [vmem:[%s1 + $0x8e0] sm:$0xff]
      %v665 = vld [vmem:[%s1 + $0x8e8] sm:$0xff]
      %v666 = vld [vmem:[%s1 + $0x8f0] sm:$0xff]
      %v667 = vld [vmem:[%s1 + $0x8f8] sm:$0xff]
      %v668 = vld [vmem:[%s1 + $0x900] sm:$0xff]
      %v669 = vld [vmem:[%s1 + $0x908] sm:$0xff]
      %v670 = vld [vmem:[%s1 + $0x910] sm:$0xff]
      %v671 = vld [vmem:[%s1 + $0x918] sm:$0xff]
      %v672 = vld [vmem:[%s1 + $0x920] sm:$0xff]
      %v673 = vld [vmem:[%s1 + $0x928] sm:$0xff]
      %v674 = vld [vmem:[%s1 + $0x930] sm:$0xff]
      %v675 = vld [vmem:[%s1 + $0x938] sm:$0xff]
      %v676 = vld [vmem:[%s1 + $0x940] sm:$0xff]
      %v677 = vld [vmem:[%s1 + $0x948] sm:$0xff]
      %v678 = vld [vmem:[%s1 + $0x950] sm:$0xff]
      %v679 = vld [vmem:[%s1 + $0x958] sm:$0xff]
      %v680 = vld [vmem:[%s1 + $0x960] sm:$0xff]
      %v681 = vld [vmem:[%s1 + $0x968] sm:$0xff]
      %v682 = vld [vmem:[%s1 + $0x970] sm:$0xff]
      %v683 = vld [vmem:[%s1 + $0x978] sm:$0xff]
      %v684 = vld [vmem:[%s1 + $0x980] sm:$0xff]
      %v685 = vld [vmem:[%s1 + $0x988] sm:$0xff]
      %v686 = vld [vmem:[%s1 + $0x990] sm:$0xff]
      %v687 = vld [vmem:[%s1 + $0x998] sm:$0xff]
      %v688 = vld [vmem:[%s1 + $0x9a0] sm:$0xff]
      %v689 = vld [vmem:[%s1 + $0x9a8] sm:$0xff]
      %v690 = vld [vmem:[%s1 + $0x9b0] sm:$0xff]
      %v691 = vld [vmem:[%s1 + $0x9b8] sm:$0xff]
      %v692 = vld [vmem:[%s1 + $0x9c0] sm:$0xff]
      %v693 = vld [vmem:[%s1 + $0x9c8] sm:$0xff]
      %v694 = vld [vmem:[%s1 + $0x9d0] sm:$0xff]
      %v695 = vld [vmem:[%s1 + $0x9d8] sm:$0xff]
      %v696 = vld [vmem:[%s1 + $0x9e0] sm:$0xff]
      %v697 = vld [vmem:[%s1 + $0x9e8] sm:$0xff]
      %v698 = vld [vmem:[%s1 + $0x9f0] sm:$0xff]
      %v699 = vld [vmem:[%s1 + $0x9f8] sm:$0xff]
      %v700 = vld [vmem:[%s1 + $0xa00] sm:$0xff]
      %v701 = vld [vmem:[%s1 + $0xa08] sm:$0xff]
      %v702 = vld [vmem:[%s1 + $0xa10] sm:$0xff]
      %v703 = vld [vmem:[%s1 + $0xa18] sm:$0xff]
      %v704 = vld [vmem:[%s1 + $0xa20] sm:$0xff]
      %v705 = vld [vmem:[%s1 + $0xa28] sm:$0xff]
      %v706 = vld [vmem:[%s1 + $0xa30] sm:$0xff]
      %v707 = vld [vmem:[%s1 + $0xa38] sm:$0xff]
      %v708 = vld [vmem:[%s1 + $0xa40] sm:$0xff]
      %v709 = vld [vmem:[%s1 + $0xa48] sm:$0xff]
      %v710 = vld [vmem:[%s1 + $0xa50] sm:$0xff]
      %v711 = vld [vmem:[%s1 + $0xa58] sm:$0xff]
      %v712 = vld [vmem:[%s1 + $0xa60] sm:$0xff]
      %v713 = vld [vmem:[%s1 + $0xa68] sm:$0xff]
      %v714 = vld [vmem:[%s1 + $0xa70] sm:$0xff]
      %v715 = vld [vmem:[%s1 + $0xa78] sm:$0xff]
      %v716 = vld [vmem:[%s1 + $0xa80] sm:$0xff]
      %v717 = vld [vmem:[%s1 + $0xa88] sm:$0xff]
      %v718 = vld [vmem:[%s1 + $0xa90] sm:$0xff]
      %v719 = vld [vmem:[%s1 + $0xa98] sm:$0xff]
      %v720 = vld [vmem:[%s1 + $0xaa0] sm:$0xff]
      %v721 = vld [vmem:[%s1 + $0xaa8] sm:$0xff]
      %v722 = vld [vmem:[%s1 + $0xab0] sm:$0xff]
      %v723 = vld [vmem:[%s1 + $0xab8] sm:$0xff]
      %v724 = vld [vmem:[%s1 + $0xac0] sm:$0xff]
      %v725 = vld [vmem:[%s1 + $0xac8] sm:$0xff]
      %v726 = vld [vmem:[%s1 + $0xad0] sm:$0xff]
      %v727 = vld [vmem:[%s1 + $0xad8] sm:$0xff]
      %v728 = vld [vmem:[%s1 + $0xae0] sm:$0xff]
      %v729 = vld [vmem:[%s1 + $0xae8] sm:$0xff]
      %v730 = vld [vmem:[%s1 + $0xaf0] sm:$0xff]
      %v731 = vld [vmem:[%s1 + $0xaf8] sm:$0xff]
      %v732 = vld [vmem:[%s1 + $0xb00] sm:$0xff]
      %v733 = vld [vmem:[%s1 + $0xb08] sm:$0xff]
      %v734 = vld [vmem:[%s1 + $0xb10] sm:$0xff]
      %v735 = vld [vmem:[%s1 + $0xb18] sm:$0xff]
      %v736 = vld [vmem:[%s1 + $0xb20] sm:$0xff]
      %v737 = vld [vmem:[%s1 + $0xb28] sm:$0xff]
      %v738 = vld [vmem:[%s1 + $0xb30] sm:$0xff]
      %v739 = vld [vmem:[%s1 + $0xb38] sm:$0xff]
      %v740 = vld [vmem:[%s1 + $0xb40] sm:$0xff]
      %v741 = vld [vmem:[%s1 + $0xb48] sm:$0xff]
      %v742 = vld [vmem:[%s1 + $0xb50] sm:$0xff]
      %v743 = vld [vmem:[%s1 + $0xb58] sm:$0xff]
      %v744 = vld [vmem:[%s1 + $0xb60] sm:$0xff]
      %v745 = vld [vmem:[%s1 + $0xb68] sm:$0xff]
      %v746 = vld [vmem:[%s1 + $0xb70] sm:$0xff]
      %v747 = vld [vmem:[%s1 + $0xb78] sm:$0xff]
      %v748 = vld [vmem:[%s1 + $0xb80] sm:$0xff]
      %v749 = vld [vmem:[%s1 + $0xb88] sm:$0xff]
      %v750 = vld [vmem:[%s1 + $0xb90] sm:$0xff]
      %v751 = vld [vmem:[%s1 + $0xb98] sm:$0xff]
      %v752 = vld [vmem:[%s1 + $0xba0] sm:$0xff]
      %v753 = vld [vmem:[%s1 + $0xba8] sm:$0xff]
      %v754 = vld [vmem:[%s1 + $0xbb0] sm:$0xff]
      %v755 = vld [vmem:[%s1 + $0xbb8] sm:$0xff]
      %v756 = vld [vmem:[%s1 + $0xbc0] sm:$0xff]
      %v757 = vld [vmem:[%s1 + $0xbc8] sm:$0xff]
      %v758 = vld [vmem:[%s1 + $0xbd0] sm:$0xff]
      %v759 = vld [vmem:[%s1 + $0xbd8] sm:$0xff]
      %v760 = vld [vmem:[%s1 + $0xbe0] sm:$0xff]
      %v761 = vld [vmem:[%s1 + $0xbe8] sm:$0xff]
      %v762 = vld [vmem:[%s1 + $0xbf0] sm:$0xff]
      %v763 = vld [vmem:[%s1 + $0xbf8] sm:$0xff]
      %v764 = vld [vmem:[%s1 + $0xc00] sm:$0xff]
      %v765 = vld [vmem:[%s1 + $0xc08] sm:$0xff]
      %v766 = vld [vmem:[%s1 + $0xc10] sm:$0xff]
      %v767 = vld [vmem:[%s1 + $0xc18] sm:$0xff]
      %v768 = vld [vmem:[%s1 + $0xc20] sm:$0xff]
      %v769 = vld [vmem:[%s1 + $0xc28] sm:$0xff]
      %v770 = vld [vmem:[%s1 + $0xc30] sm:$0xff]
      %v771 = vld [vmem:[%s1 + $0xc38] sm:$0xff]
      %v772 = vld [vmem:[%s1 + $0xc40] sm:$0xff]
      %v773 = vld [vmem:[%s1 + $0xc48] sm:$0xff]
      %v774 = vld [vmem:[%s1 + $0xc50] sm:$0xff]
      %v775 = vld [vmem:[%s1 + $0xc58] sm:$0xff]
      %v776 = vld [vmem:[%s1 + $0xc60] sm:$0xff]
      %v777 = vld [vmem:[%s1 + $0xc68] sm:$0xff]
      %v778 = vld [vmem:[%s1 + $0xc70] sm:$0xff]
      %v779 = vld [vmem:[%s1 + $0xc78] sm:$0xff]
      %v988 = vunpack.c.l.b16 %v172
      %v989 = vunpack.c.h.b16 %v172
      %v990 = vunpack.c.l.b16 %v173
      %v991 = vunpack.c.h.b16 %v173
      %v992 = vunpack.c.l.b16 %v174
      %v993 = vunpack.c.h.b16 %v174
      %v994 = vunpack.c.l.b16 %v175
      %v995 = vunpack.c.h.b16 %v175
      %v996 = vunpack.c.l.b16 %v176
      %v997 = vunpack.c.h.b16 %v176
      %v998 = vunpack.c.l.b16 %v177
      %v999 = vunpack.c.h.b16 %v177
      %v1000 = vunpack.c.l.b16 %v178
      %v1001 = vunpack.c.h.b16 %v178
      %v1002 = vunpack.c.l.b16 %v179
      %v1003 = vunpack.c.h.b16 %v179
      %v1004 = vunpack.c.l.b16 %v180
      %v1005 = vunpack.c.h.b16 %v180
      %v1006 = vunpack.c.l.b16 %v181
      %v1007 = vunpack.c.h.b16 %v181
      %v1008 = vunpack.c.l.b16 %v182
      %v1009 = vunpack.c.h.b16 %v182
      %v1010 = vunpack.c.l.b16 %v183
      %v1011 = vunpack.c.h.b16 %v183
      %v1012 = vunpack.c.l.b16 %v184
      %v1013 = vunpack.c.l.b16 %v185
      %v1014 = vunpack.c.h.b16 %v185
      %v1015 = vunpack.c.l.b16 %v186
      %v1016 = vunpack.c.h.b16 %v186
      %v1017 = vunpack.c.l.b16 %v187
      %v1018 = vunpack.c.h.b16 %v187
      %v1019 = vunpack.c.l.b16 %v188
      %v1020 = vunpack.c.h.b16 %v188
      %v1021 = vunpack.c.l.b16 %v189
      %v1022 = vunpack.c.h.b16 %v189
      %v1023 = vunpack.c.l.b16 %v190
      %v1024 = vunpack.c.h.b16 %v190
      %v1025 = vunpack.c.l.b16 %v191
      %v1026 = vunpack.c.h.b16 %v191
      %v1027 = vunpack.c.l.b16 %v192
      %v1028 = vunpack.c.h.b16 %v192
      %v1029 = vunpack.c.l.b16 %v193
      %v1030 = vunpack.c.h.b16 %v193
      %v1031 = vunpack.c.l.b16 %v194
      %v1032 = vunpack.c.h.b16 %v194
      %v1033 = vunpack.c.l.b16 %v195
      %v1034 = vunpack.c.h.b16 %v195
      %v1035 = vunpack.c.l.b16 %v196
      %v1036 = vunpack.c.h.b16 %v196
      %v1037 = vunpack.c.l.b16 %v197
      %v1038 = vunpack.c.l.b16 %v198
      %v1039 = vunpack.c.h.b16 %v198
      %v1040 = vunpack.c.l.b16 %v199
      %v1041 = vunpack.c.h.b16 %v199
      %v1042 = vunpack.c.l.b16 %v200
      %v1043 = vunpack.c.h.b16 %v200
      %v1044 = vunpack.c.l.b16 %v201
      %v1045 = vunpack.c.h.b16 %v201
      %v1046 = vunpack.c.l.b16 %v202
      %v1047 = vunpack.c.h.b16 %v202
      %v1048 = vunpack.c.l.b16 %v203
      %v1049 = vunpack.c.h.b16 %v203
      %v1050 = vunpack.c.l.b16 %v204
      %v1051 = vunpack.c.h.b16 %v204
      %v1052 = vunpack.c.l.b16 %v205
      %v1053 = vunpack.c.h.b16 %v205
      %v1054 = vunpack.c.l.b16 %v206
      %v1055 = vunpack.c.h.b16 %v206
      %v1056 = vunpack.c.l.b16 %v207
      %v1057 = vunpack.c.h.b16 %v207
      %v1058 = vunpack.c.l.b16 %v208
      %v1059 = vunpack.c.h.b16 %v208
      %v1060 = vunpack.c.l.b16 %v209
      %v1061 = vunpack.c.h.b16 %v209
      %v1062 = vunpack.c.l.b16 %v210
      %v1063 = vunpack.c.l.b16 %v211
      %v1064 = vunpack.c.h.b16 %v211
      %v1065 = vunpack.c.l.b16 %v212
      %v1066 = vunpack.c.h.b16 %v212
      %v1067 = vunpack.c.l.b16 %v213
      %v1068 = vunpack.c.h.b16 %v213
      %v1069 = vunpack.c.l.b16 %v214
      %v1070 = vunpack.c.h.b16 %v214
      %v1071 = vunpack.c.l.b16 %v215
      %v1072 = vunpack.c.h.b16 %v215
      %v1073 = vunpack.c.l.b16 %v216
      %v1074 = vunpack.c.h.b16 %v216
      %v1075 = vunpack.c.l.b16 %v217
      %v1076 = vunpack.c.h.b16 %v217
      %v1077 = vunpack.c.l.b16 %v218
      %v1078 = vunpack.c.h.b16 %v218
      %v1079 = vunpack.c.l.b16 %v219
      %v1080 = vunpack.c.h.b16 %v219
      %v1081 = vunpack.c.l.b16 %v220
      %v1082 = vunpack.c.h.b16 %v220
      %v1083 = vunpack.c.l.b16 %v221
      %v1084 = vunpack.c.h.b16 %v221
      %v1085 = vunpack.c.l.b16 %v222
      %v1086 = vunpack.c.h.b16 %v222
      %v1087 = vunpack.c.l.b16 %v223
      %v1088 = vunpack.c.l.b16 %v224
      %v1089 = vunpack.c.h.b16 %v224
      %v1090 = vunpack.c.l.b16 %v225
      %v1091 = vunpack.c.h.b16 %v225
      %v1092 = vunpack.c.l.b16 %v226
      %v1093 = vunpack.c.h.b16 %v226
      %v1094 = vunpack.c.l.b16 %v227
      %v1095 = vunpack.c.h.b16 %v227
      %v1096 = vunpack.c.l.b16 %v228
      %v1097 = vunpack.c.h.b16 %v228
      %v1098 = vunpack.c.l.b16 %v229
      %v1099 = vunpack.c.h.b16 %v229
      %v1100 = vunpack.c.l.b16 %v230
      %v1101 = vunpack.c.h.b16 %v230
      %v1102 = vunpack.c.l.b16 %v231
      %v1103 = vunpack.c.h.b16 %v231
      %v1104 = vunpack.c.l.b16 %v232
      %v1105 = vunpack.c.h.b16 %v232
      %v1106 = vunpack.c.l.b16 %v233
      %v1107 = vunpack.c.h.b16 %v233
      %v1108 = vunpack.c.l.b16 %v234
      %v1109 = vunpack.c.h.b16 %v234
      %v1110 = vunpack.c.l.b16 %v235
      %v1111 = vunpack.c.h.b16 %v235
      %v1112 = vunpack.c.l.b16 %v236
      %v1113 = vunpack.c.l.b16 %v237
      %v1114 = vunpack.c.h.b16 %v237
      %v1115 = vunpack.c.l.b16 %v238
      %v1116 = vunpack.c.h.b16 %v238
      %v1117 = vunpack.c.l.b16 %v239
      %v1118 = vunpack.c.h.b16 %v239
      %v1119 = vunpack.c.l.b16 %v240
      %v1120 = vunpack.c.h.b16 %v240
      %v1121 = vunpack.c.l.b16 %v241
      %v1122 = vunpack.c.h.b16 %v241
      %v1123 = vunpack.c.l.b16 %v242
      %v1124 = vunpack.c.h.b16 %v242
      %v1125 = vunpack.c.l.b16 %v243
      %v1126 = vunpack.c.h.b16 %v243
      %v1127 = vunpack.c.l.b16 %v244
      %v1128 = vunpack.c.h.b16 %v244
      %v1129 = vunpack.c.l.b16 %v245
      %v1130 = vunpack.c.h.b16 %v245
      %v1131 = vunpack.c.l.b16 %v246
      %v1132 = vunpack.c.h.b16 %v246
      %v1133 = vunpack.c.l.b16 %v247
      %v1134 = vunpack.c.h.b16 %v247
      %v1135 = vunpack.c.l.b16 %v248
      %v1136 = vunpack.c.h.b16 %v248
      %v1137 = vunpack.c.l.b16 %v249
      %v1138 = vunpack.c.l.b16 %v250
      %v1139 = vunpack.c.h.b16 %v250
      %v1140 = vunpack.c.l.b16 %v251
      %v1141 = vunpack.c.h.b16 %v251
      %v1142 = vunpack.c.l.b16 %v252
      %v1143 = vunpack.c.h.b16 %v252
      %v1144 = vunpack.c.l.b16 %v253
      %v1145 = vunpack.c.h.b16 %v253
      %v1146 = vunpack.c.l.b16 %v254
      %v1147 = vunpack.c.h.b16 %v254
      %v1148 = vunpack.c.l.b16 %v255
      %v1149 = vunpack.c.h.b16 %v255
      %v1150 = vunpack.c.l.b16 %v256
      %v1151 = vunpack.c.h.b16 %v256
      %v1152 = vunpack.c.l.b16 %v257
      %v1153 = vunpack.c.h.b16 %v257
      %v1154 = vunpack.c.l.b16 %v258
      %v1155 = vunpack.c.h.b16 %v258
      %v1156 = vunpack.c.l.b16 %v259
      %v1157 = vunpack.c.h.b16 %v259
      %v1158 = vunpack.c.l.b16 %v260
      %v1159 = vunpack.c.h.b16 %v260
      %v1160 = vunpack.c.l.b16 %v261
      %v1161 = vunpack.c.h.b16 %v261
      %v1162 = vunpack.c.l.b16 %v262
      %v1163 = vunpack.c.l.b16 %v263
      %v1164 = vunpack.c.h.b16 %v263
      %v1165 = vunpack.c.l.b16 %v264
      %v1166 = vunpack.c.h.b16 %v264
      %v1167 = vunpack.c.l.b16 %v265
      %v1168 = vunpack.c.h.b16 %v265
      %v1169 = vunpack.c.l.b16 %v266
      %v1170 = vunpack.c.h.b16 %v266
      %v1171 = vunpack.c.l.b16 %v267
      %v1172 = vunpack.c.h.b16 %v267
      %v1173 = vunpack.c.l.b16 %v268
      %v1174 = vunpack.c.h.b16 %v268
      %v1175 = vunpack.c.l.b16 %v269
      %v1176 = vunpack.c.h.b16 %v269
      %v1177 = vunpack.c.l.b16 %v270
      %v1178 = vunpack.c.h.b16 %v270
      %v1179 = vunpack.c.l.b16 %v271
      %v1180 = vunpack.c.h.b16 %v271
      %v1181 = vunpack.c.l.b16 %v272
      %v1182 = vunpack.c.h.b16 %v272
      %v1183 = vunpack.c.l.b16 %v273
      %v1184 = vunpack.c.h.b16 %v273
      %v1185 = vunpack.c.l.b16 %v274
      %v1186 = vunpack.c.h.b16 %v274
      %v1187 = vunpack.c.l.b16 %v275
      %v1188 = vunpack.c.l.b16 %v276
      %v1189 = vunpack.c.h.b16 %v276
      %v1190 = vunpack.c.l.b16 %v277
      %v1191 = vunpack.c.h.b16 %v277
      %v1192 = vunpack.c.l.b16 %v278
      %v1193 = vunpack.c.h.b16 %v278
      %v1194 = vunpack.c.l.b16 %v279
      %v1195 = vunpack.c.h.b16 %v279
      %v1196 = vunpack.c.l.b16 %v280
      %v1197 = vunpack.c.h.b16 %v280
      %v1198 = vunpack.c.l.b16 %v281
      %v1199 = vunpack.c.h.b16 %v281
      %v1200 = vunpack.c.l.b16 %v282
      %v1201 = vunpack.c.h.b16 %v282
      %v1202 = vunpack.c.l.b16 %v283
      %v1203 = vunpack.c.h.b16 %v283
      %v1204 = vunpack.c.l.b16 %v284
      %v1205 = vunpack.c.h.b16 %v284
      %v1206 = vunpack.c.l.b16 %v285
      %v1207 = vunpack.c.h.b16 %v285
      %v1208 = vunpack.c.l.b16 %v286
      %v1209 = vunpack.c.h.b16 %v286
      %v1210 = vunpack.c.l.b16 %v287
      %v1211 = vunpack.c.h.b16 %v287
      %v1212 = vunpack.c.l.b16 %v288
      %v1213 = vunpack.c.l.b16 %v289
      %v1214 = vunpack.c.h.b16 %v289
      %v1215 = vunpack.c.l.b16 %v290
      %v1216 = vunpack.c.h.b16 %v290
      %v1217 = vunpack.c.l.b16 %v291
      %v1218 = vunpack.c.h.b16 %v291
      %v1219 = vunpack.c.l.b16 %v292
      %v1220 = vunpack.c.h.b16 %v292
      %v1221 = vunpack.c.l.b16 %v293
      %v1222 = vunpack.c.h.b16 %v293
      %v1223 = vunpack.c.l.b16 %v294
      %v1224 = vunpack.c.h.b16 %v294
      %v1225 = vunpack.c.l.b16 %v295
      %v1226 = vunpack.c.h.b16 %v295
      %v1227 = vunpack.c.l.b16 %v296
      %v1228 = vunpack.c.h.b16 %v296
      %v1229 = vunpack.c.l.b16 %v297
      %v1230 = vunpack.c.h.b16 %v297
      %v1231 = vunpack.c.l.b16 %v298
      %v1232 = vunpack.c.h.b16 %v298
      %v1233 = vunpack.c.l.b16 %v299
      %v1234 = vunpack.c.h.b16 %v299
      %v1235 = vunpack.c.l.b16 %v300
      %v1236 = vunpack.c.h.b16 %v300
      %v1237 = vunpack.c.l.b16 %v301
      %v1238 = vunpack.c.l.b16 %v302
      %v1239 = vunpack.c.h.b16 %v302
      %v1240 = vunpack.c.l.b16 %v303
      %v1241 = vunpack.c.h.b16 %v303
      %v1242 = vunpack.c.l.b16 %v304
      %v1243 = vunpack.c.h.b16 %v304
      %v1244 = vunpack.c.l.b16 %v305
      %v1245 = vunpack.c.h.b16 %v305
      %v1246 = vunpack.c.l.b16 %v306
      %v1247 = vunpack.c.h.b16 %v306
      %v1248 = vunpack.c.l.b16 %v307
      %v1249 = vunpack.c.h.b16 %v307
      %v1250 = vunpack.c.l.b16 %v308
      %v1251 = vunpack.c.h.b16 %v308
      %v1252 = vunpack.c.l.b16 %v309
      %v1253 = vunpack.c.h.b16 %v309
      %v1254 = vunpack.c.l.b16 %v310
      %v1255 = vunpack.c.h.b16 %v310
      %v1256 = vunpack.c.l.b16 %v311
      %v1257 = vunpack.c.h.b16 %v311
      %v1258 = vunpack.c.l.b16 %v312
      %v1259 = vunpack.c.h.b16 %v312
      %v1260 = vunpack.c.l.b16 %v313
      %v1261 = vunpack.c.h.b16 %v313
      %v1262 = vunpack.c.l.b16 %v314
      %v1263 = vunpack.c.l.b16 %v315
      %v1264 = vunpack.c.h.b16 %v315
      %v1265 = vunpack.c.l.b16 %v316
      %v1266 = vunpack.c.h.b16 %v316
      %v1267 = vunpack.c.l.b16 %v317
      %v1268 = vunpack.c.h.b16 %v317
      %v1269 = vunpack.c.l.b16 %v318
      %v1270 = vunpack.c.h.b16 %v318
      %v1271 = vunpack.c.l.b16 %v319
      %v1272 = vunpack.c.h.b16 %v319
      %v1273 = vunpack.c.l.b16 %v320
      %v1274 = vunpack.c.h.b16 %v320
      %v1275 = vunpack.c.l.b16 %v321
      %v1276 = vunpack.c.h.b16 %v321
      %v1277 = vunpack.c.l.b16 %v322
      %v1278 = vunpack.c.h.b16 %v322
      %v1279 = vunpack.c.l.b16 %v323
      %v1280 = vunpack.c.h.b16 %v323
      %v1281 = vunpack.c.l.b16 %v324
      %v1282 = vunpack.c.h.b16 %v324
      %v1283 = vunpack.c.l.b16 %v325
      %v1284 = vunpack.c.h.b16 %v325
      %v1285 = vunpack.c.l.b16 %v326
      %v1286 = vunpack.c.h.b16 %v326
      %v1287 = vunpack.c.l.b16 %v327
      %v1288 = vunpack.c.l.b16 %v328
      %v1289 = vunpack.c.h.b16 %v328
      %v1290 = vunpack.c.l.b16 %v329
      %v1291 = vunpack.c.h.b16 %v329
      %v1292 = vunpack.c.l.b16 %v330
      %v1293 = vunpack.c.h.b16 %v330
      %v1294 = vunpack.c.l.b16 %v331
      %v1295 = vunpack.c.h.b16 %v331
      %v1296 = vunpack.c.l.b16 %v332
      %v1297 = vunpack.c.h.b16 %v332
      %v1298 = vunpack.c.l.b16 %v333
      %v1299 = vunpack.c.h.b16 %v333
      %v1300 = vunpack.c.l.b16 %v334
      %v1301 = vunpack.c.h.b16 %v334
      %v1302 = vunpack.c.l.b16 %v335
      %v1303 = vunpack.c.h.b16 %v335
      %v1304 = vunpack.c.l.b16 %v336
      %v1305 = vunpack.c.h.b16 %v336
      %v1306 = vunpack.c.l.b16 %v337
      %v1307 = vunpack.c.h.b16 %v337
      %v1308 = vunpack.c.l.b16 %v338
      %v1309 = vunpack.c.h.b16 %v338
      %v1310 = vunpack.c.l.b16 %v339
      %v1311 = vunpack.c.h.b16 %v339
      %v1312 = vunpack.c.l.b16 %v340
      %v1313 = vunpack.c.l.b16 %v341
      %v1314 = vunpack.c.h.b16 %v341
      %v1315 = vunpack.c.l.b16 %v342
      %v1316 = vunpack.c.h.b16 %v342
      %v1317 = vunpack.c.l.b16 %v343
      %v1318 = vunpack.c.h.b16 %v343
      %v1319 = vunpack.c.l.b16 %v344
      %v1320 = vunpack.c.h.b16 %v344
      %v1321 = vunpack.c.l.b16 %v345
      %v1322 = vunpack.c.h.b16 %v345
      %v1323 = vunpack.c.l.b16 %v346
      %v1324 = vunpack.c.h.b16 %v346
      %v1325 = vunpack.c.l.b16 %v347
      %v1326 = vunpack.c.h.b16 %v347
      %v1327 = vunpack.c.l.b16 %v348
      %v1328 = vunpack.c.h.b16 %v348
      %v1329 = vunpack.c.l.b16 %v349
      %v1330 = vunpack.c.h.b16 %v349
      %v1331 = vunpack.c.l.b16 %v350
      %v1332 = vunpack.c.h.b16 %v350
      %v1333 = vunpack.c.l.b16 %v351
      %v1334 = vunpack.c.h.b16 %v351
      %v1335 = vunpack.c.l.b16 %v352
      %v1336 = vunpack.c.h.b16 %v352
      %v1337 = vunpack.c.l.b16 %v353
      %v1338 = vunpack.c.l.b16 %v354
      %v1339 = vunpack.c.h.b16 %v354
      %v1340 = vunpack.c.l.b16 %v355
      %v1341 = vunpack.c.h.b16 %v355
      %v1342 = vunpack.c.l.b16 %v356
      %v1343 = vunpack.c.h.b16 %v356
      %v1344 = vunpack.c.l.b16 %v357
      %v1345 = vunpack.c.h.b16 %v357
      %v1346 = vunpack.c.l.b16 %v358
      %v1347 = vunpack.c.h.b16 %v358
      %v1348 = vunpack.c.l.b16 %v359
      %v1349 = vunpack.c.h.b16 %v359
      %v1350 = vunpack.c.l.b16 %v360
      %v1351 = vunpack.c.h.b16 %v360
      %v1352 = vunpack.c.l.b16 %v361
      %v1353 = vunpack.c.h.b16 %v361
      %v1354 = vunpack.c.l.b16 %v362
      %v1355 = vunpack.c.h.b16 %v362
      %v1356 = vunpack.c.l.b16 %v363
      %v1357 = vunpack.c.h.b16 %v363
      %v1358 = vunpack.c.l.b16 %v364
      %v1359 = vunpack.c.h.b16 %v364
      %v1360 = vunpack.c.l.b16 %v365
      %v1361 = vunpack.c.h.b16 %v365
      %v1362 = vunpack.c.l.b16 %v366
      %v1363 = vunpack.c.l.b16 %v367
      %v1364 = vunpack.c.h.b16 %v367
      %v1365 = vunpack.c.l.b16 %v368
      %v1366 = vunpack.c.h.b16 %v368
      %v1367 = vunpack.c.l.b16 %v369
      %v1368 = vunpack.c.h.b16 %v369
      %v1369 = vunpack.c.l.b16 %v370
      %v1370 = vunpack.c.h.b16 %v370
      %v1371 = vunpack.c.l.b16 %v371
      %v1372 = vunpack.c.h.b16 %v371
      %v1373 = vunpack.c.l.b16 %v372
      %v1374 = vunpack.c.h.b16 %v372
      %v1375 = vunpack.c.l.b16 %v373
      %v1376 = vunpack.c.h.b16 %v373
      %v1377 = vunpack.c.l.b16 %v374
      %v1378 = vunpack.c.h.b16 %v374
      %v1379 = vunpack.c.l.b16 %v375
      %v1380 = vunpack.c.h.b16 %v375
      %v1381 = vunpack.c.l.b16 %v376
      %v1382 = vunpack.c.h.b16 %v376
      %v1383 = vunpack.c.l.b16 %v377
      %v1384 = vunpack.c.h.b16 %v377
      %v1385 = vunpack.c.l.b16 %v378
      %v1386 = vunpack.c.h.b16 %v378
      %v1387 = vunpack.c.l.b16 %v379
      %v1388 = vpack.c.b16 %v1013, %v988
      %v1389 = vpack.c.b16 %v1014, %v989
      %v1390 = vpack.c.b16 %v1015, %v990
      %v1391 = vpack.c.b16 %v1016, %v991
      %v1392 = vpack.c.b16 %v1017, %v992
      %v1393 = vpack.c.b16 %v1018, %v993
      %v1394 = vpack.c.b16 %v1019, %v994
      %v1395 = vpack.c.b16 %v1020, %v995
      %v1396 = vpack.c.b16 %v1021, %v996
      %v1397 = vpack.c.b16 %v1022, %v997
      %v1398 = vpack.c.b16 %v1023, %v998
      %v1399 = vpack.c.b16 %v1024, %v999
      %v1400 = vpack.c.b16 %v1025, %v1000
      %v1401 = vpack.c.b16 %v1026, %v1001
      %v1402 = vpack.c.b16 %v1027, %v1002
      %v1403 = vpack.c.b16 %v1028, %v1003
      %v1404 = vpack.c.b16 %v1029, %v1004
      %v1405 = vpack.c.b16 %v1030, %v1005
      %v1406 = vpack.c.b16 %v1031, %v1006
      %v1407 = vpack.c.b16 %v1032, %v1007
      %v1408 = vpack.c.b16 %v1033, %v1008
      %v1409 = vpack.c.b16 %v1034, %v1009
      %v1410 = vpack.c.b16 %v1035, %v1010
      %v1411 = vpack.c.b16 %v1036, %v1011
      %v1412 = vpack.c.b16 %v1037, %v1012
      %v1413 = vpack.c.b16 %v1063, %v1038
      %v1414 = vpack.c.b16 %v1064, %v1039
      %v1415 = vpack.c.b16 %v1065, %v1040
      %v1416 = vpack.c.b16 %v1066, %v1041
      %v1417 = vpack.c.b16 %v1067, %v1042
      %v1418 = vpack.c.b16 %v1068, %v1043
      %v1419 = vpack.c.b16 %v1069, %v1044
      %v1420 = vpack.c.b16 %v1070, %v1045
      %v1421 = vpack.c.b16 %v1071, %v1046
      %v1422 = vpack.c.b16 %v1072, %v1047
      %v1423 = vpack.c.b16 %v1073, %v1048
      %v1424 = vpack.c.b16 %v1074, %v1049
      %v1425 = vpack.c.b16 %v1075, %v1050
      %v1426 = vpack.c.b16 %v1076, %v1051
      %v1427 = vpack.c.b16 %v1077, %v1052
      %v1428 = vpack.c.b16 %v1078, %v1053
      %v1429 = vpack.c.b16 %v1079, %v1054
      %v1430 = vpack.c.b16 %v1080, %v1055
      %v1431 = vpack.c.b16 %v1081, %v1056
      %v1432 = vpack.c.b16 %v1082, %v1057
      %v1433 = vpack.c.b16 %v1083, %v1058
      %v1434 = vpack.c.b16 %v1084, %v1059
      %v1435 = vpack.c.b16 %v1085, %v1060
      %v1436 = vpack.c.b16 %v1086, %v1061
      %v1437 = vpack.c.b16 %v1087, %v1062
      %v1438 = vpack.c.b16 %v1113, %v1088
      %v1439 = vpack.c.b16 %v1114, %v1089
      %v1440 = vpack.c.b16 %v1115, %v1090
      %v1441 = vpack.c.b16 %v1116, %v1091
      %v1442 = vpack.c.b16 %v1117, %v1092
      %v1443 = vpack.c.b16 %v1118, %v1093
      %v1444 = vpack.c.b16 %v1119, %v1094
      %v1445 = vpack.c.b16 %v1120, %v1095
      %v1446 = vpack.c.b16 %v1121, %v1096
      %v1447 = vpack.c.b16 %v1122, %v1097
      %v1448 = vpack.c.b16 %v1123, %v1098
      %v1449 = vpack.c.b16 %v1124, %v1099
      %v1450 = vpack.c.b16 %v1125, %v1100
      %v1451 = vpack.c.b16 %v1126, %v1101
      %v1452 = vpack.c.b16 %v1127, %v1102
      %v1453 = vpack.c.b16 %v1128, %v1103
      %v1454 = vpack.c.b16 %v1129, %v1104
      %v1455 = vpack.c.b16 %v1130, %v1105
      %v1456 = vpack.c.b16 %v1131, %v1106
      %v1457 = vpack.c.b16 %v1132, %v1107
      %v1458 = vpack.c.b16 %v1133, %v1108
      %v1459 = vpack.c.b16 %v1134, %v1109
      %v1460 = vpack.c.b16 %v1135, %v1110
      %v1461 = vpack.c.b16 %v1136, %v1111
      %v1462 = vpack.c.b16 %v1137, %v1112
      %v1463 = vpack.c.b16 %v1163, %v1138
      %v1464 = vpack.c.b16 %v1164, %v1139
      %v1465 = vpack.c.b16 %v1165, %v1140
      %v1466 = vpack.c.b16 %v1166, %v1141
      %v1467 = vpack.c.b16 %v1167, %v1142
      %v1468 = vpack.c.b16 %v1168, %v1143
      %v1469 = vpack.c.b16 %v1169, %v1144
      %v1470 = vpack.c.b16 %v1170, %v1145
      %v1471 = vpack.c.b16 %v1171, %v1146
      %v1472 = vpack.c.b16 %v1172, %v1147
      %v1473 = vpack.c.b16 %v1173, %v1148
      %v1474 = vpack.c.b16 %v1174, %v1149
      %v1475 = vpack.c.b16 %v1175, %v1150
      %v1476 = vpack.c.b16 %v1176, %v1151
      %v1477 = vpack.c.b16 %v1177, %v1152
      %v1478 = vpack.c.b16 %v1178, %v1153
      %v1479 = vpack.c.b16 %v1179, %v1154
      %v1480 = vpack.c.b16 %v1180, %v1155
      %v1481 = vpack.c.b16 %v1181, %v1156
      %v1482 = vpack.c.b16 %v1182, %v1157
      %v1483 = vpack.c.b16 %v1183, %v1158
      %v1484 = vpack.c.b16 %v1184, %v1159
      %v1485 = vpack.c.b16 %v1185, %v1160
      %v1486 = vpack.c.b16 %v1186, %v1161
      %v1487 = vpack.c.b16 %v1187, %v1162
      %v1488 = vpack.c.b16 %v1213, %v1188
      %v1489 = vpack.c.b16 %v1214, %v1189
      %v1490 = vpack.c.b16 %v1215, %v1190
      %v1491 = vpack.c.b16 %v1216, %v1191
      %v1492 = vpack.c.b16 %v1217, %v1192
      %v1493 = vpack.c.b16 %v1218, %v1193
      %v1494 = vpack.c.b16 %v1219, %v1194
      %v1495 = vpack.c.b16 %v1220, %v1195
      %v1496 = vpack.c.b16 %v1221, %v1196
      %v1497 = vpack.c.b16 %v1222, %v1197
      %v1498 = vpack.c.b16 %v1223, %v1198
      %v1499 = vpack.c.b16 %v1224, %v1199
      %v1500 = vpack.c.b16 %v1225, %v1200
      %v1501 = vpack.c.b16 %v1226, %v1201
      %v1502 = vpack.c.b16 %v1227, %v1202
      %v1503 = vpack.c.b16 %v1228, %v1203
      %v1504 = vpack.c.b16 %v1229, %v1204
      %v1505 = vpack.c.b16 %v1230, %v1205
      %v1506 = vpack.c.b16 %v1231, %v1206
      %v1507 = vpack.c.b16 %v1232, %v1207
      %v1508 = vpack.c.b16 %v1233, %v1208
      %v1509 = vpack.c.b16 %v1234, %v1209
      %v1510 = vpack.c.b16 %v1235, %v1210
      %v1511 = vpack.c.b16 %v1236, %v1211
      %v1512 = vpack.c.b16 %v1237, %v1212
      %v1513 = vpack.c.b16 %v1263, %v1238
      %v1514 = vpack.c.b16 %v1264, %v1239
      %v1515 = vpack.c.b16 %v1265, %v1240
      %v1516 = vpack.c.b16 %v1266, %v1241
      %v1517 = vpack.c.b16 %v1267, %v1242
      %v1518 = vpack.c.b16 %v1268, %v1243
      %v1519 = vpack.c.b16 %v1269, %v1244
      %v1520 = vpack.c.b16 %v1270, %v1245
      %v1521 = vpack.c.b16 %v1271, %v1246
      %v1522 = vpack.c.b16 %v1272, %v1247
      %v1523 = vpack.c.b16 %v1273, %v1248
      %v1524 = vpack.c.b16 %v1274, %v1249
      %v1525 = vpack.c.b16 %v1275, %v1250
      %v1526 = vpack.c.b16 %v1276, %v1251
      %v1527 = vpack.c.b16 %v1277, %v1252
      %v1528 = vpack.c.b16 %v1278, %v1253
      %v1529 = vpack.c.b16 %v1279, %v1254
      %v1530 = vpack.c.b16 %v1280, %v1255
      %v1531 = vpack.c.b16 %v1281, %v1256
      %v1532 = vpack.c.b16 %v1282, %v1257
      %v1533 = vpack.c.b16 %v1283, %v1258
      %v1534 = vpack.c.b16 %v1284, %v1259
      %v1535 = vpack.c.b16 %v1285, %v1260
      %v1536 = vpack.c.b16 %v1286, %v1261
      %v1537 = vpack.c.b16 %v1287, %v1262
      %v1538 = vpack.c.b16 %v1313, %v1288
      %v1539 = vpack.c.b16 %v1314, %v1289
      %v1540 = vpack.c.b16 %v1315, %v1290
      %v1541 = vpack.c.b16 %v1316, %v1291
      %v1542 = vpack.c.b16 %v1317, %v1292
      %v1543 = vpack.c.b16 %v1318, %v1293
      %v1544 = vpack.c.b16 %v1319, %v1294
      %v1545 = vpack.c.b16 %v1320, %v1295
      %v1546 = vpack.c.b16 %v1321, %v1296
      %v1547 = vpack.c.b16 %v1322, %v1297
      %v1548 = vpack.c.b16 %v1323, %v1298
      %v1549 = vpack.c.b16 %v1324, %v1299
      %v1550 = vpack.c.b16 %v1325, %v1300
      %v1551 = vpack.c.b16 %v1326, %v1301
      %v1552 = vpack.c.b16 %v1327, %v1302
      %v1553 = vpack.c.b16 %v1328, %v1303
      %v1554 = vpack.c.b16 %v1329, %v1304
      %v1555 = vpack.c.b16 %v1330, %v1305
      %v1556 = vpack.c.b16 %v1331, %v1306
      %v1557 = vpack.c.b16 %v1332, %v1307
      %v1558 = vpack.c.b16 %v1333, %v1308
      %v1559 = vpack.c.b16 %v1334, %v1309
      %v1560 = vpack.c.b16 %v1335, %v1310
      %v1561 = vpack.c.b16 %v1336, %v1311
      %v1562 = vpack.c.b16 %v1337, %v1312
      %v1563 = vpack.c.b16 %v1363, %v1338
      %v1564 = vpack.c.b16 %v1364, %v1339
      %v1565 = vpack.c.b16 %v1365, %v1340
      %v1566 = vpack.c.b16 %v1366, %v1341
      %v1567 = vpack.c.b16 %v1367, %v1342
      %v1568 = vpack.c.b16 %v1368, %v1343
      %v1569 = vpack.c.b16 %v1369, %v1344
      %v1570 = vpack.c.b16 %v1370, %v1345
      %v1571 = vpack.c.b16 %v1371, %v1346
      %v1572 = vpack.c.b16 %v1372, %v1347
      %v1573 = vpack.c.b16 %v1373, %v1348
      %v1574 = vpack.c.b16 %v1374, %v1349
      %v1575 = vpack.c.b16 %v1375, %v1350
      %v1576 = vpack.c.b16 %v1376, %v1351
      %v1577 = vpack.c.b16 %v1377, %v1352
      %v1578 = vpack.c.b16 %v1378, %v1353
      %v1579 = vpack.c.b16 %v1379, %v1354
      %v1580 = vpack.c.b16 %v1380, %v1355
      %v1581 = vpack.c.b16 %v1381, %v1356
      %v1582 = vpack.c.b16 %v1382, %v1357
      %v1583 = vpack.c.b16 %v1383, %v1358
      %v1584 = vpack.c.b16 %v1384, %v1359
      %v1585 = vpack.c.b16 %v1385, %v1360
      %v1586 = vpack.c.b16 %v1386, %v1361
      %v1587 = vpack.c.b16 %v1387, %v1362
      %v2188 = vunpack.c.l.b16 %v380
      %v2189 = vunpack.c.h.b16 %v380
      %v2190 = vunpack.c.l.b16 %v381
      %v2191 = vunpack.c.h.b16 %v381
      %v2192 = vunpack.c.l.b16 %v382
      %v2193 = vunpack.c.h.b16 %v382
      %v2194 = vunpack.c.l.b16 %v383
      %v2195 = vunpack.c.h.b16 %v383
      %v2196 = vunpack.c.l.b16 %v384
      %v2197 = vunpack.c.h.b16 %v384
      %v2198 = vunpack.c.l.b16 %v385
      %v2199 = vunpack.c.h.b16 %v385
      %v2200 = vunpack.c.l.b16 %v386
      %v2201 = vunpack.c.h.b16 %v386
      %v2202 = vunpack.c.l.b16 %v387
      %v2203 = vunpack.c.h.b16 %v387
      %v2204 = vunpack.c.l.b16 %v388
      %v2205 = vunpack.c.h.b16 %v388
      %v2206 = vunpack.c.l.b16 %v389
      %v2207 = vunpack.c.h.b16 %v389
      %v2208 = vunpack.c.l.b16 %v390
      %v2209 = vunpack.c.h.b16 %v390
      %v2210 = vunpack.c.l.b16 %v391
      %v2211 = vunpack.c.h.b16 %v391
      %v2212 = vunpack.c.l.b16 %v392
      %v2213 = vunpack.c.h.b16 %v392
      %v2214 = vunpack.c.l.b16 %v393
      %v2215 = vunpack.c.h.b16 %v393
      %v2216 = vunpack.c.l.b16 %v394
      %v2217 = vunpack.c.h.b16 %v394
      %v2218 = vunpack.c.l.b16 %v395
      %v2219 = vunpack.c.h.b16 %v395
      %v2220 = vunpack.c.l.b16 %v396
      %v2221 = vunpack.c.h.b16 %v396
      %v2222 = vunpack.c.l.b16 %v397
      %v2223 = vunpack.c.h.b16 %v397
      %v2224 = vunpack.c.l.b16 %v398
      %v2225 = vunpack.c.h.b16 %v398
      %v2226 = vunpack.c.l.b16 %v399
      %v2227 = vunpack.c.h.b16 %v399
      %v2228 = vunpack.c.l.b16 %v400
      %v2229 = vunpack.c.h.b16 %v400
      %v2230 = vunpack.c.l.b16 %v401
      %v2231 = vunpack.c.h.b16 %v401
      %v2232 = vunpack.c.l.b16 %v402
      %v2233 = vunpack.c.h.b16 %v402
      %v2234 = vunpack.c.l.b16 %v403
      %v2235 = vunpack.c.h.b16 %v403
      %v2236 = vunpack.c.l.b16 %v404
      %v2237 = vunpack.c.h.b16 %v404
      %v2238 = vunpack.c.l.b16 %v405
      %v2239 = vunpack.c.h.b16 %v405
      %v2240 = vunpack.c.l.b16 %v406
      %v2241 = vunpack.c.h.b16 %v406
      %v2242 = vunpack.c.l.b16 %v407
      %v2243 = vunpack.c.h.b16 %v407
      %v2244 = vunpack.c.l.b16 %v408
      %v2245 = vunpack.c.h.b16 %v408
      %v2246 = vunpack.c.l.b16 %v409
      %v2247 = vunpack.c.h.b16 %v409
      %v2248 = vunpack.c.l.b16 %v410
      %v2249 = vunpack.c.h.b16 %v410
      %v2250 = vunpack.c.l.b16 %v411
      %v2251 = vunpack.c.h.b16 %v411
      %v2252 = vunpack.c.l.b16 %v412
      %v2253 = vunpack.c.h.b16 %v412
      %v2254 = vunpack.c.l.b16 %v413
      %v2255 = vunpack.c.h.b16 %v413
      %v2256 = vunpack.c.l.b16 %v414
      %v2257 = vunpack.c.h.b16 %v414
      %v2258 = vunpack.c.l.b16 %v415
      %v2259 = vunpack.c.h.b16 %v415
      %v2260 = vunpack.c.l.b16 %v416
      %v2261 = vunpack.c.h.b16 %v416
      %v2262 = vunpack.c.l.b16 %v417
      %v2263 = vunpack.c.h.b16 %v417
      %v2264 = vunpack.c.l.b16 %v418
      %v2265 = vunpack.c.h.b16 %v418
      %v2266 = vunpack.c.l.b16 %v419
      %v2267 = vunpack.c.h.b16 %v419
      %v2268 = vunpack.c.l.b16 %v420
      %v2269 = vunpack.c.h.b16 %v420
      %v2270 = vunpack.c.l.b16 %v421
      %v2271 = vunpack.c.h.b16 %v421
      %v2272 = vunpack.c.l.b16 %v422
      %v2273 = vunpack.c.h.b16 %v422
      %v2274 = vunpack.c.l.b16 %v423
      %v2275 = vunpack.c.h.b16 %v423
      %v2276 = vunpack.c.l.b16 %v424
      %v2277 = vunpack.c.h.b16 %v424
      %v2278 = vunpack.c.l.b16 %v425
      %v2279 = vunpack.c.h.b16 %v425
      %v2280 = vunpack.c.l.b16 %v426
      %v2281 = vunpack.c.h.b16 %v426
      %v2282 = vunpack.c.l.b16 %v427
      %v2283 = vunpack.c.h.b16 %v427
      %v2284 = vunpack.c.l.b16 %v428
      %v2285 = vunpack.c.h.b16 %v428
      %v2286 = vunpack.c.l.b16 %v429
      %v2287 = vunpack.c.h.b16 %v429
      %v2288 = vunpack.c.l.b16 %v430
      %v2289 = vunpack.c.h.b16 %v430
      %v2290 = vunpack.c.l.b16 %v431
      %v2291 = vunpack.c.h.b16 %v431
      %v2292 = vunpack.c.l.b16 %v432
      %v2293 = vunpack.c.h.b16 %v432
      %v2294 = vunpack.c.l.b16 %v433
      %v2295 = vunpack.c.h.b16 %v433
      %v2296 = vunpack.c.l.b16 %v434
      %v2297 = vunpack.c.h.b16 %v434
      %v2298 = vunpack.c.l.b16 %v435
      %v2299 = vunpack.c.h.b16 %v435
      %v2300 = vunpack.c.l.b16 %v436
      %v2301 = vunpack.c.h.b16 %v436
      %v2302 = vunpack.c.l.b16 %v437
      %v2303 = vunpack.c.h.b16 %v437
      %v2304 = vunpack.c.l.b16 %v438
      %v2305 = vunpack.c.h.b16 %v438
      %v2306 = vunpack.c.l.b16 %v439
      %v2307 = vunpack.c.h.b16 %v439
      %v2308 = vunpack.c.l.b16 %v440
      %v2309 = vunpack.c.h.b16 %v440
      %v2310 = vunpack.c.l.b16 %v441
      %v2311 = vunpack.c.h.b16 %v441
      %v2312 = vunpack.c.l.b16 %v442
      %v2313 = vunpack.c.h.b16 %v442
      %v2314 = vunpack.c.l.b16 %v443
      %v2315 = vunpack.c.h.b16 %v443
      %v2316 = vunpack.c.l.b16 %v444
      %v2317 = vunpack.c.h.b16 %v444
      %v2318 = vunpack.c.l.b16 %v445
      %v2319 = vunpack.c.h.b16 %v445
      %v2320 = vunpack.c.l.b16 %v446
      %v2321 = vunpack.c.h.b16 %v446
      %v2322 = vunpack.c.l.b16 %v447
      %v2323 = vunpack.c.h.b16 %v447
      %v2324 = vunpack.c.l.b16 %v448
      %v2325 = vunpack.c.h.b16 %v448
      %v2326 = vunpack.c.l.b16 %v449
      %v2327 = vunpack.c.h.b16 %v449
      %v2328 = vunpack.c.l.b16 %v450
      %v2329 = vunpack.c.h.b16 %v450
      %v2330 = vunpack.c.l.b16 %v451
      %v2331 = vunpack.c.h.b16 %v451
      %v2332 = vunpack.c.l.b16 %v452
      %v2333 = vunpack.c.h.b16 %v452
      %v2334 = vunpack.c.l.b16 %v453
      %v2335 = vunpack.c.h.b16 %v453
      %v2336 = vunpack.c.l.b16 %v454
      %v2337 = vunpack.c.h.b16 %v454
      %v2338 = vunpack.c.l.b16 %v455
      %v2339 = vunpack.c.h.b16 %v455
      %v2340 = vunpack.c.l.b16 %v456
      %v2341 = vunpack.c.h.b16 %v456
      %v2342 = vunpack.c.l.b16 %v457
      %v2343 = vunpack.c.h.b16 %v457
      %v2344 = vunpack.c.l.b16 %v458
      %v2345 = vunpack.c.h.b16 %v458
      %v2346 = vunpack.c.l.b16 %v459
      %v2347 = vunpack.c.h.b16 %v459
      %v2348 = vunpack.c.l.b16 %v460
      %v2349 = vunpack.c.h.b16 %v460
      %v2350 = vunpack.c.l.b16 %v461
      %v2351 = vunpack.c.h.b16 %v461
      %v2352 = vunpack.c.l.b16 %v462
      %v2353 = vunpack.c.h.b16 %v462
      %v2354 = vunpack.c.l.b16 %v463
      %v2355 = vunpack.c.h.b16 %v463
      %v2356 = vunpack.c.l.b16 %v464
      %v2357 = vunpack.c.h.b16 %v464
      %v2358 = vunpack.c.l.b16 %v465
      %v2359 = vunpack.c.h.b16 %v465
      %v2360 = vunpack.c.l.b16 %v466
      %v2361 = vunpack.c.h.b16 %v466
      %v2362 = vunpack.c.l.b16 %v467
      %v2363 = vunpack.c.h.b16 %v467
      %v2364 = vunpack.c.l.b16 %v468
      %v2365 = vunpack.c.h.b16 %v468
      %v2366 = vunpack.c.l.b16 %v469
      %v2367 = vunpack.c.h.b16 %v469
      %v2368 = vunpack.c.l.b16 %v470
      %v2369 = vunpack.c.h.b16 %v470
      %v2370 = vunpack.c.l.b16 %v471
      %v2371 = vunpack.c.h.b16 %v471
      %v2372 = vunpack.c.l.b16 %v472
      %v2373 = vunpack.c.h.b16 %v472
      %v2374 = vunpack.c.l.b16 %v473
      %v2375 = vunpack.c.h.b16 %v473
      %v2376 = vunpack.c.l.b16 %v474
      %v2377 = vunpack.c.h.b16 %v474
      %v2378 = vunpack.c.l.b16 %v475
      %v2379 = vunpack.c.h.b16 %v475
      %v2380 = vunpack.c.l.b16 %v476
      %v2381 = vunpack.c.h.b16 %v476
      %v2382 = vunpack.c.l.b16 %v477
      %v2383 = vunpack.c.h.b16 %v477
      %v2384 = vunpack.c.l.b16 %v478
      %v2385 = vunpack.c.h.b16 %v478
      %v2386 = vunpack.c.l.b16 %v479
      %v2387 = vunpack.c.h.b16 %v479
      %v2388 = vunpack.c.l.b16 %v480
      %v2389 = vunpack.c.h.b16 %v480
      %v2390 = vunpack.c.l.b16 %v481
      %v2391 = vunpack.c.h.b16 %v481
      %v2392 = vunpack.c.l.b16 %v482
      %v2393 = vunpack.c.h.b16 %v482
      %v2394 = vunpack.c.l.b16 %v483
      %v2395 = vunpack.c.h.b16 %v483
      %v2396 = vunpack.c.l.b16 %v484
      %v2397 = vunpack.c.h.b16 %v484
      %v2398 = vunpack.c.l.b16 %v485
      %v2399 = vunpack.c.h.b16 %v485
      %v2400 = vunpack.c.l.b16 %v486
      %v2401 = vunpack.c.h.b16 %v486
      %v2402 = vunpack.c.l.b16 %v487
      %v2403 = vunpack.c.h.b16 %v487
      %v2404 = vunpack.c.l.b16 %v488
      %v2405 = vunpack.c.h.b16 %v488
      %v2406 = vunpack.c.l.b16 %v489
      %v2407 = vunpack.c.h.b16 %v489
      %v2408 = vunpack.c.l.b16 %v490
      %v2409 = vunpack.c.h.b16 %v490
      %v2410 = vunpack.c.l.b16 %v491
      %v2411 = vunpack.c.h.b16 %v491
      %v2412 = vunpack.c.l.b16 %v492
      %v2413 = vunpack.c.h.b16 %v492
      %v2414 = vunpack.c.l.b16 %v493
      %v2415 = vunpack.c.h.b16 %v493
      %v2416 = vunpack.c.l.b16 %v494
      %v2417 = vunpack.c.h.b16 %v494
      %v2418 = vunpack.c.l.b16 %v495
      %v2419 = vunpack.c.h.b16 %v495
      %v2420 = vunpack.c.l.b16 %v496
      %v2421 = vunpack.c.h.b16 %v496
      %v2422 = vunpack.c.l.b16 %v497
      %v2423 = vunpack.c.h.b16 %v497
      %v2424 = vunpack.c.l.b16 %v498
      %v2425 = vunpack.c.h.b16 %v498
      %v2426 = vunpack.c.l.b16 %v499
      %v2427 = vunpack.c.h.b16 %v499
      %v2428 = vunpack.c.l.b16 %v500
      %v2429 = vunpack.c.h.b16 %v500
      %v2430 = vunpack.c.l.b16 %v501
      %v2431 = vunpack.c.h.b16 %v501
      %v2432 = vunpack.c.l.b16 %v502
      %v2433 = vunpack.c.h.b16 %v502
      %v2434 = vunpack.c.l.b16 %v503
      %v2435 = vunpack.c.h.b16 %v503
      %v2436 = vunpack.c.l.b16 %v504
      %v2437 = vunpack.c.h.b16 %v504
      %v2438 = vunpack.c.l.b16 %v505
      %v2439 = vunpack.c.h.b16 %v505
      %v2440 = vunpack.c.l.b16 %v506
      %v2441 = vunpack.c.h.b16 %v506
      %v2442 = vunpack.c.l.b16 %v507
      %v2443 = vunpack.c.h.b16 %v507
      %v2444 = vunpack.c.l.b16 %v508
      %v2445 = vunpack.c.h.b16 %v508
      %v2446 = vunpack.c.l.b16 %v509
      %v2447 = vunpack.c.h.b16 %v509
      %v2448 = vunpack.c.l.b16 %v510
      %v2449 = vunpack.c.h.b16 %v510
      %v2450 = vunpack.c.l.b16 %v511
      %v2451 = vunpack.c.h.b16 %v511
      %v2452 = vunpack.c.l.b16 %v512
      %v2453 = vunpack.c.h.b16 %v512
      %v2454 = vunpack.c.l.b16 %v513
      %v2455 = vunpack.c.h.b16 %v513
      %v2456 = vunpack.c.l.b16 %v514
      %v2457 = vunpack.c.h.b16 %v514
      %v2458 = vunpack.c.l.b16 %v515
      %v2459 = vunpack.c.h.b16 %v515
      %v2460 = vunpack.c.l.b16 %v516
      %v2461 = vunpack.c.h.b16 %v516
      %v2462 = vunpack.c.l.b16 %v517
      %v2463 = vunpack.c.h.b16 %v517
      %v2464 = vunpack.c.l.b16 %v518
      %v2465 = vunpack.c.h.b16 %v518
      %v2466 = vunpack.c.l.b16 %v519
      %v2467 = vunpack.c.h.b16 %v519
      %v2468 = vunpack.c.l.b16 %v520
      %v2469 = vunpack.c.h.b16 %v520
      %v2470 = vunpack.c.l.b16 %v521
      %v2471 = vunpack.c.h.b16 %v521
      %v2472 = vunpack.c.l.b16 %v522
      %v2473 = vunpack.c.h.b16 %v522
      %v2474 = vunpack.c.l.b16 %v523
      %v2475 = vunpack.c.h.b16 %v523
      %v2476 = vunpack.c.l.b16 %v524
      %v2477 = vunpack.c.h.b16 %v524
      %v2478 = vunpack.c.l.b16 %v525
      %v2479 = vunpack.c.h.b16 %v525
      %v2480 = vunpack.c.l.b16 %v526
      %v2481 = vunpack.c.h.b16 %v526
      %v2482 = vunpack.c.l.b16 %v527
      %v2483 = vunpack.c.h.b16 %v527
      %v2484 = vunpack.c.l.b16 %v528
      %v2485 = vunpack.c.h.b16 %v528
      %v2486 = vunpack.c.l.b16 %v529
      %v2487 = vunpack.c.h.b16 %v529
      %v2488 = vunpack.c.l.b16 %v530
      %v2489 = vunpack.c.h.b16 %v530
      %v2490 = vunpack.c.l.b16 %v531
      %v2491 = vunpack.c.h.b16 %v531
      %v2492 = vunpack.c.l.b16 %v532
      %v2493 = vunpack.c.h.b16 %v532
      %v2494 = vunpack.c.l.b16 %v533
      %v2495 = vunpack.c.h.b16 %v533
      %v2496 = vunpack.c.l.b16 %v534
      %v2497 = vunpack.c.h.b16 %v534
      %v2498 = vunpack.c.l.b16 %v535
      %v2499 = vunpack.c.h.b16 %v535
      %v2500 = vunpack.c.l.b16 %v536
      %v2501 = vunpack.c.h.b16 %v536
      %v2502 = vunpack.c.l.b16 %v537
      %v2503 = vunpack.c.h.b16 %v537
      %v2504 = vunpack.c.l.b16 %v538
      %v2505 = vunpack.c.h.b16 %v538
      %v2506 = vunpack.c.l.b16 %v539
      %v2507 = vunpack.c.h.b16 %v539
      %v2508 = vunpack.c.l.b16 %v540
      %v2509 = vunpack.c.h.b16 %v540
      %v2510 = vunpack.c.l.b16 %v541
      %v2511 = vunpack.c.h.b16 %v541
      %v2512 = vunpack.c.l.b16 %v542
      %v2513 = vunpack.c.h.b16 %v542
      %v2514 = vunpack.c.l.b16 %v543
      %v2515 = vunpack.c.h.b16 %v543
      %v2516 = vunpack.c.l.b16 %v544
      %v2517 = vunpack.c.h.b16 %v544
      %v2518 = vunpack.c.l.b16 %v545
      %v2519 = vunpack.c.h.b16 %v545
      %v2520 = vunpack.c.l.b16 %v546
      %v2521 = vunpack.c.h.b16 %v546
      %v2522 = vunpack.c.l.b16 %v547
      %v2523 = vunpack.c.h.b16 %v547
      %v2524 = vunpack.c.l.b16 %v548
      %v2525 = vunpack.c.h.b16 %v548
      %v2526 = vunpack.c.l.b16 %v549
      %v2527 = vunpack.c.h.b16 %v549
      %v2528 = vunpack.c.l.b16 %v550
      %v2529 = vunpack.c.h.b16 %v550
      %v2530 = vunpack.c.l.b16 %v551
      %v2531 = vunpack.c.h.b16 %v551
      %v2532 = vunpack.c.l.b16 %v552
      %v2533 = vunpack.c.h.b16 %v552
      %v2534 = vunpack.c.l.b16 %v553
      %v2535 = vunpack.c.h.b16 %v553
      %v2536 = vunpack.c.l.b16 %v554
      %v2537 = vunpack.c.h.b16 %v554
      %v2538 = vunpack.c.l.b16 %v555
      %v2539 = vunpack.c.h.b16 %v555
      %v2540 = vunpack.c.l.b16 %v556
      %v2541 = vunpack.c.h.b16 %v556
      %v2542 = vunpack.c.l.b16 %v557
      %v2543 = vunpack.c.h.b16 %v557
      %v2544 = vunpack.c.l.b16 %v558
      %v2545 = vunpack.c.h.b16 %v558
      %v2546 = vunpack.c.l.b16 %v559
      %v2547 = vunpack.c.h.b16 %v559
      %v2548 = vunpack.c.l.b16 %v560
      %v2549 = vunpack.c.h.b16 %v560
      %v2550 = vunpack.c.l.b16 %v561
      %v2551 = vunpack.c.h.b16 %v561
      %v2552 = vunpack.c.l.b16 %v562
      %v2553 = vunpack.c.h.b16 %v562
      %v2554 = vunpack.c.l.b16 %v563
      %v2555 = vunpack.c.h.b16 %v563
      %v2556 = vunpack.c.l.b16 %v564
      %v2557 = vunpack.c.h.b16 %v564
      %v2558 = vunpack.c.l.b16 %v565
      %v2559 = vunpack.c.h.b16 %v565
      %v2560 = vunpack.c.l.b16 %v566
      %v2561 = vunpack.c.h.b16 %v566
      %v2562 = vunpack.c.l.b16 %v567
      %v2563 = vunpack.c.h.b16 %v567
      %v2564 = vunpack.c.l.b16 %v568
      %v2565 = vunpack.c.h.b16 %v568
      %v2566 = vunpack.c.l.b16 %v569
      %v2567 = vunpack.c.h.b16 %v569
      %v2568 = vunpack.c.l.b16 %v570
      %v2569 = vunpack.c.h.b16 %v570
      %v2570 = vunpack.c.l.b16 %v571
      %v2571 = vunpack.c.h.b16 %v571
      %v2572 = vunpack.c.l.b16 %v572
      %v2573 = vunpack.c.h.b16 %v572
      %v2574 = vunpack.c.l.b16 %v573
      %v2575 = vunpack.c.h.b16 %v573
      %v2576 = vunpack.c.l.b16 %v574
      %v2577 = vunpack.c.h.b16 %v574
      %v2578 = vunpack.c.l.b16 %v575
      %v2579 = vunpack.c.h.b16 %v575
      %v2580 = vunpack.c.l.b16 %v576
      %v2581 = vunpack.c.h.b16 %v576
      %v2582 = vunpack.c.l.b16 %v577
      %v2583 = vunpack.c.h.b16 %v577
      %v2584 = vunpack.c.l.b16 %v578
      %v2585 = vunpack.c.h.b16 %v578
      %v2586 = vunpack.c.l.b16 %v579
      %v2587 = vunpack.c.h.b16 %v579
      %v2588 = vunpack.c.l.b16 %v580
      %v2589 = vunpack.c.h.b16 %v580
      %v2590 = vunpack.c.l.b16 %v581
      %v2591 = vunpack.c.h.b16 %v581
      %v2592 = vunpack.c.l.b16 %v582
      %v2593 = vunpack.c.h.b16 %v582
      %v2594 = vunpack.c.l.b16 %v583
      %v2595 = vunpack.c.h.b16 %v583
      %v2596 = vunpack.c.l.b16 %v584
      %v2597 = vunpack.c.h.b16 %v584
      %v2598 = vunpack.c.l.b16 %v585
      %v2599 = vunpack.c.h.b16 %v585
      %v2600 = vunpack.c.l.b16 %v586
      %v2601 = vunpack.c.h.b16 %v586
      %v2602 = vunpack.c.l.b16 %v587
      %v2603 = vunpack.c.h.b16 %v587
      %v2604 = vunpack.c.l.b16 %v588
      %v2605 = vunpack.c.h.b16 %v588
      %v2606 = vunpack.c.l.b16 %v589
      %v2607 = vunpack.c.h.b16 %v589
      %v2608 = vunpack.c.l.b16 %v590
      %v2609 = vunpack.c.h.b16 %v590
      %v2610 = vunpack.c.l.b16 %v591
      %v2611 = vunpack.c.h.b16 %v591
      %v2612 = vunpack.c.l.b16 %v592
      %v2613 = vunpack.c.h.b16 %v592
      %v2614 = vunpack.c.l.b16 %v593
      %v2615 = vunpack.c.h.b16 %v593
      %v2616 = vunpack.c.l.b16 %v594
      %v2617 = vunpack.c.h.b16 %v594
      %v2618 = vunpack.c.l.b16 %v595
      %v2619 = vunpack.c.h.b16 %v595
      %v2620 = vunpack.c.l.b16 %v596
      %v2621 = vunpack.c.h.b16 %v596
      %v2622 = vunpack.c.l.b16 %v597
      %v2623 = vunpack.c.h.b16 %v597
      %v2624 = vunpack.c.l.b16 %v598
      %v2625 = vunpack.c.h.b16 %v598
      %v2626 = vunpack.c.l.b16 %v599
      %v2627 = vunpack.c.h.b16 %v599
      %v2628 = vunpack.c.l.b16 %v600
      %v2629 = vunpack.c.h.b16 %v600
      %v2630 = vunpack.c.l.b16 %v601
      %v2631 = vunpack.c.h.b16 %v601
      %v2632 = vunpack.c.l.b16 %v602
      %v2633 = vunpack.c.h.b16 %v602
      %v2634 = vunpack.c.l.b16 %v603
      %v2635 = vunpack.c.h.b16 %v603
      %v2636 = vunpack.c.l.b16 %v604
      %v2637 = vunpack.c.h.b16 %v604
      %v2638 = vunpack.c.l.b16 %v605
      %v2639 = vunpack.c.h.b16 %v605
      %v2640 = vunpack.c.l.b16 %v606
      %v2641 = vunpack.c.h.b16 %v606
      %v2642 = vunpack.c.l.b16 %v607
      %v2643 = vunpack.c.h.b16 %v607
      %v2644 = vunpack.c.l.b16 %v608
      %v2645 = vunpack.c.h.b16 %v608
      %v2646 = vunpack.c.l.b16 %v609
      %v2647 = vunpack.c.h.b16 %v609
      %v2648 = vunpack.c.l.b16 %v610
      %v2649 = vunpack.c.h.b16 %v610
      %v2650 = vunpack.c.l.b16 %v611
      %v2651 = vunpack.c.h.b16 %v611
      %v2652 = vunpack.c.l.b16 %v612
      %v2653 = vunpack.c.h.b16 %v612
      %v2654 = vunpack.c.l.b16 %v613
      %v2655 = vunpack.c.h.b16 %v613
      %v2656 = vunpack.c.l.b16 %v614
      %v2657 = vunpack.c.h.b16 %v614
      %v2658 = vunpack.c.l.b16 %v615
      %v2659 = vunpack.c.h.b16 %v615
      %v2660 = vunpack.c.l.b16 %v616
      %v2661 = vunpack.c.h.b16 %v616
      %v2662 = vunpack.c.l.b16 %v617
      %v2663 = vunpack.c.h.b16 %v617
      %v2664 = vunpack.c.l.b16 %v618
      %v2665 = vunpack.c.h.b16 %v618
      %v2666 = vunpack.c.l.b16 %v619
      %v2667 = vunpack.c.h.b16 %v619
      %v2668 = vunpack.c.l.b16 %v620
      %v2669 = vunpack.c.h.b16 %v620
      %v2670 = vunpack.c.l.b16 %v621
      %v2671 = vunpack.c.h.b16 %v621
      %v2672 = vunpack.c.l.b16 %v622
      %v2673 = vunpack.c.h.b16 %v622
      %v2674 = vunpack.c.l.b16 %v623
      %v2675 = vunpack.c.h.b16 %v623
      %v2676 = vunpack.c.l.b16 %v624
      %v2677 = vunpack.c.h.b16 %v624
      %v2678 = vunpack.c.l.b16 %v625
      %v2679 = vunpack.c.h.b16 %v625
      %v2680 = vunpack.c.l.b16 %v626
      %v2681 = vunpack.c.h.b16 %v626
      %v2682 = vunpack.c.l.b16 %v627
      %v2683 = vunpack.c.h.b16 %v627
      %v2684 = vunpack.c.l.b16 %v628
      %v2685 = vunpack.c.h.b16 %v628
      %v2686 = vunpack.c.l.b16 %v629
      %v2687 = vunpack.c.h.b16 %v629
      %v2688 = vunpack.c.l.b16 %v630
      %v2689 = vunpack.c.h.b16 %v630
      %v2690 = vunpack.c.l.b16 %v631
      %v2691 = vunpack.c.h.b16 %v631
      %v2692 = vunpack.c.l.b16 %v632
      %v2693 = vunpack.c.h.b16 %v632
      %v2694 = vunpack.c.l.b16 %v633
      %v2695 = vunpack.c.h.b16 %v633
      %v2696 = vunpack.c.l.b16 %v634
      %v2697 = vunpack.c.h.b16 %v634
      %v2698 = vunpack.c.l.b16 %v635
      %v2699 = vunpack.c.h.b16 %v635
      %v2700 = vunpack.c.l.b16 %v636
      %v2701 = vunpack.c.h.b16 %v636
      %v2702 = vunpack.c.l.b16 %v637
      %v2703 = vunpack.c.h.b16 %v637
      %v2704 = vunpack.c.l.b16 %v638
      %v2705 = vunpack.c.h.b16 %v638
      %v2706 = vunpack.c.l.b16 %v639
      %v2707 = vunpack.c.h.b16 %v639
      %v2708 = vunpack.c.l.b16 %v640
      %v2709 = vunpack.c.h.b16 %v640
      %v2710 = vunpack.c.l.b16 %v641
      %v2711 = vunpack.c.h.b16 %v641
      %v2712 = vunpack.c.l.b16 %v642
      %v2713 = vunpack.c.h.b16 %v642
      %v2714 = vunpack.c.l.b16 %v643
      %v2715 = vunpack.c.h.b16 %v643
      %v2716 = vunpack.c.l.b16 %v644
      %v2717 = vunpack.c.h.b16 %v644
      %v2718 = vunpack.c.l.b16 %v645
      %v2719 = vunpack.c.h.b16 %v645
      %v2720 = vunpack.c.l.b16 %v646
      %v2721 = vunpack.c.h.b16 %v646
      %v2722 = vunpack.c.l.b16 %v647
      %v2723 = vunpack.c.h.b16 %v647
      %v2724 = vunpack.c.l.b16 %v648
      %v2725 = vunpack.c.h.b16 %v648
      %v2726 = vunpack.c.l.b16 %v649
      %v2727 = vunpack.c.h.b16 %v649
      %v2728 = vunpack.c.l.b16 %v650
      %v2729 = vunpack.c.h.b16 %v650
      %v2730 = vunpack.c.l.b16 %v651
      %v2731 = vunpack.c.h.b16 %v651
      %v2732 = vunpack.c.l.b16 %v652
      %v2733 = vunpack.c.h.b16 %v652
      %v2734 = vunpack.c.l.b16 %v653
      %v2735 = vunpack.c.h.b16 %v653
      %v2736 = vunpack.c.l.b16 %v654
      %v2737 = vunpack.c.h.b16 %v654
      %v2738 = vunpack.c.l.b16 %v655
      %v2739 = vunpack.c.h.b16 %v655
      %v2740 = vunpack.c.l.b16 %v656
      %v2741 = vunpack.c.h.b16 %v656
      %v2742 = vunpack.c.l.b16 %v657
      %v2743 = vunpack.c.h.b16 %v657
      %v2744 = vunpack.c.l.b16 %v658
      %v2745 = vunpack.c.h.b16 %v658
      %v2746 = vunpack.c.l.b16 %v659
      %v2747 = vunpack.c.h.b16 %v659
      %v2748 = vunpack.c.l.b16 %v660
      %v2749 = vunpack.c.h.b16 %v660
      %v2750 = vunpack.c.l.b16 %v661
      %v2751 = vunpack.c.h.b16 %v661
      %v2752 = vunpack.c.l.b16 %v662
      %v2753 = vunpack.c.h.b16 %v662
      %v2754 = vunpack.c.l.b16 %v663
      %v2755 = vunpack.c.h.b16 %v663
      %v2756 = vunpack.c.l.b16 %v664
      %v2757 = vunpack.c.h.b16 %v664
      %v2758 = vunpack.c.l.b16 %v665
      %v2759 = vunpack.c.h.b16 %v665
      %v2760 = vunpack.c.l.b16 %v666
      %v2761 = vunpack.c.h.b16 %v666
      %v2762 = vunpack.c.l.b16 %v667
      %v2763 = vunpack.c.h.b16 %v667
      %v2764 = vunpack.c.l.b16 %v668
      %v2765 = vunpack.c.h.b16 %v668
      %v2766 = vunpack.c.l.b16 %v669
      %v2767 = vunpack.c.h.b16 %v669
      %v2768 = vunpack.c.l.b16 %v670
      %v2769 = vunpack.c.h.b16 %v670
      %v2770 = vunpack.c.l.b16 %v671
      %v2771 = vunpack.c.h.b16 %v671
      %v2772 = vunpack.c.l.b16 %v672
      %v2773 = vunpack.c.h.b16 %v672
      %v2774 = vunpack.c.l.b16 %v673
      %v2775 = vunpack.c.h.b16 %v673
      %v2776 = vunpack.c.l.b16 %v674
      %v2777 = vunpack.c.h.b16 %v674
      %v2778 = vunpack.c.l.b16 %v675
      %v2779 = vunpack.c.h.b16 %v675
      %v2780 = vunpack.c.l.b16 %v676
      %v2781 = vunpack.c.h.b16 %v676
      %v2782 = vunpack.c.l.b16 %v677
      %v2783 = vunpack.c.h.b16 %v677
      %v2784 = vunpack.c.l.b16 %v678
      %v2785 = vunpack.c.h.b16 %v678
      %v2786 = vunpack.c.l.b16 %v679
      %v2787 = vunpack.c.h.b16 %v679
      %v2788 = vunpack.c.l.b16 %v680
      %v2789 = vunpack.c.h.b16 %v680
      %v2790 = vunpack.c.l.b16 %v681
      %v2791 = vunpack.c.h.b16 %v681
      %v2792 = vunpack.c.l.b16 %v682
      %v2793 = vunpack.c.h.b16 %v682
      %v2794 = vunpack.c.l.b16 %v683
      %v2795 = vunpack.c.h.b16 %v683
      %v2796 = vunpack.c.l.b16 %v684
      %v2797 = vunpack.c.h.b16 %v684
      %v2798 = vunpack.c.l.b16 %v685
      %v2799 = vunpack.c.h.b16 %v685
      %v2800 = vunpack.c.l.b16 %v686
      %v2801 = vunpack.c.h.b16 %v686
      %v2802 = vunpack.c.l.b16 %v687
      %v2803 = vunpack.c.h.b16 %v687
      %v2804 = vunpack.c.l.b16 %v688
      %v2805 = vunpack.c.h.b16 %v688
      %v2806 = vunpack.c.l.b16 %v689
      %v2807 = vunpack.c.h.b16 %v689
      %v2808 = vunpack.c.l.b16 %v690
      %v2809 = vunpack.c.h.b16 %v690
      %v2810 = vunpack.c.l.b16 %v691
      %v2811 = vunpack.c.h.b16 %v691
      %v2812 = vunpack.c.l.b16 %v692
      %v2813 = vunpack.c.h.b16 %v692
      %v2814 = vunpack.c.l.b16 %v693
      %v2815 = vunpack.c.h.b16 %v693
      %v2816 = vunpack.c.l.b16 %v694
      %v2817 = vunpack.c.h.b16 %v694
      %v2818 = vunpack.c.l.b16 %v695
      %v2819 = vunpack.c.h.b16 %v695
      %v2820 = vunpack.c.l.b16 %v696
      %v2821 = vunpack.c.h.b16 %v696
      %v2822 = vunpack.c.l.b16 %v697
      %v2823 = vunpack.c.h.b16 %v697
      %v2824 = vunpack.c.l.b16 %v698
      %v2825 = vunpack.c.h.b16 %v698
      %v2826 = vunpack.c.l.b16 %v699
      %v2827 = vunpack.c.h.b16 %v699
      %v2828 = vunpack.c.l.b16 %v700
      %v2829 = vunpack.c.h.b16 %v700
      %v2830 = vunpack.c.l.b16 %v701
      %v2831 = vunpack.c.h.b16 %v701
      %v2832 = vunpack.c.l.b16 %v702
      %v2833 = vunpack.c.h.b16 %v702
      %v2834 = vunpack.c.l.b16 %v703
      %v2835 = vunpack.c.h.b16 %v703
      %v2836 = vunpack.c.l.b16 %v704
      %v2837 = vunpack.c.h.b16 %v704
      %v2838 = vunpack.c.l.b16 %v705
      %v2839 = vunpack.c.h.b16 %v705
      %v2840 = vunpack.c.l.b16 %v706
      %v2841 = vunpack.c.h.b16 %v706
      %v2842 = vunpack.c.l.b16 %v707
      %v2843 = vunpack.c.h.b16 %v707
      %v2844 = vunpack.c.l.b16 %v708
      %v2845 = vunpack.c.h.b16 %v708
      %v2846 = vunpack.c.l.b16 %v709
      %v2847 = vunpack.c.h.b16 %v709
      %v2848 = vunpack.c.l.b16 %v710
      %v2849 = vunpack.c.h.b16 %v710
      %v2850 = vunpack.c.l.b16 %v711
      %v2851 = vunpack.c.h.b16 %v711
      %v2852 = vunpack.c.l.b16 %v712
      %v2853 = vunpack.c.h.b16 %v712
      %v2854 = vunpack.c.l.b16 %v713
      %v2855 = vunpack.c.h.b16 %v713
      %v2856 = vunpack.c.l.b16 %v714
      %v2857 = vunpack.c.h.b16 %v714
      %v2858 = vunpack.c.l.b16 %v715
      %v2859 = vunpack.c.h.b16 %v715
      %v2860 = vunpack.c.l.b16 %v716
      %v2861 = vunpack.c.h.b16 %v716
      %v2862 = vunpack.c.l.b16 %v717
      %v2863 = vunpack.c.h.b16 %v717
      %v2864 = vunpack.c.l.b16 %v718
      %v2865 = vunpack.c.h.b16 %v718
      %v2866 = vunpack.c.l.b16 %v719
      %v2867 = vunpack.c.h.b16 %v719
      %v2868 = vunpack.c.l.b16 %v720
      %v2869 = vunpack.c.h.b16 %v720
      %v2870 = vunpack.c.l.b16 %v721
      %v2871 = vunpack.c.h.b16 %v721
      %v2872 = vunpack.c.l.b16 %v722
      %v2873 = vunpack.c.h.b16 %v722
      %v2874 = vunpack.c.l.b16 %v723
      %v2875 = vunpack.c.h.b16 %v723
      %v2876 = vunpack.c.l.b16 %v724
      %v2877 = vunpack.c.h.b16 %v724
      %v2878 = vunpack.c.l.b16 %v725
      %v2879 = vunpack.c.h.b16 %v725
      %v2880 = vunpack.c.l.b16 %v726
      %v2881 = vunpack.c.h.b16 %v726
      %v2882 = vunpack.c.l.b16 %v727
      %v2883 = vunpack.c.h.b16 %v727
      %v2884 = vunpack.c.l.b16 %v728
      %v2885 = vunpack.c.h.b16 %v728
      %v2886 = vunpack.c.l.b16 %v729
      %v2887 = vunpack.c.h.b16 %v729
      %v2888 = vunpack.c.l.b16 %v730
      %v2889 = vunpack.c.h.b16 %v730
      %v2890 = vunpack.c.l.b16 %v731
      %v2891 = vunpack.c.h.b16 %v731
      %v2892 = vunpack.c.l.b16 %v732
      %v2893 = vunpack.c.h.b16 %v732
      %v2894 = vunpack.c.l.b16 %v733
      %v2895 = vunpack.c.h.b16 %v733
      %v2896 = vunpack.c.l.b16 %v734
      %v2897 = vunpack.c.h.b16 %v734
      %v2898 = vunpack.c.l.b16 %v735
      %v2899 = vunpack.c.h.b16 %v735
      %v2900 = vunpack.c.l.b16 %v736
      %v2901 = vunpack.c.h.b16 %v736
      %v2902 = vunpack.c.l.b16 %v737
      %v2903 = vunpack.c.h.b16 %v737
      %v2904 = vunpack.c.l.b16 %v738
      %v2905 = vunpack.c.h.b16 %v738
      %v2906 = vunpack.c.l.b16 %v739
      %v2907 = vunpack.c.h.b16 %v739
      %v2908 = vunpack.c.l.b16 %v740
      %v2909 = vunpack.c.h.b16 %v740
      %v2910 = vunpack.c.l.b16 %v741
      %v2911 = vunpack.c.h.b16 %v741
      %v2912 = vunpack.c.l.b16 %v742
      %v2913 = vunpack.c.h.b16 %v742
      %v2914 = vunpack.c.l.b16 %v743
      %v2915 = vunpack.c.h.b16 %v743
      %v2916 = vunpack.c.l.b16 %v744
      %v2917 = vunpack.c.h.b16 %v744
      %v2918 = vunpack.c.l.b16 %v745
      %v2919 = vunpack.c.h.b16 %v745
      %v2920 = vunpack.c.l.b16 %v746
      %v2921 = vunpack.c.h.b16 %v746
      %v2922 = vunpack.c.l.b16 %v747
      %v2923 = vunpack.c.h.b16 %v747
      %v2924 = vunpack.c.l.b16 %v748
      %v2925 = vunpack.c.h.b16 %v748
      %v2926 = vunpack.c.l.b16 %v749
      %v2927 = vunpack.c.h.b16 %v749
      %v2928 = vunpack.c.l.b16 %v750
      %v2929 = vunpack.c.h.b16 %v750
      %v2930 = vunpack.c.l.b16 %v751
      %v2931 = vunpack.c.h.b16 %v751
      %v2932 = vunpack.c.l.b16 %v752
      %v2933 = vunpack.c.h.b16 %v752
      %v2934 = vunpack.c.l.b16 %v753
      %v2935 = vunpack.c.h.b16 %v753
      %v2936 = vunpack.c.l.b16 %v754
      %v2937 = vunpack.c.h.b16 %v754
      %v2938 = vunpack.c.l.b16 %v755
      %v2939 = vunpack.c.h.b16 %v755
      %v2940 = vunpack.c.l.b16 %v756
      %v2941 = vunpack.c.h.b16 %v756
      %v2942 = vunpack.c.l.b16 %v757
      %v2943 = vunpack.c.h.b16 %v757
      %v2944 = vunpack.c.l.b16 %v758
      %v2945 = vunpack.c.h.b16 %v758
      %v2946 = vunpack.c.l.b16 %v759
      %v2947 = vunpack.c.h.b16 %v759
      %v2948 = vunpack.c.l.b16 %v760
      %v2949 = vunpack.c.h.b16 %v760
      %v2950 = vunpack.c.l.b16 %v761
      %v2951 = vunpack.c.h.b16 %v761
      %v2952 = vunpack.c.l.b16 %v762
      %v2953 = vunpack.c.h.b16 %v762
      %v2954 = vunpack.c.l.b16 %v763
      %v2955 = vunpack.c.h.b16 %v763
      %v2956 = vunpack.c.l.b16 %v764
      %v2957 = vunpack.c.h.b16 %v764
      %v2958 = vunpack.c.l.b16 %v765
      %v2959 = vunpack.c.h.b16 %v765
      %v2960 = vunpack.c.l.b16 %v766
      %v2961 = vunpack.c.h.b16 %v766
      %v2962 = vunpack.c.l.b16 %v767
      %v2963 = vunpack.c.h.b16 %v767
      %v2964 = vunpack.c.l.b16 %v768
      %v2965 = vunpack.c.h.b16 %v768
      %v2966 = vunpack.c.l.b16 %v769
      %v2967 = vunpack.c.h.b16 %v769
      %v2968 = vunpack.c.l.b16 %v770
      %v2969 = vunpack.c.h.b16 %v770
      %v2970 = vunpack.c.l.b16 %v771
      %v2971 = vunpack.c.h.b16 %v771
      %v2972 = vunpack.c.l.b16 %v772
      %v2973 = vunpack.c.h.b16 %v772
      %v2974 = vunpack.c.l.b16 %v773
      %v2975 = vunpack.c.h.b16 %v773
      %v2976 = vunpack.c.l.b16 %v774
      %v2977 = vunpack.c.h.b16 %v774
      %v2978 = vunpack.c.l.b16 %v775
      %v2979 = vunpack.c.h.b16 %v775
      %v2980 = vunpack.c.l.b16 %v776
      %v2981 = vunpack.c.h.b16 %v776
      %v2982 = vunpack.c.l.b16 %v777
      %v2983 = vunpack.c.h.b16 %v777
      %v2984 = vunpack.c.l.b16 %v778
      %v2985 = vunpack.c.h.b16 %v778
      %v2986 = vunpack.c.l.b16 %v779
      %v2987 = vunpack.c.h.b16 %v779
      %v2988 = vpack.c.b16 %v2190, %v2188
      %v2989 = vpack.c.b16 %v2191, %v2189
      %v2990 = vpack.c.b16 %v2194, %v2192
      %v2991 = vpack.c.b16 %v2195, %v2193
      %v2992 = vpack.c.b16 %v2198, %v2196
      %v2993 = vpack.c.b16 %v2199, %v2197
      %v2994 = vpack.c.b16 %v2202, %v2200
      %v2995 = vpack.c.b16 %v2203, %v2201
      %v2996 = vpack.c.b16 %v2206, %v2204
      %v2997 = vpack.c.b16 %v2207, %v2205
      %v2998 = vpack.c.b16 %v2210, %v2208
      %v2999 = vpack.c.b16 %v2211, %v2209
      %v3000 = vpack.c.b16 %v2214, %v2212
      %v3001 = vpack.c.b16 %v2215, %v2213
      %v3002 = vpack.c.b16 %v2218, %v2216
      %v3003 = vpack.c.b16 %v2219, %v2217
      %v3004 = vpack.c.b16 %v2222, %v2220
      %v3005 = vpack.c.b16 %v2223, %v2221
      %v3006 = vpack.c.b16 %v2226, %v2224
      %v3007 = vpack.c.b16 %v2227, %v2225
      %v3008 = vpack.c.b16 %v2230, %v2228
      %v3009 = vpack.c.b16 %v2231, %v2229
      %v3010 = vpack.c.b16 %v2234, %v2232
      %v3011 = vpack.c.b16 %v2235, %v2233
      %v3012 = vpack.c.b16 %v2238, %v2236
      %v3013 = vpack.c.b16 %v2239, %v2237
      %v3014 = vpack.c.b16 %v2242, %v2240
      %v3015 = vpack.c.b16 %v2243, %v2241
      %v3016 = vpack.c.b16 %v2246, %v2244
      %v3017 = vpack.c.b16 %v2247, %v2245
      %v3018 = vpack.c.b16 %v2250, %v2248
      %v3019 = vpack.c.b16 %v2251, %v2249
      %v3020 = vpack.c.b16 %v2254, %v2252
      %v3021 = vpack.c.b16 %v2255, %v2253
      %v3022 = vpack.c.b16 %v2258, %v2256
      %v3023 = vpack.c.b16 %v2259, %v2257
      %v3024 = vpack.c.b16 %v2262, %v2260
      %v3025 = vpack.c.b16 %v2263, %v2261
      %v3026 = vpack.c.b16 %v2266, %v2264
      %v3027 = vpack.c.b16 %v2267, %v2265
      %v3028 = vpack.c.b16 %v2270, %v2268
      %v3029 = vpack.c.b16 %v2271, %v2269
      %v3030 = vpack.c.b16 %v2274, %v2272
      %v3031 = vpack.c.b16 %v2275, %v2273
      %v3032 = vpack.c.b16 %v2278, %v2276
      %v3033 = vpack.c.b16 %v2279, %v2277
      %v3034 = vpack.c.b16 %v2282, %v2280
      %v3035 = vpack.c.b16 %v2283, %v2281
      %v3036 = vpack.c.b16 %v2286, %v2284
      %v3037 = vpack.c.b16 %v2287, %v2285
      %v3038 = vpack.c.b16 %v2290, %v2288
      %v3039 = vpack.c.b16 %v2291, %v2289
      %v3040 = vpack.c.b16 %v2294, %v2292
      %v3041 = vpack.c.b16 %v2295, %v2293
      %v3042 = vpack.c.b16 %v2298, %v2296
      %v3043 = vpack.c.b16 %v2299, %v2297
      %v3044 = vpack.c.b16 %v2302, %v2300
      %v3045 = vpack.c.b16 %v2303, %v2301
      %v3046 = vpack.c.b16 %v2306, %v2304
      %v3047 = vpack.c.b16 %v2307, %v2305
      %v3048 = vpack.c.b16 %v2310, %v2308
      %v3049 = vpack.c.b16 %v2311, %v2309
      %v3050 = vpack.c.b16 %v2314, %v2312
      %v3051 = vpack.c.b16 %v2315, %v2313
      %v3052 = vpack.c.b16 %v2318, %v2316
      %v3053 = vpack.c.b16 %v2319, %v2317
      %v3054 = vpack.c.b16 %v2322, %v2320
      %v3055 = vpack.c.b16 %v2323, %v2321
      %v3056 = vpack.c.b16 %v2326, %v2324
      %v3057 = vpack.c.b16 %v2327, %v2325
      %v3058 = vpack.c.b16 %v2330, %v2328
      %v3059 = vpack.c.b16 %v2331, %v2329
      %v3060 = vpack.c.b16 %v2334, %v2332
      %v3061 = vpack.c.b16 %v2335, %v2333
      %v3062 = vpack.c.b16 %v2338, %v2336
      %v3063 = vpack.c.b16 %v2339, %v2337
      %v3064 = vpack.c.b16 %v2342, %v2340
      %v3065 = vpack.c.b16 %v2343, %v2341
      %v3066 = vpack.c.b16 %v2346, %v2344
      %v3067 = vpack.c.b16 %v2347, %v2345
      %v3068 = vpack.c.b16 %v2350, %v2348
      %v3069 = vpack.c.b16 %v2351, %v2349
      %v3070 = vpack.c.b16 %v2354, %v2352
      %v3071 = vpack.c.b16 %v2355, %v2353
      %v3072 = vpack.c.b16 %v2358, %v2356
      %v3073 = vpack.c.b16 %v2359, %v2357
      %v3074 = vpack.c.b16 %v2362, %v2360
      %v3075 = vpack.c.b16 %v2363, %v2361
      %v3076 = vpack.c.b16 %v2366, %v2364
      %v3077 = vpack.c.b16 %v2367, %v2365
      %v3078 = vpack.c.b16 %v2370, %v2368
      %v3079 = vpack.c.b16 %v2371, %v2369
      %v3080 = vpack.c.b16 %v2374, %v2372
      %v3081 = vpack.c.b16 %v2375, %v2373
      %v3082 = vpack.c.b16 %v2378, %v2376
      %v3083 = vpack.c.b16 %v2379, %v2377
      %v3084 = vpack.c.b16 %v2382, %v2380
      %v3085 = vpack.c.b16 %v2383, %v2381
      %v3086 = vpack.c.b16 %v2386, %v2384
      %v3087 = vpack.c.b16 %v2387, %v2385
      %v3088 = vpack.c.b16 %v2390, %v2388
      %v3089 = vpack.c.b16 %v2391, %v2389
      %v3090 = vpack.c.b16 %v2394, %v2392
      %v3091 = vpack.c.b16 %v2395, %v2393
      %v3092 = vpack.c.b16 %v2398, %v2396
      %v3093 = vpack.c.b16 %v2399, %v2397
      %v3094 = vpack.c.b16 %v2402, %v2400
      %v3095 = vpack.c.b16 %v2403, %v2401
      %v3096 = vpack.c.b16 %v2406, %v2404
      %v3097 = vpack.c.b16 %v2407, %v2405
      %v3098 = vpack.c.b16 %v2410, %v2408
      %v3099 = vpack.c.b16 %v2411, %v2409
      %v3100 = vpack.c.b16 %v2414, %v2412
      %v3101 = vpack.c.b16 %v2415, %v2413
      %v3102 = vpack.c.b16 %v2418, %v2416
      %v3103 = vpack.c.b16 %v2419, %v2417
      %v3104 = vpack.c.b16 %v2422, %v2420
      %v3105 = vpack.c.b16 %v2423, %v2421
      %v3106 = vpack.c.b16 %v2426, %v2424
      %v3107 = vpack.c.b16 %v2427, %v2425
      %v3108 = vpack.c.b16 %v2430, %v2428
      %v3109 = vpack.c.b16 %v2431, %v2429
      %v3110 = vpack.c.b16 %v2434, %v2432
      %v3111 = vpack.c.b16 %v2435, %v2433
      %v3112 = vpack.c.b16 %v2438, %v2436
      %v3113 = vpack.c.b16 %v2439, %v2437
      %v3114 = vpack.c.b16 %v2442, %v2440
      %v3115 = vpack.c.b16 %v2443, %v2441
      %v3116 = vpack.c.b16 %v2446, %v2444
      %v3117 = vpack.c.b16 %v2447, %v2445
      %v3118 = vpack.c.b16 %v2450, %v2448
      %v3119 = vpack.c.b16 %v2451, %v2449
      %v3120 = vpack.c.b16 %v2454, %v2452
      %v3121 = vpack.c.b16 %v2455, %v2453
      %v3122 = vpack.c.b16 %v2458, %v2456
      %v3123 = vpack.c.b16 %v2459, %v2457
      %v3124 = vpack.c.b16 %v2462, %v2460
      %v3125 = vpack.c.b16 %v2463, %v2461
      %v3126 = vpack.c.b16 %v2466, %v2464
      %v3127 = vpack.c.b16 %v2467, %v2465
      %v3128 = vpack.c.b16 %v2470, %v2468
      %v3129 = vpack.c.b16 %v2471, %v2469
      %v3130 = vpack.c.b16 %v2474, %v2472
      %v3131 = vpack.c.b16 %v2475, %v2473
      %v3132 = vpack.c.b16 %v2478, %v2476
      %v3133 = vpack.c.b16 %v2479, %v2477
      %v3134 = vpack.c.b16 %v2482, %v2480
      %v3135 = vpack.c.b16 %v2483, %v2481
      %v3136 = vpack.c.b16 %v2486, %v2484
      %v3137 = vpack.c.b16 %v2487, %v2485
      %v3138 = vpack.c.b16 %v2490, %v2488
      %v3139 = vpack.c.b16 %v2491, %v2489
      %v3140 = vpack.c.b16 %v2494, %v2492
      %v3141 = vpack.c.b16 %v2495, %v2493
      %v3142 = vpack.c.b16 %v2498, %v2496
      %v3143 = vpack.c.b16 %v2499, %v2497
      %v3144 = vpack.c.b16 %v2502, %v2500
      %v3145 = vpack.c.b16 %v2503, %v2501
      %v3146 = vpack.c.b16 %v2506, %v2504
      %v3147 = vpack.c.b16 %v2507, %v2505
      %v3148 = vpack.c.b16 %v2510, %v2508
      %v3149 = vpack.c.b16 %v2511, %v2509
      %v3150 = vpack.c.b16 %v2514, %v2512
      %v3151 = vpack.c.b16 %v2515, %v2513
      %v3152 = vpack.c.b16 %v2518, %v2516
      %v3153 = vpack.c.b16 %v2519, %v2517
      %v3154 = vpack.c.b16 %v2522, %v2520
      %v3155 = vpack.c.b16 %v2523, %v2521
      %v3156 = vpack.c.b16 %v2526, %v2524
      %v3157 = vpack.c.b16 %v2527, %v2525
      %v3158 = vpack.c.b16 %v2530, %v2528
      %v3159 = vpack.c.b16 %v2531, %v2529
      %v3160 = vpack.c.b16 %v2534, %v2532
      %v3161 = vpack.c.b16 %v2535, %v2533
      %v3162 = vpack.c.b16 %v2538, %v2536
      %v3163 = vpack.c.b16 %v2539, %v2537
      %v3164 = vpack.c.b16 %v2542, %v2540
      %v3165 = vpack.c.b16 %v2543, %v2541
      %v3166 = vpack.c.b16 %v2546, %v2544
      %v3167 = vpack.c.b16 %v2547, %v2545
      %v3168 = vpack.c.b16 %v2550, %v2548
      %v3169 = vpack.c.b16 %v2551, %v2549
      %v3170 = vpack.c.b16 %v2554, %v2552
      %v3171 = vpack.c.b16 %v2555, %v2553
      %v3172 = vpack.c.b16 %v2558, %v2556
      %v3173 = vpack.c.b16 %v2559, %v2557
      %v3174 = vpack.c.b16 %v2562, %v2560
      %v3175 = vpack.c.b16 %v2563, %v2561
      %v3176 = vpack.c.b16 %v2566, %v2564
      %v3177 = vpack.c.b16 %v2567, %v2565
      %v3178 = vpack.c.b16 %v2570, %v2568
      %v3179 = vpack.c.b16 %v2571, %v2569
      %v3180 = vpack.c.b16 %v2574, %v2572
      %v3181 = vpack.c.b16 %v2575, %v2573
      %v3182 = vpack.c.b16 %v2578, %v2576
      %v3183 = vpack.c.b16 %v2579, %v2577
      %v3184 = vpack.c.b16 %v2582, %v2580
      %v3185 = vpack.c.b16 %v2583, %v2581
      %v3186 = vpack.c.b16 %v2586, %v2584
      %v3187 = vpack.c.b16 %v2587, %v2585
      %v3188 = vpack.c.b16 %v2590, %v2588
      %v3189 = vpack.c.b16 %v2591, %v2589
      %v3190 = vpack.c.b16 %v2594, %v2592
      %v3191 = vpack.c.b16 %v2595, %v2593
      %v3192 = vpack.c.b16 %v2598, %v2596
      %v3193 = vpack.c.b16 %v2599, %v2597
      %v3194 = vpack.c.b16 %v2602, %v2600
      %v3195 = vpack.c.b16 %v2603, %v2601
      %v3196 = vpack.c.b16 %v2606, %v2604
      %v3197 = vpack.c.b16 %v2607, %v2605
      %v3198 = vpack.c.b16 %v2610, %v2608
      %v3199 = vpack.c.b16 %v2611, %v2609
      %v3200 = vpack.c.b16 %v2614, %v2612
      %v3201 = vpack.c.b16 %v2615, %v2613
      %v3202 = vpack.c.b16 %v2618, %v2616
      %v3203 = vpack.c.b16 %v2619, %v2617
      %v3204 = vpack.c.b16 %v2622, %v2620
      %v3205 = vpack.c.b16 %v2623, %v2621
      %v3206 = vpack.c.b16 %v2626, %v2624
      %v3207 = vpack.c.b16 %v2627, %v2625
      %v3208 = vpack.c.b16 %v2630, %v2628
      %v3209 = vpack.c.b16 %v2631, %v2629
      %v3210 = vpack.c.b16 %v2634, %v2632
      %v3211 = vpack.c.b16 %v2635, %v2633
      %v3212 = vpack.c.b16 %v2638, %v2636
      %v3213 = vpack.c.b16 %v2639, %v2637
      %v3214 = vpack.c.b16 %v2642, %v2640
      %v3215 = vpack.c.b16 %v2643, %v2641
      %v3216 = vpack.c.b16 %v2646, %v2644
      %v3217 = vpack.c.b16 %v2647, %v2645
      %v3218 = vpack.c.b16 %v2650, %v2648
      %v3219 = vpack.c.b16 %v2651, %v2649
      %v3220 = vpack.c.b16 %v2654, %v2652
      %v3221 = vpack.c.b16 %v2655, %v2653
      %v3222 = vpack.c.b16 %v2658, %v2656
      %v3223 = vpack.c.b16 %v2659, %v2657
      %v3224 = vpack.c.b16 %v2662, %v2660
      %v3225 = vpack.c.b16 %v2663, %v2661
      %v3226 = vpack.c.b16 %v2666, %v2664
      %v3227 = vpack.c.b16 %v2667, %v2665
      %v3228 = vpack.c.b16 %v2670, %v2668
      %v3229 = vpack.c.b16 %v2671, %v2669
      %v3230 = vpack.c.b16 %v2674, %v2672
      %v3231 = vpack.c.b16 %v2675, %v2673
      %v3232 = vpack.c.b16 %v2678, %v2676
      %v3233 = vpack.c.b16 %v2679, %v2677
      %v3234 = vpack.c.b16 %v2682, %v2680
      %v3235 = vpack.c.b16 %v2683, %v2681
      %v3236 = vpack.c.b16 %v2686, %v2684
      %v3237 = vpack.c.b16 %v2687, %v2685
      %v3238 = vpack.c.b16 %v2690, %v2688
      %v3239 = vpack.c.b16 %v2691, %v2689
      %v3240 = vpack.c.b16 %v2694, %v2692
      %v3241 = vpack.c.b16 %v2695, %v2693
      %v3242 = vpack.c.b16 %v2698, %v2696
      %v3243 = vpack.c.b16 %v2699, %v2697
      %v3244 = vpack.c.b16 %v2702, %v2700
      %v3245 = vpack.c.b16 %v2703, %v2701
      %v3246 = vpack.c.b16 %v2706, %v2704
      %v3247 = vpack.c.b16 %v2707, %v2705
      %v3248 = vpack.c.b16 %v2710, %v2708
      %v3249 = vpack.c.b16 %v2711, %v2709
      %v3250 = vpack.c.b16 %v2714, %v2712
      %v3251 = vpack.c.b16 %v2715, %v2713
      %v3252 = vpack.c.b16 %v2718, %v2716
      %v3253 = vpack.c.b16 %v2719, %v2717
      %v3254 = vpack.c.b16 %v2722, %v2720
      %v3255 = vpack.c.b16 %v2723, %v2721
      %v3256 = vpack.c.b16 %v2726, %v2724
      %v3257 = vpack.c.b16 %v2727, %v2725
      %v3258 = vpack.c.b16 %v2730, %v2728
      %v3259 = vpack.c.b16 %v2731, %v2729
      %v3260 = vpack.c.b16 %v2734, %v2732
      %v3261 = vpack.c.b16 %v2735, %v2733
      %v3262 = vpack.c.b16 %v2738, %v2736
      %v3263 = vpack.c.b16 %v2739, %v2737
      %v3264 = vpack.c.b16 %v2742, %v2740
      %v3265 = vpack.c.b16 %v2743, %v2741
      %v3266 = vpack.c.b16 %v2746, %v2744
      %v3267 = vpack.c.b16 %v2747, %v2745
      %v3268 = vpack.c.b16 %v2750, %v2748
      %v3269 = vpack.c.b16 %v2751, %v2749
      %v3270 = vpack.c.b16 %v2754, %v2752
      %v3271 = vpack.c.b16 %v2755, %v2753
      %v3272 = vpack.c.b16 %v2758, %v2756
      %v3273 = vpack.c.b16 %v2759, %v2757
      %v3274 = vpack.c.b16 %v2762, %v2760
      %v3275 = vpack.c.b16 %v2763, %v2761
      %v3276 = vpack.c.b16 %v2766, %v2764
      %v3277 = vpack.c.b16 %v2767, %v2765
      %v3278 = vpack.c.b16 %v2770, %v2768
      %v3279 = vpack.c.b16 %v2771, %v2769
      %v3280 = vpack.c.b16 %v2774, %v2772
      %v3281 = vpack.c.b16 %v2775, %v2773
      %v3282 = vpack.c.b16 %v2778, %v2776
      %v3283 = vpack.c.b16 %v2779, %v2777
      %v3284 = vpack.c.b16 %v2782, %v2780
      %v3285 = vpack.c.b16 %v2783, %v2781
      %v3286 = vpack.c.b16 %v2786, %v2784
      %v3287 = vpack.c.b16 %v2787, %v2785
      %v3288 = vpack.c.b16 %v2790, %v2788
      %v3289 = vpack.c.b16 %v2791, %v2789
      %v3290 = vpack.c.b16 %v2794, %v2792
      %v3291 = vpack.c.b16 %v2795, %v2793
      %v3292 = vpack.c.b16 %v2798, %v2796
      %v3293 = vpack.c.b16 %v2799, %v2797
      %v3294 = vpack.c.b16 %v2802, %v2800
      %v3295 = vpack.c.b16 %v2803, %v2801
      %v3296 = vpack.c.b16 %v2806, %v2804
      %v3297 = vpack.c.b16 %v2807, %v2805
      %v3298 = vpack.c.b16 %v2810, %v2808
      %v3299 = vpack.c.b16 %v2811, %v2809
      %v3300 = vpack.c.b16 %v2814, %v2812
      %v3301 = vpack.c.b16 %v2815, %v2813
      %v3302 = vpack.c.b16 %v2818, %v2816
      %v3303 = vpack.c.b16 %v2819, %v2817
      %v3304 = vpack.c.b16 %v2822, %v2820
      %v3305 = vpack.c.b16 %v2823, %v2821
      %v3306 = vpack.c.b16 %v2826, %v2824
      %v3307 = vpack.c.b16 %v2827, %v2825
      %v3308 = vpack.c.b16 %v2830, %v2828
      %v3309 = vpack.c.b16 %v2831, %v2829
      %v3310 = vpack.c.b16 %v2834, %v2832
      %v3311 = vpack.c.b16 %v2835, %v2833
      %v3312 = vpack.c.b16 %v2838, %v2836
      %v3313 = vpack.c.b16 %v2839, %v2837
      %v3314 = vpack.c.b16 %v2842, %v2840
      %v3315 = vpack.c.b16 %v2843, %v2841
      %v3316 = vpack.c.b16 %v2846, %v2844
      %v3317 = vpack.c.b16 %v2847, %v2845
      %v3318 = vpack.c.b16 %v2850, %v2848
      %v3319 = vpack.c.b16 %v2851, %v2849
      %v3320 = vpack.c.b16 %v2854, %v2852
      %v3321 = vpack.c.b16 %v2855, %v2853
      %v3322 = vpack.c.b16 %v2858, %v2856
      %v3323 = vpack.c.b16 %v2859, %v2857
      %v3324 = vpack.c.b16 %v2862, %v2860
      %v3325 = vpack.c.b16 %v2863, %v2861
      %v3326 = vpack.c.b16 %v2866, %v2864
      %v3327 = vpack.c.b16 %v2867, %v2865
      %v3328 = vpack.c.b16 %v2870, %v2868
      %v3329 = vpack.c.b16 %v2871, %v2869
      %v3330 = vpack.c.b16 %v2874, %v2872
      %v3331 = vpack.c.b16 %v2875, %v2873
      %v3332 = vpack.c.b16 %v2878, %v2876
      %v3333 = vpack.c.b16 %v2879, %v2877
      %v3334 = vpack.c.b16 %v2882, %v2880
      %v3335 = vpack.c.b16 %v2883, %v2881
      %v3336 = vpack.c.b16 %v2886, %v2884
      %v3337 = vpack.c.b16 %v2887, %v2885
      %v3338 = vpack.c.b16 %v2890, %v2888
      %v3339 = vpack.c.b16 %v2891, %v2889
      %v3340 = vpack.c.b16 %v2894, %v2892
      %v3341 = vpack.c.b16 %v2895, %v2893
      %v3342 = vpack.c.b16 %v2898, %v2896
      %v3343 = vpack.c.b16 %v2899, %v2897
      %v3344 = vpack.c.b16 %v2902, %v2900
      %v3345 = vpack.c.b16 %v2903, %v2901
      %v3346 = vpack.c.b16 %v2906, %v2904
      %v3347 = vpack.c.b16 %v2907, %v2905
      %v3348 = vpack.c.b16 %v2910, %v2908
      %v3349 = vpack.c.b16 %v2911, %v2909
      %v3350 = vpack.c.b16 %v2914, %v2912
      %v3351 = vpack.c.b16 %v2915, %v2913
      %v3352 = vpack.c.b16 %v2918, %v2916
      %v3353 = vpack.c.b16 %v2919, %v2917
      %v3354 = vpack.c.b16 %v2922, %v2920
      %v3355 = vpack.c.b16 %v2923, %v2921
      %v3356 = vpack.c.b16 %v2926, %v2924
      %v3357 = vpack.c.b16 %v2927, %v2925
      %v3358 = vpack.c.b16 %v2930, %v2928
      %v3359 = vpack.c.b16 %v2931, %v2929
      %v3360 = vpack.c.b16 %v2934, %v2932
      %v3361 = vpack.c.b16 %v2935, %v2933
      %v3362 = vpack.c.b16 %v2938, %v2936
      %v3363 = vpack.c.b16 %v2939, %v2937
      %v3364 = vpack.c.b16 %v2942, %v2940
      %v3365 = vpack.c.b16 %v2943, %v2941
      %v3366 = vpack.c.b16 %v2946, %v2944
      %v3367 = vpack.c.b16 %v2947, %v2945
      %v3368 = vpack.c.b16 %v2950, %v2948
      %v3369 = vpack.c.b16 %v2951, %v2949
      %v3370 = vpack.c.b16 %v2954, %v2952
      %v3371 = vpack.c.b16 %v2955, %v2953
      %v3372 = vpack.c.b16 %v2958, %v2956
      %v3373 = vpack.c.b16 %v2959, %v2957
      %v3374 = vpack.c.b16 %v2962, %v2960
      %v3375 = vpack.c.b16 %v2963, %v2961
      %v3376 = vpack.c.b16 %v2966, %v2964
      %v3377 = vpack.c.b16 %v2967, %v2965
      %v3378 = vpack.c.b16 %v2970, %v2968
      %v3379 = vpack.c.b16 %v2971, %v2969
      %v3380 = vpack.c.b16 %v2974, %v2972
      %v3381 = vpack.c.b16 %v2975, %v2973
      %v3382 = vpack.c.b16 %v2978, %v2976
      %v3383 = vpack.c.b16 %v2979, %v2977
      %v3384 = vpack.c.b16 %v2982, %v2980
      %v3385 = vpack.c.b16 %v2983, %v2981
      %v3386 = vpack.c.b16 %v2986, %v2984
      %v3387 = vpack.c.b16 %v2987, %v2985
      %3788 = vmatprep.subr.bf16.mxu0 %v2989
      %3789 = vmatpush1.bf16.msra.mxu0 %v2988
      %3790 = vmatprep.subr.bf16.mxu0 %v2991
      %3791 = vmatpush1.bf16.msra.mxu0 %v2990
      %3792 = vmatprep.subr.bf16.mxu0 %v2993
      %3793 = vmatpush1.bf16.msra.mxu0 %v2992
      %3794 = vmatprep.subr.bf16.mxu0 %v2995
      %3795 = vmatpush1.bf16.msra.mxu0 %v2994
      %3796 = vmatprep.subr.bf16.mxu0 %v2997
      %3797 = vmatpush1.bf16.msra.mxu0 %v2996
      %3798 = vmatprep.subr.bf16.mxu0 %v2999
      %3799 = vmatpush1.bf16.msra.mxu0 %v2998
      %3800 = vmatprep.subr.bf16.mxu0 %v3001
      %3801 = vmatpush1.bf16.msra.mxu0 %v3000
      %3802 = vmatprep.subr.bf16.mxu0 %v3003
      %3803 = vmatpush1.bf16.msra.mxu0 %v3002
      %3804 = vmatprep.subr.bf16.mxu0 %v3005
      %3805 = vmatpush1.bf16.msra.mxu0 %v3004
      %3806 = vmatprep.subr.bf16.mxu0 %v3007
      %3807 = vmatpush1.bf16.msra.mxu0 %v3006
      %3808 = vmatprep.subr.bf16.mxu0 %v3009
      %3809 = vmatpush1.bf16.msra.mxu0 %v3008
      %3810 = vmatprep.subr.bf16.mxu0 %v3011
      %3811 = vmatpush1.bf16.msra.mxu0 %v3010
      %3812 = vmatprep.subr.bf16.mxu0 %v3013
      %3813 = vmatpush1.bf16.msra.mxu0 %v3012
      %3814 = vmatprep.subr.bf16.mxu0 %v3015
      %3815 = vmatpush1.bf16.msra.mxu0 %v3014
      %3816 = vmatprep.subr.bf16.mxu0 %v3017
      %3817 = vmatpush1.bf16.msra.mxu0 %v3016
      %3818 = vmatprep.subr.bf16.mxu0 %v3019
      %3819 = vmatpush1.bf16.msra.mxu0 %v3018
      %3820 = vmatprep.mubr.bf16.mxu0 %v1389
      %3821 = vmatmul.mubr.bf16.gmra.mrb[0].mxu0 %v1388
      %v3822 = vpop.f32.mrb[0].mxu0
      %v3823 = vadd.f32 0.0, %v3822
      %v3824 = vpop.f32.mrb[0].mxu0
      %v3825 = vadd.f32 0.0, %v3824
      %v3826 = vpop.f32.mrb[0].mxu0
      %v3827 = vadd.f32 0.0, %v3826
      %v3828 = vpop.f32.mrb[0].mxu0
      %v3829 = vadd.f32 0.0, %v3828
      %3830 = vmatprep.mubr.bf16.mxu0 %v1414
      %3831 = vmatmul.mubr.bf16.gmra.mrb[0].mxu0 %v1413
      %v3832 = vpop.f32.mrb[0].mxu0
      %v3833 = vadd.f32 0.0, %v3832
      %v3834 = vpop.f32.mrb[0].mxu0
      %v3835 = vadd.f32 0.0, %v3834
      %v3836 = vpop.f32.mrb[0].mxu0
      %v3837 = vadd.f32 0.0, %v3836
      %v3838 = vpop.f32.mrb[0].mxu0
      %v3839 = vadd.f32 0.0, %v3838
      %3840 = vmatprep.mubr.bf16.mxu0 %v1439
      %3841 = vmatmul.mubr.bf16.gmra.mrb[0].mxu0 %v1438
      %v3842 = vpop.f32.mrb[0].mxu0
      %v3843 = vadd.f32 0.0, %v3842
      %v3844 = vpop.f32.mrb[0].mxu0
      %v3845 = vadd.f32 0.0, %v3844
      %v3846 = vpop.f32.mrb[0].mxu0
      %v3847 = vadd.f32 0.0, %v3846
      %v3848 = vpop.f32.mrb[0].mxu0
      %v3849 = vadd.f32 0.0, %v3848
      %3850 = vmatprep.mubr.bf16.mxu0 %v1464
      %3851 = vmatmul.mubr.bf16.gmra.mrb[0].mxu0 %v1463
      %v3852 = vpop.f32.mrb[0].mxu0
      %v3853 = vadd.f32 0.0, %v3852
      %v3854 = vpop.f32.mrb[0].mxu0
      %v3855 = vadd.f32 0.0, %v3854
      %v3856 = vpop.f32.mrb[0].mxu0
      %v3857 = vadd.f32 0.0, %v3856
      %v3858 = vpop.f32.mrb[0].mxu0
      %v3859 = vadd.f32 0.0, %v3858
      %3860 = vmatprep.mubr.bf16.mxu0 %v1489
      %3861 = vmatmul.mubr.bf16.gmra.mrb[0].mxu0 %v1488
      %v3862 = vpop.f32.mrb[0].mxu0
      %v3863 = vadd.f32 0.0, %v3862
      %v3864 = vpop.f32.mrb[0].mxu0
      %v3865 = vadd.f32 0.0, %v3864
      %v3866 = vpop.f32.mrb[0].mxu0
      %v3867 = vadd.f32 0.0, %v3866
      %v3868 = vpop.f32.mrb[0].mxu0
      %v3869 = vadd.f32 0.0, %v3868
      %3870 = vmatprep.mubr.bf16.mxu0 %v1514
      %3871 = vmatmul.mubr.bf16.gmra.mrb[0].mxu0 %v1513
      %v3872 = vpop.f32.mrb[0].mxu0
      %v3873 = vadd.f32 0.0, %v3872
      %v3874 = vpop.f32.mrb[0].mxu0
      %v3875 = vadd.f32 0.0, %v3874
      %v3876 = vpop.f32.mrb[0].mxu0
      %v3877 = vadd.f32 0.0, %v3876
      %v3878 = vpop.f32.mrb[0].mxu0
      %v3879 = vadd.f32 0.0, %v3878
      %3880 = vmatprep.mubr.bf16.mxu0 %v1539
      %3881 = vmatmul.mubr.bf16.gmra.mrb[0].mxu0 %v1538
      %v3882 = vpop.f32.mrb[0].mxu0
      %v3883 = vadd.f32 0.0, %v3882
      %v3884 = vpop.f32.mrb[0].mxu0
      %v3885 = vadd.f32 0.0, %v3884
      %v3886 = vpop.f32.mrb[0].mxu0
      %v3887 = vadd.f32 0.0, %v3886
      %v3888 = vpop.f32.mrb[0].mxu0
      %v3889 = vadd.f32 0.0, %v3888
      %3890 = vmatprep.mubr.bf16.mxu0 %v1564
      %3891 = vmatmul.mubr.bf16.gmra.mrb[0].mxu0 %v1563
      %v3892 = vpop.f32.mrb[0].mxu0
      %v3893 = vadd.f32 0.0, %v3892
      %v3894 = vpop.f32.mrb[0].mxu0
      %v3895 = vadd.f32 0.0, %v3894
      %v3896 = vpop.f32.mrb[0].mxu0
      %v3897 = vadd.f32 0.0, %v3896
      %v3898 = vpop.f32.mrb[0].mxu0
      %v3899 = vadd.f32 0.0, %v3898
      %3900 = vdwg.mxu0
      %3901 = vmatprep.subr.bf16.mxu0 %v3021
      %3902 = vmatpush1.bf16.msra.mxu0 %v3020
      %3903 = vmatprep.subr.bf16.mxu0 %v3023
      %3904 = vmatpush1.bf16.msra.mxu0 %v3022
      %3905 = vmatprep.subr.bf16.mxu0 %v3025
      %3906 = vmatpush1.bf16.msra.mxu0 %v3024
      %3907 = vmatprep.subr.bf16.mxu0 %v3027
      %3908 = vmatpush1.bf16.msra.mxu0 %v3026
      %3909 = vmatprep.subr.bf16.mxu0 %v3029
      %3910 = vmatpush1.bf16.msra.mxu0 %v3028
      %3911 = vmatprep.subr.bf16.mxu0 %v3031
      %3912 = vmatpush1.bf16.msra.mxu0 %v3030
      %3913 = vmatprep.subr.bf16.mxu0 %v3033
      %3914 = vmatpush1.bf16.msra.mxu0 %v3032
      %3915 = vmatprep.subr.bf16.mxu0 %v3035
      %3916 = vmatpush1.bf16.msra.mxu0 %v3034
      %3917 = vmatprep.subr.bf16.mxu0 %v3037
      %3918 = vmatpush1.bf16.msra.mxu0 %v3036
      %3919 = vmatprep.subr.bf16.mxu0 %v3039
      %3920 = vmatpush1.bf16.msra.mxu0 %v3038
      %3921 = vmatprep.subr.bf16.mxu0 %v3041
      %3922 = vmatpush1.bf16.msra.mxu0 %v3040
      %3923 = vmatprep.subr.bf16.mxu0 %v3043
      %3924 = vmatpush1.bf16.msra.mxu0 %v3042
      %3925 = vmatprep.subr.bf16.mxu0 %v3045
      %3926 = vmatpush1.bf16.msra.mxu0 %v3044
      %3927 = vmatprep.subr.bf16.mxu0 %v3047
      %3928 = vmatpush1.bf16.msra.mxu0 %v3046
      %3929 = vmatprep.subr.bf16.mxu0 %v3049
      %3930 = vmatpush1.bf16.msra.mxu0 %v3048
      %3931 = vmatprep.subr.bf16.mxu0 %v3051
      %3932 = vmatpush1.bf16.msra.mxu0 %v3050
      %3933 = vmatprep.mubr.bf16.mxu0 %v1391
      %3934 = vmatmul.mubr.bf16.gmra.mrb[0].mxu0 %v1390
      %v3935 = vpop.f32.mrb[0].mxu0
      %v3936 = vadd.f32 %v3823, %v3935
      %v3937 = vpop.f32.mrb[0].mxu0
      %v3938 = vadd.f32 %v3825, %v3937
      %v3939 = vpop.f32.mrb[0].mxu0
      %v3940 = vadd.f32 %v3827, %v3939
      %v3941 = vpop.f32.mrb[0].mxu0
      %v3942 = vadd.f32 %v3829, %v3941
      %3943 = vmatprep.mubr.bf16.mxu0 %v1416
      %3944 = vmatmul.mubr.bf16.gmra.mrb[0].mxu0 %v1415
      %v3945 = vpop.f32.mrb[0].mxu0
      %v3946 = vadd.f32 %v3833, %v3945
      %v3947 = vpop.f32.mrb[0].mxu0
      %v3948 = vadd.f32 %v3835, %v3947
      %v3949 = vpop.f32.mrb[0].mxu0
      %v3950 = vadd.f32 %v3837, %v3949
      %v3951 = vpop.f32.mrb[0].mxu0
      %v3952 = vadd.f32 %v3839, %v3951
      %3953 = vmatprep.mubr.bf16.mxu0 %v1441
      %3954 = vmatmul.mubr.bf16.gmra.mrb[0].mxu0 %v1440
      %v3955 = vpop.f32.mrb[0].mxu0
      %v3956 = vadd.f32 %v3843, %v3955
      %v3957 = vpop.f32.mrb[0].mxu0
      %v3958 = vadd.f32 %v3845, %v3957
      %v3959 = vpop.f32.mrb[0].mxu0
      %v3960 = vadd.f32 %v3847, %v3959
      %v3961 = vpop.f32.mrb[0].mxu0
      %v3962 = vadd.f32 %v3849, %v3961
      %3963 = vmatprep.mubr.bf16.mxu0 %v1466
      %3964 = vmatmul.mubr.bf16.gmra.mrb[0].mxu0 %v1465
      %v3965 = vpop.f32.mrb[0].mxu0
      %v3966 = vadd.f32 %v3853, %v3965
      %v3967 = vpop.f32.mrb[0].mxu0
      %v3968 = vadd.f32 %v3855, %v3967
      %v3969 = vpop.f32.mrb[0].mxu0
      %v3970 = vadd.f32 %v3857, %v3969
      %v3971 = vpop.f32.mrb[0].mxu0
      %v3972 = vadd.f32 %v3859, %v3971
      %3973 = vmatprep.mubr.bf16.mxu0 %v1491
      %3974 = vmatmul.mubr.bf16.gmra.mrb[0].mxu0 %v1490
      %v3975 = vpop.f32.mrb[0].mxu0
      %v3976 = vadd.f32 %v3863, %v3975
      %v3977 = vpop.f32.mrb[0].mxu0
      %v3978 = vadd.f32 %v3865, %v3977
      %v3979 = vpop.f32.mrb[0].mxu0
      %v3980 = vadd.f32 %v3867, %v3979
      %v3981 = vpop.f32.mrb[0].mxu0
      %v3982 = vadd.f32 %v3869, %v3981
      %3983 = vmatprep.mubr.bf16.mxu0 %v1516
      %3984 = vmatmul.mubr.bf16.gmra.mrb[0].mxu0 %v1515
      %v3985 = vpop.f32.mrb[0].mxu0
      %v3986 = vadd.f32 %v3873, %v3985
      %v3987 = vpop.f32.mrb[0].mxu0
      %v3988 = vadd.f32 %v3875, %v3987
      %v3989 = vpop.f32.mrb[0].mxu0
      %v3990 = vadd.f32 %v3877, %v3989
      %v3991 = vpop.f32.mrb[0].mxu0
      %v3992 = vadd.f32 %v3879, %v3991
      %3993 = vmatprep.mubr.bf16.mxu0 %v1541
      %3994 = vmatmul.mubr.bf16.gmra.mrb[0].mxu0 %v1540
      %v3995 = vpop.f32.mrb[0].mxu0
      %v3996 = vadd.f32 %v3883, %v3995
      %v3997 = vpop.f32.mrb[0].mxu0
      %v3998 = vadd.f32 %v3885, %v3997
      %v3999 = vpop.f32.mrb[0].mxu0
      %v4000 = vadd.f32 %v3887, %v3999
      %v4001 = vpop.f32.mrb[0].mxu0
      %v4002 = vadd.f32 %v3889, %v4001
      %4003 = vmatprep.mubr.bf16.mxu0 %v1566
      %4004 = vmatmul.mubr.bf16.gmra.mrb[0].mxu0 %v1565
      %v4005 = vpop.f32.mrb[0].mxu0
      %v4006 = vadd.f32 %v3893, %v4005
      %v4007 = vpop.f32.mrb[0].mxu0
      %v4008 = vadd.f32 %v3895, %v4007
      %v4009 = vpop.f32.mrb[0].mxu0
      %v4010 = vadd.f32 %v3897, %v4009
      %v4011 = vpop.f32.mrb[0].mxu0
      %v4012 = vadd.f32 %v3899, %v4011
      %4013 = vdwg.mxu0
      %4014 = vmatprep.subr.bf16.mxu0 %v3053
      %4015 = vmatpush1.bf16.msra.mxu0 %v3052
      %4016 = vmatprep.subr.bf16.mxu0 %v3055
      %4017 = vmatpush1.bf16.msra.mxu0 %v3054
      %4018 = vmatprep.subr.bf16.mxu0 %v3057
      %4019 = vmatpush1.bf16.msra.mxu0 %v3056
      %4020 = vmatprep.subr.bf16.mxu0 %v3059
      %4021 = vmatpush1.bf16.msra.mxu0 %v3058
      %4022 = vmatprep.subr.bf16.mxu0 %v3061
      %4023 = vmatpush1.bf16.msra.mxu0 %v3060
      %4024 = vmatprep.subr.bf16.mxu0 %v3063
      %4025 = vmatpush1.bf16.msra.mxu0 %v3062
      %4026 = vmatprep.subr.bf16.mxu0 %v3065
      %4027 = vmatpush1.bf16.msra.mxu0 %v3064
      %4028 = vmatprep.subr.bf16.mxu0 %v3067
      %4029 = vmatpush1.bf16.msra.mxu0 %v3066
      %4030 = vmatprep.subr.bf16.mxu0 %v3069
      %4031 = vmatpush1.bf16.msra.mxu0 %v3068
      %4032 = vmatprep.subr.bf16.mxu0 %v3071
      %4033 = vmatpush1.bf16.msra.mxu0 %v3070
      %4034 = vmatprep.subr.bf16.mxu0 %v3073
      %4035 = vmatpush1.bf16.msra.mxu0 %v3072
      %4036 = vmatprep.subr.bf16.mxu0 %v3075
      %4037 = vmatpush1.bf16.msra.mxu0 %v3074
      %4038 = vmatprep.subr.bf16.mxu0 %v3077
      %4039 = vmatpush1.bf16.msra.mxu0 %v3076
      %4040 = vmatprep.subr.bf16.mxu0 %v3079
      %4041 = vmatpush1.bf16.msra.mxu0 %v3078
      %4042 = vmatprep.subr.bf16.mxu0 %v3081
      %4043 = vmatpush1.bf16.msra.mxu0 %v3080
      %4044 = vmatprep.subr.bf16.mxu0 %v3083
      %4045 = vmatpush1.bf16.msra.mxu0 %v3082
      %4046 = vmatprep.mubr.bf16.mxu0 %v1393
      %4047 = vmatmul.mubr.bf16.gmra.mrb[0].mxu0 %v1392
      %v4048 = vpop.f32.mrb[0].mxu0
      %v4049 = vadd.f32 %v3936, %v4048
      %v4050 = vpop.f32.mrb[0].mxu0
      %v4051 = vadd.f32 %v3938, %v4050
      %v4052 = vpop.f32.mrb[0].mxu0
      %v4053 = vadd.f32 %v3940, %v4052
      %v4054 = vpop.f32.mrb[0].mxu0
      %v4055 = vadd.f32 %v3942, %v4054
      %4056 = vmatprep.mubr.bf16.mxu0 %v1418
      %4057 = vmatmul.mubr.bf16.gmra.mrb[0].mxu0 %v1417
      %v4058 = vpop.f32.mrb[0].mxu0
      %v4059 = vadd.f32 %v3946, %v4058
      %v4060 = vpop.f32.mrb[0].mxu0
      %v4061 = vadd.f32 %v3948, %v4060
      %v4062 = vpop.f32.mrb[0].mxu0
      %v4063 = vadd.f32 %v3950, %v4062
      %v4064 = vpop.f32.mrb[0].mxu0
      %v4065 = vadd.f32 %v3952, %v4064
      %4066 = vmatprep.mubr.bf16.mxu0 %v1443
      %4067 = vmatmul.mubr.bf16.gmra.mrb[0].mxu0 %v1442
      %v4068 = vpop.f32.mrb[0].mxu0
      %v4069 = vadd.f32 %v3956, %v4068
      %v4070 = vpop.f32.mrb[0].mxu0
      %v4071 = vadd.f32 %v3958, %v4070
      %v4072 = vpop.f32.mrb[0].mxu0
      %v4073 = vadd.f32 %v3960, %v4072
      %v4074 = vpop.f32.mrb[0].mxu0
      %v4075 = vadd.f32 %v3962, %v4074
      %4076 = vmatprep.mubr.bf16.mxu0 %v1468
      %4077 = vmatmul.mubr.bf16.gmra.mrb[0].mxu0 %v1467
      %v4078 = vpop.f32.mrb[0].mxu0
      %v4079 = vadd.f32 %v3966, %v4078
      %v4080 = vpop.f32.mrb[0].mxu0
      %v4081 = vadd.f32 %v3968, %v4080
      %v4082 = vpop.f32.mrb[0].mxu0
      %v4083 = vadd.f32 %v3970, %v4082
      %v4084 = vpop.f32.mrb[0].mxu0
      %v4085 = vadd.f32 %v3972, %v4084
      %4086 = vmatprep.mubr.bf16.mxu0 %v1493
      %4087 = vmatmul.mubr.bf16.gmra.mrb[0].mxu0 %v1492
      %v4088 = vpop.f32.mrb[0].mxu0
      %v4089 = vadd.f32 %v3976, %v4088
      %v4090 = vpop.f32.mrb[0].mxu0
      %v4091 = vadd.f32 %v3978, %v4090
      %v4092 = vpop.f32.mrb[0].mxu0
      %v4093 = vadd.f32 %v3980, %v4092
      %v4094 = vpop.f32.mrb[0].mxu0
      %v4095 = vadd.f32 %v3982, %v4094
      %4096 = vmatprep.mubr.bf16.mxu0 %v1518
      %4097 = vmatmul.mubr.bf16.gmra.mrb[0].mxu0 %v1517
      %v4098 = vpop.f32.mrb[0].mxu0
      %v4099 = vadd.f32 %v3986, %v4098
      %v4100 = vpop.f32.mrb[0].mxu0
      %v4101 = vadd.f32 %v3988, %v4100
      %v4102 = vpop.f32.mrb[0].mxu0
      %v4103 = vadd.f32 %v3990, %v4102
      %v4104 = vpop.f32.mrb[0].mxu0
      %v4105 = vadd.f32 %v3992, %v4104
      %4106 = vmatprep.mubr.bf16.mxu0 %v1543
      %4107 = vmatmul.mubr.bf16.gmra.mrb[0].mxu0 %v1542
      %v4108 = vpop.f32.mrb[0].mxu0
      %v4109 = vadd.f32 %v3996, %v4108
      %v4110 = vpop.f32.mrb[0].mxu0
      %v4111 = vadd.f32 %v3998, %v4110
      %v4112 = vpop.f32.mrb[0].mxu0
      %v4113 = vadd.f32 %v4000, %v4112
      %v4114 = vpop.f32.mrb[0].mxu0
      %v4115 = vadd.f32 %v4002, %v4114
      %4116 = vmatprep.mubr.bf16.mxu0 %v1568
      %4117 = vmatmul.mubr.bf16.gmra.mrb[0].mxu0 %v1567
      %v4118 = vpop.f32.mrb[0].mxu0
      %v4119 = vadd.f32 %v4006, %v4118
      %v4120 = vpop.f32.mrb[0].mxu0
      %v4121 = vadd.f32 %v4008, %v4120
      %v4122 = vpop.f32.mrb[0].mxu0
      %v4123 = vadd.f32 %v4010, %v4122
      %v4124 = vpop.f32.mrb[0].mxu0
      %v4125 = vadd.f32 %v4012, %v4124
      %4126 = vdwg.mxu0
      %4127 = vmatprep.subr.bf16.mxu0 %v3085
      %4128 = vmatpush1.bf16.msra.mxu0 %v3084
      %4129 = vmatprep.subr.bf16.mxu0 %v3087
      %4130 = vmatpush1.bf16.msra.mxu0 %v3086
      %4131 = vmatprep.subr.bf16.mxu0 %v3089
      %4132 = vmatpush1.bf16.msra.mxu0 %v3088
      %4133 = vmatprep.subr.bf16.mxu0 %v3091
      %4134 = vmatpush1.bf16.msra.mxu0 %v3090
      %4135 = vmatprep.subr.bf16.mxu0 %v3093
      %4136 = vmatpush1.bf16.msra.mxu0 %v3092
      %4137 = vmatprep.subr.bf16.mxu0 %v3095
      %4138 = vmatpush1.bf16.msra.mxu0 %v3094
      %4139 = vmatprep.subr.bf16.mxu0 %v3097
      %4140 = vmatpush1.bf16.msra.mxu0 %v3096
      %4141 = vmatprep.subr.bf16.mxu0 %v3099
      %4142 = vmatpush1.bf16.msra.mxu0 %v3098
      %4143 = vmatprep.subr.bf16.mxu0 %v3101
      %4144 = vmatpush1.bf16.msra.mxu0 %v3100
      %4145 = vmatprep.subr.bf16.mxu0 %v3103
      %4146 = vmatpush1.bf16.msra.mxu0 %v3102
      %4147 = vmatprep.subr.bf16.mxu0 %v3105
      %4148 = vmatpush1.bf16.msra.mxu0 %v3104
      %4149 = vmatprep.subr.bf16.mxu0 %v3107
      %4150 = vmatpush1.bf16.msra.mxu0 %v3106
      %4151 = vmatprep.subr.bf16.mxu0 %v3109
      %4152 = vmatpush1.bf16.msra.mxu0 %v3108
      %4153 = vmatprep.subr.bf16.mxu0 %v3111
      %4154 = vmatpush1.bf16.msra.mxu0 %v3110
      %4155 = vmatprep.subr.bf16.mxu0 %v3113
      %4156 = vmatpush1.bf16.msra.mxu0 %v3112
      %4157 = vmatprep.subr.bf16.mxu0 %v3115
      %4158 = vmatpush1.bf16.msra.mxu0 %v3114
      %4159 = vmatprep.mubr.bf16.mxu0 %v1395
      %4160 = vmatmul.mubr.bf16.gmra.mrb[0].mxu0 %v1394
      %v4161 = vpop.f32.mrb[0].mxu0
      %v4162 = vadd.f32 %v4049, %v4161
      %v4163 = vpop.f32.mrb[0].mxu0
      %v4164 = vadd.f32 %v4051, %v4163
      %v4165 = vpop.f32.mrb[0].mxu0
      %v4166 = vadd.f32 %v4053, %v4165
      %v4167 = vpop.f32.mrb[0].mxu0
      %v4168 = vadd.f32 %v4055, %v4167
      %4169 = vmatprep.mubr.bf16.mxu0 %v1420
      %4170 = vmatmul.mubr.bf16.gmra.mrb[0].mxu0 %v1419
      %v4171 = vpop.f32.mrb[0].mxu0
      %v4172 = vadd.f32 %v4059, %v4171
      %v4173 = vpop.f32.mrb[0].mxu0
      %v4174 = vadd.f32 %v4061, %v4173
      %v4175 = vpop.f32.mrb[0].mxu0
      %v4176 = vadd.f32 %v4063, %v4175
      %v4177 = vpop.f32.mrb[0].mxu0
      %v4178 = vadd.f32 %v4065, %v4177
      %4179 = vmatprep.mubr.bf16.mxu0 %v1445
      %4180 = vmatmul.mubr.bf16.gmra.mrb[0].mxu0 %v1444
      %v4181 = vpop.f32.mrb[0].mxu0
      %v4182 = vadd.f32 %v4069, %v4181
      %v4183 = vpop.f32.mrb[0].mxu0
      %v4184 = vadd.f32 %v4071, %v4183
      %v4185 = vpop.f32.mrb[0].mxu0
      %v4186 = vadd.f32 %v4073, %v4185
      %v4187 = vpop.f32.mrb[0].mxu0
      %v4188 = vadd.f32 %v4075, %v4187
      %4189 = vmatprep.mubr.bf16.mxu0 %v1470
      %4190 = vmatmul.mubr.bf16.gmra.mrb[0].mxu0 %v1469
      %v4191 = vpop.f32.mrb[0].mxu0
      %v4192 = vadd.f32 %v4079, %v4191
      %v4193 = vpop.f32.mrb[0].mxu0
      %v4194 = vadd.f32 %v4081, %v4193
      %v4195 = vpop.f32.mrb[0].mxu0
      %v4196 = vadd.f32 %v4083, %v4195
      %v4197 = vpop.f32.mrb[0].mxu0
      %v4198 = vadd.f32 %v4085, %v4197
      %4199 = vmatprep.mubr.bf16.mxu0 %v1495
      %4200 = vmatmul.mubr.bf16.gmra.mrb[0].mxu0 %v1494
      %v4201 = vpop.f32.mrb[0].mxu0
      %v4202 = vadd.f32 %v4089, %v4201
      %v4203 = vpop.f32.mrb[0].mxu0
      %v4204 = vadd.f32 %v4091, %v4203
      %v4205 = vpop.f32.mrb[0].mxu0
      %v4206 = vadd.f32 %v4093, %v4205
      %v4207 = vpop.f32.mrb[0].mxu0
      %v4208 = vadd.f32 %v4095, %v4207
      %4209 = vmatprep.mubr.bf16.mxu0 %v1520
      %4210 = vmatmul.mubr.bf16.gmra.mrb[0].mxu0 %v1519
      %v4211 = vpop.f32.mrb[0].mxu0
      %v4212 = vadd.f32 %v4099, %v4211
      %v4213 = vpop.f32.mrb[0].mxu0
      %v4214 = vadd.f32 %v4101, %v4213
      %v4215 = vpop.f32.mrb[0].mxu0
      %v4216 = vadd.f32 %v4103, %v4215
      %v4217 = vpop.f32.mrb[0].mxu0
      %v4218 = vadd.f32 %v4105, %v4217
      %4219 = vmatprep.mubr.bf16.mxu0 %v1545
      %4220 = vmatmul.mubr.bf16.gmra.mrb[0].mxu0 %v1544
      %v4221 = vpop.f32.mrb[0].mxu0
      %v4222 = vadd.f32 %v4109, %v4221
      %v4223 = vpop.f32.mrb[0].mxu0
      %v4224 = vadd.f32 %v4111, %v4223
      %v4225 = vpop.f32.mrb[0].mxu0
      %v4226 = vadd.f32 %v4113, %v4225
      %v4227 = vpop.f32.mrb[0].mxu0
      %v4228 = vadd.f32 %v4115, %v4227
      %4229 = vmatprep.mubr.bf16.mxu0 %v1570
      %4230 = vmatmul.mubr.bf16.gmra.mrb[0].mxu0 %v1569
      %v4231 = vpop.f32.mrb[0].mxu0
      %v4232 = vadd.f32 %v4119, %v4231
      %v4233 = vpop.f32.mrb[0].mxu0
      %v4234 = vadd.f32 %v4121, %v4233
      %v4235 = vpop.f32.mrb[0].mxu0
      %v4236 = vadd.f32 %v4123, %v4235
      %v4237 = vpop.f32.mrb[0].mxu0
      %v4238 = vadd.f32 %v4125, %v4237
      %4239 = vdwg.mxu0
      %4240 = vmatprep.subr.bf16.mxu0 %v3117
      %4241 = vmatpush1.bf16.msra.mxu0 %v3116
      %4242 = vmatprep.subr.bf16.mxu0 %v3119
      %4243 = vmatpush1.bf16.msra.mxu0 %v3118
      %4244 = vmatprep.subr.bf16.mxu0 %v3121
      %4245 = vmatpush1.bf16.msra.mxu0 %v3120
      %4246 = vmatprep.subr.bf16.mxu0 %v3123
      %4247 = vmatpush1.bf16.msra.mxu0 %v3122
      %4248 = vmatprep.subr.bf16.mxu0 %v3125
      %4249 = vmatpush1.bf16.msra.mxu0 %v3124
      %4250 = vmatprep.subr.bf16.mxu0 %v3127
      %4251 = vmatpush1.bf16.msra.mxu0 %v3126
      %4252 = vmatprep.subr.bf16.mxu0 %v3129
      %4253 = vmatpush1.bf16.msra.mxu0 %v3128
      %4254 = vmatprep.subr.bf16.mxu0 %v3131
      %4255 = vmatpush1.bf16.msra.mxu0 %v3130
      %4256 = vmatprep.subr.bf16.mxu0 %v3133
      %4257 = vmatpush1.bf16.msra.mxu0 %v3132
      %4258 = vmatprep.subr.bf16.mxu0 %v3135
      %4259 = vmatpush1.bf16.msra.mxu0 %v3134
      %4260 = vmatprep.subr.bf16.mxu0 %v3137
      %4261 = vmatpush1.bf16.msra.mxu0 %v3136
      %4262 = vmatprep.subr.bf16.mxu0 %v3139
      %4263 = vmatpush1.bf16.msra.mxu0 %v3138
      %4264 = vmatprep.subr.bf16.mxu0 %v3141
      %4265 = vmatpush1.bf16.msra.mxu0 %v3140
      %4266 = vmatprep.subr.bf16.mxu0 %v3143
      %4267 = vmatpush1.bf16.msra.mxu0 %v3142
      %4268 = vmatprep.subr.bf16.mxu0 %v3145
      %4269 = vmatpush1.bf16.msra.mxu0 %v3144
      %4270 = vmatprep.subr.bf16.mxu0 %v3147
      %4271 = vmatpush1.bf16.msra.mxu0 %v3146
      %4272 = vmatprep.mubr.bf16.mxu0 %v1397
      %4273 = vmatmul.mubr.bf16.gmra.mrb[0].mxu0 %v1396
      %v4274 = vpop.f32.mrb[0].mxu0
      %v4275 = vadd.f32 %v4162, %v4274
      %v4276 = vpop.f32.mrb[0].mxu0
      %v4277 = vadd.f32 %v4164, %v4276
      %v4278 = vpop.f32.mrb[0].mxu0
      %v4279 = vadd.f32 %v4166, %v4278
      %v4280 = vpop.f32.mrb[0].mxu0
      %v4281 = vadd.f32 %v4168, %v4280
      %4282 = vmatprep.mubr.bf16.mxu0 %v1422
      %4283 = vmatmul.mubr.bf16.gmra.mrb[0].mxu0 %v1421
      %v4284 = vpop.f32.mrb[0].mxu0
      %v4285 = vadd.f32 %v4172, %v4284
      %v4286 = vpop.f32.mrb[0].mxu0
      %v4287 = vadd.f32 %v4174, %v4286
      %v4288 = vpop.f32.mrb[0].mxu0
      %v4289 = vadd.f32 %v4176, %v4288
      %v4290 = vpop.f32.mrb[0].mxu0
      %v4291 = vadd.f32 %v4178, %v4290
      %4292 = vmatprep.mubr.bf16.mxu0 %v1447
      %4293 = vmatmul.mubr.bf16.gmra.mrb[0].mxu0 %v1446
      %v4294 = vpop.f32.mrb[0].mxu0
      %v4295 = vadd.f32 %v4182, %v4294
      %v4296 = vpop.f32.mrb[0].mxu0
      %v4297 = vadd.f32 %v4184, %v4296
      %v4298 = vpop.f32.mrb[0].mxu0
      %v4299 = vadd.f32 %v4186, %v4298
      %v4300 = vpop.f32.mrb[0].mxu0
      %v4301 = vadd.f32 %v4188, %v4300
      %4302 = vmatprep.mubr.bf16.mxu0 %v1472
      %4303 = vmatmul.mubr.bf16.gmra.mrb[0].mxu0 %v1471
      %v4304 = vpop.f32.mrb[0].mxu0
      %v4305 = vadd.f32 %v4192, %v4304
      %v4306 = vpop.f32.mrb[0].mxu0
      %v4307 = vadd.f32 %v4194, %v4306
      %v4308 = vpop.f32.mrb[0].mxu0
      %v4309 = vadd.f32 %v4196, %v4308
      %v4310 = vpop.f32.mrb[0].mxu0
      %v4311 = vadd.f32 %v4198, %v4310
      %4312 = vmatprep.mubr.bf16.mxu0 %v1497
      %4313 = vmatmul.mubr.bf16.gmra.mrb[0].mxu0 %v1496
      %v4314 = vpop.f32.mrb[0].mxu0
      %v4315 = vadd.f32 %v4202, %v4314
      %v4316 = vpop.f32.mrb[0].mxu0
      %v4317 = vadd.f32 %v4204, %v4316
      %v4318 = vpop.f32.mrb[0].mxu0
      %v4319 = vadd.f32 %v4206, %v4318
      %v4320 = vpop.f32.mrb[0].mxu0
      %v4321 = vadd.f32 %v4208, %v4320
      %4322 = vmatprep.mubr.bf16.mxu0 %v1522
      %4323 = vmatmul.mubr.bf16.gmra.mrb[0].mxu0 %v1521
      %v4324 = vpop.f32.mrb[0].mxu0
      %v4325 = vadd.f32 %v4212, %v4324
      %v4326 = vpop.f32.mrb[0].mxu0
      %v4327 = vadd.f32 %v4214, %v4326
      %v4328 = vpop.f32.mrb[0].mxu0
      %v4329 = vadd.f32 %v4216, %v4328
      %v4330 = vpop.f32.mrb[0].mxu0
      %v4331 = vadd.f32 %v4218, %v4330
      %4332 = vmatprep.mubr.bf16.mxu0 %v1547
      %4333 = vmatmul.mubr.bf16.gmra.mrb[0].mxu0 %v1546
      %v4334 = vpop.f32.mrb[0].mxu0
      %v4335 = vadd.f32 %v4222, %v4334
      %v4336 = vpop.f32.mrb[0].mxu0
      %v4337 = vadd.f32 %v4224, %v4336
      %v4338 = vpop.f32.mrb[0].mxu0
      %v4339 = vadd.f32 %v4226, %v4338
      %v4340 = vpop.f32.mrb[0].mxu0
      %v4341 = vadd.f32 %v4228, %v4340
      %4342 = vmatprep.mubr.bf16.mxu0 %v1572
      %4343 = vmatmul.mubr.bf16.gmra.mrb[0].mxu0 %v1571
      %v4344 = vpop.f32.mrb[0].mxu0
      %v4345 = vadd.f32 %v4232, %v4344
      %v4346 = vpop.f32.mrb[0].mxu0
      %v4347 = vadd.f32 %v4234, %v4346
      %v4348 = vpop.f32.mrb[0].mxu0
      %v4349 = vadd.f32 %v4236, %v4348
      %v4350 = vpop.f32.mrb[0].mxu0
      %v4351 = vadd.f32 %v4238, %v4350
      %4352 = vdwg.mxu0
      %4353 = vmatprep.subr.bf16.mxu0 %v3149
      %4354 = vmatpush1.bf16.msra.mxu0 %v3148
      %4355 = vmatprep.subr.bf16.mxu0 %v3151
      %4356 = vmatpush1.bf16.msra.mxu0 %v3150
      %4357 = vmatprep.subr.bf16.mxu0 %v3153
      %4358 = vmatpush1.bf16.msra.mxu0 %v3152
      %4359 = vmatprep.subr.bf16.mxu0 %v3155
      %4360 = vmatpush1.bf16.msra.mxu0 %v3154
      %4361 = vmatprep.subr.bf16.mxu0 %v3157
      %4362 = vmatpush1.bf16.msra.mxu0 %v3156
      %4363 = vmatprep.subr.bf16.mxu0 %v3159
      %4364 = vmatpush1.bf16.msra.mxu0 %v3158
      %4365 = vmatprep.subr.bf16.mxu0 %v3161
      %4366 = vmatpush1.bf16.msra.mxu0 %v3160
      %4367 = vmatprep.subr.bf16.mxu0 %v3163
      %4368 = vmatpush1.bf16.msra.mxu0 %v3162
      %4369 = vmatprep.subr.bf16.mxu0 %v3165
      %4370 = vmatpush1.bf16.msra.mxu0 %v3164
      %4371 = vmatprep.subr.bf16.mxu0 %v3167
      %4372 = vmatpush1.bf16.msra.mxu0 %v3166
      %4373 = vmatprep.subr.bf16.mxu0 %v3169
      %4374 = vmatpush1.bf16.msra.mxu0 %v3168
      %4375 = vmatprep.subr.bf16.mxu0 %v3171
      %4376 = vmatpush1.bf16.msra.mxu0 %v3170
      %4377 = vmatprep.subr.bf16.mxu0 %v3173
      %4378 = vmatpush1.bf16.msra.mxu0 %v3172
      %4379 = vmatprep.subr.bf16.mxu0 %v3175
      %4380 = vmatpush1.bf16.msra.mxu0 %v3174
      %4381 = vmatprep.subr.bf16.mxu0 %v3177
      %4382 = vmatpush1.bf16.msra.mxu0 %v3176
      %4383 = vmatprep.subr.bf16.mxu0 %v3179
      %4384 = vmatpush1.bf16.msra.mxu0 %v3178
      %4385 = vmatprep.mubr.bf16.mxu0 %v1399
      %4386 = vmatmul.mubr.bf16.gmra.mrb[0].mxu0 %v1398
      %v4387 = vpop.f32.mrb[0].mxu0
      %v4388 = vadd.f32 %v4275, %v4387
      %v4389 = vpop.f32.mrb[0].mxu0
      %v4390 = vadd.f32 %v4277, %v4389
      %v4391 = vpop.f32.mrb[0].mxu0
      %v4392 = vadd.f32 %v4279, %v4391
      %v4393 = vpop.f32.mrb[0].mxu0
      %v4394 = vadd.f32 %v4281, %v4393
      %4395 = vmatprep.mubr.bf16.mxu0 %v1424
      %4396 = vmatmul.mubr.bf16.gmra.mrb[0].mxu0 %v1423
      %v4397 = vpop.f32.mrb[0].mxu0
      %v4398 = vadd.f32 %v4285, %v4397
      %v4399 = vpop.f32.mrb[0].mxu0
      %v4400 = vadd.f32 %v4287, %v4399
      %v4401 = vpop.f32.mrb[0].mxu0
      %v4402 = vadd.f32 %v4289, %v4401
      %v4403 = vpop.f32.mrb[0].mxu0
      %v4404 = vadd.f32 %v4291, %v4403
      %4405 = vmatprep.mubr.bf16.mxu0 %v1449
      %4406 = vmatmul.mubr.bf16.gmra.mrb[0].mxu0 %v1448
      %v4407 = vpop.f32.mrb[0].mxu0
      %v4408 = vadd.f32 %v4295, %v4407
      %v4409 = vpop.f32.mrb[0].mxu0
      %v4410 = vadd.f32 %v4297, %v4409
      %v4411 = vpop.f32.mrb[0].mxu0
      %v4412 = vadd.f32 %v4299, %v4411
      %v4413 = vpop.f32.mrb[0].mxu0
      %v4414 = vadd.f32 %v4301, %v4413
      %4415 = vmatprep.mubr.bf16.mxu0 %v1474
      %4416 = vmatmul.mubr.bf16.gmra.mrb[0].mxu0 %v1473
      %v4417 = vpop.f32.mrb[0].mxu0
      %v4418 = vadd.f32 %v4305, %v4417
      %v4419 = vpop.f32.mrb[0].mxu0
      %v4420 = vadd.f32 %v4307, %v4419
      %v4421 = vpop.f32.mrb[0].mxu0
      %v4422 = vadd.f32 %v4309, %v4421
      %v4423 = vpop.f32.mrb[0].mxu0
      %v4424 = vadd.f32 %v4311, %v4423
      %4425 = vmatprep.mubr.bf16.mxu0 %v1499
      %4426 = vmatmul.mubr.bf16.gmra.mrb[0].mxu0 %v1498
      %v4427 = vpop.f32.mrb[0].mxu0
      %v4428 = vadd.f32 %v4315, %v4427
      %v4429 = vpop.f32.mrb[0].mxu0
      %v4430 = vadd.f32 %v4317, %v4429
      %v4431 = vpop.f32.mrb[0].mxu0
      %v4432 = vadd.f32 %v4319, %v4431
      %v4433 = vpop.f32.mrb[0].mxu0
      %v4434 = vadd.f32 %v4321, %v4433
      %4435 = vmatprep.mubr.bf16.mxu0 %v1524
      %4436 = vmatmul.mubr.bf16.gmra.mrb[0].mxu0 %v1523
      %v4437 = vpop.f32.mrb[0].mxu0
      %v4438 = vadd.f32 %v4325, %v4437
      %v4439 = vpop.f32.mrb[0].mxu0
      %v4440 = vadd.f32 %v4327, %v4439
      %v4441 = vpop.f32.mrb[0].mxu0
      %v4442 = vadd.f32 %v4329, %v4441
      %v4443 = vpop.f32.mrb[0].mxu0
      %v4444 = vadd.f32 %v4331, %v4443
      %4445 = vmatprep.mubr.bf16.mxu0 %v1549
      %4446 = vmatmul.mubr.bf16.gmra.mrb[0].mxu0 %v1548
      %v4447 = vpop.f32.mrb[0].mxu0
      %v4448 = vadd.f32 %v4335, %v4447
      %v4449 = vpop.f32.mrb[0].mxu0
      %v4450 = vadd.f32 %v4337, %v4449
      %v4451 = vpop.f32.mrb[0].mxu0
      %v4452 = vadd.f32 %v4339, %v4451
      %v4453 = vpop.f32.mrb[0].mxu0
      %v4454 = vadd.f32 %v4341, %v4453
      %4455 = vmatprep.mubr.bf16.mxu0 %v1574
      %4456 = vmatmul.mubr.bf16.gmra.mrb[0].mxu0 %v1573
      %v4457 = vpop.f32.mrb[0].mxu0
      %v4458 = vadd.f32 %v4345, %v4457
      %v4459 = vpop.f32.mrb[0].mxu0
      %v4460 = vadd.f32 %v4347, %v4459
      %v4461 = vpop.f32.mrb[0].mxu0
      %v4462 = vadd.f32 %v4349, %v4461
      %v4463 = vpop.f32.mrb[0].mxu0
      %v4464 = vadd.f32 %v4351, %v4463
      %4465 = vdwg.mxu0
      %4466 = vmatprep.subr.bf16.mxu0 %v3181
      %4467 = vmatpush1.bf16.msra.mxu0 %v3180
      %4468 = vmatprep.subr.bf16.mxu0 %v3183
      %4469 = vmatpush1.bf16.msra.mxu0 %v3182
      %4470 = vmatprep.subr.bf16.mxu0 %v3185
      %4471 = vmatpush1.bf16.msra.mxu0 %v3184
      %4472 = vmatprep.subr.bf16.mxu0 %v3187
      %4473 = vmatpush1.bf16.msra.mxu0 %v3186
      %4474 = vmatprep.subr.bf16.mxu0 %v3189
      %4475 = vmatpush1.bf16.msra.mxu0 %v3188
      %4476 = vmatprep.subr.bf16.mxu0 %v3191
      %4477 = vmatpush1.bf16.msra.mxu0 %v3190
      %4478 = vmatprep.subr.bf16.mxu0 %v3193
      %4479 = vmatpush1.bf16.msra.mxu0 %v3192
      %4480 = vmatprep.subr.bf16.mxu0 %v3195
      %4481 = vmatpush1.bf16.msra.mxu0 %v3194
      %4482 = vmatprep.subr.bf16.mxu0 %v3197
      %4483 = vmatpush1.bf16.msra.mxu0 %v3196
      %4484 = vmatprep.subr.bf16.mxu0 %v3199
      %4485 = vmatpush1.bf16.msra.mxu0 %v3198
      %4486 = vmatprep.subr.bf16.mxu0 %v3201
      %4487 = vmatpush1.bf16.msra.mxu0 %v3200
      %4488 = vmatprep.subr.bf16.mxu0 %v3203
      %4489 = vmatpush1.bf16.msra.mxu0 %v3202
      %4490 = vmatprep.subr.bf16.mxu0 %v3205
      %4491 = vmatpush1.bf16.msra.mxu0 %v3204
      %4492 = vmatprep.subr.bf16.mxu0 %v3207
      %4493 = vmatpush1.bf16.msra.mxu0 %v3206
      %4494 = vmatprep.subr.bf16.mxu0 %v3209
      %4495 = vmatpush1.bf16.msra.mxu0 %v3208
      %4496 = vmatprep.subr.bf16.mxu0 %v3211
      %4497 = vmatpush1.bf16.msra.mxu0 %v3210
      %4498 = vmatprep.mubr.bf16.mxu0 %v1401
      %4499 = vmatmul.mubr.bf16.gmra.mrb[0].mxu0 %v1400
      %v4500 = vpop.f32.mrb[0].mxu0
      %v4501 = vadd.f32 %v4388, %v4500
      %v4502 = vpop.f32.mrb[0].mxu0
      %v4503 = vadd.f32 %v4390, %v4502
      %v4504 = vpop.f32.mrb[0].mxu0
      %v4505 = vadd.f32 %v4392, %v4504
      %v4506 = vpop.f32.mrb[0].mxu0
      %v4507 = vadd.f32 %v4394, %v4506
      %4508 = vmatprep.mubr.bf16.mxu0 %v1426
      %4509 = vmatmul.mubr.bf16.gmra.mrb[0].mxu0 %v1425
      %v4510 = vpop.f32.mrb[0].mxu0
      %v4511 = vadd.f32 %v4398, %v4510
      %v4512 = vpop.f32.mrb[0].mxu0
      %v4513 = vadd.f32 %v4400, %v4512
      %v4514 = vpop.f32.mrb[0].mxu0
      %v4515 = vadd.f32 %v4402, %v4514
      %v4516 = vpop.f32.mrb[0].mxu0
      %v4517 = vadd.f32 %v4404, %v4516
      %4518 = vmatprep.mubr.bf16.mxu0 %v1451
      %4519 = vmatmul.mubr.bf16.gmra.mrb[0].mxu0 %v1450
      %v4520 = vpop.f32.mrb[0].mxu0
      %v4521 = vadd.f32 %v4408, %v4520
      %v4522 = vpop.f32.mrb[0].mxu0
      %v4523 = vadd.f32 %v4410, %v4522
      %v4524 = vpop.f32.mrb[0].mxu0
      %v4525 = vadd.f32 %v4412, %v4524
      %v4526 = vpop.f32.mrb[0].mxu0
      %v4527 = vadd.f32 %v4414, %v4526
      %4528 = vmatprep.mubr.bf16.mxu0 %v1476
      %4529 = vmatmul.mubr.bf16.gmra.mrb[0].mxu0 %v1475
      %v4530 = vpop.f32.mrb[0].mxu0
      %v4531 = vadd.f32 %v4418, %v4530
      %v4532 = vpop.f32.mrb[0].mxu0
      %v4533 = vadd.f32 %v4420, %v4532
      %v4534 = vpop.f32.mrb[0].mxu0
      %v4535 = vadd.f32 %v4422, %v4534
      %v4536 = vpop.f32.mrb[0].mxu0
      %v4537 = vadd.f32 %v4424, %v4536
      %4538 = vmatprep.mubr.bf16.mxu0 %v1501
      %4539 = vmatmul.mubr.bf16.gmra.mrb[0].mxu0 %v1500
      %v4540 = vpop.f32.mrb[0].mxu0
      %v4541 = vadd.f32 %v4428, %v4540
      %v4542 = vpop.f32.mrb[0].mxu0
      %v4543 = vadd.f32 %v4430, %v4542
      %v4544 = vpop.f32.mrb[0].mxu0
      %v4545 = vadd.f32 %v4432, %v4544
      %v4546 = vpop.f32.mrb[0].mxu0
      %v4547 = vadd.f32 %v4434, %v4546
      %4548 = vmatprep.mubr.bf16.mxu0 %v1526
      %4549 = vmatmul.mubr.bf16.gmra.mrb[0].mxu0 %v1525
      %v4550 = vpop.f32.mrb[0].mxu0
      %v4551 = vadd.f32 %v4438, %v4550
      %v4552 = vpop.f32.mrb[0].mxu0
      %v4553 = vadd.f32 %v4440, %v4552
      %v4554 = vpop.f32.mrb[0].mxu0
      %v4555 = vadd.f32 %v4442, %v4554
      %v4556 = vpop.f32.mrb[0].mxu0
      %v4557 = vadd.f32 %v4444, %v4556
      %4558 = vmatprep.mubr.bf16.mxu0 %v1551
      %4559 = vmatmul.mubr.bf16.gmra.mrb[0].mxu0 %v1550
      %v4560 = vpop.f32.mrb[0].mxu0
      %v4561 = vadd.f32 %v4448, %v4560
      %v4562 = vpop.f32.mrb[0].mxu0
      %v4563 = vadd.f32 %v4450, %v4562
      %v4564 = vpop.f32.mrb[0].mxu0
      %v4565 = vadd.f32 %v4452, %v4564
      %v4566 = vpop.f32.mrb[0].mxu0
      %v4567 = vadd.f32 %v4454, %v4566
      %4568 = vmatprep.mubr.bf16.mxu0 %v1576
      %4569 = vmatmul.mubr.bf16.gmra.mrb[0].mxu0 %v1575
      %v4570 = vpop.f32.mrb[0].mxu0
      %v4571 = vadd.f32 %v4458, %v4570
      %v4572 = vpop.f32.mrb[0].mxu0
      %v4573 = vadd.f32 %v4460, %v4572
      %v4574 = vpop.f32.mrb[0].mxu0
      %v4575 = vadd.f32 %v4462, %v4574
      %v4576 = vpop.f32.mrb[0].mxu0
      %v4577 = vadd.f32 %v4464, %v4576
      %4578 = vdwg.mxu0
      %4579 = vmatprep.subr.bf16.mxu0 %v3213
      %4580 = vmatpush1.bf16.msra.mxu0 %v3212
      %4581 = vmatprep.subr.bf16.mxu0 %v3215
      %4582 = vmatpush1.bf16.msra.mxu0 %v3214
      %4583 = vmatprep.subr.bf16.mxu0 %v3217
      %4584 = vmatpush1.bf16.msra.mxu0 %v3216
      %4585 = vmatprep.subr.bf16.mxu0 %v3219
      %4586 = vmatpush1.bf16.msra.mxu0 %v3218
      %4587 = vmatprep.subr.bf16.mxu0 %v3221
      %4588 = vmatpush1.bf16.msra.mxu0 %v3220
      %4589 = vmatprep.subr.bf16.mxu0 %v3223
      %4590 = vmatpush1.bf16.msra.mxu0 %v3222
      %4591 = vmatprep.subr.bf16.mxu0 %v3225
      %4592 = vmatpush1.bf16.msra.mxu0 %v3224
      %4593 = vmatprep.subr.bf16.mxu0 %v3227
      %4594 = vmatpush1.bf16.msra.mxu0 %v3226
      %4595 = vmatprep.subr.bf16.mxu0 %v3229
      %4596 = vmatpush1.bf16.msra.mxu0 %v3228
      %4597 = vmatprep.subr.bf16.mxu0 %v3231
      %4598 = vmatpush1.bf16.msra.mxu0 %v3230
      %4599 = vmatprep.subr.bf16.mxu0 %v3233
      %4600 = vmatpush1.bf16.msra.mxu0 %v3232
      %4601 = vmatprep.subr.bf16.mxu0 %v3235
      %4602 = vmatpush1.bf16.msra.mxu0 %v3234
      %4603 = vmatprep.subr.bf16.mxu0 %v3237
      %4604 = vmatpush1.bf16.msra.mxu0 %v3236
      %4605 = vmatprep.subr.bf16.mxu0 %v3239
      %4606 = vmatpush1.bf16.msra.mxu0 %v3238
      %4607 = vmatprep.subr.bf16.mxu0 %v3241
      %4608 = vmatpush1.bf16.msra.mxu0 %v3240
      %4609 = vmatprep.subr.bf16.mxu0 %v3243
      %4610 = vmatpush1.bf16.msra.mxu0 %v3242
      %4611 = vmatprep.mubr.bf16.mxu0 %v1403
      %4612 = vmatmul.mubr.bf16.gmra.mrb[0].mxu0 %v1402
      %v4613 = vpop.f32.mrb[0].mxu0
      %v4614 = vadd.f32 %v4501, %v4613
      %v4615 = vpop.f32.mrb[0].mxu0
      %v4616 = vadd.f32 %v4503, %v4615
      %v4617 = vpop.f32.mrb[0].mxu0
      %v4618 = vadd.f32 %v4505, %v4617
      %v4619 = vpop.f32.mrb[0].mxu0
      %v4620 = vadd.f32 %v4507, %v4619
      %4621 = vmatprep.mubr.bf16.mxu0 %v1428
      %4622 = vmatmul.mubr.bf16.gmra.mrb[0].mxu0 %v1427
      %v4623 = vpop.f32.mrb[0].mxu0
      %v4624 = vadd.f32 %v4511, %v4623
      %v4625 = vpop.f32.mrb[0].mxu0
      %v4626 = vadd.f32 %v4513, %v4625
      %v4627 = vpop.f32.mrb[0].mxu0
      %v4628 = vadd.f32 %v4515, %v4627
      %v4629 = vpop.f32.mrb[0].mxu0
      %v4630 = vadd.f32 %v4517, %v4629
      %4631 = vmatprep.mubr.bf16.mxu0 %v1453
      %4632 = vmatmul.mubr.bf16.gmra.mrb[0].mxu0 %v1452
      %v4633 = vpop.f32.mrb[0].mxu0
      %v4634 = vadd.f32 %v4521, %v4633
      %v4635 = vpop.f32.mrb[0].mxu0
      %v4636 = vadd.f32 %v4523, %v4635
      %v4637 = vpop.f32.mrb[0].mxu0
      %v4638 = vadd.f32 %v4525, %v4637
      %v4639 = vpop.f32.mrb[0].mxu0
      %v4640 = vadd.f32 %v4527, %v4639
      %4641 = vmatprep.mubr.bf16.mxu0 %v1478
      %4642 = vmatmul.mubr.bf16.gmra.mrb[0].mxu0 %v1477
      %v4643 = vpop.f32.mrb[0].mxu0
      %v4644 = vadd.f32 %v4531, %v4643
      %v4645 = vpop.f32.mrb[0].mxu0
      %v4646 = vadd.f32 %v4533, %v4645
      %v4647 = vpop.f32.mrb[0].mxu0
      %v4648 = vadd.f32 %v4535, %v4647
      %v4649 = vpop.f32.mrb[0].mxu0
      %v4650 = vadd.f32 %v4537, %v4649
      %4651 = vmatprep.mubr.bf16.mxu0 %v1503
      %4652 = vmatmul.mubr.bf16.gmra.mrb[0].mxu0 %v1502
      %v4653 = vpop.f32.mrb[0].mxu0
      %v4654 = vadd.f32 %v4541, %v4653
      %v4655 = vpop.f32.mrb[0].mxu0
      %v4656 = vadd.f32 %v4543, %v4655
      %v4657 = vpop.f32.mrb[0].mxu0
      %v4658 = vadd.f32 %v4545, %v4657
      %v4659 = vpop.f32.mrb[0].mxu0
      %v4660 = vadd.f32 %v4547, %v4659
      %4661 = vmatprep.mubr.bf16.mxu0 %v1528
      %4662 = vmatmul.mubr.bf16.gmra.mrb[0].mxu0 %v1527
      %v4663 = vpop.f32.mrb[0].mxu0
      %v4664 = vadd.f32 %v4551, %v4663
      %v4665 = vpop.f32.mrb[0].mxu0
      %v4666 = vadd.f32 %v4553, %v4665
      %v4667 = vpop.f32.mrb[0].mxu0
      %v4668 = vadd.f32 %v4555, %v4667
      %v4669 = vpop.f32.mrb[0].mxu0
      %v4670 = vadd.f32 %v4557, %v4669
      %4671 = vmatprep.mubr.bf16.mxu0 %v1553
      %4672 = vmatmul.mubr.bf16.gmra.mrb[0].mxu0 %v1552
      %v4673 = vpop.f32.mrb[0].mxu0
      %v4674 = vadd.f32 %v4561, %v4673
      %v4675 = vpop.f32.mrb[0].mxu0
      %v4676 = vadd.f32 %v4563, %v4675
      %v4677 = vpop.f32.mrb[0].mxu0
      %v4678 = vadd.f32 %v4565, %v4677
      %v4679 = vpop.f32.mrb[0].mxu0
      %v4680 = vadd.f32 %v4567, %v4679
      %4681 = vmatprep.mubr.bf16.mxu0 %v1578
      %4682 = vmatmul.mubr.bf16.gmra.mrb[0].mxu0 %v1577
      %v4683 = vpop.f32.mrb[0].mxu0
      %v4684 = vadd.f32 %v4571, %v4683
      %v4685 = vpop.f32.mrb[0].mxu0
      %v4686 = vadd.f32 %v4573, %v4685
      %v4687 = vpop.f32.mrb[0].mxu0
      %v4688 = vadd.f32 %v4575, %v4687
      %v4689 = vpop.f32.mrb[0].mxu0
      %v4690 = vadd.f32 %v4577, %v4689
      %4691 = vdwg.mxu0
      %4692 = vmatprep.subr.bf16.mxu0 %v3245
      %4693 = vmatpush1.bf16.msra.mxu0 %v3244
      %4694 = vmatprep.subr.bf16.mxu0 %v3247
      %4695 = vmatpush1.bf16.msra.mxu0 %v3246
      %4696 = vmatprep.subr.bf16.mxu0 %v3249
      %4697 = vmatpush1.bf16.msra.mxu0 %v3248
      %4698 = vmatprep.subr.bf16.mxu0 %v3251
      %4699 = vmatpush1.bf16.msra.mxu0 %v3250
      %4700 = vmatprep.subr.bf16.mxu0 %v3253
      %4701 = vmatpush1.bf16.msra.mxu0 %v3252
      %4702 = vmatprep.subr.bf16.mxu0 %v3255
      %4703 = vmatpush1.bf16.msra.mxu0 %v3254
      %4704 = vmatprep.subr.bf16.mxu0 %v3257
      %4705 = vmatpush1.bf16.msra.mxu0 %v3256
      %4706 = vmatprep.subr.bf16.mxu0 %v3259
      %4707 = vmatpush1.bf16.msra.mxu0 %v3258
      %4708 = vmatprep.subr.bf16.mxu0 %v3261
      %4709 = vmatpush1.bf16.msra.mxu0 %v3260
      %4710 = vmatprep.subr.bf16.mxu0 %v3263
      %4711 = vmatpush1.bf16.msra.mxu0 %v3262
      %4712 = vmatprep.subr.bf16.mxu0 %v3265
      %4713 = vmatpush1.bf16.msra.mxu0 %v3264
      %4714 = vmatprep.subr.bf16.mxu0 %v3267
      %4715 = vmatpush1.bf16.msra.mxu0 %v3266
      %4716 = vmatprep.subr.bf16.mxu0 %v3269
      %4717 = vmatpush1.bf16.msra.mxu0 %v3268
      %4718 = vmatprep.subr.bf16.mxu0 %v3271
      %4719 = vmatpush1.bf16.msra.mxu0 %v3270
      %4720 = vmatprep.subr.bf16.mxu0 %v3273
      %4721 = vmatpush1.bf16.msra.mxu0 %v3272
      %4722 = vmatprep.subr.bf16.mxu0 %v3275
      %4723 = vmatpush1.bf16.msra.mxu0 %v3274
      %4724 = vmatprep.mubr.bf16.mxu0 %v1405
      %4725 = vmatmul.mubr.bf16.gmra.mrb[0].mxu0 %v1404
      %v4726 = vpop.f32.mrb[0].mxu0
      %v4727 = vadd.f32 %v4614, %v4726
      %v4728 = vpop.f32.mrb[0].mxu0
      %v4729 = vadd.f32 %v4616, %v4728
      %v4730 = vpop.f32.mrb[0].mxu0
      %v4731 = vadd.f32 %v4618, %v4730
      %v4732 = vpop.f32.mrb[0].mxu0
      %v4733 = vadd.f32 %v4620, %v4732
      %4734 = vmatprep.mubr.bf16.mxu0 %v1430
      %4735 = vmatmul.mubr.bf16.gmra.mrb[0].mxu0 %v1429
      %v4736 = vpop.f32.mrb[0].mxu0
      %v4737 = vadd.f32 %v4624, %v4736
      %v4738 = vpop.f32.mrb[0].mxu0
      %v4739 = vadd.f32 %v4626, %v4738
      %v4740 = vpop.f32.mrb[0].mxu0
      %v4741 = vadd.f32 %v4628, %v4740
      %v4742 = vpop.f32.mrb[0].mxu0
      %v4743 = vadd.f32 %v4630, %v4742
      %4744 = vmatprep.mubr.bf16.mxu0 %v1455
      %4745 = vmatmul.mubr.bf16.gmra.mrb[0].mxu0 %v1454
      %v4746 = vpop.f32.mrb[0].mxu0
      %v4747 = vadd.f32 %v4634, %v4746
      %v4748 = vpop.f32.mrb[0].mxu0
      %v4749 = vadd.f32 %v4636, %v4748
      %v4750 = vpop.f32.mrb[0].mxu0
      %v4751 = vadd.f32 %v4638, %v4750
      %v4752 = vpop.f32.mrb[0].mxu0
      %v4753 = vadd.f32 %v4640, %v4752
      %4754 = vmatprep.mubr.bf16.mxu0 %v1480
      %4755 = vmatmul.mubr.bf16.gmra.mrb[0].mxu0 %v1479
      %v4756 = vpop.f32.mrb[0].mxu0
      %v4757 = vadd.f32 %v4644, %v4756
      %v4758 = vpop.f32.mrb[0].mxu0
      %v4759 = vadd.f32 %v4646, %v4758
      %v4760 = vpop.f32.mrb[0].mxu0
      %v4761 = vadd.f32 %v4648, %v4760
      %v4762 = vpop.f32.mrb[0].mxu0
      %v4763 = vadd.f32 %v4650, %v4762
      %4764 = vmatprep.mubr.bf16.mxu0 %v1505
      %4765 = vmatmul.mubr.bf16.gmra.mrb[0].mxu0 %v1504
      %v4766 = vpop.f32.mrb[0].mxu0
      %v4767 = vadd.f32 %v4654, %v4766
      %v4768 = vpop.f32.mrb[0].mxu0
      %v4769 = vadd.f32 %v4656, %v4768
      %v4770 = vpop.f32.mrb[0].mxu0
      %v4771 = vadd.f32 %v4658, %v4770
      %v4772 = vpop.f32.mrb[0].mxu0
      %v4773 = vadd.f32 %v4660, %v4772
      %4774 = vmatprep.mubr.bf16.mxu0 %v1530
      %4775 = vmatmul.mubr.bf16.gmra.mrb[0].mxu0 %v1529
      %v4776 = vpop.f32.mrb[0].mxu0
      %v4777 = vadd.f32 %v4664, %v4776
      %v4778 = vpop.f32.mrb[0].mxu0
      %v4779 = vadd.f32 %v4666, %v4778
      %v4780 = vpop.f32.mrb[0].mxu0
      %v4781 = vadd.f32 %v4668, %v4780
      %v4782 = vpop.f32.mrb[0].mxu0
      %v4783 = vadd.f32 %v4670, %v4782
      %4784 = vmatprep.mubr.bf16.mxu0 %v1555
      %4785 = vmatmul.mubr.bf16.gmra.mrb[0].mxu0 %v1554
      %v4786 = vpop.f32.mrb[0].mxu0
      %v4787 = vadd.f32 %v4674, %v4786
      %v4788 = vpop.f32.mrb[0].mxu0
      %v4789 = vadd.f32 %v4676, %v4788
      %v4790 = vpop.f32.mrb[0].mxu0
      %v4791 = vadd.f32 %v4678, %v4790
      %v4792 = vpop.f32.mrb[0].mxu0
      %v4793 = vadd.f32 %v4680, %v4792
      %4794 = vmatprep.mubr.bf16.mxu0 %v1580
      %4795 = vmatmul.mubr.bf16.gmra.mrb[0].mxu0 %v1579
      %v4796 = vpop.f32.mrb[0].mxu0
      %v4797 = vadd.f32 %v4684, %v4796
      %v4798 = vpop.f32.mrb[0].mxu0
      %v4799 = vadd.f32 %v4686, %v4798
      %v4800 = vpop.f32.mrb[0].mxu0
      %v4801 = vadd.f32 %v4688, %v4800
      %v4802 = vpop.f32.mrb[0].mxu0
      %v4803 = vadd.f32 %v4690, %v4802
      %4804 = vdwg.mxu0
      %4805 = vmatprep.subr.bf16.mxu0 %v3277
      %4806 = vmatpush1.bf16.msra.mxu0 %v3276
      %4807 = vmatprep.subr.bf16.mxu0 %v3279
      %4808 = vmatpush1.bf16.msra.mxu0 %v3278
      %4809 = vmatprep.subr.bf16.mxu0 %v3281
      %4810 = vmatpush1.bf16.msra.mxu0 %v3280
      %4811 = vmatprep.subr.bf16.mxu0 %v3283
      %4812 = vmatpush1.bf16.msra.mxu0 %v3282
      %4813 = vmatprep.subr.bf16.mxu0 %v3285
      %4814 = vmatpush1.bf16.msra.mxu0 %v3284
      %4815 = vmatprep.subr.bf16.mxu0 %v3287
      %4816 = vmatpush1.bf16.msra.mxu0 %v3286
      %4817 = vmatprep.subr.bf16.mxu0 %v3289
      %4818 = vmatpush1.bf16.msra.mxu0 %v3288
      %4819 = vmatprep.subr.bf16.mxu0 %v3291
      %4820 = vmatpush1.bf16.msra.mxu0 %v3290
      %4821 = vmatprep.subr.bf16.mxu0 %v3293
      %4822 = vmatpush1.bf16.msra.mxu0 %v3292
      %4823 = vmatprep.subr.bf16.mxu0 %v3295
      %4824 = vmatpush1.bf16.msra.mxu0 %v3294
      %4825 = vmatprep.subr.bf16.mxu0 %v3297
      %4826 = vmatpush1.bf16.msra.mxu0 %v3296
      %4827 = vmatprep.subr.bf16.mxu0 %v3299
      %4828 = vmatpush1.bf16.msra.mxu0 %v3298
      %4829 = vmatprep.subr.bf16.mxu0 %v3301
      %4830 = vmatpush1.bf16.msra.mxu0 %v3300
      %4831 = vmatprep.subr.bf16.mxu0 %v3303
      %4832 = vmatpush1.bf16.msra.mxu0 %v3302
      %4833 = vmatprep.subr.bf16.mxu0 %v3305
      %4834 = vmatpush1.bf16.msra.mxu0 %v3304
      %4835 = vmatprep.subr.bf16.mxu0 %v3307
      %4836 = vmatpush1.bf16.msra.mxu0 %v3306
      %4837 = vmatprep.mubr.bf16.mxu0 %v1407
      %4838 = vmatmul.mubr.bf16.gmra.mrb[0].mxu0 %v1406
      %v4839 = vpop.f32.mrb[0].mxu0
      %v4840 = vadd.f32 %v4727, %v4839
      %v4841 = vpop.f32.mrb[0].mxu0
      %v4842 = vadd.f32 %v4729, %v4841
      %v4843 = vpop.f32.mrb[0].mxu0
      %v4844 = vadd.f32 %v4731, %v4843
      %v4845 = vpop.f32.mrb[0].mxu0
      %v4846 = vadd.f32 %v4733, %v4845
      %4847 = vmatprep.mubr.bf16.mxu0 %v1432
      %4848 = vmatmul.mubr.bf16.gmra.mrb[0].mxu0 %v1431
      %v4849 = vpop.f32.mrb[0].mxu0
      %v4850 = vadd.f32 %v4737, %v4849
      %v4851 = vpop.f32.mrb[0].mxu0
      %v4852 = vadd.f32 %v4739, %v4851
      %v4853 = vpop.f32.mrb[0].mxu0
      %v4854 = vadd.f32 %v4741, %v4853
      %v4855 = vpop.f32.mrb[0].mxu0
      %v4856 = vadd.f32 %v4743, %v4855
      %4857 = vmatprep.mubr.bf16.mxu0 %v1457
      %4858 = vmatmul.mubr.bf16.gmra.mrb[0].mxu0 %v1456
      %v4859 = vpop.f32.mrb[0].mxu0
      %v4860 = vadd.f32 %v4747, %v4859
      %v4861 = vpop.f32.mrb[0].mxu0
      %v4862 = vadd.f32 %v4749, %v4861
      %v4863 = vpop.f32.mrb[0].mxu0
      %v4864 = vadd.f32 %v4751, %v4863
      %v4865 = vpop.f32.mrb[0].mxu0
      %v4866 = vadd.f32 %v4753, %v4865
      %4867 = vmatprep.mubr.bf16.mxu0 %v1482
      %4868 = vmatmul.mubr.bf16.gmra.mrb[0].mxu0 %v1481
      %v4869 = vpop.f32.mrb[0].mxu0
      %v4870 = vadd.f32 %v4757, %v4869
      %v4871 = vpop.f32.mrb[0].mxu0
      %v4872 = vadd.f32 %v4759, %v4871
      %v4873 = vpop.f32.mrb[0].mxu0
      %v4874 = vadd.f32 %v4761, %v4873
      %v4875 = vpop.f32.mrb[0].mxu0
      %v4876 = vadd.f32 %v4763, %v4875
      %4877 = vmatprep.mubr.bf16.mxu0 %v1507
      %4878 = vmatmul.mubr.bf16.gmra.mrb[0].mxu0 %v1506
      %v4879 = vpop.f32.mrb[0].mxu0
      %v4880 = vadd.f32 %v4767, %v4879
      %v4881 = vpop.f32.mrb[0].mxu0
      %v4882 = vadd.f32 %v4769, %v4881
      %v4883 = vpop.f32.mrb[0].mxu0
      %v4884 = vadd.f32 %v4771, %v4883
      %v4885 = vpop.f32.mrb[0].mxu0
      %v4886 = vadd.f32 %v4773, %v4885
      %4887 = vmatprep.mubr.bf16.mxu0 %v1532
      %4888 = vmatmul.mubr.bf16.gmra.mrb[0].mxu0 %v1531
      %v4889 = vpop.f32.mrb[0].mxu0
      %v4890 = vadd.f32 %v4777, %v4889
      %v4891 = vpop.f32.mrb[0].mxu0
      %v4892 = vadd.f32 %v4779, %v4891
      %v4893 = vpop.f32.mrb[0].mxu0
      %v4894 = vadd.f32 %v4781, %v4893
      %v4895 = vpop.f32.mrb[0].mxu0
      %v4896 = vadd.f32 %v4783, %v4895
      %4897 = vmatprep.mubr.bf16.mxu0 %v1557
      %4898 = vmatmul.mubr.bf16.gmra.mrb[0].mxu0 %v1556
      %v4899 = vpop.f32.mrb[0].mxu0
      %v4900 = vadd.f32 %v4787, %v4899
      %v4901 = vpop.f32.mrb[0].mxu0
      %v4902 = vadd.f32 %v4789, %v4901
      %v4903 = vpop.f32.mrb[0].mxu0
      %v4904 = vadd.f32 %v4791, %v4903
      %v4905 = vpop.f32.mrb[0].mxu0
      %v4906 = vadd.f32 %v4793, %v4905
      %4907 = vmatprep.mubr.bf16.mxu0 %v1582
      %4908 = vmatmul.mubr.bf16.gmra.mrb[0].mxu0 %v1581
      %v4909 = vpop.f32.mrb[0].mxu0
      %v4910 = vadd.f32 %v4797, %v4909
      %v4911 = vpop.f32.mrb[0].mxu0
      %v4912 = vadd.f32 %v4799, %v4911
      %v4913 = vpop.f32.mrb[0].mxu0
      %v4914 = vadd.f32 %v4801, %v4913
      %v4915 = vpop.f32.mrb[0].mxu0
      %v4916 = vadd.f32 %v4803, %v4915
      %4917 = vdwg.mxu0
      %4918 = vmatprep.subr.bf16.mxu0 %v3309
      %4919 = vmatpush1.bf16.msra.mxu0 %v3308
      %4920 = vmatprep.subr.bf16.mxu0 %v3311
      %4921 = vmatpush1.bf16.msra.mxu0 %v3310
      %4922 = vmatprep.subr.bf16.mxu0 %v3313
      %4923 = vmatpush1.bf16.msra.mxu0 %v3312
      %4924 = vmatprep.subr.bf16.mxu0 %v3315
      %4925 = vmatpush1.bf16.msra.mxu0 %v3314
      %4926 = vmatprep.subr.bf16.mxu0 %v3317
      %4927 = vmatpush1.bf16.msra.mxu0 %v3316
      %4928 = vmatprep.subr.bf16.mxu0 %v3319
      %4929 = vmatpush1.bf16.msra.mxu0 %v3318
      %4930 = vmatprep.subr.bf16.mxu0 %v3321
      %4931 = vmatpush1.bf16.msra.mxu0 %v3320
      %4932 = vmatprep.subr.bf16.mxu0 %v3323
      %4933 = vmatpush1.bf16.msra.mxu0 %v3322
      %4934 = vmatprep.subr.bf16.mxu0 %v3325
      %4935 = vmatpush1.bf16.msra.mxu0 %v3324
      %4936 = vmatprep.subr.bf16.mxu0 %v3327
      %4937 = vmatpush1.bf16.msra.mxu0 %v3326
      %4938 = vmatprep.subr.bf16.mxu0 %v3329
      %4939 = vmatpush1.bf16.msra.mxu0 %v3328
      %4940 = vmatprep.subr.bf16.mxu0 %v3331
      %4941 = vmatpush1.bf16.msra.mxu0 %v3330
      %4942 = vmatprep.subr.bf16.mxu0 %v3333
      %4943 = vmatpush1.bf16.msra.mxu0 %v3332
      %4944 = vmatprep.subr.bf16.mxu0 %v3335
      %4945 = vmatpush1.bf16.msra.mxu0 %v3334
      %4946 = vmatprep.subr.bf16.mxu0 %v3337
      %4947 = vmatpush1.bf16.msra.mxu0 %v3336
      %4948 = vmatprep.subr.bf16.mxu0 %v3339
      %4949 = vmatpush1.bf16.msra.mxu0 %v3338
      %4950 = vmatprep.mubr.bf16.mxu0 %v1409
      %4951 = vmatmul.mubr.bf16.gmra.mrb[0].mxu0 %v1408
      %v4952 = vpop.f32.mrb[0].mxu0
      %v4953 = vadd.f32 %v4840, %v4952
      %v4954 = vpop.f32.mrb[0].mxu0
      %v4955 = vadd.f32 %v4842, %v4954
      %v4956 = vpop.f32.mrb[0].mxu0
      %v4957 = vadd.f32 %v4844, %v4956
      %v4958 = vpop.f32.mrb[0].mxu0
      %v4959 = vadd.f32 %v4846, %v4958
      %4960 = vmatprep.mubr.bf16.mxu0 %v1434
      %4961 = vmatmul.mubr.bf16.gmra.mrb[0].mxu0 %v1433
      %v4962 = vpop.f32.mrb[0].mxu0
      %v4963 = vadd.f32 %v4850, %v4962
      %v4964 = vpop.f32.mrb[0].mxu0
      %v4965 = vadd.f32 %v4852, %v4964
      %v4966 = vpop.f32.mrb[0].mxu0
      %v4967 = vadd.f32 %v4854, %v4966
      %v4968 = vpop.f32.mrb[0].mxu0
      %v4969 = vadd.f32 %v4856, %v4968
      %4970 = vmatprep.mubr.bf16.mxu0 %v1459
      %4971 = vmatmul.mubr.bf16.gmra.mrb[0].mxu0 %v1458
      %v4972 = vpop.f32.mrb[0].mxu0
      %v4973 = vadd.f32 %v4860, %v4972
      %v4974 = vpop.f32.mrb[0].mxu0
      %v4975 = vadd.f32 %v4862, %v4974
      %v4976 = vpop.f32.mrb[0].mxu0
      %v4977 = vadd.f32 %v4864, %v4976
      %v4978 = vpop.f32.mrb[0].mxu0
      %v4979 = vadd.f32 %v4866, %v4978
      %4980 = vmatprep.mubr.bf16.mxu0 %v1484
      %4981 = vmatmul.mubr.bf16.gmra.mrb[0].mxu0 %v1483
      %v4982 = vpop.f32.mrb[0].mxu0
      %v4983 = vadd.f32 %v4870, %v4982
      %v4984 = vpop.f32.mrb[0].mxu0
      %v4985 = vadd.f32 %v4872, %v4984
      %v4986 = vpop.f32.mrb[0].mxu0
      %v4987 = vadd.f32 %v4874, %v4986
      %v4988 = vpop.f32.mrb[0].mxu0
      %v4989 = vadd.f32 %v4876, %v4988
      %4990 = vmatprep.mubr.bf16.mxu0 %v1509
      %4991 = vmatmul.mubr.bf16.gmra.mrb[0].mxu0 %v1508
      %v4992 = vpop.f32.mrb[0].mxu0
      %v4993 = vadd.f32 %v4880, %v4992
      %v4994 = vpop.f32.mrb[0].mxu0
      %v4995 = vadd.f32 %v4882, %v4994
      %v4996 = vpop.f32.mrb[0].mxu0
      %v4997 = vadd.f32 %v4884, %v4996
      %v4998 = vpop.f32.mrb[0].mxu0
      %v4999 = vadd.f32 %v4886, %v4998
      %5000 = vmatprep.mubr.bf16.mxu0 %v1534
      %5001 = vmatmul.mubr.bf16.gmra.mrb[0].mxu0 %v1533
      %v5002 = vpop.f32.mrb[0].mxu0
      %v5003 = vadd.f32 %v4890, %v5002
      %v5004 = vpop.f32.mrb[0].mxu0
      %v5005 = vadd.f32 %v4892, %v5004
      %v5006 = vpop.f32.mrb[0].mxu0
      %v5007 = vadd.f32 %v4894, %v5006
      %v5008 = vpop.f32.mrb[0].mxu0
      %v5009 = vadd.f32 %v4896, %v5008
      %5010 = vmatprep.mubr.bf16.mxu0 %v1559
      %5011 = vmatmul.mubr.bf16.gmra.mrb[0].mxu0 %v1558
      %v5012 = vpop.f32.mrb[0].mxu0
      %v5013 = vadd.f32 %v4900, %v5012
      %v5014 = vpop.f32.mrb[0].mxu0
      %v5015 = vadd.f32 %v4902, %v5014
      %v5016 = vpop.f32.mrb[0].mxu0
      %v5017 = vadd.f32 %v4904, %v5016
      %v5018 = vpop.f32.mrb[0].mxu0
      %v5019 = vadd.f32 %v4906, %v5018
      %5020 = vmatprep.mubr.bf16.mxu0 %v1584
      %5021 = vmatmul.mubr.bf16.gmra.mrb[0].mxu0 %v1583
      %v5022 = vpop.f32.mrb[0].mxu0
      %v5023 = vadd.f32 %v4910, %v5022
      %v5024 = vpop.f32.mrb[0].mxu0
      %v5025 = vadd.f32 %v4912, %v5024
      %v5026 = vpop.f32.mrb[0].mxu0
      %v5027 = vadd.f32 %v4914, %v5026
      %v5028 = vpop.f32.mrb[0].mxu0
      %v5029 = vadd.f32 %v4916, %v5028
      %5030 = vdwg.mxu0
      %5031 = vmatprep.subr.bf16.mxu0 %v3341
      %5032 = vmatpush1.bf16.msra.mxu0 %v3340
      %5033 = vmatprep.subr.bf16.mxu0 %v3343
      %5034 = vmatpush1.bf16.msra.mxu0 %v3342
      %5035 = vmatprep.subr.bf16.mxu0 %v3345
      %5036 = vmatpush1.bf16.msra.mxu0 %v3344
      %5037 = vmatprep.subr.bf16.mxu0 %v3347
      %5038 = vmatpush1.bf16.msra.mxu0 %v3346
      %5039 = vmatprep.subr.bf16.mxu0 %v3349
      %5040 = vmatpush1.bf16.msra.mxu0 %v3348
      %5041 = vmatprep.subr.bf16.mxu0 %v3351
      %5042 = vmatpush1.bf16.msra.mxu0 %v3350
      %5043 = vmatprep.subr.bf16.mxu0 %v3353
      %5044 = vmatpush1.bf16.msra.mxu0 %v3352
      %5045 = vmatprep.subr.bf16.mxu0 %v3355
      %5046 = vmatpush1.bf16.msra.mxu0 %v3354
      %5047 = vmatprep.subr.bf16.mxu0 %v3357
      %5048 = vmatpush1.bf16.msra.mxu0 %v3356
      %5049 = vmatprep.subr.bf16.mxu0 %v3359
      %5050 = vmatpush1.bf16.msra.mxu0 %v3358
      %5051 = vmatprep.subr.bf16.mxu0 %v3361
      %5052 = vmatpush1.bf16.msra.mxu0 %v3360
      %5053 = vmatprep.subr.bf16.mxu0 %v3363
      %5054 = vmatpush1.bf16.msra.mxu0 %v3362
      %5055 = vmatprep.subr.bf16.mxu0 %v3365
      %5056 = vmatpush1.bf16.msra.mxu0 %v3364
      %5057 = vmatprep.subr.bf16.mxu0 %v3367
      %5058 = vmatpush1.bf16.msra.mxu0 %v3366
      %5059 = vmatprep.subr.bf16.mxu0 %v3369
      %5060 = vmatpush1.bf16.msra.mxu0 %v3368
      %5061 = vmatprep.subr.bf16.mxu0 %v3371
      %5062 = vmatpush1.bf16.msra.mxu0 %v3370
      %5063 = vmatprep.mubr.bf16.mxu0 %v1411
      %5064 = vmatmul.mubr.bf16.gmra.mrb[0].mxu0 %v1410
      %v5065 = vpop.f32.mrb[0].mxu0
      %v5066 = vadd.f32 %v4953, %v5065
      %v5067 = vpop.f32.mrb[0].mxu0
      %v5068 = vadd.f32 %v4955, %v5067
      %v5069 = vpop.f32.mrb[0].mxu0
      %v5070 = vadd.f32 %v4957, %v5069
      %v5071 = vpop.f32.mrb[0].mxu0
      %v5072 = vadd.f32 %v4959, %v5071
      %5073 = vmatprep.mubr.bf16.mxu0 %v1436
      %5074 = vmatmul.mubr.bf16.gmra.mrb[0].mxu0 %v1435
      %v5075 = vpop.f32.mrb[0].mxu0
      %v5076 = vadd.f32 %v4963, %v5075
      %v5077 = vpop.f32.mrb[0].mxu0
      %v5078 = vadd.f32 %v4965, %v5077
      %v5079 = vpop.f32.mrb[0].mxu0
      %v5080 = vadd.f32 %v4967, %v5079
      %v5081 = vpop.f32.mrb[0].mxu0
      %v5082 = vadd.f32 %v4969, %v5081
      %5083 = vmatprep.mubr.bf16.mxu0 %v1461
      %5084 = vmatmul.mubr.bf16.gmra.mrb[0].mxu0 %v1460
      %v5085 = vpop.f32.mrb[0].mxu0
      %v5086 = vadd.f32 %v4973, %v5085
      %v5087 = vpop.f32.mrb[0].mxu0
      %v5088 = vadd.f32 %v4975, %v5087
      %v5089 = vpop.f32.mrb[0].mxu0
      %v5090 = vadd.f32 %v4977, %v5089
      %v5091 = vpop.f32.mrb[0].mxu0
      %v5092 = vadd.f32 %v4979, %v5091
      %5093 = vmatprep.mubr.bf16.mxu0 %v1486
      %5094 = vmatmul.mubr.bf16.gmra.mrb[0].mxu0 %v1485
      %v5095 = vpop.f32.mrb[0].mxu0
      %v5096 = vadd.f32 %v4983, %v5095
      %v5097 = vpop.f32.mrb[0].mxu0
      %v5098 = vadd.f32 %v4985, %v5097
      %v5099 = vpop.f32.mrb[0].mxu0
      %v5100 = vadd.f32 %v4987, %v5099
      %v5101 = vpop.f32.mrb[0].mxu0
      %v5102 = vadd.f32 %v4989, %v5101
      %5103 = vmatprep.mubr.bf16.mxu0 %v1511
      %5104 = vmatmul.mubr.bf16.gmra.mrb[0].mxu0 %v1510
      %v5105 = vpop.f32.mrb[0].mxu0
      %v5106 = vadd.f32 %v4993, %v5105
      %v5107 = vpop.f32.mrb[0].mxu0
      %v5108 = vadd.f32 %v4995, %v5107
      %v5109 = vpop.f32.mrb[0].mxu0
      %v5110 = vadd.f32 %v4997, %v5109
      %v5111 = vpop.f32.mrb[0].mxu0
      %v5112 = vadd.f32 %v4999, %v5111
      %5113 = vmatprep.mubr.bf16.mxu0 %v1536
      %5114 = vmatmul.mubr.bf16.gmra.mrb[0].mxu0 %v1535
      %v5115 = vpop.f32.mrb[0].mxu0
      %v5116 = vadd.f32 %v5003, %v5115
      %v5117 = vpop.f32.mrb[0].mxu0
      %v5118 = vadd.f32 %v5005, %v5117
      %v5119 = vpop.f32.mrb[0].mxu0
      %v5120 = vadd.f32 %v5007, %v5119
      %v5121 = vpop.f32.mrb[0].mxu0
      %v5122 = vadd.f32 %v5009, %v5121
      %5123 = vmatprep.mubr.bf16.mxu0 %v1561
      %5124 = vmatmul.mubr.bf16.gmra.mrb[0].mxu0 %v1560
      %v5125 = vpop.f32.mrb[0].mxu0
      %v5126 = vadd.f32 %v5013, %v5125
      %v5127 = vpop.f32.mrb[0].mxu0
      %v5128 = vadd.f32 %v5015, %v5127
      %v5129 = vpop.f32.mrb[0].mxu0
      %v5130 = vadd.f32 %v5017, %v5129
      %v5131 = vpop.f32.mrb[0].mxu0
      %v5132 = vadd.f32 %v5019, %v5131
      %5133 = vmatprep.mubr.bf16.mxu0 %v1586
      %5134 = vmatmul.mubr.bf16.gmra.mrb[0].mxu0 %v1585
      %v5135 = vpop.f32.mrb[0].mxu0
      %v5136 = vadd.f32 %v5023, %v5135
      %v5137 = vpop.f32.mrb[0].mxu0
      %v5138 = vadd.f32 %v5025, %v5137
      %v5139 = vpop.f32.mrb[0].mxu0
      %v5140 = vadd.f32 %v5027, %v5139
      %v5141 = vpop.f32.mrb[0].mxu0
      %v5142 = vadd.f32 %v5029, %v5141
      %5143 = vdwg.mxu0
      %5144 = vmatprep.subr.bf16.mxu0 %v3373
      %5145 = vmatpush1.bf16.msra.mxu0 %v3372
      %5146 = vmatprep.subr.bf16.mxu0 %v3375
      %5147 = vmatpush1.bf16.msra.mxu0 %v3374
      %5148 = vmatprep.subr.bf16.mxu0 %v3377
      %5149 = vmatpush1.bf16.msra.mxu0 %v3376
      %5150 = vmatprep.subr.bf16.mxu0 %v3379
      %5151 = vmatpush1.bf16.msra.mxu0 %v3378
      %5152 = vmatprep.subr.bf16.mxu0 %v3381
      %5153 = vmatpush1.bf16.msra.mxu0 %v3380
      %5154 = vmatprep.subr.bf16.mxu0 %v3383
      %5155 = vmatpush1.bf16.msra.mxu0 %v3382
      %5156 = vmatprep.subr.bf16.mxu0 %v3385
      %5157 = vmatpush1.bf16.msra.mxu0 %v3384
      %5158 = vmatprep.subr.bf16.mxu0 %v3387
      %5159 = vmatpush1.bf16.msra.mxu0 %v3386
      %5160 = vmatprep.subr.bf16.mxu0 0
      %5161 = vmatpush1.bf16.msra.mxu0 0
      %5162 = vmatprep.subr.bf16.mxu0 0
      %5163 = vmatpush1.bf16.msra.mxu0 0
      %5164 = vmatprep.subr.bf16.mxu0 0
      %5165 = vmatpush1.bf16.msra.mxu0 0
      %5166 = vmatprep.subr.bf16.mxu0 0
      %5167 = vmatpush1.bf16.msra.mxu0 0
      %5168 = vmatprep.subr.bf16.mxu0 0
      %5169 = vmatpush1.bf16.msra.mxu0 0
      %5170 = vmatprep.subr.bf16.mxu0 0
      %5171 = vmatpush1.bf16.msra.mxu0 0
      %5172 = vmatprep.subr.bf16.mxu0 0
      %5173 = vmatpush1.bf16.msra.mxu0 0
      %5174 = vmatprep.subr.bf16.mxu0 0
      %5175 = vmatpush1.bf16.msra.mxu0 0
      %5176 = vmatprep.mubr.bf16.mxu0 0
      %5177 = vmatmul.mubr.bf16.gmra.mrb[0].mxu0 %v1412
      %v5178 = vpop.f32.mrb[0].mxu0
      %v5179 = vadd.f32 %v5066, %v5178
      %v5180 = vpop.f32.mrb[0].mxu0
      %v5181 = vadd.f32 %v5068, %v5180
      %v5182 = vpop.f32.mrb[0].mxu0
      %v5183 = vadd.f32 %v5070, %v5182
      %v5184 = vpop.f32.mrb[0].mxu0
      %v5185 = vadd.f32 %v5072, %v5184
      %5186 = vmatprep.mubr.bf16.mxu0 0
      %5187 = vmatmul.mubr.bf16.gmra.mrb[0].mxu0 %v1437
      %v5188 = vpop.f32.mrb[0].mxu0
      %v5189 = vadd.f32 %v5076, %v5188
      %v5190 = vpop.f32.mrb[0].mxu0
      %v5191 = vadd.f32 %v5078, %v5190
      %v5192 = vpop.f32.mrb[0].mxu0
      %v5193 = vadd.f32 %v5080, %v5192
      %v5194 = vpop.f32.mrb[0].mxu0
      %v5195 = vadd.f32 %v5082, %v5194
      %5196 = vmatprep.mubr.bf16.mxu0 0
      %5197 = vmatmul.mubr.bf16.gmra.mrb[0].mxu0 %v1462
      %v5198 = vpop.f32.mrb[0].mxu0
      %v5199 = vadd.f32 %v5086, %v5198
      %v5200 = vpop.f32.mrb[0].mxu0
      %v5201 = vadd.f32 %v5088, %v5200
      %v5202 = vpop.f32.mrb[0].mxu0
      %v5203 = vadd.f32 %v5090, %v5202
      %v5204 = vpop.f32.mrb[0].mxu0
      %v5205 = vadd.f32 %v5092, %v5204
      %5206 = vmatprep.mubr.bf16.mxu0 0
      %5207 = vmatmul.mubr.bf16.gmra.mrb[0].mxu0 %v1487
      %v5208 = vpop.f32.mrb[0].mxu0
      %v5209 = vadd.f32 %v5096, %v5208
      %v5210 = vpop.f32.mrb[0].mxu0
      %v5211 = vadd.f32 %v5098, %v5210
      %v5212 = vpop.f32.mrb[0].mxu0
      %v5213 = vadd.f32 %v5100, %v5212
      %v5214 = vpop.f32.mrb[0].mxu0
      %v5215 = vadd.f32 %v5102, %v5214
      %5216 = vmatprep.mubr.bf16.mxu0 0
      %5217 = vmatmul.mubr.bf16.gmra.mrb[0].mxu0 %v1512
      %v5218 = vpop.f32.mrb[0].mxu0
      %v5219 = vadd.f32 %v5106, %v5218
      %v5220 = vpop.f32.mrb[0].mxu0
      %v5221 = vadd.f32 %v5108, %v5220
      %v5222 = vpop.f32.mrb[0].mxu0
      %v5223 = vadd.f32 %v5110, %v5222
      %v5224 = vpop.f32.mrb[0].mxu0
      %v5225 = vadd.f32 %v5112, %v5224
      %5226 = vmatprep.mubr.bf16.mxu0 0
      %5227 = vmatmul.mubr.bf16.gmra.mrb[0].mxu0 %v1537
      %v5228 = vpop.f32.mrb[0].mxu0
      %v5229 = vadd.f32 %v5116, %v5228
      %v5230 = vpop.f32.mrb[0].mxu0
      %v5231 = vadd.f32 %v5118, %v5230
      %v5232 = vpop.f32.mrb[0].mxu0
      %v5233 = vadd.f32 %v5120, %v5232
      %v5234 = vpop.f32.mrb[0].mxu0
      %v5235 = vadd.f32 %v5122, %v5234
      %5236 = vmatprep.mubr.bf16.mxu0 0
      %5237 = vmatmul.mubr.bf16.gmra.mrb[0].mxu0 %v1562
      %v5238 = vpop.f32.mrb[0].mxu0
      %v5239 = vadd.f32 %v5126, %v5238
      %v5240 = vpop.f32.mrb[0].mxu0
      %v5241 = vadd.f32 %v5128, %v5240
      %v5242 = vpop.f32.mrb[0].mxu0
      %v5243 = vadd.f32 %v5130, %v5242
      %v5244 = vpop.f32.mrb[0].mxu0
      %v5245 = vadd.f32 %v5132, %v5244
      %5246 = vmatprep.mubr.bf16.mxu0 0
      %5247 = vmatmul.mubr.bf16.gmra.mrb[0].mxu0 %v1587
      %v5248 = vpop.f32.mrb[0].mxu0
      %v5249 = vadd.f32 %v5136, %v5248
      %v5250 = vpop.f32.mrb[0].mxu0
      %v5251 = vadd.f32 %v5138, %v5250
      %v5252 = vpop.f32.mrb[0].mxu0
      %v5253 = vadd.f32 %v5140, %v5252
      %v5254 = vpop.f32.mrb[0].mxu0
      %v5255 = vadd.f32 %v5142, %v5254
      %5256 = vdwg.mxu0
      %v5257 = vmax.f32 %v5179, %v5199
      %v5258 = vmax.f32 %v5181, %v5201
      %v5259 = vmax.f32 %v5183, %v5203
      %v5260 = vmax.f32 %v5185, %v5205
      %v5261 = vmax.f32 %v5189, %v5209
      %v5262 = vmax.f32 %v5191, %v5211
      %v5263 = vmax.f32 %v5193, %v5213
      %v5264 = vmax.f32 %v5195, %v5215
      %v5265 = vmax.f32 %v5219, %v5239
      %v5266 = vmax.f32 %v5221, %v5241
      %v5267 = vmax.f32 %v5223, %v5243
      %v5268 = vmax.f32 %v5225, %v5245
      %v5269 = vmax.f32 %v5229, %v5249
      %v5270 = vmax.f32 %v5231, %v5251
      %v5271 = vmax.f32 %v5233, %v5253
      %v5272 = vmax.f32 %v5235, %v5255
      %v5273 = vmax.f32 %v5257, %v5265
      %v5274 = vmax.f32 %v5258, %v5266
      %v5275 = vmax.f32 %v5259, %v5267
      %v5276 = vmax.f32 %v5260, %v5268
      %v5277 = vmax.f32 %v5261, %v5269
      %v5278 = vmax.f32 %v5262, %v5270
      %v5279 = vmax.f32 %v5263, %v5271
      %v5280 = vmax.f32 %v5264, %v5272
      %v5281 = vld [vmem:[%s2] sm:$0x3]
      %v5283 = vlaneseq
      %v5284 = vshrl.u32 %v5283, 7
      %v5285 = vsub.s32 0, %v5284
      %v5286 = vrot.slane %v5281, %v5285
      %v5287 = vlaneseq
      %v5288 = vshrl.u32 %v5287, 7
      %v5289 = vsub.s32 1, %v5288
      %v5290 = vrot.slane %v5281, %v5289
      %v5293 = vadd.f32 %v5273, %v5286
      %v5294 = vadd.f32 %v5274, %v5290
      %v5295 = vadd.f32 %v5275, %v5286
      %v5296 = vadd.f32 %v5276, %v5290
      %v5297 = vadd.f32 %v5277, %v5286
      %v5298 = vadd.f32 %v5278, %v5290
      %v5299 = vadd.f32 %v5279, %v5286
      %v5300 = vadd.f32 %v5280, %v5290
      %v5301 = vmax.f32 %v5293, 0.0
      %v5302 = vmax.f32 %v5294, 0.0
      %v5303 = vmax.f32 %v5295, 0.0
      %v5304 = vmax.f32 %v5296, 0.0
      %v5305 = vmax.f32 %v5297, 0.0
      %v5306 = vmax.f32 %v5298, 0.0
      %v5307 = vmax.f32 %v5299, 0.0
      %v5308 = vmax.f32 %v5300, 0.0
      %v5309 = vpack.c.bf16 %v5303, %v5301
      %v5310 = vpack.c.bf16 %v5304, %v5302
      %v5311 = vpack.c.bf16 %v5307, %v5305
      %v5312 = vpack.c.bf16 %v5308, %v5306
      %v5317 = vunpack.c.l.b16 %v5309
      %v5318 = vunpack.c.l.b16 %v5310
      %v5319 = vunpack.c.h.b16 %v5309
      %v5320 = vunpack.c.h.b16 %v5310
      %v5321 = vunpack.c.l.b16 %v5311
      %v5322 = vunpack.c.l.b16 %v5312
      %v5323 = vunpack.c.h.b16 %v5311
      %v5324 = vunpack.c.h.b16 %v5312
      %v5325 = vpack.c.b16 %v5318, %v5317
      %v5326 = vpack.c.b16 %v5320, %v5319
      %v5327 = vpack.c.b16 %v5322, %v5321
      %v5328 = vpack.c.b16 %v5324, %v5323
      %5333 = vst [vmem:[%s170] sm:$0xff] %v5325
      %5334 = vst [vmem:[%s170 + $0x8] sm:$0xff] %v5326
      %5335 = vst [vmem:[%s170 + $0x10] sm:$0xff] %v5327
      %5336 = vst [vmem:[%s170 + $0x18] sm:$0xff] %v5328
      %p5337 = scmp.lt.s32.totalorder %s14, 1
      %s5338 = scalar_select %p5337, %s14, 1
      %s5339 = smul.addr %s5338, 8
      %s5340 = smul.addr %s5339, 4
      %s5341 = scalar_lea.vmem %s3, %s5340
      // Predicated region
      $region33: #{classifier_net_forward.4} parent=31 // pred_check
        %p5342 = pneg %p100
      $region34: #{classifier_net_forward.4} parent=31 // pred_check_branch
        %5344 = sbr.rel (%p5342) target = $region36
      $region35: #{classifier_net_forward.4} parent=31 // pred_region
        _
      $region36: #{classifier_net_forward.4} parent=31 // pred_fallthru
        _
    $region32: #{classifier_net_forward.4} parent=5 // pred_fallthru
      _
    %p5345 = scmp.le.s32.totalorder 2, %s9
    // Predicated region
    $region37: #{classifier_net_forward.4} parent=5 // pred_check
      %p5346 = pneg %p5345
    $region38: #{classifier_net_forward.4} parent=5 // pred_check_branch
      %5348 = sbr.rel (%p5346) target = $region40
    $region39: #{classifier_net_forward.4} parent=5 // pred_region
      %s5349 = ssub.s32 %s9, 2
      // Predicated region
      $region41: #{classifier_net_forward.4} parent=39 // pred_check
        %p5350 = pneg %p106
      $region42: #{classifier_net_forward.4} parent=39 // pred_check_branch
        %5352 = sbr.rel (%p5350) target = $region44
      $region43: #{classifier_net_forward.4} parent=39 // pred_region
        %p5353 = scmp.lt.s32.totalorder %s15, 1
        %s5354 = scalar_select %p5353, %s15, 1
        %s5355 = smul.addr %s5354, 8
        %s5356 = smul.addr %s5355, 4
        %s5357 = scalar_lea.vmem %s3, %s5356
      $region44: #{classifier_net_forward.4} parent=39 // pred_fallthru
        _
    $region40: #{classifier_net_forward.4} parent=5 // pred_fallthru
      _
  $region6: #{classifier_net_forward.4} parent=0 // loop_footer
    %s13 = sadd.s32 1, %s9
  $region7: #{classifier_net_forward.4} parent=0 // loop_footer_branch
    %8 = sbr.rel target = $region3
  $region8: #{classifier_net_forward.4} parent=0 // loop_exit
    _

// kernel: classifier_net_forward.5
$region0: #{classifier_net_forward.5}
  #allocation0 [shape = 'u32[]', space=smem, size = 0x4, offset = 0x4, fixed_abs, tag = 'smem constant byte address 0x4 - core index']
  #allocation1 [shape = 'u32[144,128]{1,0:T(1,128)}', space=vmem, size = 0x12000, scoped, tag = 'internal scratch']
  %s0 = inlined_call_operand.vmem [shape: bf16[8,6400], index: 0, kind: input, shape index: {}]
  %s1 = inlined_call_operand.vmem [shape: bf16[6400,256], index: 1, kind: input, shape index: {}]
  %s2 = inlined_call_operand.vmem [shape: f32[1,256], index: 2, kind: input, shape index: {}]
  %s3 = inlined_call_operand.vmem [shape: bf16[256,128], index: 3, kind: input, shape index: {}]
  %s4 = inlined_call_operand.vmem [shape: f32[1,128], index: 4, kind: input, shape index: {}]
  %s5 = inlined_call_operand.vmem [shape: bf16[128,128], index: 5, kind: input, shape index: {}]
  %s6 = inlined_call_operand.vmem [shape: f32[1,128], index: 6, kind: input, shape index: {}]
  %s7 = inlined_call_operand.vmem [shape: f32[8,128], index: 7, kind: output, shape index: {}]
  %s8 = sld [smem:[#allocation0]]
  $region38: #{classifier_net_forward.5} parent=0
    _
  %s10 = ssub.s32 1, %s8
  %s11 = scalar_select 0, %s10, %s8
  // Predicated region
  $region2: #{classifier_net_forward.5} parent=0 // pred_check
    _
  $region3: #{classifier_net_forward.5} parent=0 // pred_check_branch
    %13 = sbr.rel (0) target = $region5
  $region4: #{classifier_net_forward.5} parent=0 // pred_region
    _
  $region5: #{classifier_net_forward.5} parent=0 // pred_fallthru
    _
  // Predicated region
  $region6: #{classifier_net_forward.5} parent=0 // pred_check
    _
  $region7: #{classifier_net_forward.5} parent=0 // pred_check_branch
    %15 = sbr.rel (0) target = $region9
  $region8: #{classifier_net_forward.5} parent=0 // pred_region
    _
  $region9: #{classifier_net_forward.5} parent=0 // pred_fallthru
    _
  // Predicated region
  $region10: #{classifier_net_forward.5} parent=0 // pred_check
    _
  $region11: #{classifier_net_forward.5} parent=0 // pred_check_branch
    %17 = sbr.rel (0) target = $region13
  $region12: #{classifier_net_forward.5} parent=0 // pred_region
    _
  $region13: #{classifier_net_forward.5} parent=0 // pred_fallthru
    _
  // Predicated region
  $region14: #{classifier_net_forward.5} parent=0 // pred_check
    _
  $region15: #{classifier_net_forward.5} parent=0 // pred_check_branch
    %19 = sbr.rel (0) target = $region17
  $region16: #{classifier_net_forward.5} parent=0 // pred_region
    _
  $region17: #{classifier_net_forward.5} parent=0 // pred_fallthru
    _
  // Predicated region
  $region18: #{classifier_net_forward.5} parent=0 // pred_check
    _
  $region19: #{classifier_net_forward.5} parent=0 // pred_check_branch
    %21 = sbr.rel (0) target = $region21
  $region20: #{classifier_net_forward.5} parent=0 // pred_region
    _
  $region21: #{classifier_net_forward.5} parent=0 // pred_fallthru
    _
  // Predicated region
  $region22: #{classifier_net_forward.5} parent=0 // pred_check
    _
  $region23: #{classifier_net_forward.5} parent=0 // pred_check_branch
    %23 = sbr.rel (0) target = $region25
  $region24: #{classifier_net_forward.5} parent=0 // pred_region
    _
  $region25: #{classifier_net_forward.5} parent=0 // pred_fallthru
    _
  // Predicated region
  $region26: #{classifier_net_forward.5} parent=0 // pred_check
    _
  $region27: #{classifier_net_forward.5} parent=0 // pred_check_branch
    %25 = sbr.rel (0) target = $region29
  $region28: #{classifier_net_forward.5} parent=0 // pred_region
    _
  $region29: #{classifier_net_forward.5} parent=0 // pred_fallthru
    _
  %v27 = vld [vmem:[%s0] sm:$0xff]
  %v28 = vld [vmem:[%s0 + $0x8] sm:$0xff]
  %v29 = vld [vmem:[%s0 + $0x10] sm:$0xff]
  %v30 = vld [vmem:[%s0 + $0x18] sm:$0xff]
  %v31 = vld [vmem:[%s0 + $0x20] sm:$0xff]
  %v32 = vld [vmem:[%s0 + $0x28] sm:$0xff]
  %v33 = vld [vmem:[%s0 + $0x30] sm:$0xff]
  %v34 = vld [vmem:[%s0 + $0x38] sm:$0xff]
  %v35 = vld [vmem:[%s0 + $0x40] sm:$0xff]
  %v36 = vld [vmem:[%s0 + $0x48] sm:$0xff]
  %v37 = vld [vmem:[%s0 + $0x50] sm:$0xff]
  %v38 = vld [vmem:[%s0 + $0x58] sm:$0xff]
  %v39 = vld [vmem:[%s0 + $0x60] sm:$0xff]
  %v40 = vld [vmem:[%s0 + $0x68] sm:$0xff]
  %v41 = vld [vmem:[%s0 + $0x70] sm:$0xff]
  %v42 = vld [vmem:[%s0 + $0x78] sm:$0xff]
  %v43 = vld [vmem:[%s0 + $0x80] sm:$0xff]
  %v44 = vld [vmem:[%s0 + $0x88] sm:$0xff]
  %v45 = vld [vmem:[%s0 + $0x90] sm:$0xff]
  %v46 = vld [vmem:[%s0 + $0x98] sm:$0xff]
  %v47 = vld [vmem:[%s0 + $0xa0] sm:$0xff]
  %v48 = vld [vmem:[%s0 + $0xa8] sm:$0xff]
  %v49 = vld [vmem:[%s0 + $0xb0] sm:$0xff]
  %v50 = vld [vmem:[%s0 + $0xb8] sm:$0xff]
  %v51 = vld [vmem:[%s0 + $0xc0] sm:$0xff]
  %v52 = vld [vmem:[%s1] sm:$0xff]
  %v53 = vld [vmem:[%s1 + $0x8] sm:$0xff]
  %v54 = vld [vmem:[%s1 + $0x10] sm:$0xff]
  %v55 = vld [vmem:[%s1 + $0x18] sm:$0xff]
  %v56 = vld [vmem:[%s1 + $0x20] sm:$0xff]
  %v57 = vld [vmem:[%s1 + $0x28] sm:$0xff]
  %v58 = vld [vmem:[%s1 + $0x30] sm:$0xff]
  %v59 = vld [vmem:[%s1 + $0x38] sm:$0xff]
  %v60 = vld [vmem:[%s1 + $0x40] sm:$0xff]
  %v61 = vld [vmem:[%s1 + $0x48] sm:$0xff]
  %v62 = vld [vmem:[%s1 + $0x50] sm:$0xff]
  %v63 = vld [vmem:[%s1 + $0x58] sm:$0xff]
  %v64 = vld [vmem:[%s1 + $0x60] sm:$0xff]
  %v65 = vld [vmem:[%s1 + $0x68] sm:$0xff]
  %v66 = vld [vmem:[%s1 + $0x70] sm:$0xff]
  %v67 = vld [vmem:[%s1 + $0x78] sm:$0xff]
  %v68 = vld [vmem:[%s1 + $0x80] sm:$0xff]
  %v69 = vld [vmem:[%s1 + $0x88] sm:$0xff]
  %v70 = vld [vmem:[%s1 + $0x90] sm:$0xff]
  %v71 = vld [vmem:[%s1 + $0x98] sm:$0xff]
  %v72 = vld [vmem:[%s1 + $0xa0] sm:$0xff]
  %v73 = vld [vmem:[%s1 + $0xa8] sm:$0xff]
  %v74 = vld [vmem:[%s1 + $0xb0] sm:$0xff]
  %v75 = vld [vmem:[%s1 + $0xb8] sm:$0xff]
  %v76 = vld [vmem:[%s1 + $0xc0] sm:$0xff]
  %v77 = vld [vmem:[%s1 + $0xc8] sm:$0xff]
  %v78 = vld [vmem:[%s1 + $0xd0] sm:$0xff]
  %v79 = vld [vmem:[%s1 + $0xd8] sm:$0xff]
  %v80 = vld [vmem:[%s1 + $0xe0] sm:$0xff]
  %v81 = vld [vmem:[%s1 + $0xe8] sm:$0xff]
  %v82 = vld [vmem:[%s1 + $0xf0] sm:$0xff]
  %v83 = vld [vmem:[%s1 + $0xf8] sm:$0xff]
  %v84 = vld [vmem:[%s1 + $0x100] sm:$0xff]
  %v85 = vld [vmem:[%s1 + $0x108] sm:$0xff]
  %v86 = vld [vmem:[%s1 + $0x110] sm:$0xff]
  %v87 = vld [vmem:[%s1 + $0x118] sm:$0xff]
  %v88 = vld [vmem:[%s1 + $0x120] sm:$0xff]
  %v89 = vld [vmem:[%s1 + $0x128] sm:$0xff]
  %v90 = vld [vmem:[%s1 + $0x130] sm:$0xff]
  %v91 = vld [vmem:[%s1 + $0x138] sm:$0xff]
  %v92 = vld [vmem:[%s1 + $0x140] sm:$0xff]
  %v93 = vld [vmem:[%s1 + $0x148] sm:$0xff]
  %v94 = vld [vmem:[%s1 + $0x150] sm:$0xff]
  %v95 = vld [vmem:[%s1 + $0x158] sm:$0xff]
  %v96 = vld [vmem:[%s1 + $0x160] sm:$0xff]
  %v97 = vld [vmem:[%s1 + $0x168] sm:$0xff]
  %v98 = vld [vmem:[%s1 + $0x170] sm:$0xff]
  %v99 = vld [vmem:[%s1 + $0x178] sm:$0xff]
  %v100 = vld [vmem:[%s1 + $0x180] sm:$0xff]
  %v101 = vld [vmem:[%s1 + $0x188] sm:$0xff]
  %v102 = vld [vmem:[%s1 + $0x190] sm:$0xff]
  %v103 = vld [vmem:[%s1 + $0x198] sm:$0xff]
  %v104 = vld [vmem:[%s1 + $0x1a0] sm:$0xff]
  %v105 = vld [vmem:[%s1 + $0x1a8] sm:$0xff]
  %v106 = vld [vmem:[%s1 + $0x1b0] sm:$0xff]
  %v107 = vld [vmem:[%s1 + $0x1b8] sm:$0xff]
  %v108 = vld [vmem:[%s1 + $0x1c0] sm:$0xff]
  %v109 = vld [vmem:[%s1 + $0x1c8] sm:$0xff]
  %v110 = vld [vmem:[%s1 + $0x1d0] sm:$0xff]
  %v111 = vld [vmem:[%s1 + $0x1d8] sm:$0xff]
  %v112 = vld [vmem:[%s1 + $0x1e0] sm:$0xff]
  %v113 = vld [vmem:[%s1 + $0x1e8] sm:$0xff]
  %v114 = vld [vmem:[%s1 + $0x1f0] sm:$0xff]
  %v115 = vld [vmem:[%s1 + $0x1f8] sm:$0xff]
  %v116 = vld [vmem:[%s1 + $0x200] sm:$0xff]
  %v117 = vld [vmem:[%s1 + $0x208] sm:$0xff]
  %v118 = vld [vmem:[%s1 + $0x210] sm:$0xff]
  %v119 = vld [vmem:[%s1 + $0x218] sm:$0xff]
  %v120 = vld [vmem:[%s1 + $0x220] sm:$0xff]
  %v121 = vld [vmem:[%s1 + $0x228] sm:$0xff]
  %v122 = vld [vmem:[%s1 + $0x230] sm:$0xff]
  %v123 = vld [vmem:[%s1 + $0x238] sm:$0xff]
  %v124 = vld [vmem:[%s1 + $0x240] sm:$0xff]
  %v125 = vld [vmem:[%s1 + $0x248] sm:$0xff]
  %v126 = vld [vmem:[%s1 + $0x250] sm:$0xff]
  %v127 = vld [vmem:[%s1 + $0x258] sm:$0xff]
  %v128 = vld [vmem:[%s1 + $0x260] sm:$0xff]
  %v129 = vld [vmem:[%s1 + $0x268] sm:$0xff]
  %v130 = vld [vmem:[%s1 + $0x270] sm:$0xff]
  %v131 = vld [vmem:[%s1 + $0x278] sm:$0xff]
  %v132 = vld [vmem:[%s1 + $0x280] sm:$0xff]
  %v133 = vld [vmem:[%s1 + $0x288] sm:$0xff]
  %v134 = vld [vmem:[%s1 + $0x290] sm:$0xff]
  %v135 = vld [vmem:[%s1 + $0x298] sm:$0xff]
  %v136 = vld [vmem:[%s1 + $0x2a0] sm:$0xff]
  %v137 = vld [vmem:[%s1 + $0x2a8] sm:$0xff]
  %v138 = vld [vmem:[%s1 + $0x2b0] sm:$0xff]
  %v139 = vld [vmem:[%s1 + $0x2b8] sm:$0xff]
  %v140 = vld [vmem:[%s1 + $0x2c0] sm:$0xff]
  %v141 = vld [vmem:[%s1 + $0x2c8] sm:$0xff]
  %v142 = vld [vmem:[%s1 + $0x2d0] sm:$0xff]
  %v143 = vld [vmem:[%s1 + $0x2d8] sm:$0xff]
  %v144 = vld [vmem:[%s1 + $0x2e0] sm:$0xff]
  %v145 = vld [vmem:[%s1 + $0x2e8] sm:$0xff]
  %v146 = vld [vmem:[%s1 + $0x2f0] sm:$0xff]
  %v147 = vld [vmem:[%s1 + $0x2f8] sm:$0xff]
  %v148 = vld [vmem:[%s1 + $0x300] sm:$0xff]
  %v149 = vld [vmem:[%s1 + $0x308] sm:$0xff]
  %v150 = vld [vmem:[%s1 + $0x310] sm:$0xff]
  %v151 = vld [vmem:[%s1 + $0x318] sm:$0xff]
  %v152 = vld [vmem:[%s1 + $0x320] sm:$0xff]
  %v153 = vld [vmem:[%s1 + $0x328] sm:$0xff]
  %v154 = vld [vmem:[%s1 + $0x330] sm:$0xff]
  %v155 = vld [vmem:[%s1 + $0x338] sm:$0xff]
  %v156 = vld [vmem:[%s1 + $0x340] sm:$0xff]
  %v157 = vld [vmem:[%s1 + $0x348] sm:$0xff]
  %v158 = vld [vmem:[%s1 + $0x350] sm:$0xff]
  %v159 = vld [vmem:[%s1 + $0x358] sm:$0xff]
  %v160 = vld [vmem:[%s1 + $0x360] sm:$0xff]
  %v161 = vld [vmem:[%s1 + $0x368] sm:$0xff]
  %v162 = vld [vmem:[%s1 + $0x370] sm:$0xff]
  %v163 = vld [vmem:[%s1 + $0x378] sm:$0xff]
  %v164 = vld [vmem:[%s1 + $0x380] sm:$0xff]
  %v165 = vld [vmem:[%s1 + $0x388] sm:$0xff]
  %v166 = vld [vmem:[%s1 + $0x390] sm:$0xff]
  %v167 = vld [vmem:[%s1 + $0x398] sm:$0xff]
  %v168 = vld [vmem:[%s1 + $0x3a0] sm:$0xff]
  %v169 = vld [vmem:[%s1 + $0x3a8] sm:$0xff]
  %v170 = vld [vmem:[%s1 + $0x3b0] sm:$0xff]
  %v171 = vld [vmem:[%s1 + $0x3b8] sm:$0xff]
  %v172 = vld [vmem:[%s1 + $0x3c0] sm:$0xff]
  %v173 = vld [vmem:[%s1 + $0x3c8] sm:$0xff]
  %v174 = vld [vmem:[%s1 + $0x3d0] sm:$0xff]
  %v175 = vld [vmem:[%s1 + $0x3d8] sm:$0xff]
  %v176 = vld [vmem:[%s1 + $0x3e0] sm:$0xff]
  %v177 = vld [vmem:[%s1 + $0x3e8] sm:$0xff]
  %v178 = vld [vmem:[%s1 + $0x3f0] sm:$0xff]
  %v179 = vld [vmem:[%s1 + $0x3f8] sm:$0xff]
  %v180 = vld [vmem:[%s1 + $0x400] sm:$0xff]
  %v181 = vld [vmem:[%s1 + $0x408] sm:$0xff]
  %v182 = vld [vmem:[%s1 + $0x410] sm:$0xff]
  %v183 = vld [vmem:[%s1 + $0x418] sm:$0xff]
  %v184 = vld [vmem:[%s1 + $0x420] sm:$0xff]
  %v185 = vld [vmem:[%s1 + $0x428] sm:$0xff]
  %v186 = vld [vmem:[%s1 + $0x430] sm:$0xff]
  %v187 = vld [vmem:[%s1 + $0x438] sm:$0xff]
  %v188 = vld [vmem:[%s1 + $0x440] sm:$0xff]
  %v189 = vld [vmem:[%s1 + $0x448] sm:$0xff]
  %v190 = vld [vmem:[%s1 + $0x450] sm:$0xff]
  %v191 = vld [vmem:[%s1 + $0x458] sm:$0xff]
  %v192 = vld [vmem:[%s1 + $0x460] sm:$0xff]
  %v193 = vld [vmem:[%s1 + $0x468] sm:$0xff]
  %v194 = vld [vmem:[%s1 + $0x470] sm:$0xff]
  %v195 = vld [vmem:[%s1 + $0x478] sm:$0xff]
  %v196 = vld [vmem:[%s1 + $0x480] sm:$0xff]
  %v197 = vld [vmem:[%s1 + $0x488] sm:$0xff]
  %v198 = vld [vmem:[%s1 + $0x490] sm:$0xff]
  %v199 = vld [vmem:[%s1 + $0x498] sm:$0xff]
  %v200 = vld [vmem:[%s1 + $0x4a0] sm:$0xff]
  %v201 = vld [vmem:[%s1 + $0x4a8] sm:$0xff]
  %v202 = vld [vmem:[%s1 + $0x4b0] sm:$0xff]
  %v203 = vld [vmem:[%s1 + $0x4b8] sm:$0xff]
  %v204 = vld [vmem:[%s1 + $0x4c0] sm:$0xff]
  %v205 = vld [vmem:[%s1 + $0x4c8] sm:$0xff]
  %v206 = vld [vmem:[%s1 + $0x4d0] sm:$0xff]
  %v207 = vld [vmem:[%s1 + $0x4d8] sm:$0xff]
  %v208 = vld [vmem:[%s1 + $0x4e0] sm:$0xff]
  %v209 = vld [vmem:[%s1 + $0x4e8] sm:$0xff]
  %v210 = vld [vmem:[%s1 + $0x4f0] sm:$0xff]
  %v211 = vld [vmem:[%s1 + $0x4f8] sm:$0xff]
  %v212 = vld [vmem:[%s1 + $0x500] sm:$0xff]
  %v213 = vld [vmem:[%s1 + $0x508] sm:$0xff]
  %v214 = vld [vmem:[%s1 + $0x510] sm:$0xff]
  %v215 = vld [vmem:[%s1 + $0x518] sm:$0xff]
  %v216 = vld [vmem:[%s1 + $0x520] sm:$0xff]
  %v217 = vld [vmem:[%s1 + $0x528] sm:$0xff]
  %v218 = vld [vmem:[%s1 + $0x530] sm:$0xff]
  %v219 = vld [vmem:[%s1 + $0x538] sm:$0xff]
  %v220 = vld [vmem:[%s1 + $0x540] sm:$0xff]
  %v221 = vld [vmem:[%s1 + $0x548] sm:$0xff]
  %v222 = vld [vmem:[%s1 + $0x550] sm:$0xff]
  %v223 = vld [vmem:[%s1 + $0x558] sm:$0xff]
  %v224 = vld [vmem:[%s1 + $0x560] sm:$0xff]
  %v225 = vld [vmem:[%s1 + $0x568] sm:$0xff]
  %v226 = vld [vmem:[%s1 + $0x570] sm:$0xff]
  %v227 = vld [vmem:[%s1 + $0x578] sm:$0xff]
  %v228 = vld [vmem:[%s1 + $0x580] sm:$0xff]
  %v229 = vld [vmem:[%s1 + $0x588] sm:$0xff]
  %v230 = vld [vmem:[%s1 + $0x590] sm:$0xff]
  %v231 = vld [vmem:[%s1 + $0x598] sm:$0xff]
  %v232 = vld [vmem:[%s1 + $0x5a0] sm:$0xff]
  %v233 = vld [vmem:[%s1 + $0x5a8] sm:$0xff]
  %v234 = vld [vmem:[%s1 + $0x5b0] sm:$0xff]
  %v235 = vld [vmem:[%s1 + $0x5b8] sm:$0xff]
  %v236 = vld [vmem:[%s1 + $0x5c0] sm:$0xff]
  %v237 = vld [vmem:[%s1 + $0x5c8] sm:$0xff]
  %v238 = vld [vmem:[%s1 + $0x5d0] sm:$0xff]
  %v239 = vld [vmem:[%s1 + $0x5d8] sm:$0xff]
  %v240 = vld [vmem:[%s1 + $0x5e0] sm:$0xff]
  %v241 = vld [vmem:[%s1 + $0x5e8] sm:$0xff]
  %v242 = vld [vmem:[%s1 + $0x5f0] sm:$0xff]
  %v243 = vld [vmem:[%s1 + $0x5f8] sm:$0xff]
  %v244 = vld [vmem:[%s1 + $0x600] sm:$0xff]
  %v245 = vld [vmem:[%s1 + $0x608] sm:$0xff]
  %v246 = vld [vmem:[%s1 + $0x610] sm:$0xff]
  %v247 = vld [vmem:[%s1 + $0x618] sm:$0xff]
  %v248 = vld [vmem:[%s1 + $0x620] sm:$0xff]
  %v249 = vld [vmem:[%s1 + $0x628] sm:$0xff]
  %v250 = vld [vmem:[%s1 + $0x630] sm:$0xff]
  %v251 = vld [vmem:[%s1 + $0x638] sm:$0xff]
  %v252 = vld [vmem:[%s1 + $0x640] sm:$0xff]
  %v253 = vld [vmem:[%s1 + $0x648] sm:$0xff]
  %v254 = vld [vmem:[%s1 + $0x650] sm:$0xff]
  %v255 = vld [vmem:[%s1 + $0x658] sm:$0xff]
  %v256 = vld [vmem:[%s1 + $0x660] sm:$0xff]
  %v257 = vld [vmem:[%s1 + $0x668] sm:$0xff]
  %v258 = vld [vmem:[%s1 + $0x670] sm:$0xff]
  %v259 = vld [vmem:[%s1 + $0x678] sm:$0xff]
  %v260 = vld [vmem:[%s1 + $0x680] sm:$0xff]
  %v261 = vld [vmem:[%s1 + $0x688] sm:$0xff]
  %v262 = vld [vmem:[%s1 + $0x690] sm:$0xff]
  %v263 = vld [vmem:[%s1 + $0x698] sm:$0xff]
  %v264 = vld [vmem:[%s1 + $0x6a0] sm:$0xff]
  %v265 = vld [vmem:[%s1 + $0x6a8] sm:$0xff]
  %v266 = vld [vmem:[%s1 + $0x6b0] sm:$0xff]
  %v267 = vld [vmem:[%s1 + $0x6b8] sm:$0xff]
  %v268 = vld [vmem:[%s1 + $0x6c0] sm:$0xff]
  %v269 = vld [vmem:[%s1 + $0x6c8] sm:$0xff]
  %v270 = vld [vmem:[%s1 + $0x6d0] sm:$0xff]
  %v271 = vld [vmem:[%s1 + $0x6d8] sm:$0xff]
  %v272 = vld [vmem:[%s1 + $0x6e0] sm:$0xff]
  %v273 = vld [vmem:[%s1 + $0x6e8] sm:$0xff]
  %v274 = vld [vmem:[%s1 + $0x6f0] sm:$0xff]
  %v275 = vld [vmem:[%s1 + $0x6f8] sm:$0xff]
  %v276 = vld [vmem:[%s1 + $0x700] sm:$0xff]
  %v277 = vld [vmem:[%s1 + $0x708] sm:$0xff]
  %v278 = vld [vmem:[%s1 + $0x710] sm:$0xff]
  %v279 = vld [vmem:[%s1 + $0x718] sm:$0xff]
  %v280 = vld [vmem:[%s1 + $0x720] sm:$0xff]
  %v281 = vld [vmem:[%s1 + $0x728] sm:$0xff]
  %v282 = vld [vmem:[%s1 + $0x730] sm:$0xff]
  %v283 = vld [vmem:[%s1 + $0x738] sm:$0xff]
  %v284 = vld [vmem:[%s1 + $0x740] sm:$0xff]
  %v285 = vld [vmem:[%s1 + $0x748] sm:$0xff]
  %v286 = vld [vmem:[%s1 + $0x750] sm:$0xff]
  %v287 = vld [vmem:[%s1 + $0x758] sm:$0xff]
  %v288 = vld [vmem:[%s1 + $0x760] sm:$0xff]
  %v289 = vld [vmem:[%s1 + $0x768] sm:$0xff]
  %v290 = vld [vmem:[%s1 + $0x770] sm:$0xff]
  %v291 = vld [vmem:[%s1 + $0x778] sm:$0xff]
  %v292 = vld [vmem:[%s1 + $0x780] sm:$0xff]
  %v293 = vld [vmem:[%s1 + $0x788] sm:$0xff]
  %v294 = vld [vmem:[%s1 + $0x790] sm:$0xff]
  %v295 = vld [vmem:[%s1 + $0x798] sm:$0xff]
  %v296 = vld [vmem:[%s1 + $0x7a0] sm:$0xff]
  %v297 = vld [vmem:[%s1 + $0x7a8] sm:$0xff]
  %v298 = vld [vmem:[%s1 + $0x7b0] sm:$0xff]
  %v299 = vld [vmem:[%s1 + $0x7b8] sm:$0xff]
  %v300 = vld [vmem:[%s1 + $0x7c0] sm:$0xff]
  %v301 = vld [vmem:[%s1 + $0x7c8] sm:$0xff]
  %v302 = vld [vmem:[%s1 + $0x7d0] sm:$0xff]
  %v303 = vld [vmem:[%s1 + $0x7d8] sm:$0xff]
  %v304 = vld [vmem:[%s1 + $0x7e0] sm:$0xff]
  %v305 = vld [vmem:[%s1 + $0x7e8] sm:$0xff]
  %v306 = vld [vmem:[%s1 + $0x7f0] sm:$0xff]
  %v307 = vld [vmem:[%s1 + $0x7f8] sm:$0xff]
  %v308 = vld [vmem:[%s1 + $0x800] sm:$0xff]
  %v309 = vld [vmem:[%s1 + $0x808] sm:$0xff]
  %v310 = vld [vmem:[%s1 + $0x810] sm:$0xff]
  %v311 = vld [vmem:[%s1 + $0x818] sm:$0xff]
  %v312 = vld [vmem:[%s1 + $0x820] sm:$0xff]
  %v313 = vld [vmem:[%s1 + $0x828] sm:$0xff]
  %v314 = vld [vmem:[%s1 + $0x830] sm:$0xff]
  %v315 = vld [vmem:[%s1 + $0x838] sm:$0xff]
  %v316 = vld [vmem:[%s1 + $0x840] sm:$0xff]
  %v317 = vld [vmem:[%s1 + $0x848] sm:$0xff]
  %v318 = vld [vmem:[%s1 + $0x850] sm:$0xff]
  %v319 = vld [vmem:[%s1 + $0x858] sm:$0xff]
  %v320 = vld [vmem:[%s1 + $0x860] sm:$0xff]
  %v321 = vld [vmem:[%s1 + $0x868] sm:$0xff]
  %v322 = vld [vmem:[%s1 + $0x870] sm:$0xff]
  %v323 = vld [vmem:[%s1 + $0x878] sm:$0xff]
  %v324 = vld [vmem:[%s1 + $0x880] sm:$0xff]
  %v325 = vld [vmem:[%s1 + $0x888] sm:$0xff]
  %v326 = vld [vmem:[%s1 + $0x890] sm:$0xff]
  %v327 = vld [vmem:[%s1 + $0x898] sm:$0xff]
  %v328 = vld [vmem:[%s1 + $0x8a0] sm:$0xff]
  %v329 = vld [vmem:[%s1 + $0x8a8] sm:$0xff]
  %v330 = vld [vmem:[%s1 + $0x8b0] sm:$0xff]
  %v331 = vld [vmem:[%s1 + $0x8b8] sm:$0xff]
  %v332 = vld [vmem:[%s1 + $0x8c0] sm:$0xff]
  %v333 = vld [vmem:[%s1 + $0x8c8] sm:$0xff]
  %v334 = vld [vmem:[%s1 + $0x8d0] sm:$0xff]
  %v335 = vld [vmem:[%s1 + $0x8d8] sm:$0xff]
  %v336 = vld [vmem:[%s1 + $0x8e0] sm:$0xff]
  %v337 = vld [vmem:[%s1 + $0x8e8] sm:$0xff]
  %v338 = vld [vmem:[%s1 + $0x8f0] sm:$0xff]
  %v339 = vld [vmem:[%s1 + $0x8f8] sm:$0xff]
  %v340 = vld [vmem:[%s1 + $0x900] sm:$0xff]
  %v341 = vld [vmem:[%s1 + $0x908] sm:$0xff]
  %v342 = vld [vmem:[%s1 + $0x910] sm:$0xff]
  %v343 = vld [vmem:[%s1 + $0x918] sm:$0xff]
  %v344 = vld [vmem:[%s1 + $0x920] sm:$0xff]
  %v345 = vld [vmem:[%s1 + $0x928] sm:$0xff]
  %v346 = vld [vmem:[%s1 + $0x930] sm:$0xff]
  %v347 = vld [vmem:[%s1 + $0x938] sm:$0xff]
  %v348 = vld [vmem:[%s1 + $0x940] sm:$0xff]
  %v349 = vld [vmem:[%s1 + $0x948] sm:$0xff]
  %v350 = vld [vmem:[%s1 + $0x950] sm:$0xff]
  %v351 = vld [vmem:[%s1 + $0x958] sm:$0xff]
  %v352 = vld [vmem:[%s1 + $0x960] sm:$0xff]
  %v353 = vld [vmem:[%s1 + $0x968] sm:$0xff]
  %v354 = vld [vmem:[%s1 + $0x970] sm:$0xff]
  %v355 = vld [vmem:[%s1 + $0x978] sm:$0xff]
  %v356 = vld [vmem:[%s1 + $0x980] sm:$0xff]
  %v357 = vld [vmem:[%s1 + $0x988] sm:$0xff]
  %v358 = vld [vmem:[%s1 + $0x990] sm:$0xff]
  %v359 = vld [vmem:[%s1 + $0x998] sm:$0xff]
  %v360 = vld [vmem:[%s1 + $0x9a0] sm:$0xff]
  %v361 = vld [vmem:[%s1 + $0x9a8] sm:$0xff]
  %v362 = vld [vmem:[%s1 + $0x9b0] sm:$0xff]
  %v363 = vld [vmem:[%s1 + $0x9b8] sm:$0xff]
  %v364 = vld [vmem:[%s1 + $0x9c0] sm:$0xff]
  %v365 = vld [vmem:[%s1 + $0x9c8] sm:$0xff]
  %v366 = vld [vmem:[%s1 + $0x9d0] sm:$0xff]
  %v367 = vld [vmem:[%s1 + $0x9d8] sm:$0xff]
  %v368 = vld [vmem:[%s1 + $0x9e0] sm:$0xff]
  %v369 = vld [vmem:[%s1 + $0x9e8] sm:$0xff]
  %v370 = vld [vmem:[%s1 + $0x9f0] sm:$0xff]
  %v371 = vld [vmem:[%s1 + $0x9f8] sm:$0xff]
  %v372 = vld [vmem:[%s1 + $0xa00] sm:$0xff]
  %v373 = vld [vmem:[%s1 + $0xa08] sm:$0xff]
  %v374 = vld [vmem:[%s1 + $0xa10] sm:$0xff]
  %v375 = vld [vmem:[%s1 + $0xa18] sm:$0xff]
  %v376 = vld [vmem:[%s1 + $0xa20] sm:$0xff]
  %v377 = vld [vmem:[%s1 + $0xa28] sm:$0xff]
  %v378 = vld [vmem:[%s1 + $0xa30] sm:$0xff]
  %v379 = vld [vmem:[%s1 + $0xa38] sm:$0xff]
  %v380 = vld [vmem:[%s1 + $0xa40] sm:$0xff]
  %v381 = vld [vmem:[%s1 + $0xa48] sm:$0xff]
  %v382 = vld [vmem:[%s1 + $0xa50] sm:$0xff]
  %v383 = vld [vmem:[%s1 + $0xa58] sm:$0xff]
  %v384 = vld [vmem:[%s1 + $0xa60] sm:$0xff]
  %v385 = vld [vmem:[%s1 + $0xa68] sm:$0xff]
  %v386 = vld [vmem:[%s1 + $0xa70] sm:$0xff]
  %v387 = vld [vmem:[%s1 + $0xa78] sm:$0xff]
  %v388 = vld [vmem:[%s1 + $0xa80] sm:$0xff]
  %v389 = vld [vmem:[%s1 + $0xa88] sm:$0xff]
  %v390 = vld [vmem:[%s1 + $0xa90] sm:$0xff]
  %v391 = vld [vmem:[%s1 + $0xa98] sm:$0xff]
  %v392 = vld [vmem:[%s1 + $0xaa0] sm:$0xff]
  %v393 = vld [vmem:[%s1 + $0xaa8] sm:$0xff]
  %v394 = vld [vmem:[%s1 + $0xab0] sm:$0xff]
  %v395 = vld [vmem:[%s1 + $0xab8] sm:$0xff]
  %v396 = vld [vmem:[%s1 + $0xac0] sm:$0xff]
  %v397 = vld [vmem:[%s1 + $0xac8] sm:$0xff]
  %v398 = vld [vmem:[%s1 + $0xad0] sm:$0xff]
  %v399 = vld [vmem:[%s1 + $0xad8] sm:$0xff]
  %v400 = vld [vmem:[%s1 + $0xae0] sm:$0xff]
  %v401 = vld [vmem:[%s1 + $0xae8] sm:$0xff]
  %v402 = vld [vmem:[%s1 + $0xaf0] sm:$0xff]
  %v403 = vld [vmem:[%s1 + $0xaf8] sm:$0xff]
  %v404 = vld [vmem:[%s1 + $0xb00] sm:$0xff]
  %v405 = vld [vmem:[%s1 + $0xb08] sm:$0xff]
  %v406 = vld [vmem:[%s1 + $0xb10] sm:$0xff]
  %v407 = vld [vmem:[%s1 + $0xb18] sm:$0xff]
  %v408 = vld [vmem:[%s1 + $0xb20] sm:$0xff]
  %v409 = vld [vmem:[%s1 + $0xb28] sm:$0xff]
  %v410 = vld [vmem:[%s1 + $0xb30] sm:$0xff]
  %v411 = vld [vmem:[%s1 + $0xb38] sm:$0xff]
  %v412 = vld [vmem:[%s1 + $0xb40] sm:$0xff]
  %v413 = vld [vmem:[%s1 + $0xb48] sm:$0xff]
  %v414 = vld [vmem:[%s1 + $0xb50] sm:$0xff]
  %v415 = vld [vmem:[%s1 + $0xb58] sm:$0xff]
  %v416 = vld [vmem:[%s1 + $0xb60] sm:$0xff]
  %v417 = vld [vmem:[%s1 + $0xb68] sm:$0xff]
  %v418 = vld [vmem:[%s1 + $0xb70] sm:$0xff]
  %v419 = vld [vmem:[%s1 + $0xb78] sm:$0xff]
  %v420 = vld [vmem:[%s1 + $0xb80] sm:$0xff]
  %v421 = vld [vmem:[%s1 + $0xb88] sm:$0xff]
  %v422 = vld [vmem:[%s1 + $0xb90] sm:$0xff]
  %v423 = vld [vmem:[%s1 + $0xb98] sm:$0xff]
  %v424 = vld [vmem:[%s1 + $0xba0] sm:$0xff]
  %v425 = vld [vmem:[%s1 + $0xba8] sm:$0xff]
  %v426 = vld [vmem:[%s1 + $0xbb0] sm:$0xff]
  %v427 = vld [vmem:[%s1 + $0xbb8] sm:$0xff]
  %v428 = vld [vmem:[%s1 + $0xbc0] sm:$0xff]
  %v429 = vld [vmem:[%s1 + $0xbc8] sm:$0xff]
  %v430 = vld [vmem:[%s1 + $0xbd0] sm:$0xff]
  %v431 = vld [vmem:[%s1 + $0xbd8] sm:$0xff]
  %v432 = vld [vmem:[%s1 + $0xbe0] sm:$0xff]
  %v433 = vld [vmem:[%s1 + $0xbe8] sm:$0xff]
  %v434 = vld [vmem:[%s1 + $0xbf0] sm:$0xff]
  %v435 = vld [vmem:[%s1 + $0xbf8] sm:$0xff]
  %v436 = vld [vmem:[%s1 + $0xc00] sm:$0xff]
  %v437 = vld [vmem:[%s1 + $0xc08] sm:$0xff]
  %v438 = vld [vmem:[%s1 + $0xc10] sm:$0xff]
  %v439 = vld [vmem:[%s1 + $0xc18] sm:$0xff]
  %v440 = vld [vmem:[%s1 + $0xc20] sm:$0xff]
  %v441 = vld [vmem:[%s1 + $0xc28] sm:$0xff]
  %v442 = vld [vmem:[%s1 + $0xc30] sm:$0xff]
  %v443 = vld [vmem:[%s1 + $0xc38] sm:$0xff]
  %v444 = vld [vmem:[%s1 + $0xc40] sm:$0xff]
  %v445 = vld [vmem:[%s1 + $0xc48] sm:$0xff]
  %v446 = vld [vmem:[%s1 + $0xc50] sm:$0xff]
  %v447 = vld [vmem:[%s1 + $0xc58] sm:$0xff]
  %v448 = vld [vmem:[%s1 + $0xc60] sm:$0xff]
  %v449 = vld [vmem:[%s1 + $0xc68] sm:$0xff]
  %v450 = vld [vmem:[%s1 + $0xc70] sm:$0xff]
  %v451 = vld [vmem:[%s1 + $0xc78] sm:$0xff]
  %v452 = vld [vmem:[%s1 + $0xc80] sm:$0xff]
  %v453 = vld [vmem:[%s1 + $0xc88] sm:$0xff]
  %v454 = vld [vmem:[%s1 + $0xc90] sm:$0xff]
  %v455 = vld [vmem:[%s1 + $0xc98] sm:$0xff]
  %v456 = vld [vmem:[%s1 + $0xca0] sm:$0xff]
  %v457 = vld [vmem:[%s1 + $0xca8] sm:$0xff]
  %v458 = vld [vmem:[%s1 + $0xcb0] sm:$0xff]
  %v459 = vld [vmem:[%s1 + $0xcb8] sm:$0xff]
  %v460 = vld [vmem:[%s1 + $0xcc0] sm:$0xff]
  %v461 = vld [vmem:[%s1 + $0xcc8] sm:$0xff]
  %v462 = vld [vmem:[%s1 + $0xcd0] sm:$0xff]
  %v463 = vld [vmem:[%s1 + $0xcd8] sm:$0xff]
  %v464 = vld [vmem:[%s1 + $0xce0] sm:$0xff]
  %v465 = vld [vmem:[%s1 + $0xce8] sm:$0xff]
  %v466 = vld [vmem:[%s1 + $0xcf0] sm:$0xff]
  %v467 = vld [vmem:[%s1 + $0xcf8] sm:$0xff]
  %v468 = vld [vmem:[%s1 + $0xd00] sm:$0xff]
  %v469 = vld [vmem:[%s1 + $0xd08] sm:$0xff]
  %v470 = vld [vmem:[%s1 + $0xd10] sm:$0xff]
  %v471 = vld [vmem:[%s1 + $0xd18] sm:$0xff]
  %v472 = vld [vmem:[%s1 + $0xd20] sm:$0xff]
  %v473 = vld [vmem:[%s1 + $0xd28] sm:$0xff]
  %v474 = vld [vmem:[%s1 + $0xd30] sm:$0xff]
  %v475 = vld [vmem:[%s1 + $0xd38] sm:$0xff]
  %v476 = vld [vmem:[%s1 + $0xd40] sm:$0xff]
  %v477 = vld [vmem:[%s1 + $0xd48] sm:$0xff]
  %v478 = vld [vmem:[%s1 + $0xd50] sm:$0xff]
  %v479 = vld [vmem:[%s1 + $0xd58] sm:$0xff]
  %v480 = vld [vmem:[%s1 + $0xd60] sm:$0xff]
  %v481 = vld [vmem:[%s1 + $0xd68] sm:$0xff]
  %v482 = vld [vmem:[%s1 + $0xd70] sm:$0xff]
  %v483 = vld [vmem:[%s1 + $0xd78] sm:$0xff]
  %v484 = vld [vmem:[%s1 + $0xd80] sm:$0xff]
  %v485 = vld [vmem:[%s1 + $0xd88] sm:$0xff]
  %v486 = vld [vmem:[%s1 + $0xd90] sm:$0xff]
  %v487 = vld [vmem:[%s1 + $0xd98] sm:$0xff]
  %v488 = vld [vmem:[%s1 + $0xda0] sm:$0xff]
  %v489 = vld [vmem:[%s1 + $0xda8] sm:$0xff]
  %v490 = vld [vmem:[%s1 + $0xdb0] sm:$0xff]
  %v491 = vld [vmem:[%s1 + $0xdb8] sm:$0xff]
  %v492 = vld [vmem:[%s1 + $0xdc0] sm:$0xff]
  %v493 = vld [vmem:[%s1 + $0xdc8] sm:$0xff]
  %v494 = vld [vmem:[%s1 + $0xdd0] sm:$0xff]
  %v495 = vld [vmem:[%s1 + $0xdd8] sm:$0xff]
  %v496 = vld [vmem:[%s1 + $0xde0] sm:$0xff]
  %v497 = vld [vmem:[%s1 + $0xde8] sm:$0xff]
  %v498 = vld [vmem:[%s1 + $0xdf0] sm:$0xff]
  %v499 = vld [vmem:[%s1 + $0xdf8] sm:$0xff]
  %v500 = vld [vmem:[%s1 + $0xe00] sm:$0xff]
  %v501 = vld [vmem:[%s1 + $0xe08] sm:$0xff]
  %v502 = vld [vmem:[%s1 + $0xe10] sm:$0xff]
  %v503 = vld [vmem:[%s1 + $0xe18] sm:$0xff]
  %v504 = vld [vmem:[%s1 + $0xe20] sm:$0xff]
  %v505 = vld [vmem:[%s1 + $0xe28] sm:$0xff]
  %v506 = vld [vmem:[%s1 + $0xe30] sm:$0xff]
  %v507 = vld [vmem:[%s1 + $0xe38] sm:$0xff]
  %v508 = vld [vmem:[%s1 + $0xe40] sm:$0xff]
  %v509 = vld [vmem:[%s1 + $0xe48] sm:$0xff]
  %v510 = vld [vmem:[%s1 + $0xe50] sm:$0xff]
  %v511 = vld [vmem:[%s1 + $0xe58] sm:$0xff]
  %v512 = vld [vmem:[%s1 + $0xe60] sm:$0xff]
  %v513 = vld [vmem:[%s1 + $0xe68] sm:$0xff]
  %v514 = vld [vmem:[%s1 + $0xe70] sm:$0xff]
  %v515 = vld [vmem:[%s1 + $0xe78] sm:$0xff]
  %v516 = vld [vmem:[%s1 + $0xe80] sm:$0xff]
  %v517 = vld [vmem:[%s1 + $0xe88] sm:$0xff]
  %v518 = vld [vmem:[%s1 + $0xe90] sm:$0xff]
  %v519 = vld [vmem:[%s1 + $0xe98] sm:$0xff]
  %v520 = vld [vmem:[%s1 + $0xea0] sm:$0xff]
  %v521 = vld [vmem:[%s1 + $0xea8] sm:$0xff]
  %v522 = vld [vmem:[%s1 + $0xeb0] sm:$0xff]
  %v523 = vld [vmem:[%s1 + $0xeb8] sm:$0xff]
  %v524 = vld [vmem:[%s1 + $0xec0] sm:$0xff]
  %v525 = vld [vmem:[%s1 + $0xec8] sm:$0xff]
  %v526 = vld [vmem:[%s1 + $0xed0] sm:$0xff]
  %v527 = vld [vmem:[%s1 + $0xed8] sm:$0xff]
  %v528 = vld [vmem:[%s1 + $0xee0] sm:$0xff]
  %v529 = vld [vmem:[%s1 + $0xee8] sm:$0xff]
  %v530 = vld [vmem:[%s1 + $0xef0] sm:$0xff]
  %v531 = vld [vmem:[%s1 + $0xef8] sm:$0xff]
  %v532 = vld [vmem:[%s1 + $0xf00] sm:$0xff]
  %v533 = vld [vmem:[%s1 + $0xf08] sm:$0xff]
  %v534 = vld [vmem:[%s1 + $0xf10] sm:$0xff]
  %v535 = vld [vmem:[%s1 + $0xf18] sm:$0xff]
  %v536 = vld [vmem:[%s1 + $0xf20] sm:$0xff]
  %v537 = vld [vmem:[%s1 + $0xf28] sm:$0xff]
  %v538 = vld [vmem:[%s1 + $0xf30] sm:$0xff]
  %v539 = vld [vmem:[%s1 + $0xf38] sm:$0xff]
  %v540 = vld [vmem:[%s1 + $0xf40] sm:$0xff]
  %v541 = vld [vmem:[%s1 + $0xf48] sm:$0xff]
  %v542 = vld [vmem:[%s1 + $0xf50] sm:$0xff]
  %v543 = vld [vmem:[%s1 + $0xf58] sm:$0xff]
  %v544 = vld [vmem:[%s1 + $0xf60] sm:$0xff]
  %v545 = vld [vmem:[%s1 + $0xf68] sm:$0xff]
  %v546 = vld [vmem:[%s1 + $0xf70] sm:$0xff]
  %v547 = vld [vmem:[%s1 + $0xf78] sm:$0xff]
  %v548 = vld [vmem:[%s1 + $0xf80] sm:$0xff]
  %v549 = vld [vmem:[%s1 + $0xf88] sm:$0xff]
  %v550 = vld [vmem:[%s1 + $0xf90] sm:$0xff]
  %v551 = vld [vmem:[%s1 + $0xf98] sm:$0xff]
  %v552 = vld [vmem:[%s1 + $0xfa0] sm:$0xff]
  %v553 = vld [vmem:[%s1 + $0xfa8] sm:$0xff]
  %v554 = vld [vmem:[%s1 + $0xfb0] sm:$0xff]
  %v555 = vld [vmem:[%s1 + $0xfb8] sm:$0xff]
  %v556 = vld [vmem:[%s1 + $0xfc0] sm:$0xff]
  %v557 = vld [vmem:[%s1 + $0xfc8] sm:$0xff]
  %v558 = vld [vmem:[%s1 + $0xfd0] sm:$0xff]
  %v559 = vld [vmem:[%s1 + $0xfd8] sm:$0xff]
  %v560 = vld [vmem:[%s1 + $0xfe0] sm:$0xff]
  %v561 = vld [vmem:[%s1 + $0xfe8] sm:$0xff]
  %v562 = vld [vmem:[%s1 + $0xff0] sm:$0xff]
  %v563 = vld [vmem:[%s1 + $0xff8] sm:$0xff]
  %v564 = vld [vmem:[%s1 + $0x1000] sm:$0xff]
  %v565 = vld [vmem:[%s1 + $0x1008] sm:$0xff]
  %v566 = vld [vmem:[%s1 + $0x1010] sm:$0xff]
  %v567 = vld [vmem:[%s1 + $0x1018] sm:$0xff]
  %v568 = vld [vmem:[%s1 + $0x1020] sm:$0xff]
  %v569 = vld [vmem:[%s1 + $0x1028] sm:$0xff]
  %v570 = vld [vmem:[%s1 + $0x1030] sm:$0xff]
  %v571 = vld [vmem:[%s1 + $0x1038] sm:$0xff]
  %v572 = vld [vmem:[%s1 + $0x1040] sm:$0xff]
  %v573 = vld [vmem:[%s1 + $0x1048] sm:$0xff]
  %v574 = vld [vmem:[%s1 + $0x1050] sm:$0xff]
  %v575 = vld [vmem:[%s1 + $0x1058] sm:$0xff]
  %v576 = vld [vmem:[%s1 + $0x1060] sm:$0xff]
  %v577 = vld [vmem:[%s1 + $0x1068] sm:$0xff]
  %v578 = vld [vmem:[%s1 + $0x1070] sm:$0xff]
  %v579 = vld [vmem:[%s1 + $0x1078] sm:$0xff]
  %v580 = vld [vmem:[%s1 + $0x1080] sm:$0xff]
  %v581 = vld [vmem:[%s1 + $0x1088] sm:$0xff]
  %v582 = vld [vmem:[%s1 + $0x1090] sm:$0xff]
  %v583 = vld [vmem:[%s1 + $0x1098] sm:$0xff]
  %v584 = vld [vmem:[%s1 + $0x10a0] sm:$0xff]
  %v585 = vld [vmem:[%s1 + $0x10a8] sm:$0xff]
  %v586 = vld [vmem:[%s1 + $0x10b0] sm:$0xff]
  %v587 = vld [vmem:[%s1 + $0x10b8] sm:$0xff]
  %v588 = vld [vmem:[%s1 + $0x10c0] sm:$0xff]
  %v589 = vld [vmem:[%s1 + $0x10c8] sm:$0xff]
  %v590 = vld [vmem:[%s1 + $0x10d0] sm:$0xff]
  %v591 = vld [vmem:[%s1 + $0x10d8] sm:$0xff]
  %v592 = vld [vmem:[%s1 + $0x10e0] sm:$0xff]
  %v593 = vld [vmem:[%s1 + $0x10e8] sm:$0xff]
  %v594 = vld [vmem:[%s1 + $0x10f0] sm:$0xff]
  %v595 = vld [vmem:[%s1 + $0x10f8] sm:$0xff]
  %v596 = vld [vmem:[%s1 + $0x1100] sm:$0xff]
  %v597 = vld [vmem:[%s1 + $0x1108] sm:$0xff]
  %v598 = vld [vmem:[%s1 + $0x1110] sm:$0xff]
  %v599 = vld [vmem:[%s1 + $0x1118] sm:$0xff]
  %v600 = vld [vmem:[%s1 + $0x1120] sm:$0xff]
  %v601 = vld [vmem:[%s1 + $0x1128] sm:$0xff]
  %v602 = vld [vmem:[%s1 + $0x1130] sm:$0xff]
  %v603 = vld [vmem:[%s1 + $0x1138] sm:$0xff]
  %v604 = vld [vmem:[%s1 + $0x1140] sm:$0xff]
  %v605 = vld [vmem:[%s1 + $0x1148] sm:$0xff]
  %v606 = vld [vmem:[%s1 + $0x1150] sm:$0xff]
  %v607 = vld [vmem:[%s1 + $0x1158] sm:$0xff]
  %v608 = vld [vmem:[%s1 + $0x1160] sm:$0xff]
  %v609 = vld [vmem:[%s1 + $0x1168] sm:$0xff]
  %v610 = vld [vmem:[%s1 + $0x1170] sm:$0xff]
  %v611 = vld [vmem:[%s1 + $0x1178] sm:$0xff]
  %v612 = vld [vmem:[%s1 + $0x1180] sm:$0xff]
  %v613 = vld [vmem:[%s1 + $0x1188] sm:$0xff]
  %v614 = vld [vmem:[%s1 + $0x1190] sm:$0xff]
  %v615 = vld [vmem:[%s1 + $0x1198] sm:$0xff]
  %v616 = vld [vmem:[%s1 + $0x11a0] sm:$0xff]
  %v617 = vld [vmem:[%s1 + $0x11a8] sm:$0xff]
  %v618 = vld [vmem:[%s1 + $0x11b0] sm:$0xff]
  %v619 = vld [vmem:[%s1 + $0x11b8] sm:$0xff]
  %v620 = vld [vmem:[%s1 + $0x11c0] sm:$0xff]
  %v621 = vld [vmem:[%s1 + $0x11c8] sm:$0xff]
  %v622 = vld [vmem:[%s1 + $0x11d0] sm:$0xff]
  %v623 = vld [vmem:[%s1 + $0x11d8] sm:$0xff]
  %v624 = vld [vmem:[%s1 + $0x11e0] sm:$0xff]
  %v625 = vld [vmem:[%s1 + $0x11e8] sm:$0xff]
  %v626 = vld [vmem:[%s1 + $0x11f0] sm:$0xff]
  %v627 = vld [vmem:[%s1 + $0x11f8] sm:$0xff]
  %v628 = vld [vmem:[%s1 + $0x1200] sm:$0xff]
  %v629 = vld [vmem:[%s1 + $0x1208] sm:$0xff]
  %v630 = vld [vmem:[%s1 + $0x1210] sm:$0xff]
  %v631 = vld [vmem:[%s1 + $0x1218] sm:$0xff]
  %v632 = vld [vmem:[%s1 + $0x1220] sm:$0xff]
  %v633 = vld [vmem:[%s1 + $0x1228] sm:$0xff]
  %v634 = vld [vmem:[%s1 + $0x1230] sm:$0xff]
  %v635 = vld [vmem:[%s1 + $0x1238] sm:$0xff]
  %v636 = vld [vmem:[%s1 + $0x1240] sm:$0xff]
  %v637 = vld [vmem:[%s1 + $0x1248] sm:$0xff]
  %v638 = vld [vmem:[%s1 + $0x1250] sm:$0xff]
  %v639 = vld [vmem:[%s1 + $0x1258] sm:$0xff]
  %v640 = vld [vmem:[%s1 + $0x1260] sm:$0xff]
  %v641 = vld [vmem:[%s1 + $0x1268] sm:$0xff]
  %v642 = vld [vmem:[%s1 + $0x1270] sm:$0xff]
  %v643 = vld [vmem:[%s1 + $0x1278] sm:$0xff]
  %v644 = vld [vmem:[%s1 + $0x1280] sm:$0xff]
  %v645 = vld [vmem:[%s1 + $0x1288] sm:$0xff]
  %v646 = vld [vmem:[%s1 + $0x1290] sm:$0xff]
  %v647 = vld [vmem:[%s1 + $0x1298] sm:$0xff]
  %v648 = vld [vmem:[%s1 + $0x12a0] sm:$0xff]
  %v649 = vld [vmem:[%s1 + $0x12a8] sm:$0xff]
  %v650 = vld [vmem:[%s1 + $0x12b0] sm:$0xff]
  %v651 = vld [vmem:[%s1 + $0x12b8] sm:$0xff]
  %v652 = vld [vmem:[%s1 + $0x12c0] sm:$0xff]
  %v653 = vld [vmem:[%s1 + $0x12c8] sm:$0xff]
  %v654 = vld [vmem:[%s1 + $0x12d0] sm:$0xff]
  %v655 = vld [vmem:[%s1 + $0x12d8] sm:$0xff]
  %v656 = vld [vmem:[%s1 + $0x12e0] sm:$0xff]
  %v657 = vld [vmem:[%s1 + $0x12e8] sm:$0xff]
  %v658 = vld [vmem:[%s1 + $0x12f0] sm:$0xff]
  %v659 = vld [vmem:[%s1 + $0x12f8] sm:$0xff]
  %v660 = vld [vmem:[%s1 + $0x1300] sm:$0xff]
  %v661 = vld [vmem:[%s1 + $0x1308] sm:$0xff]
  %v662 = vld [vmem:[%s1 + $0x1310] sm:$0xff]
  %v663 = vld [vmem:[%s1 + $0x1318] sm:$0xff]
  %v664 = vld [vmem:[%s1 + $0x1320] sm:$0xff]
  %v665 = vld [vmem:[%s1 + $0x1328] sm:$0xff]
  %v666 = vld [vmem:[%s1 + $0x1330] sm:$0xff]
  %v667 = vld [vmem:[%s1 + $0x1338] sm:$0xff]
  %v668 = vld [vmem:[%s1 + $0x1340] sm:$0xff]
  %v669 = vld [vmem:[%s1 + $0x1348] sm:$0xff]
  %v670 = vld [vmem:[%s1 + $0x1350] sm:$0xff]
  %v671 = vld [vmem:[%s1 + $0x1358] sm:$0xff]
  %v672 = vld [vmem:[%s1 + $0x1360] sm:$0xff]
  %v673 = vld [vmem:[%s1 + $0x1368] sm:$0xff]
  %v674 = vld [vmem:[%s1 + $0x1370] sm:$0xff]
  %v675 = vld [vmem:[%s1 + $0x1378] sm:$0xff]
  %v676 = vld [vmem:[%s1 + $0x1380] sm:$0xff]
  %v677 = vld [vmem:[%s1 + $0x1388] sm:$0xff]
  %v678 = vld [vmem:[%s1 + $0x1390] sm:$0xff]
  %v679 = vld [vmem:[%s1 + $0x1398] sm:$0xff]
  %v680 = vld [vmem:[%s1 + $0x13a0] sm:$0xff]
  %v681 = vld [vmem:[%s1 + $0x13a8] sm:$0xff]
  %v682 = vld [vmem:[%s1 + $0x13b0] sm:$0xff]
  %v683 = vld [vmem:[%s1 + $0x13b8] sm:$0xff]
  %v684 = vld [vmem:[%s1 + $0x13c0] sm:$0xff]
  %v685 = vld [vmem:[%s1 + $0x13c8] sm:$0xff]
  %v686 = vld [vmem:[%s1 + $0x13d0] sm:$0xff]
  %v687 = vld [vmem:[%s1 + $0x13d8] sm:$0xff]
  %v688 = vld [vmem:[%s1 + $0x13e0] sm:$0xff]
  %v689 = vld [vmem:[%s1 + $0x13e8] sm:$0xff]
  %v690 = vld [vmem:[%s1 + $0x13f0] sm:$0xff]
  %v691 = vld [vmem:[%s1 + $0x13f8] sm:$0xff]
  %v692 = vld [vmem:[%s1 + $0x1400] sm:$0xff]
  %v693 = vld [vmem:[%s1 + $0x1408] sm:$0xff]
  %v694 = vld [vmem:[%s1 + $0x1410] sm:$0xff]
  %v695 = vld [vmem:[%s1 + $0x1418] sm:$0xff]
  %v696 = vld [vmem:[%s1 + $0x1420] sm:$0xff]
  %v697 = vld [vmem:[%s1 + $0x1428] sm:$0xff]
  %v698 = vld [vmem:[%s1 + $0x1430] sm:$0xff]
  %v699 = vld [vmem:[%s1 + $0x1438] sm:$0xff]
  %v700 = vld [vmem:[%s1 + $0x1440] sm:$0xff]
  %v701 = vld [vmem:[%s1 + $0x1448] sm:$0xff]
  %v702 = vld [vmem:[%s1 + $0x1450] sm:$0xff]
  %v703 = vld [vmem:[%s1 + $0x1458] sm:$0xff]
  %v704 = vld [vmem:[%s1 + $0x1460] sm:$0xff]
  %v705 = vld [vmem:[%s1 + $0x1468] sm:$0xff]
  %v706 = vld [vmem:[%s1 + $0x1470] sm:$0xff]
  %v707 = vld [vmem:[%s1 + $0x1478] sm:$0xff]
  %v708 = vld [vmem:[%s1 + $0x1480] sm:$0xff]
  %v709 = vld [vmem:[%s1 + $0x1488] sm:$0xff]
  %v710 = vld [vmem:[%s1 + $0x1490] sm:$0xff]
  %v711 = vld [vmem:[%s1 + $0x1498] sm:$0xff]
  %v712 = vld [vmem:[%s1 + $0x14a0] sm:$0xff]
  %v713 = vld [vmem:[%s1 + $0x14a8] sm:$0xff]
  %v714 = vld [vmem:[%s1 + $0x14b0] sm:$0xff]
  %v715 = vld [vmem:[%s1 + $0x14b8] sm:$0xff]
  %v716 = vld [vmem:[%s1 + $0x14c0] sm:$0xff]
  %v717 = vld [vmem:[%s1 + $0x14c8] sm:$0xff]
  %v718 = vld [vmem:[%s1 + $0x14d0] sm:$0xff]
  %v719 = vld [vmem:[%s1 + $0x14d8] sm:$0xff]
  %v720 = vld [vmem:[%s1 + $0x14e0] sm:$0xff]
  %v721 = vld [vmem:[%s1 + $0x14e8] sm:$0xff]
  %v722 = vld [vmem:[%s1 + $0x14f0] sm:$0xff]
  %v723 = vld [vmem:[%s1 + $0x14f8] sm:$0xff]
  %v724 = vld [vmem:[%s1 + $0x1500] sm:$0xff]
  %v725 = vld [vmem:[%s1 + $0x1508] sm:$0xff]
  %v726 = vld [vmem:[%s1 + $0x1510] sm:$0xff]
  %v727 = vld [vmem:[%s1 + $0x1518] sm:$0xff]
  %v728 = vld [vmem:[%s1 + $0x1520] sm:$0xff]
  %v729 = vld [vmem:[%s1 + $0x1528] sm:$0xff]
  %v730 = vld [vmem:[%s1 + $0x1530] sm:$0xff]
  %v731 = vld [vmem:[%s1 + $0x1538] sm:$0xff]
  %v732 = vld [vmem:[%s1 + $0x1540] sm:$0xff]
  %v733 = vld [vmem:[%s1 + $0x1548] sm:$0xff]
  %v734 = vld [vmem:[%s1 + $0x1550] sm:$0xff]
  %v735 = vld [vmem:[%s1 + $0x1558] sm:$0xff]
  %v736 = vld [vmem:[%s1 + $0x1560] sm:$0xff]
  %v737 = vld [vmem:[%s1 + $0x1568] sm:$0xff]
  %v738 = vld [vmem:[%s1 + $0x1570] sm:$0xff]
  %v739 = vld [vmem:[%s1 + $0x1578] sm:$0xff]
  %v740 = vld [vmem:[%s1 + $0x1580] sm:$0xff]
  %v741 = vld [vmem:[%s1 + $0x1588] sm:$0xff]
  %v742 = vld [vmem:[%s1 + $0x1590] sm:$0xff]
  %v743 = vld [vmem:[%s1 + $0x1598] sm:$0xff]
  %v744 = vld [vmem:[%s1 + $0x15a0] sm:$0xff]
  %v745 = vld [vmem:[%s1 + $0x15a8] sm:$0xff]
  %v746 = vld [vmem:[%s1 + $0x15b0] sm:$0xff]
  %v747 = vld [vmem:[%s1 + $0x15b8] sm:$0xff]
  %v748 = vld [vmem:[%s1 + $0x15c0] sm:$0xff]
  %v749 = vld [vmem:[%s1 + $0x15c8] sm:$0xff]
  %v750 = vld [vmem:[%s1 + $0x15d0] sm:$0xff]
  %v751 = vld [vmem:[%s1 + $0x15d8] sm:$0xff]
  %v752 = vld [vmem:[%s1 + $0x15e0] sm:$0xff]
  %v753 = vld [vmem:[%s1 + $0x15e8] sm:$0xff]
  %v754 = vld [vmem:[%s1 + $0x15f0] sm:$0xff]
  %v755 = vld [vmem:[%s1 + $0x15f8] sm:$0xff]
  %v756 = vld [vmem:[%s1 + $0x1600] sm:$0xff]
  %v757 = vld [vmem:[%s1 + $0x1608] sm:$0xff]
  %v758 = vld [vmem:[%s1 + $0x1610] sm:$0xff]
  %v759 = vld [vmem:[%s1 + $0x1618] sm:$0xff]
  %v760 = vld [vmem:[%s1 + $0x1620] sm:$0xff]
  %v761 = vld [vmem:[%s1 + $0x1628] sm:$0xff]
  %v762 = vld [vmem:[%s1 + $0x1630] sm:$0xff]
  %v763 = vld [vmem:[%s1 + $0x1638] sm:$0xff]
  %v764 = vld [vmem:[%s1 + $0x1640] sm:$0xff]
  %v765 = vld [vmem:[%s1 + $0x1648] sm:$0xff]
  %v766 = vld [vmem:[%s1 + $0x1650] sm:$0xff]
  %v767 = vld [vmem:[%s1 + $0x1658] sm:$0xff]
  %v768 = vld [vmem:[%s1 + $0x1660] sm:$0xff]
  %v769 = vld [vmem:[%s1 + $0x1668] sm:$0xff]
  %v770 = vld [vmem:[%s1 + $0x1670] sm:$0xff]
  %v771 = vld [vmem:[%s1 + $0x1678] sm:$0xff]
  %v772 = vld [vmem:[%s1 + $0x1680] sm:$0xff]
  %v773 = vld [vmem:[%s1 + $0x1688] sm:$0xff]
  %v774 = vld [vmem:[%s1 + $0x1690] sm:$0xff]
  %v775 = vld [vmem:[%s1 + $0x1698] sm:$0xff]
  %v776 = vld [vmem:[%s1 + $0x16a0] sm:$0xff]
  %v777 = vld [vmem:[%s1 + $0x16a8] sm:$0xff]
  %v778 = vld [vmem:[%s1 + $0x16b0] sm:$0xff]
  %v779 = vld [vmem:[%s1 + $0x16b8] sm:$0xff]
  %v780 = vld [vmem:[%s1 + $0x16c0] sm:$0xff]
  %v781 = vld [vmem:[%s1 + $0x16c8] sm:$0xff]
  %v782 = vld [vmem:[%s1 + $0x16d0] sm:$0xff]
  %v783 = vld [vmem:[%s1 + $0x16d8] sm:$0xff]
  %v784 = vld [vmem:[%s1 + $0x16e0] sm:$0xff]
  %v785 = vld [vmem:[%s1 + $0x16e8] sm:$0xff]
  %v786 = vld [vmem:[%s1 + $0x16f0] sm:$0xff]
  %v787 = vld [vmem:[%s1 + $0x16f8] sm:$0xff]
  %v788 = vld [vmem:[%s1 + $0x1700] sm:$0xff]
  %v789 = vld [vmem:[%s1 + $0x1708] sm:$0xff]
  %v790 = vld [vmem:[%s1 + $0x1710] sm:$0xff]
  %v791 = vld [vmem:[%s1 + $0x1718] sm:$0xff]
  %v792 = vld [vmem:[%s1 + $0x1720] sm:$0xff]
  %v793 = vld [vmem:[%s1 + $0x1728] sm:$0xff]
  %v794 = vld [vmem:[%s1 + $0x1730] sm:$0xff]
  %v795 = vld [vmem:[%s1 + $0x1738] sm:$0xff]
  %v796 = vld [vmem:[%s1 + $0x1740] sm:$0xff]
  %v797 = vld [vmem:[%s1 + $0x1748] sm:$0xff]
  %v798 = vld [vmem:[%s1 + $0x1750] sm:$0xff]
  %v799 = vld [vmem:[%s1 + $0x1758] sm:$0xff]
  %v800 = vld [vmem:[%s1 + $0x1760] sm:$0xff]
  %v801 = vld [vmem:[%s1 + $0x1768] sm:$0xff]
  %v802 = vld [vmem:[%s1 + $0x1770] sm:$0xff]
  %v803 = vld [vmem:[%s1 + $0x1778] sm:$0xff]
  %v804 = vld [vmem:[%s1 + $0x1780] sm:$0xff]
  %v805 = vld [vmem:[%s1 + $0x1788] sm:$0xff]
  %v806 = vld [vmem:[%s1 + $0x1790] sm:$0xff]
  %v807 = vld [vmem:[%s1 + $0x1798] sm:$0xff]
  %v808 = vld [vmem:[%s1 + $0x17a0] sm:$0xff]
  %v809 = vld [vmem:[%s1 + $0x17a8] sm:$0xff]
  %v810 = vld [vmem:[%s1 + $0x17b0] sm:$0xff]
  %v811 = vld [vmem:[%s1 + $0x17b8] sm:$0xff]
  %v812 = vld [vmem:[%s1 + $0x17c0] sm:$0xff]
  %v813 = vld [vmem:[%s1 + $0x17c8] sm:$0xff]
  %v814 = vld [vmem:[%s1 + $0x17d0] sm:$0xff]
  %v815 = vld [vmem:[%s1 + $0x17d8] sm:$0xff]
  %v816 = vld [vmem:[%s1 + $0x17e0] sm:$0xff]
  %v817 = vld [vmem:[%s1 + $0x17e8] sm:$0xff]
  %v818 = vld [vmem:[%s1 + $0x17f0] sm:$0xff]
  %v819 = vld [vmem:[%s1 + $0x17f8] sm:$0xff]
  %v820 = vld [vmem:[%s1 + $0x1800] sm:$0xff]
  %v821 = vld [vmem:[%s1 + $0x1808] sm:$0xff]
  %v822 = vld [vmem:[%s1 + $0x1810] sm:$0xff]
  %v823 = vld [vmem:[%s1 + $0x1818] sm:$0xff]
  %v824 = vld [vmem:[%s1 + $0x1820] sm:$0xff]
  %v825 = vld [vmem:[%s1 + $0x1828] sm:$0xff]
  %v826 = vld [vmem:[%s1 + $0x1830] sm:$0xff]
  %v827 = vld [vmem:[%s1 + $0x1838] sm:$0xff]
  %v828 = vld [vmem:[%s1 + $0x1840] sm:$0xff]
  %v829 = vld [vmem:[%s1 + $0x1848] sm:$0xff]
  %v830 = vld [vmem:[%s1 + $0x1850] sm:$0xff]
  %v831 = vld [vmem:[%s1 + $0x1858] sm:$0xff]
  %v832 = vld [vmem:[%s1 + $0x1860] sm:$0xff]
  %v833 = vld [vmem:[%s1 + $0x1868] sm:$0xff]
  %v834 = vld [vmem:[%s1 + $0x1870] sm:$0xff]
  %v835 = vld [vmem:[%s1 + $0x1878] sm:$0xff]
  %v836 = vld [vmem:[%s1 + $0x1880] sm:$0xff]
  %v837 = vld [vmem:[%s1 + $0x1888] sm:$0xff]
  %v838 = vld [vmem:[%s1 + $0x1890] sm:$0xff]
  %v839 = vld [vmem:[%s1 + $0x1898] sm:$0xff]
  %v840 = vld [vmem:[%s1 + $0x18a0] sm:$0xff]
  %v841 = vld [vmem:[%s1 + $0x18a8] sm:$0xff]
  %v842 = vld [vmem:[%s1 + $0x18b0] sm:$0xff]
  %v843 = vld [vmem:[%s1 + $0x18b8] sm:$0xff]
  %v844 = vld [vmem:[%s1 + $0x18c0] sm:$0xff]
  %v845 = vld [vmem:[%s1 + $0x18c8] sm:$0xff]
  %v846 = vld [vmem:[%s1 + $0x18d0] sm:$0xff]
  %v847 = vld [vmem:[%s1 + $0x18d8] sm:$0xff]
  %v848 = vld [vmem:[%s1 + $0x18e0] sm:$0xff]
  %v849 = vld [vmem:[%s1 + $0x18e8] sm:$0xff]
  %v850 = vld [vmem:[%s1 + $0x18f0] sm:$0xff]
  %v851 = vld [vmem:[%s1 + $0x18f8] sm:$0xff]
  %v852 = vld [vmem:[%s2] sm:$0x3]
  %v854 = vlaneseq
  %v855 = vshrl.u32 %v854, 7
  %v856 = vsub.s32 0, %v855
  %v857 = vrot.slane %v852, %v856
  %v858 = vlaneseq
  %v859 = vshrl.u32 %v858, 7
  %v860 = vsub.s32 1, %v859
  %v861 = vrot.slane %v852, %v860
  %v889 = vunpack.c.l.b16 %v27
  %v890 = vunpack.c.h.b16 %v27
  %v891 = vunpack.c.l.b16 %v28
  %v892 = vunpack.c.h.b16 %v28
  %v893 = vunpack.c.l.b16 %v29
  %v894 = vunpack.c.h.b16 %v29
  %v895 = vunpack.c.l.b16 %v30
  %v896 = vunpack.c.h.b16 %v30
  %v897 = vunpack.c.l.b16 %v31
  %v898 = vunpack.c.h.b16 %v31
  %v899 = vunpack.c.l.b16 %v32
  %v900 = vunpack.c.h.b16 %v32
  %v901 = vunpack.c.l.b16 %v33
  %v902 = vunpack.c.h.b16 %v33
  %v903 = vunpack.c.l.b16 %v34
  %v904 = vunpack.c.h.b16 %v34
  %v905 = vunpack.c.l.b16 %v35
  %v906 = vunpack.c.h.b16 %v35
  %v907 = vunpack.c.l.b16 %v36
  %v908 = vunpack.c.h.b16 %v36
  %v909 = vunpack.c.l.b16 %v37
  %v910 = vunpack.c.h.b16 %v37
  %v911 = vunpack.c.l.b16 %v38
  %v912 = vunpack.c.h.b16 %v38
  %v913 = vunpack.c.l.b16 %v39
  %v914 = vunpack.c.h.b16 %v39
  %v915 = vunpack.c.l.b16 %v40
  %v916 = vunpack.c.h.b16 %v40
  %v917 = vunpack.c.l.b16 %v41
  %v918 = vunpack.c.h.b16 %v41
  %v919 = vunpack.c.l.b16 %v42
  %v920 = vunpack.c.h.b16 %v42
  %v921 = vunpack.c.l.b16 %v43
  %v922 = vunpack.c.h.b16 %v43
  %v923 = vunpack.c.l.b16 %v44
  %v924 = vunpack.c.h.b16 %v44
  %v925 = vunpack.c.l.b16 %v45
  %v926 = vunpack.c.h.b16 %v45
  %v927 = vunpack.c.l.b16 %v46
  %v928 = vunpack.c.h.b16 %v46
  %v929 = vunpack.c.l.b16 %v47
  %v930 = vunpack.c.h.b16 %v47
  %v931 = vunpack.c.l.b16 %v48
  %v932 = vunpack.c.h.b16 %v48
  %v933 = vunpack.c.l.b16 %v49
  %v934 = vunpack.c.h.b16 %v49
  %v935 = vunpack.c.l.b16 %v50
  %v936 = vunpack.c.h.b16 %v50
  %v937 = vunpack.c.l.b16 %v51
  %v938 = vunpack.c.h.b16 %v51
  %v939 = vpack.c.b16 %v889, %v889
  %v940 = vpack.c.b16 %v890, %v890
  %v941 = vpack.c.b16 %v891, %v891
  %v942 = vpack.c.b16 %v892, %v892
  %v943 = vpack.c.b16 %v893, %v893
  %v944 = vpack.c.b16 %v894, %v894
  %v945 = vpack.c.b16 %v895, %v895
  %v946 = vpack.c.b16 %v896, %v896
  %v947 = vpack.c.b16 %v897, %v897
  %v948 = vpack.c.b16 %v898, %v898
  %v949 = vpack.c.b16 %v899, %v899
  %v950 = vpack.c.b16 %v900, %v900
  %v951 = vpack.c.b16 %v901, %v901
  %v952 = vpack.c.b16 %v902, %v902
  %v953 = vpack.c.b16 %v903, %v903
  %v954 = vpack.c.b16 %v904, %v904
  %v955 = vpack.c.b16 %v905, %v905
  %v956 = vpack.c.b16 %v906, %v906
  %v957 = vpack.c.b16 %v907, %v907
  %v958 = vpack.c.b16 %v908, %v908
  %v959 = vpack.c.b16 %v909, %v909
  %v960 = vpack.c.b16 %v910, %v910
  %v961 = vpack.c.b16 %v911, %v911
  %v962 = vpack.c.b16 %v912, %v912
  %v963 = vpack.c.b16 %v913, %v913
  %v964 = vpack.c.b16 %v914, %v914
  %v965 = vpack.c.b16 %v915, %v915
  %v966 = vpack.c.b16 %v916, %v916
  %v967 = vpack.c.b16 %v917, %v917
  %v968 = vpack.c.b16 %v918, %v918
  %v969 = vpack.c.b16 %v919, %v919
  %v970 = vpack.c.b16 %v920, %v920
  %v971 = vpack.c.b16 %v921, %v921
  %v972 = vpack.c.b16 %v922, %v922
  %v973 = vpack.c.b16 %v923, %v923
  %v974 = vpack.c.b16 %v924, %v924
  %v975 = vpack.c.b16 %v925, %v925
  %v976 = vpack.c.b16 %v926, %v926
  %v977 = vpack.c.b16 %v927, %v927
  %v978 = vpack.c.b16 %v928, %v928
  %v979 = vpack.c.b16 %v929, %v929
  %v980 = vpack.c.b16 %v930, %v930
  %v981 = vpack.c.b16 %v931, %v931
  %v982 = vpack.c.b16 %v932, %v932
  %v983 = vpack.c.b16 %v933, %v933
  %v984 = vpack.c.b16 %v934, %v934
  %v985 = vpack.c.b16 %v935, %v935
  %v986 = vpack.c.b16 %v936, %v936
  %v987 = vpack.c.b16 %v937, %v937
  %v988 = vpack.c.b16 %v938, %v938
  %v1839 = vunpack.c.l.b16 %v52
  %v1840 = vunpack.c.h.b16 %v52
  %v1841 = vunpack.c.l.b16 %v53
  %v1842 = vunpack.c.h.b16 %v53
  %v1843 = vunpack.c.l.b16 %v54
  %v1844 = vunpack.c.h.b16 %v54
  %v1845 = vunpack.c.l.b16 %v55
  %v1846 = vunpack.c.h.b16 %v55
  %v1847 = vunpack.c.l.b16 %v56
  %v1848 = vunpack.c.h.b16 %v56
  %v1849 = vunpack.c.l.b16 %v57
  %v1850 = vunpack.c.h.b16 %v57
  %v1851 = vunpack.c.l.b16 %v58
  %v1852 = vunpack.c.h.b16 %v58
  %v1853 = vunpack.c.l.b16 %v59
  %v1854 = vunpack.c.h.b16 %v59
  %v1855 = vunpack.c.l.b16 %v60
  %v1856 = vunpack.c.h.b16 %v60
  %v1857 = vunpack.c.l.b16 %v61
  %v1858 = vunpack.c.h.b16 %v61
  %v1859 = vunpack.c.l.b16 %v62
  %v1860 = vunpack.c.h.b16 %v62
  %v1861 = vunpack.c.l.b16 %v63
  %v1862 = vunpack.c.h.b16 %v63
  %v1863 = vunpack.c.l.b16 %v64
  %v1864 = vunpack.c.h.b16 %v64
  %v1865 = vunpack.c.l.b16 %v65
  %v1866 = vunpack.c.h.b16 %v65
  %v1867 = vunpack.c.l.b16 %v66
  %v1868 = vunpack.c.h.b16 %v66
  %v1869 = vunpack.c.l.b16 %v67
  %v1870 = vunpack.c.h.b16 %v67
  %v1871 = vunpack.c.l.b16 %v68
  %v1872 = vunpack.c.h.b16 %v68
  %v1873 = vunpack.c.l.b16 %v69
  %v1874 = vunpack.c.h.b16 %v69
  %v1875 = vunpack.c.l.b16 %v70
  %v1876 = vunpack.c.h.b16 %v70
  %v1877 = vunpack.c.l.b16 %v71
  %v1878 = vunpack.c.h.b16 %v71
  %v1879 = vunpack.c.l.b16 %v72
  %v1880 = vunpack.c.h.b16 %v72
  %v1881 = vunpack.c.l.b16 %v73
  %v1882 = vunpack.c.h.b16 %v73
  %v1883 = vunpack.c.l.b16 %v74
  %v1884 = vunpack.c.h.b16 %v74
  %v1885 = vunpack.c.l.b16 %v75
  %v1886 = vunpack.c.h.b16 %v75
  %v1887 = vunpack.c.l.b16 %v76
  %v1888 = vunpack.c.h.b16 %v76
  %v1889 = vunpack.c.l.b16 %v77
  %v1890 = vunpack.c.h.b16 %v77
  %v1891 = vunpack.c.l.b16 %v78
  %v1892 = vunpack.c.h.b16 %v78
  %v1893 = vunpack.c.l.b16 %v79
  %v1894 = vunpack.c.h.b16 %v79
  %v1895 = vunpack.c.l.b16 %v80
  %v1896 = vunpack.c.h.b16 %v80
  %v1897 = vunpack.c.l.b16 %v81
  %v1898 = vunpack.c.h.b16 %v81
  %v1899 = vunpack.c.l.b16 %v82
  %v1900 = vunpack.c.h.b16 %v82
  %v1901 = vunpack.c.l.b16 %v83
  %v1902 = vunpack.c.h.b16 %v83
  %v1903 = vunpack.c.l.b16 %v84
  %v1904 = vunpack.c.h.b16 %v84
  %v1905 = vunpack.c.l.b16 %v85
  %v1906 = vunpack.c.h.b16 %v85
  %v1907 = vunpack.c.l.b16 %v86
  %v1908 = vunpack.c.h.b16 %v86
  %v1909 = vunpack.c.l.b16 %v87
  %v1910 = vunpack.c.h.b16 %v87
  %v1911 = vunpack.c.l.b16 %v88
  %v1912 = vunpack.c.h.b16 %v88
  %v1913 = vunpack.c.l.b16 %v89
  %v1914 = vunpack.c.h.b16 %v89
  %v1915 = vunpack.c.l.b16 %v90
  %v1916 = vunpack.c.h.b16 %v90
  %v1917 = vunpack.c.l.b16 %v91
  %v1918 = vunpack.c.h.b16 %v91
  %v1919 = vunpack.c.l.b16 %v92
  %v1920 = vunpack.c.h.b16 %v92
  %v1921 = vunpack.c.l.b16 %v93
  %v1922 = vunpack.c.h.b16 %v93
  %v1923 = vunpack.c.l.b16 %v94
  %v1924 = vunpack.c.h.b16 %v94
  %v1925 = vunpack.c.l.b16 %v95
  %v1926 = vunpack.c.h.b16 %v95
  %v1927 = vunpack.c.l.b16 %v96
  %v1928 = vunpack.c.h.b16 %v96
  %v1929 = vunpack.c.l.b16 %v97
  %v1930 = vunpack.c.h.b16 %v97
  %v1931 = vunpack.c.l.b16 %v98
  %v1932 = vunpack.c.h.b16 %v98
  %v1933 = vunpack.c.l.b16 %v99
  %v1934 = vunpack.c.h.b16 %v99
  %v1935 = vunpack.c.l.b16 %v100
  %v1936 = vunpack.c.h.b16 %v100
  %v1937 = vunpack.c.l.b16 %v101
  %v1938 = vunpack.c.h.b16 %v101
  %v1939 = vunpack.c.l.b16 %v102
  %v1940 = vunpack.c.h.b16 %v102
  %v1941 = vunpack.c.l.b16 %v103
  %v1942 = vunpack.c.h.b16 %v103
  %v1943 = vunpack.c.l.b16 %v104
  %v1944 = vunpack.c.h.b16 %v104
  %v1945 = vunpack.c.l.b16 %v105
  %v1946 = vunpack.c.h.b16 %v105
  %v1947 = vunpack.c.l.b16 %v106
  %v1948 = vunpack.c.h.b16 %v106
  %v1949 = vunpack.c.l.b16 %v107
  %v1950 = vunpack.c.h.b16 %v107
  %v1951 = vunpack.c.l.b16 %v108
  %v1952 = vunpack.c.h.b16 %v108
  %v1953 = vunpack.c.l.b16 %v109
  %v1954 = vunpack.c.h.b16 %v109
  %v1955 = vunpack.c.l.b16 %v110
  %v1956 = vunpack.c.h.b16 %v110
  %v1957 = vunpack.c.l.b16 %v111
  %v1958 = vunpack.c.h.b16 %v111
  %v1959 = vunpack.c.l.b16 %v112
  %v1960 = vunpack.c.h.b16 %v112
  %v1961 = vunpack.c.l.b16 %v113
  %v1962 = vunpack.c.h.b16 %v113
  %v1963 = vunpack.c.l.b16 %v114
  %v1964 = vunpack.c.h.b16 %v114
  %v1965 = vunpack.c.l.b16 %v115
  %v1966 = vunpack.c.h.b16 %v115
  %v1967 = vunpack.c.l.b16 %v116
  %v1968 = vunpack.c.h.b16 %v116
  %v1969 = vunpack.c.l.b16 %v117
  %v1970 = vunpack.c.h.b16 %v117
  %v1971 = vunpack.c.l.b16 %v118
  %v1972 = vunpack.c.h.b16 %v118
  %v1973 = vunpack.c.l.b16 %v119
  %v1974 = vunpack.c.h.b16 %v119
  %v1975 = vunpack.c.l.b16 %v120
  %v1976 = vunpack.c.h.b16 %v120
  %v1977 = vunpack.c.l.b16 %v121
  %v1978 = vunpack.c.h.b16 %v121
  %v1979 = vunpack.c.l.b16 %v122
  %v1980 = vunpack.c.h.b16 %v122
  %v1981 = vunpack.c.l.b16 %v123
  %v1982 = vunpack.c.h.b16 %v123
  %v1983 = vunpack.c.l.b16 %v124
  %v1984 = vunpack.c.h.b16 %v124
  %v1985 = vunpack.c.l.b16 %v125
  %v1986 = vunpack.c.h.b16 %v125
  %v1987 = vunpack.c.l.b16 %v126
  %v1988 = vunpack.c.h.b16 %v126
  %v1989 = vunpack.c.l.b16 %v127
  %v1990 = vunpack.c.h.b16 %v127
  %v1991 = vunpack.c.l.b16 %v128
  %v1992 = vunpack.c.h.b16 %v128
  %v1993 = vunpack.c.l.b16 %v129
  %v1994 = vunpack.c.h.b16 %v129
  %v1995 = vunpack.c.l.b16 %v130
  %v1996 = vunpack.c.h.b16 %v130
  %v1997 = vunpack.c.l.b16 %v131
  %v1998 = vunpack.c.h.b16 %v131
  %v1999 = vunpack.c.l.b16 %v132
  %v2000 = vunpack.c.h.b16 %v132
  %v2001 = vunpack.c.l.b16 %v133
  %v2002 = vunpack.c.h.b16 %v133
  %v2003 = vunpack.c.l.b16 %v134
  %v2004 = vunpack.c.h.b16 %v134
  %v2005 = vunpack.c.l.b16 %v135
  %v2006 = vunpack.c.h.b16 %v135
  %v2007 = vunpack.c.l.b16 %v136
  %v2008 = vunpack.c.h.b16 %v136
  %v2009 = vunpack.c.l.b16 %v137
  %v2010 = vunpack.c.h.b16 %v137
  %v2011 = vunpack.c.l.b16 %v138
  %v2012 = vunpack.c.h.b16 %v138
  %v2013 = vunpack.c.l.b16 %v139
  %v2014 = vunpack.c.h.b16 %v139
  %v2015 = vunpack.c.l.b16 %v140
  %v2016 = vunpack.c.h.b16 %v140
  %v2017 = vunpack.c.l.b16 %v141
  %v2018 = vunpack.c.h.b16 %v141
  %v2019 = vunpack.c.l.b16 %v142
  %v2020 = vunpack.c.h.b16 %v142
  %v2021 = vunpack.c.l.b16 %v143
  %v2022 = vunpack.c.h.b16 %v143
  %v2023 = vunpack.c.l.b16 %v144
  %v2024 = vunpack.c.h.b16 %v144
  %v2025 = vunpack.c.l.b16 %v145
  %v2026 = vunpack.c.h.b16 %v145
  %v2027 = vunpack.c.l.b16 %v146
  %v2028 = vunpack.c.h.b16 %v146
  %v2029 = vunpack.c.l.b16 %v147
  %v2030 = vunpack.c.h.b16 %v147
  %v2031 = vunpack.c.l.b16 %v148
  %v2032 = vunpack.c.h.b16 %v148
  %v2033 = vunpack.c.l.b16 %v149
  %v2034 = vunpack.c.h.b16 %v149
  %v2035 = vunpack.c.l.b16 %v150
  %v2036 = vunpack.c.h.b16 %v150
  %v2037 = vunpack.c.l.b16 %v151
  %v2038 = vunpack.c.h.b16 %v151
  %v2039 = vunpack.c.l.b16 %v152
  %v2040 = vunpack.c.h.b16 %v152
  %v2041 = vunpack.c.l.b16 %v153
  %v2042 = vunpack.c.h.b16 %v153
  %v2043 = vunpack.c.l.b16 %v154
  %v2044 = vunpack.c.h.b16 %v154
  %v2045 = vunpack.c.l.b16 %v155
  %v2046 = vunpack.c.h.b16 %v155
  %v2047 = vunpack.c.l.b16 %v156
  %v2048 = vunpack.c.h.b16 %v156
  %v2049 = vunpack.c.l.b16 %v157
  %v2050 = vunpack.c.h.b16 %v157
  %v2051 = vunpack.c.l.b16 %v158
  %v2052 = vunpack.c.h.b16 %v158
  %v2053 = vunpack.c.l.b16 %v159
  %v2054 = vunpack.c.h.b16 %v159
  %v2055 = vunpack.c.l.b16 %v160
  %v2056 = vunpack.c.h.b16 %v160
  %v2057 = vunpack.c.l.b16 %v161
  %v2058 = vunpack.c.h.b16 %v161
  %v2059 = vunpack.c.l.b16 %v162
  %v2060 = vunpack.c.h.b16 %v162
  %v2061 = vunpack.c.l.b16 %v163
  %v2062 = vunpack.c.h.b16 %v163
  %v2063 = vunpack.c.l.b16 %v164
  %v2064 = vunpack.c.h.b16 %v164
  %v2065 = vunpack.c.l.b16 %v165
  %v2066 = vunpack.c.h.b16 %v165
  %v2067 = vunpack.c.l.b16 %v166
  %v2068 = vunpack.c.h.b16 %v166
  %v2069 = vunpack.c.l.b16 %v167
  %v2070 = vunpack.c.h.b16 %v167
  %v2071 = vunpack.c.l.b16 %v168
  %v2072 = vunpack.c.h.b16 %v168
  %v2073 = vunpack.c.l.b16 %v169
  %v2074 = vunpack.c.h.b16 %v169
  %v2075 = vunpack.c.l.b16 %v170
  %v2076 = vunpack.c.h.b16 %v170
  %v2077 = vunpack.c.l.b16 %v171
  %v2078 = vunpack.c.h.b16 %v171
  %v2079 = vunpack.c.l.b16 %v172
  %v2080 = vunpack.c.h.b16 %v172
  %v2081 = vunpack.c.l.b16 %v173
  %v2082 = vunpack.c.h.b16 %v173
  %v2083 = vunpack.c.l.b16 %v174
  %v2084 = vunpack.c.h.b16 %v174
  %v2085 = vunpack.c.l.b16 %v175
  %v2086 = vunpack.c.h.b16 %v175
  %v2087 = vunpack.c.l.b16 %v176
  %v2088 = vunpack.c.h.b16 %v176
  %v2089 = vunpack.c.l.b16 %v177
  %v2090 = vunpack.c.h.b16 %v177
  %v2091 = vunpack.c.l.b16 %v178
  %v2092 = vunpack.c.h.b16 %v178
  %v2093 = vunpack.c.l.b16 %v179
  %v2094 = vunpack.c.h.b16 %v179
  %v2095 = vunpack.c.l.b16 %v180
  %v2096 = vunpack.c.h.b16 %v180
  %v2097 = vunpack.c.l.b16 %v181
  %v2098 = vunpack.c.h.b16 %v181
  %v2099 = vunpack.c.l.b16 %v182
  %v2100 = vunpack.c.h.b16 %v182
  %v2101 = vunpack.c.l.b16 %v183
  %v2102 = vunpack.c.h.b16 %v183
  %v2103 = vunpack.c.l.b16 %v184
  %v2104 = vunpack.c.h.b16 %v184
  %v2105 = vunpack.c.l.b16 %v185
  %v2106 = vunpack.c.h.b16 %v185
  %v2107 = vunpack.c.l.b16 %v186
  %v2108 = vunpack.c.h.b16 %v186
  %v2109 = vunpack.c.l.b16 %v187
  %v2110 = vunpack.c.h.b16 %v187
  %v2111 = vunpack.c.l.b16 %v188
  %v2112 = vunpack.c.h.b16 %v188
  %v2113 = vunpack.c.l.b16 %v189
  %v2114 = vunpack.c.h.b16 %v189
  %v2115 = vunpack.c.l.b16 %v190
  %v2116 = vunpack.c.h.b16 %v190
  %v2117 = vunpack.c.l.b16 %v191
  %v2118 = vunpack.c.h.b16 %v191
  %v2119 = vunpack.c.l.b16 %v192
  %v2120 = vunpack.c.h.b16 %v192
  %v2121 = vunpack.c.l.b16 %v193
  %v2122 = vunpack.c.h.b16 %v193
  %v2123 = vunpack.c.l.b16 %v194
  %v2124 = vunpack.c.h.b16 %v194
  %v2125 = vunpack.c.l.b16 %v195
  %v2126 = vunpack.c.h.b16 %v195
  %v2127 = vunpack.c.l.b16 %v196
  %v2128 = vunpack.c.h.b16 %v196
  %v2129 = vunpack.c.l.b16 %v197
  %v2130 = vunpack.c.h.b16 %v197
  %v2131 = vunpack.c.l.b16 %v198
  %v2132 = vunpack.c.h.b16 %v198
  %v2133 = vunpack.c.l.b16 %v199
  %v2134 = vunpack.c.h.b16 %v199
  %v2135 = vunpack.c.l.b16 %v200
  %v2136 = vunpack.c.h.b16 %v200
  %v2137 = vunpack.c.l.b16 %v201
  %v2138 = vunpack.c.h.b16 %v201
  %v2139 = vunpack.c.l.b16 %v202
  %v2140 = vunpack.c.h.b16 %v202
  %v2141 = vunpack.c.l.b16 %v203
  %v2142 = vunpack.c.h.b16 %v203
  %v2143 = vunpack.c.l.b16 %v204
  %v2144 = vunpack.c.h.b16 %v204
  %v2145 = vunpack.c.l.b16 %v205
  %v2146 = vunpack.c.h.b16 %v205
  %v2147 = vunpack.c.l.b16 %v206
  %v2148 = vunpack.c.h.b16 %v206
  %v2149 = vunpack.c.l.b16 %v207
  %v2150 = vunpack.c.h.b16 %v207
  %v2151 = vunpack.c.l.b16 %v208
  %v2152 = vunpack.c.h.b16 %v208
  %v2153 = vunpack.c.l.b16 %v209
  %v2154 = vunpack.c.h.b16 %v209
  %v2155 = vunpack.c.l.b16 %v210
  %v2156 = vunpack.c.h.b16 %v210
  %v2157 = vunpack.c.l.b16 %v211
  %v2158 = vunpack.c.h.b16 %v211
  %v2159 = vunpack.c.l.b16 %v212
  %v2160 = vunpack.c.h.b16 %v212
  %v2161 = vunpack.c.l.b16 %v213
  %v2162 = vunpack.c.h.b16 %v213
  %v2163 = vunpack.c.l.b16 %v214
  %v2164 = vunpack.c.h.b16 %v214
  %v2165 = vunpack.c.l.b16 %v215
  %v2166 = vunpack.c.h.b16 %v215
  %v2167 = vunpack.c.l.b16 %v216
  %v2168 = vunpack.c.h.b16 %v216
  %v2169 = vunpack.c.l.b16 %v217
  %v2170 = vunpack.c.h.b16 %v217
  %v2171 = vunpack.c.l.b16 %v218
  %v2172 = vunpack.c.h.b16 %v218
  %v2173 = vunpack.c.l.b16 %v219
  %v2174 = vunpack.c.h.b16 %v219
  %v2175 = vunpack.c.l.b16 %v220
  %v2176 = vunpack.c.h.b16 %v220
  %v2177 = vunpack.c.l.b16 %v221
  %v2178 = vunpack.c.h.b16 %v221
  %v2179 = vunpack.c.l.b16 %v222
  %v2180 = vunpack.c.h.b16 %v222
  %v2181 = vunpack.c.l.b16 %v223
  %v2182 = vunpack.c.h.b16 %v223
  %v2183 = vunpack.c.l.b16 %v224
  %v2184 = vunpack.c.h.b16 %v224
  %v2185 = vunpack.c.l.b16 %v225
  %v2186 = vunpack.c.h.b16 %v225
  %v2187 = vunpack.c.l.b16 %v226
  %v2188 = vunpack.c.h.b16 %v226
  %v2189 = vunpack.c.l.b16 %v227
  %v2190 = vunpack.c.h.b16 %v227
  %v2191 = vunpack.c.l.b16 %v228
  %v2192 = vunpack.c.h.b16 %v228
  %v2193 = vunpack.c.l.b16 %v229
  %v2194 = vunpack.c.h.b16 %v229
  %v2195 = vunpack.c.l.b16 %v230
  %v2196 = vunpack.c.h.b16 %v230
  %v2197 = vunpack.c.l.b16 %v231
  %v2198 = vunpack.c.h.b16 %v231
  %v2199 = vunpack.c.l.b16 %v232
  %v2200 = vunpack.c.h.b16 %v232
  %v2201 = vunpack.c.l.b16 %v233
  %v2202 = vunpack.c.h.b16 %v233
  %v2203 = vunpack.c.l.b16 %v234
  %v2204 = vunpack.c.h.b16 %v234
  %v2205 = vunpack.c.l.b16 %v235
  %v2206 = vunpack.c.h.b16 %v235
  %v2207 = vunpack.c.l.b16 %v236
  %v2208 = vunpack.c.h.b16 %v236
  %v2209 = vunpack.c.l.b16 %v237
  %v2210 = vunpack.c.h.b16 %v237
  %v2211 = vunpack.c.l.b16 %v238
  %v2212 = vunpack.c.h.b16 %v238
  %v2213 = vunpack.c.l.b16 %v239
  %v2214 = vunpack.c.h.b16 %v239
  %v2215 = vunpack.c.l.b16 %v240
  %v2216 = vunpack.c.h.b16 %v240
  %v2217 = vunpack.c.l.b16 %v241
  %v2218 = vunpack.c.h.b16 %v241
  %v2219 = vunpack.c.l.b16 %v242
  %v2220 = vunpack.c.h.b16 %v242
  %v2221 = vunpack.c.l.b16 %v243
  %v2222 = vunpack.c.h.b16 %v243
  %v2223 = vunpack.c.l.b16 %v244
  %v2224 = vunpack.c.h.b16 %v244
  %v2225 = vunpack.c.l.b16 %v245
  %v2226 = vunpack.c.h.b16 %v245
  %v2227 = vunpack.c.l.b16 %v246
  %v2228 = vunpack.c.h.b16 %v246
  %v2229 = vunpack.c.l.b16 %v247
  %v2230 = vunpack.c.h.b16 %v247
  %v2231 = vunpack.c.l.b16 %v248
  %v2232 = vunpack.c.h.b16 %v248
  %v2233 = vunpack.c.l.b16 %v249
  %v2234 = vunpack.c.h.b16 %v249
  %v2235 = vunpack.c.l.b16 %v250
  %v2236 = vunpack.c.h.b16 %v250
  %v2237 = vunpack.c.l.b16 %v251
  %v2238 = vunpack.c.h.b16 %v251
  %v2239 = vunpack.c.l.b16 %v252
  %v2240 = vunpack.c.h.b16 %v252
  %v2241 = vunpack.c.l.b16 %v253
  %v2242 = vunpack.c.h.b16 %v253
  %v2243 = vunpack.c.l.b16 %v254
  %v2244 = vunpack.c.h.b16 %v254
  %v2245 = vunpack.c.l.b16 %v255
  %v2246 = vunpack.c.h.b16 %v255
  %v2247 = vunpack.c.l.b16 %v256
  %v2248 = vunpack.c.h.b16 %v256
  %v2249 = vunpack.c.l.b16 %v257
  %v2250 = vunpack.c.h.b16 %v257
  %v2251 = vunpack.c.l.b16 %v258
  %v2252 = vunpack.c.h.b16 %v258
  %v2253 = vunpack.c.l.b16 %v259
  %v2254 = vunpack.c.h.b16 %v259
  %v2255 = vunpack.c.l.b16 %v260
  %v2256 = vunpack.c.h.b16 %v260
  %v2257 = vunpack.c.l.b16 %v261
  %v2258 = vunpack.c.h.b16 %v261
  %v2259 = vunpack.c.l.b16 %v262
  %v2260 = vunpack.c.h.b16 %v262
  %v2261 = vunpack.c.l.b16 %v263
  %v2262 = vunpack.c.h.b16 %v263
  %v2263 = vunpack.c.l.b16 %v264
  %v2264 = vunpack.c.h.b16 %v264
  %v2265 = vunpack.c.l.b16 %v265
  %v2266 = vunpack.c.h.b16 %v265
  %v2267 = vunpack.c.l.b16 %v266
  %v2268 = vunpack.c.h.b16 %v266
  %v2269 = vunpack.c.l.b16 %v267
  %v2270 = vunpack.c.h.b16 %v267
  %v2271 = vunpack.c.l.b16 %v268
  %v2272 = vunpack.c.h.b16 %v268
  %v2273 = vunpack.c.l.b16 %v269
  %v2274 = vunpack.c.h.b16 %v269
  %v2275 = vunpack.c.l.b16 %v270
  %v2276 = vunpack.c.h.b16 %v270
  %v2277 = vunpack.c.l.b16 %v271
  %v2278 = vunpack.c.h.b16 %v271
  %v2279 = vunpack.c.l.b16 %v272
  %v2280 = vunpack.c.h.b16 %v272
  %v2281 = vunpack.c.l.b16 %v273
  %v2282 = vunpack.c.h.b16 %v273
  %v2283 = vunpack.c.l.b16 %v274
  %v2284 = vunpack.c.h.b16 %v274
  %v2285 = vunpack.c.l.b16 %v275
  %v2286 = vunpack.c.h.b16 %v275
  %v2287 = vunpack.c.l.b16 %v276
  %v2288 = vunpack.c.h.b16 %v276
  %v2289 = vunpack.c.l.b16 %v277
  %v2290 = vunpack.c.h.b16 %v277
  %v2291 = vunpack.c.l.b16 %v278
  %v2292 = vunpack.c.h.b16 %v278
  %v2293 = vunpack.c.l.b16 %v279
  %v2294 = vunpack.c.h.b16 %v279
  %v2295 = vunpack.c.l.b16 %v280
  %v2296 = vunpack.c.h.b16 %v280
  %v2297 = vunpack.c.l.b16 %v281
  %v2298 = vunpack.c.h.b16 %v281
  %v2299 = vunpack.c.l.b16 %v282
  %v2300 = vunpack.c.h.b16 %v282
  %v2301 = vunpack.c.l.b16 %v283
  %v2302 = vunpack.c.h.b16 %v283
  %v2303 = vunpack.c.l.b16 %v284
  %v2304 = vunpack.c.h.b16 %v284
  %v2305 = vunpack.c.l.b16 %v285
  %v2306 = vunpack.c.h.b16 %v285
  %v2307 = vunpack.c.l.b16 %v286
  %v2308 = vunpack.c.h.b16 %v286
  %v2309 = vunpack.c.l.b16 %v287
  %v2310 = vunpack.c.h.b16 %v287
  %v2311 = vunpack.c.l.b16 %v288
  %v2312 = vunpack.c.h.b16 %v288
  %v2313 = vunpack.c.l.b16 %v289
  %v2314 = vunpack.c.h.b16 %v289
  %v2315 = vunpack.c.l.b16 %v290
  %v2316 = vunpack.c.h.b16 %v290
  %v2317 = vunpack.c.l.b16 %v291
  %v2318 = vunpack.c.h.b16 %v291
  %v2319 = vunpack.c.l.b16 %v292
  %v2320 = vunpack.c.h.b16 %v292
  %v2321 = vunpack.c.l.b16 %v293
  %v2322 = vunpack.c.h.b16 %v293
  %v2323 = vunpack.c.l.b16 %v294
  %v2324 = vunpack.c.h.b16 %v294
  %v2325 = vunpack.c.l.b16 %v295
  %v2326 = vunpack.c.h.b16 %v295
  %v2327 = vunpack.c.l.b16 %v296
  %v2328 = vunpack.c.h.b16 %v296
  %v2329 = vunpack.c.l.b16 %v297
  %v2330 = vunpack.c.h.b16 %v297
  %v2331 = vunpack.c.l.b16 %v298
  %v2332 = vunpack.c.h.b16 %v298
  %v2333 = vunpack.c.l.b16 %v299
  %v2334 = vunpack.c.h.b16 %v299
  %v2335 = vunpack.c.l.b16 %v300
  %v2336 = vunpack.c.h.b16 %v300
  %v2337 = vunpack.c.l.b16 %v301
  %v2338 = vunpack.c.h.b16 %v301
  %v2339 = vunpack.c.l.b16 %v302
  %v2340 = vunpack.c.h.b16 %v302
  %v2341 = vunpack.c.l.b16 %v303
  %v2342 = vunpack.c.h.b16 %v303
  %v2343 = vunpack.c.l.b16 %v304
  %v2344 = vunpack.c.h.b16 %v304
  %v2345 = vunpack.c.l.b16 %v305
  %v2346 = vunpack.c.h.b16 %v305
  %v2347 = vunpack.c.l.b16 %v306
  %v2348 = vunpack.c.h.b16 %v306
  %v2349 = vunpack.c.l.b16 %v307
  %v2350 = vunpack.c.h.b16 %v307
  %v2351 = vunpack.c.l.b16 %v308
  %v2352 = vunpack.c.h.b16 %v308
  %v2353 = vunpack.c.l.b16 %v309
  %v2354 = vunpack.c.h.b16 %v309
  %v2355 = vunpack.c.l.b16 %v310
  %v2356 = vunpack.c.h.b16 %v310
  %v2357 = vunpack.c.l.b16 %v311
  %v2358 = vunpack.c.h.b16 %v311
  %v2359 = vunpack.c.l.b16 %v312
  %v2360 = vunpack.c.h.b16 %v312
  %v2361 = vunpack.c.l.b16 %v313
  %v2362 = vunpack.c.h.b16 %v313
  %v2363 = vunpack.c.l.b16 %v314
  %v2364 = vunpack.c.h.b16 %v314
  %v2365 = vunpack.c.l.b16 %v315
  %v2366 = vunpack.c.h.b16 %v315
  %v2367 = vunpack.c.l.b16 %v316
  %v2368 = vunpack.c.h.b16 %v316
  %v2369 = vunpack.c.l.b16 %v317
  %v2370 = vunpack.c.h.b16 %v317
  %v2371 = vunpack.c.l.b16 %v318
  %v2372 = vunpack.c.h.b16 %v318
  %v2373 = vunpack.c.l.b16 %v319
  %v2374 = vunpack.c.h.b16 %v319
  %v2375 = vunpack.c.l.b16 %v320
  %v2376 = vunpack.c.h.b16 %v320
  %v2377 = vunpack.c.l.b16 %v321
  %v2378 = vunpack.c.h.b16 %v321
  %v2379 = vunpack.c.l.b16 %v322
  %v2380 = vunpack.c.h.b16 %v322
  %v2381 = vunpack.c.l.b16 %v323
  %v2382 = vunpack.c.h.b16 %v323
  %v2383 = vunpack.c.l.b16 %v324
  %v2384 = vunpack.c.h.b16 %v324
  %v2385 = vunpack.c.l.b16 %v325
  %v2386 = vunpack.c.h.b16 %v325
  %v2387 = vunpack.c.l.b16 %v326
  %v2388 = vunpack.c.h.b16 %v326
  %v2389 = vunpack.c.l.b16 %v327
  %v2390 = vunpack.c.h.b16 %v327
  %v2391 = vunpack.c.l.b16 %v328
  %v2392 = vunpack.c.h.b16 %v328
  %v2393 = vunpack.c.l.b16 %v329
  %v2394 = vunpack.c.h.b16 %v329
  %v2395 = vunpack.c.l.b16 %v330
  %v2396 = vunpack.c.h.b16 %v330
  %v2397 = vunpack.c.l.b16 %v331
  %v2398 = vunpack.c.h.b16 %v331
  %v2399 = vunpack.c.l.b16 %v332
  %v2400 = vunpack.c.h.b16 %v332
  %v2401 = vunpack.c.l.b16 %v333
  %v2402 = vunpack.c.h.b16 %v333
  %v2403 = vunpack.c.l.b16 %v334
  %v2404 = vunpack.c.h.b16 %v334
  %v2405 = vunpack.c.l.b16 %v335
  %v2406 = vunpack.c.h.b16 %v335
  %v2407 = vunpack.c.l.b16 %v336
  %v2408 = vunpack.c.h.b16 %v336
  %v2409 = vunpack.c.l.b16 %v337
  %v2410 = vunpack.c.h.b16 %v337
  %v2411 = vunpack.c.l.b16 %v338
  %v2412 = vunpack.c.h.b16 %v338
  %v2413 = vunpack.c.l.b16 %v339
  %v2414 = vunpack.c.h.b16 %v339
  %v2415 = vunpack.c.l.b16 %v340
  %v2416 = vunpack.c.h.b16 %v340
  %v2417 = vunpack.c.l.b16 %v341
  %v2418 = vunpack.c.h.b16 %v341
  %v2419 = vunpack.c.l.b16 %v342
  %v2420 = vunpack.c.h.b16 %v342
  %v2421 = vunpack.c.l.b16 %v343
  %v2422 = vunpack.c.h.b16 %v343
  %v2423 = vunpack.c.l.b16 %v344
  %v2424 = vunpack.c.h.b16 %v344
  %v2425 = vunpack.c.l.b16 %v345
  %v2426 = vunpack.c.h.b16 %v345
  %v2427 = vunpack.c.l.b16 %v346
  %v2428 = vunpack.c.h.b16 %v346
  %v2429 = vunpack.c.l.b16 %v347
  %v2430 = vunpack.c.h.b16 %v347
  %v2431 = vunpack.c.l.b16 %v348
  %v2432 = vunpack.c.h.b16 %v348
  %v2433 = vunpack.c.l.b16 %v349
  %v2434 = vunpack.c.h.b16 %v349
  %v2435 = vunpack.c.l.b16 %v350
  %v2436 = vunpack.c.h.b16 %v350
  %v2437 = vunpack.c.l.b16 %v351
  %v2438 = vunpack.c.h.b16 %v351
  %v2439 = vunpack.c.l.b16 %v352
  %v2440 = vunpack.c.h.b16 %v352
  %v2441 = vunpack.c.l.b16 %v353
  %v2442 = vunpack.c.h.b16 %v353
  %v2443 = vunpack.c.l.b16 %v354
  %v2444 = vunpack.c.h.b16 %v354
  %v2445 = vunpack.c.l.b16 %v355
  %v2446 = vunpack.c.h.b16 %v355
  %v2447 = vunpack.c.l.b16 %v356
  %v2448 = vunpack.c.h.b16 %v356
  %v2449 = vunpack.c.l.b16 %v357
  %v2450 = vunpack.c.h.b16 %v357
  %v2451 = vunpack.c.l.b16 %v358
  %v2452 = vunpack.c.h.b16 %v358
  %v2453 = vunpack.c.l.b16 %v359
  %v2454 = vunpack.c.h.b16 %v359
  %v2455 = vunpack.c.l.b16 %v360
  %v2456 = vunpack.c.h.b16 %v360
  %v2457 = vunpack.c.l.b16 %v361
  %v2458 = vunpack.c.h.b16 %v361
  %v2459 = vunpack.c.l.b16 %v362
  %v2460 = vunpack.c.h.b16 %v362
  %v2461 = vunpack.c.l.b16 %v363
  %v2462 = vunpack.c.h.b16 %v363
  %v2463 = vunpack.c.l.b16 %v364
  %v2464 = vunpack.c.h.b16 %v364
  %v2465 = vunpack.c.l.b16 %v365
  %v2466 = vunpack.c.h.b16 %v365
  %v2467 = vunpack.c.l.b16 %v366
  %v2468 = vunpack.c.h.b16 %v366
  %v2469 = vunpack.c.l.b16 %v367
  %v2470 = vunpack.c.h.b16 %v367
  %v2471 = vunpack.c.l.b16 %v368
  %v2472 = vunpack.c.h.b16 %v368
  %v2473 = vunpack.c.l.b16 %v369
  %v2474 = vunpack.c.h.b16 %v369
  %v2475 = vunpack.c.l.b16 %v370
  %v2476 = vunpack.c.h.b16 %v370
  %v2477 = vunpack.c.l.b16 %v371
  %v2478 = vunpack.c.h.b16 %v371
  %v2479 = vunpack.c.l.b16 %v372
  %v2480 = vunpack.c.h.b16 %v372
  %v2481 = vunpack.c.l.b16 %v373
  %v2482 = vunpack.c.h.b16 %v373
  %v2483 = vunpack.c.l.b16 %v374
  %v2484 = vunpack.c.h.b16 %v374
  %v2485 = vunpack.c.l.b16 %v375
  %v2486 = vunpack.c.h.b16 %v375
  %v2487 = vunpack.c.l.b16 %v376
  %v2488 = vunpack.c.h.b16 %v376
  %v2489 = vunpack.c.l.b16 %v377
  %v2490 = vunpack.c.h.b16 %v377
  %v2491 = vunpack.c.l.b16 %v378
  %v2492 = vunpack.c.h.b16 %v378
  %v2493 = vunpack.c.l.b16 %v379
  %v2494 = vunpack.c.h.b16 %v379
  %v2495 = vunpack.c.l.b16 %v380
  %v2496 = vunpack.c.h.b16 %v380
  %v2497 = vunpack.c.l.b16 %v381
  %v2498 = vunpack.c.h.b16 %v381
  %v2499 = vunpack.c.l.b16 %v382
  %v2500 = vunpack.c.h.b16 %v382
  %v2501 = vunpack.c.l.b16 %v383
  %v2502 = vunpack.c.h.b16 %v383
  %v2503 = vunpack.c.l.b16 %v384
  %v2504 = vunpack.c.h.b16 %v384
  %v2505 = vunpack.c.l.b16 %v385
  %v2506 = vunpack.c.h.b16 %v385
  %v2507 = vunpack.c.l.b16 %v386
  %v2508 = vunpack.c.h.b16 %v386
  %v2509 = vunpack.c.l.b16 %v387
  %v2510 = vunpack.c.h.b16 %v387
  %v2511 = vunpack.c.l.b16 %v388
  %v2512 = vunpack.c.h.b16 %v388
  %v2513 = vunpack.c.l.b16 %v389
  %v2514 = vunpack.c.h.b16 %v389
  %v2515 = vunpack.c.l.b16 %v390
  %v2516 = vunpack.c.h.b16 %v390
  %v2517 = vunpack.c.l.b16 %v391
  %v2518 = vunpack.c.h.b16 %v391
  %v2519 = vunpack.c.l.b16 %v392
  %v2520 = vunpack.c.h.b16 %v392
  %v2521 = vunpack.c.l.b16 %v393
  %v2522 = vunpack.c.h.b16 %v393
  %v2523 = vunpack.c.l.b16 %v394
  %v2524 = vunpack.c.h.b16 %v394
  %v2525 = vunpack.c.l.b16 %v395
  %v2526 = vunpack.c.h.b16 %v395
  %v2527 = vunpack.c.l.b16 %v396
  %v2528 = vunpack.c.h.b16 %v396
  %v2529 = vunpack.c.l.b16 %v397
  %v2530 = vunpack.c.h.b16 %v397
  %v2531 = vunpack.c.l.b16 %v398
  %v2532 = vunpack.c.h.b16 %v398
  %v2533 = vunpack.c.l.b16 %v399
  %v2534 = vunpack.c.h.b16 %v399
  %v2535 = vunpack.c.l.b16 %v400
  %v2536 = vunpack.c.h.b16 %v400
  %v2537 = vunpack.c.l.b16 %v401
  %v2538 = vunpack.c.h.b16 %v401
  %v2539 = vunpack.c.l.b16 %v402
  %v2540 = vunpack.c.h.b16 %v402
  %v2541 = vunpack.c.l.b16 %v403
  %v2542 = vunpack.c.h.b16 %v403
  %v2543 = vunpack.c.l.b16 %v404
  %v2544 = vunpack.c.h.b16 %v404
  %v2545 = vunpack.c.l.b16 %v405
  %v2546 = vunpack.c.h.b16 %v405
  %v2547 = vunpack.c.l.b16 %v406
  %v2548 = vunpack.c.h.b16 %v406
  %v2549 = vunpack.c.l.b16 %v407
  %v2550 = vunpack.c.h.b16 %v407
  %v2551 = vunpack.c.l.b16 %v408
  %v2552 = vunpack.c.h.b16 %v408
  %v2553 = vunpack.c.l.b16 %v409
  %v2554 = vunpack.c.h.b16 %v409
  %v2555 = vunpack.c.l.b16 %v410
  %v2556 = vunpack.c.h.b16 %v410
  %v2557 = vunpack.c.l.b16 %v411
  %v2558 = vunpack.c.h.b16 %v411
  %v2559 = vunpack.c.l.b16 %v412
  %v2560 = vunpack.c.h.b16 %v412
  %v2561 = vunpack.c.l.b16 %v413
  %v2562 = vunpack.c.h.b16 %v413
  %v2563 = vunpack.c.l.b16 %v414
  %v2564 = vunpack.c.h.b16 %v414
  %v2565 = vunpack.c.l.b16 %v415
  %v2566 = vunpack.c.h.b16 %v415
  %v2567 = vunpack.c.l.b16 %v416
  %v2568 = vunpack.c.h.b16 %v416
  %v2569 = vunpack.c.l.b16 %v417
  %v2570 = vunpack.c.h.b16 %v417
  %v2571 = vunpack.c.l.b16 %v418
  %v2572 = vunpack.c.h.b16 %v418
  %v2573 = vunpack.c.l.b16 %v419
  %v2574 = vunpack.c.h.b16 %v419
  %v2575 = vunpack.c.l.b16 %v420
  %v2576 = vunpack.c.h.b16 %v420
  %v2577 = vunpack.c.l.b16 %v421
  %v2578 = vunpack.c.h.b16 %v421
  %v2579 = vunpack.c.l.b16 %v422
  %v2580 = vunpack.c.h.b16 %v422
  %v2581 = vunpack.c.l.b16 %v423
  %v2582 = vunpack.c.h.b16 %v423
  %v2583 = vunpack.c.l.b16 %v424
  %v2584 = vunpack.c.h.b16 %v424
  %v2585 = vunpack.c.l.b16 %v425
  %v2586 = vunpack.c.h.b16 %v425
  %v2587 = vunpack.c.l.b16 %v426
  %v2588 = vunpack.c.h.b16 %v426
  %v2589 = vunpack.c.l.b16 %v427
  %v2590 = vunpack.c.h.b16 %v427
  %v2591 = vunpack.c.l.b16 %v428
  %v2592 = vunpack.c.h.b16 %v428
  %v2593 = vunpack.c.l.b16 %v429
  %v2594 = vunpack.c.h.b16 %v429
  %v2595 = vunpack.c.l.b16 %v430
  %v2596 = vunpack.c.h.b16 %v430
  %v2597 = vunpack.c.l.b16 %v431
  %v2598 = vunpack.c.h.b16 %v431
  %v2599 = vunpack.c.l.b16 %v432
  %v2600 = vunpack.c.h.b16 %v432
  %v2601 = vunpack.c.l.b16 %v433
  %v2602 = vunpack.c.h.b16 %v433
  %v2603 = vunpack.c.l.b16 %v434
  %v2604 = vunpack.c.h.b16 %v434
  %v2605 = vunpack.c.l.b16 %v435
  %v2606 = vunpack.c.h.b16 %v435
  %v2607 = vunpack.c.l.b16 %v436
  %v2608 = vunpack.c.h.b16 %v436
  %v2609 = vunpack.c.l.b16 %v437
  %v2610 = vunpack.c.h.b16 %v437
  %v2611 = vunpack.c.l.b16 %v438
  %v2612 = vunpack.c.h.b16 %v438
  %v2613 = vunpack.c.l.b16 %v439
  %v2614 = vunpack.c.h.b16 %v439
  %v2615 = vunpack.c.l.b16 %v440
  %v2616 = vunpack.c.h.b16 %v440
  %v2617 = vunpack.c.l.b16 %v441
  %v2618 = vunpack.c.h.b16 %v441
  %v2619 = vunpack.c.l.b16 %v442
  %v2620 = vunpack.c.h.b16 %v442
  %v2621 = vunpack.c.l.b16 %v443
  %v2622 = vunpack.c.h.b16 %v443
  %v2623 = vunpack.c.l.b16 %v444
  %v2624 = vunpack.c.h.b16 %v444
  %v2625 = vunpack.c.l.b16 %v445
  %v2626 = vunpack.c.h.b16 %v445
  %v2627 = vunpack.c.l.b16 %v446
  %v2628 = vunpack.c.h.b16 %v446
  %v2629 = vunpack.c.l.b16 %v447
  %v2630 = vunpack.c.h.b16 %v447
  %v2631 = vunpack.c.l.b16 %v448
  %v2632 = vunpack.c.h.b16 %v448
  %v2633 = vunpack.c.l.b16 %v449
  %v2634 = vunpack.c.h.b16 %v449
  %v2635 = vunpack.c.l.b16 %v450
  %v2636 = vunpack.c.h.b16 %v450
  %v2637 = vunpack.c.l.b16 %v451
  %v2638 = vunpack.c.h.b16 %v451
  %v2639 = vunpack.c.l.b16 %v452
  %v2640 = vunpack.c.h.b16 %v452
  %v2641 = vunpack.c.l.b16 %v453
  %v2642 = vunpack.c.h.b16 %v453
  %v2643 = vunpack.c.l.b16 %v454
  %v2644 = vunpack.c.h.b16 %v454
  %v2645 = vunpack.c.l.b16 %v455
  %v2646 = vunpack.c.h.b16 %v455
  %v2647 = vunpack.c.l.b16 %v456
  %v2648 = vunpack.c.h.b16 %v456
  %v2649 = vunpack.c.l.b16 %v457
  %v2650 = vunpack.c.h.b16 %v457
  %v2651 = vunpack.c.l.b16 %v458
  %v2652 = vunpack.c.h.b16 %v458
  %v2653 = vunpack.c.l.b16 %v459
  %v2654 = vunpack.c.h.b16 %v459
  %v2655 = vunpack.c.l.b16 %v460
  %v2656 = vunpack.c.h.b16 %v460
  %v2657 = vunpack.c.l.b16 %v461
  %v2658 = vunpack.c.h.b16 %v461
  %v2659 = vunpack.c.l.b16 %v462
  %v2660 = vunpack.c.h.b16 %v462
  %v2661 = vunpack.c.l.b16 %v463
  %v2662 = vunpack.c.h.b16 %v463
  %v2663 = vunpack.c.l.b16 %v464
  %v2664 = vunpack.c.h.b16 %v464
  %v2665 = vunpack.c.l.b16 %v465
  %v2666 = vunpack.c.h.b16 %v465
  %v2667 = vunpack.c.l.b16 %v466
  %v2668 = vunpack.c.h.b16 %v466
  %v2669 = vunpack.c.l.b16 %v467
  %v2670 = vunpack.c.h.b16 %v467
  %v2671 = vunpack.c.l.b16 %v468
  %v2672 = vunpack.c.h.b16 %v468
  %v2673 = vunpack.c.l.b16 %v469
  %v2674 = vunpack.c.h.b16 %v469
  %v2675 = vunpack.c.l.b16 %v470
  %v2676 = vunpack.c.h.b16 %v470
  %v2677 = vunpack.c.l.b16 %v471
  %v2678 = vunpack.c.h.b16 %v471
  %v2679 = vunpack.c.l.b16 %v472
  %v2680 = vunpack.c.h.b16 %v472
  %v2681 = vunpack.c.l.b16 %v473
  %v2682 = vunpack.c.h.b16 %v473
  %v2683 = vunpack.c.l.b16 %v474
  %v2684 = vunpack.c.h.b16 %v474
  %v2685 = vunpack.c.l.b16 %v475
  %v2686 = vunpack.c.h.b16 %v475
  %v2687 = vunpack.c.l.b16 %v476
  %v2688 = vunpack.c.h.b16 %v476
  %v2689 = vunpack.c.l.b16 %v477
  %v2690 = vunpack.c.h.b16 %v477
  %v2691 = vunpack.c.l.b16 %v478
  %v2692 = vunpack.c.h.b16 %v478
  %v2693 = vunpack.c.l.b16 %v479
  %v2694 = vunpack.c.h.b16 %v479
  %v2695 = vunpack.c.l.b16 %v480
  %v2696 = vunpack.c.h.b16 %v480
  %v2697 = vunpack.c.l.b16 %v481
  %v2698 = vunpack.c.h.b16 %v481
  %v2699 = vunpack.c.l.b16 %v482
  %v2700 = vunpack.c.h.b16 %v482
  %v2701 = vunpack.c.l.b16 %v483
  %v2702 = vunpack.c.h.b16 %v483
  %v2703 = vunpack.c.l.b16 %v484
  %v2704 = vunpack.c.h.b16 %v484
  %v2705 = vunpack.c.l.b16 %v485
  %v2706 = vunpack.c.h.b16 %v485
  %v2707 = vunpack.c.l.b16 %v486
  %v2708 = vunpack.c.h.b16 %v486
  %v2709 = vunpack.c.l.b16 %v487
  %v2710 = vunpack.c.h.b16 %v487
  %v2711 = vunpack.c.l.b16 %v488
  %v2712 = vunpack.c.h.b16 %v488
  %v2713 = vunpack.c.l.b16 %v489
  %v2714 = vunpack.c.h.b16 %v489
  %v2715 = vunpack.c.l.b16 %v490
  %v2716 = vunpack.c.h.b16 %v490
  %v2717 = vunpack.c.l.b16 %v491
  %v2718 = vunpack.c.h.b16 %v491
  %v2719 = vunpack.c.l.b16 %v492
  %v2720 = vunpack.c.h.b16 %v492
  %v2721 = vunpack.c.l.b16 %v493
  %v2722 = vunpack.c.h.b16 %v493
  %v2723 = vunpack.c.l.b16 %v494
  %v2724 = vunpack.c.h.b16 %v494
  %v2725 = vunpack.c.l.b16 %v495
  %v2726 = vunpack.c.h.b16 %v495
  %v2727 = vunpack.c.l.b16 %v496
  %v2728 = vunpack.c.h.b16 %v496
  %v2729 = vunpack.c.l.b16 %v497
  %v2730 = vunpack.c.h.b16 %v497
  %v2731 = vunpack.c.l.b16 %v498
  %v2732 = vunpack.c.h.b16 %v498
  %v2733 = vunpack.c.l.b16 %v499
  %v2734 = vunpack.c.h.b16 %v499
  %v2735 = vunpack.c.l.b16 %v500
  %v2736 = vunpack.c.h.b16 %v500
  %v2737 = vunpack.c.l.b16 %v501
  %v2738 = vunpack.c.h.b16 %v501
  %v2739 = vunpack.c.l.b16 %v502
  %v2740 = vunpack.c.h.b16 %v502
  %v2741 = vunpack.c.l.b16 %v503
  %v2742 = vunpack.c.h.b16 %v503
  %v2743 = vunpack.c.l.b16 %v504
  %v2744 = vunpack.c.h.b16 %v504
  %v2745 = vunpack.c.l.b16 %v505
  %v2746 = vunpack.c.h.b16 %v505
  %v2747 = vunpack.c.l.b16 %v506
  %v2748 = vunpack.c.h.b16 %v506
  %v2749 = vunpack.c.l.b16 %v507
  %v2750 = vunpack.c.h.b16 %v507
  %v2751 = vunpack.c.l.b16 %v508
  %v2752 = vunpack.c.h.b16 %v508
  %v2753 = vunpack.c.l.b16 %v509
  %v2754 = vunpack.c.h.b16 %v509
  %v2755 = vunpack.c.l.b16 %v510
  %v2756 = vunpack.c.h.b16 %v510
  %v2757 = vunpack.c.l.b16 %v511
  %v2758 = vunpack.c.h.b16 %v511
  %v2759 = vunpack.c.l.b16 %v512
  %v2760 = vunpack.c.h.b16 %v512
  %v2761 = vunpack.c.l.b16 %v513
  %v2762 = vunpack.c.h.b16 %v513
  %v2763 = vunpack.c.l.b16 %v514
  %v2764 = vunpack.c.h.b16 %v514
  %v2765 = vunpack.c.l.b16 %v515
  %v2766 = vunpack.c.h.b16 %v515
  %v2767 = vunpack.c.l.b16 %v516
  %v2768 = vunpack.c.h.b16 %v516
  %v2769 = vunpack.c.l.b16 %v517
  %v2770 = vunpack.c.h.b16 %v517
  %v2771 = vunpack.c.l.b16 %v518
  %v2772 = vunpack.c.h.b16 %v518
  %v2773 = vunpack.c.l.b16 %v519
  %v2774 = vunpack.c.h.b16 %v519
  %v2775 = vunpack.c.l.b16 %v520
  %v2776 = vunpack.c.h.b16 %v520
  %v2777 = vunpack.c.l.b16 %v521
  %v2778 = vunpack.c.h.b16 %v521
  %v2779 = vunpack.c.l.b16 %v522
  %v2780 = vunpack.c.h.b16 %v522
  %v2781 = vunpack.c.l.b16 %v523
  %v2782 = vunpack.c.h.b16 %v523
  %v2783 = vunpack.c.l.b16 %v524
  %v2784 = vunpack.c.h.b16 %v524
  %v2785 = vunpack.c.l.b16 %v525
  %v2786 = vunpack.c.h.b16 %v525
  %v2787 = vunpack.c.l.b16 %v526
  %v2788 = vunpack.c.h.b16 %v526
  %v2789 = vunpack.c.l.b16 %v527
  %v2790 = vunpack.c.h.b16 %v527
  %v2791 = vunpack.c.l.b16 %v528
  %v2792 = vunpack.c.h.b16 %v528
  %v2793 = vunpack.c.l.b16 %v529
  %v2794 = vunpack.c.h.b16 %v529
  %v2795 = vunpack.c.l.b16 %v530
  %v2796 = vunpack.c.h.b16 %v530
  %v2797 = vunpack.c.l.b16 %v531
  %v2798 = vunpack.c.h.b16 %v531
  %v2799 = vunpack.c.l.b16 %v532
  %v2800 = vunpack.c.h.b16 %v532
  %v2801 = vunpack.c.l.b16 %v533
  %v2802 = vunpack.c.h.b16 %v533
  %v2803 = vunpack.c.l.b16 %v534
  %v2804 = vunpack.c.h.b16 %v534
  %v2805 = vunpack.c.l.b16 %v535
  %v2806 = vunpack.c.h.b16 %v535
  %v2807 = vunpack.c.l.b16 %v536
  %v2808 = vunpack.c.h.b16 %v536
  %v2809 = vunpack.c.l.b16 %v537
  %v2810 = vunpack.c.h.b16 %v537
  %v2811 = vunpack.c.l.b16 %v538
  %v2812 = vunpack.c.h.b16 %v538
  %v2813 = vunpack.c.l.b16 %v539
  %v2814 = vunpack.c.h.b16 %v539
  %v2815 = vunpack.c.l.b16 %v540
  %v2816 = vunpack.c.h.b16 %v540
  %v2817 = vunpack.c.l.b16 %v541
  %v2818 = vunpack.c.h.b16 %v541
  %v2819 = vunpack.c.l.b16 %v542
  %v2820 = vunpack.c.h.b16 %v542
  %v2821 = vunpack.c.l.b16 %v543
  %v2822 = vunpack.c.h.b16 %v543
  %v2823 = vunpack.c.l.b16 %v544
  %v2824 = vunpack.c.h.b16 %v544
  %v2825 = vunpack.c.l.b16 %v545
  %v2826 = vunpack.c.h.b16 %v545
  %v2827 = vunpack.c.l.b16 %v546
  %v2828 = vunpack.c.h.b16 %v546
  %v2829 = vunpack.c.l.b16 %v547
  %v2830 = vunpack.c.h.b16 %v547
  %v2831 = vunpack.c.l.b16 %v548
  %v2832 = vunpack.c.h.b16 %v548
  %v2833 = vunpack.c.l.b16 %v549
  %v2834 = vunpack.c.h.b16 %v549
  %v2835 = vunpack.c.l.b16 %v550
  %v2836 = vunpack.c.h.b16 %v550
  %v2837 = vunpack.c.l.b16 %v551
  %v2838 = vunpack.c.h.b16 %v551
  %v2839 = vunpack.c.l.b16 %v552
  %v2840 = vunpack.c.h.b16 %v552
  %v2841 = vunpack.c.l.b16 %v553
  %v2842 = vunpack.c.h.b16 %v553
  %v2843 = vunpack.c.l.b16 %v554
  %v2844 = vunpack.c.h.b16 %v554
  %v2845 = vunpack.c.l.b16 %v555
  %v2846 = vunpack.c.h.b16 %v555
  %v2847 = vunpack.c.l.b16 %v556
  %v2848 = vunpack.c.h.b16 %v556
  %v2849 = vunpack.c.l.b16 %v557
  %v2850 = vunpack.c.h.b16 %v557
  %v2851 = vunpack.c.l.b16 %v558
  %v2852 = vunpack.c.h.b16 %v558
  %v2853 = vunpack.c.l.b16 %v559
  %v2854 = vunpack.c.h.b16 %v559
  %v2855 = vunpack.c.l.b16 %v560
  %v2856 = vunpack.c.h.b16 %v560
  %v2857 = vunpack.c.l.b16 %v561
  %v2858 = vunpack.c.h.b16 %v561
  %v2859 = vunpack.c.l.b16 %v562
  %v2860 = vunpack.c.h.b16 %v562
  %v2861 = vunpack.c.l.b16 %v563
  %v2862 = vunpack.c.h.b16 %v563
  %v2863 = vunpack.c.l.b16 %v564
  %v2864 = vunpack.c.h.b16 %v564
  %v2865 = vunpack.c.l.b16 %v565
  %v2866 = vunpack.c.h.b16 %v565
  %v2867 = vunpack.c.l.b16 %v566
  %v2868 = vunpack.c.h.b16 %v566
  %v2869 = vunpack.c.l.b16 %v567
  %v2870 = vunpack.c.h.b16 %v567
  %v2871 = vunpack.c.l.b16 %v568
  %v2872 = vunpack.c.h.b16 %v568
  %v2873 = vunpack.c.l.b16 %v569
  %v2874 = vunpack.c.h.b16 %v569
  %v2875 = vunpack.c.l.b16 %v570
  %v2876 = vunpack.c.h.b16 %v570
  %v2877 = vunpack.c.l.b16 %v571
  %v2878 = vunpack.c.h.b16 %v571
  %v2879 = vunpack.c.l.b16 %v572
  %v2880 = vunpack.c.h.b16 %v572
  %v2881 = vunpack.c.l.b16 %v573
  %v2882 = vunpack.c.h.b16 %v573
  %v2883 = vunpack.c.l.b16 %v574
  %v2884 = vunpack.c.h.b16 %v574
  %v2885 = vunpack.c.l.b16 %v575
  %v2886 = vunpack.c.h.b16 %v575
  %v2887 = vunpack.c.l.b16 %v576
  %v2888 = vunpack.c.h.b16 %v576
  %v2889 = vunpack.c.l.b16 %v577
  %v2890 = vunpack.c.h.b16 %v577
  %v2891 = vunpack.c.l.b16 %v578
  %v2892 = vunpack.c.h.b16 %v578
  %v2893 = vunpack.c.l.b16 %v579
  %v2894 = vunpack.c.h.b16 %v579
  %v2895 = vunpack.c.l.b16 %v580
  %v2896 = vunpack.c.h.b16 %v580
  %v2897 = vunpack.c.l.b16 %v581
  %v2898 = vunpack.c.h.b16 %v581
  %v2899 = vunpack.c.l.b16 %v582
  %v2900 = vunpack.c.h.b16 %v582
  %v2901 = vunpack.c.l.b16 %v583
  %v2902 = vunpack.c.h.b16 %v583
  %v2903 = vunpack.c.l.b16 %v584
  %v2904 = vunpack.c.h.b16 %v584
  %v2905 = vunpack.c.l.b16 %v585
  %v2906 = vunpack.c.h.b16 %v585
  %v2907 = vunpack.c.l.b16 %v586
  %v2908 = vunpack.c.h.b16 %v586
  %v2909 = vunpack.c.l.b16 %v587
  %v2910 = vunpack.c.h.b16 %v587
  %v2911 = vunpack.c.l.b16 %v588
  %v2912 = vunpack.c.h.b16 %v588
  %v2913 = vunpack.c.l.b16 %v589
  %v2914 = vunpack.c.h.b16 %v589
  %v2915 = vunpack.c.l.b16 %v590
  %v2916 = vunpack.c.h.b16 %v590
  %v2917 = vunpack.c.l.b16 %v591
  %v2918 = vunpack.c.h.b16 %v591
  %v2919 = vunpack.c.l.b16 %v592
  %v2920 = vunpack.c.h.b16 %v592
  %v2921 = vunpack.c.l.b16 %v593
  %v2922 = vunpack.c.h.b16 %v593
  %v2923 = vunpack.c.l.b16 %v594
  %v2924 = vunpack.c.h.b16 %v594
  %v2925 = vunpack.c.l.b16 %v595
  %v2926 = vunpack.c.h.b16 %v595
  %v2927 = vunpack.c.l.b16 %v596
  %v2928 = vunpack.c.h.b16 %v596
  %v2929 = vunpack.c.l.b16 %v597
  %v2930 = vunpack.c.h.b16 %v597
  %v2931 = vunpack.c.l.b16 %v598
  %v2932 = vunpack.c.h.b16 %v598
  %v2933 = vunpack.c.l.b16 %v599
  %v2934 = vunpack.c.h.b16 %v599
  %v2935 = vunpack.c.l.b16 %v600
  %v2936 = vunpack.c.h.b16 %v600
  %v2937 = vunpack.c.l.b16 %v601
  %v2938 = vunpack.c.h.b16 %v601
  %v2939 = vunpack.c.l.b16 %v602
  %v2940 = vunpack.c.h.b16 %v602
  %v2941 = vunpack.c.l.b16 %v603
  %v2942 = vunpack.c.h.b16 %v603
  %v2943 = vunpack.c.l.b16 %v604
  %v2944 = vunpack.c.h.b16 %v604
  %v2945 = vunpack.c.l.b16 %v605
  %v2946 = vunpack.c.h.b16 %v605
  %v2947 = vunpack.c.l.b16 %v606
  %v2948 = vunpack.c.h.b16 %v606
  %v2949 = vunpack.c.l.b16 %v607
  %v2950 = vunpack.c.h.b16 %v607
  %v2951 = vunpack.c.l.b16 %v608
  %v2952 = vunpack.c.h.b16 %v608
  %v2953 = vunpack.c.l.b16 %v609
  %v2954 = vunpack.c.h.b16 %v609
  %v2955 = vunpack.c.l.b16 %v610
  %v2956 = vunpack.c.h.b16 %v610
  %v2957 = vunpack.c.l.b16 %v611
  %v2958 = vunpack.c.h.b16 %v611
  %v2959 = vunpack.c.l.b16 %v612
  %v2960 = vunpack.c.h.b16 %v612
  %v2961 = vunpack.c.l.b16 %v613
  %v2962 = vunpack.c.h.b16 %v613
  %v2963 = vunpack.c.l.b16 %v614
  %v2964 = vunpack.c.h.b16 %v614
  %v2965 = vunpack.c.l.b16 %v615
  %v2966 = vunpack.c.h.b16 %v615
  %v2967 = vunpack.c.l.b16 %v616
  %v2968 = vunpack.c.h.b16 %v616
  %v2969 = vunpack.c.l.b16 %v617
  %v2970 = vunpack.c.h.b16 %v617
  %v2971 = vunpack.c.l.b16 %v618
  %v2972 = vunpack.c.h.b16 %v618
  %v2973 = vunpack.c.l.b16 %v619
  %v2974 = vunpack.c.h.b16 %v619
  %v2975 = vunpack.c.l.b16 %v620
  %v2976 = vunpack.c.h.b16 %v620
  %v2977 = vunpack.c.l.b16 %v621
  %v2978 = vunpack.c.h.b16 %v621
  %v2979 = vunpack.c.l.b16 %v622
  %v2980 = vunpack.c.h.b16 %v622
  %v2981 = vunpack.c.l.b16 %v623
  %v2982 = vunpack.c.h.b16 %v623
  %v2983 = vunpack.c.l.b16 %v624
  %v2984 = vunpack.c.h.b16 %v624
  %v2985 = vunpack.c.l.b16 %v625
  %v2986 = vunpack.c.h.b16 %v625
  %v2987 = vunpack.c.l.b16 %v626
  %v2988 = vunpack.c.h.b16 %v626
  %v2989 = vunpack.c.l.b16 %v627
  %v2990 = vunpack.c.h.b16 %v627
  %v2991 = vunpack.c.l.b16 %v628
  %v2992 = vunpack.c.h.b16 %v628
  %v2993 = vunpack.c.l.b16 %v629
  %v2994 = vunpack.c.h.b16 %v629
  %v2995 = vunpack.c.l.b16 %v630
  %v2996 = vunpack.c.h.b16 %v630
  %v2997 = vunpack.c.l.b16 %v631
  %v2998 = vunpack.c.h.b16 %v631
  %v2999 = vunpack.c.l.b16 %v632
  %v3000 = vunpack.c.h.b16 %v632
  %v3001 = vunpack.c.l.b16 %v633
  %v3002 = vunpack.c.h.b16 %v633
  %v3003 = vunpack.c.l.b16 %v634
  %v3004 = vunpack.c.h.b16 %v634
  %v3005 = vunpack.c.l.b16 %v635
  %v3006 = vunpack.c.h.b16 %v635
  %v3007 = vunpack.c.l.b16 %v636
  %v3008 = vunpack.c.h.b16 %v636
  %v3009 = vunpack.c.l.b16 %v637
  %v3010 = vunpack.c.h.b16 %v637
  %v3011 = vunpack.c.l.b16 %v638
  %v3012 = vunpack.c.h.b16 %v638
  %v3013 = vunpack.c.l.b16 %v639
  %v3014 = vunpack.c.h.b16 %v639
  %v3015 = vunpack.c.l.b16 %v640
  %v3016 = vunpack.c.h.b16 %v640
  %v3017 = vunpack.c.l.b16 %v641
  %v3018 = vunpack.c.h.b16 %v641
  %v3019 = vunpack.c.l.b16 %v642
  %v3020 = vunpack.c.h.b16 %v642
  %v3021 = vunpack.c.l.b16 %v643
  %v3022 = vunpack.c.h.b16 %v643
  %v3023 = vunpack.c.l.b16 %v644
  %v3024 = vunpack.c.h.b16 %v644
  %v3025 = vunpack.c.l.b16 %v645
  %v3026 = vunpack.c.h.b16 %v645
  %v3027 = vunpack.c.l.b16 %v646
  %v3028 = vunpack.c.h.b16 %v646
  %v3029 = vunpack.c.l.b16 %v647
  %v3030 = vunpack.c.h.b16 %v647
  %v3031 = vunpack.c.l.b16 %v648
  %v3032 = vunpack.c.h.b16 %v648
  %v3033 = vunpack.c.l.b16 %v649
  %v3034 = vunpack.c.h.b16 %v649
  %v3035 = vunpack.c.l.b16 %v650
  %v3036 = vunpack.c.h.b16 %v650
  %v3037 = vunpack.c.l.b16 %v651
  %v3038 = vunpack.c.h.b16 %v651
  %v3039 = vunpack.c.l.b16 %v652
  %v3040 = vunpack.c.h.b16 %v652
  %v3041 = vunpack.c.l.b16 %v653
  %v3042 = vunpack.c.h.b16 %v653
  %v3043 = vunpack.c.l.b16 %v654
  %v3044 = vunpack.c.h.b16 %v654
  %v3045 = vunpack.c.l.b16 %v655
  %v3046 = vunpack.c.h.b16 %v655
  %v3047 = vunpack.c.l.b16 %v656
  %v3048 = vunpack.c.h.b16 %v656
  %v3049 = vunpack.c.l.b16 %v657
  %v3050 = vunpack.c.h.b16 %v657
  %v3051 = vunpack.c.l.b16 %v658
  %v3052 = vunpack.c.h.b16 %v658
  %v3053 = vunpack.c.l.b16 %v659
  %v3054 = vunpack.c.h.b16 %v659
  %v3055 = vunpack.c.l.b16 %v660
  %v3056 = vunpack.c.h.b16 %v660
  %v3057 = vunpack.c.l.b16 %v661
  %v3058 = vunpack.c.h.b16 %v661
  %v3059 = vunpack.c.l.b16 %v662
  %v3060 = vunpack.c.h.b16 %v662
  %v3061 = vunpack.c.l.b16 %v663
  %v3062 = vunpack.c.h.b16 %v663
  %v3063 = vunpack.c.l.b16 %v664
  %v3064 = vunpack.c.h.b16 %v664
  %v3065 = vunpack.c.l.b16 %v665
  %v3066 = vunpack.c.h.b16 %v665
  %v3067 = vunpack.c.l.b16 %v666
  %v3068 = vunpack.c.h.b16 %v666
  %v3069 = vunpack.c.l.b16 %v667
  %v3070 = vunpack.c.h.b16 %v667
  %v3071 = vunpack.c.l.b16 %v668
  %v3072 = vunpack.c.h.b16 %v668
  %v3073 = vunpack.c.l.b16 %v669
  %v3074 = vunpack.c.h.b16 %v669
  %v3075 = vunpack.c.l.b16 %v670
  %v3076 = vunpack.c.h.b16 %v670
  %v3077 = vunpack.c.l.b16 %v671
  %v3078 = vunpack.c.h.b16 %v671
  %v3079 = vunpack.c.l.b16 %v672
  %v3080 = vunpack.c.h.b16 %v672
  %v3081 = vunpack.c.l.b16 %v673
  %v3082 = vunpack.c.h.b16 %v673
  %v3083 = vunpack.c.l.b16 %v674
  %v3084 = vunpack.c.h.b16 %v674
  %v3085 = vunpack.c.l.b16 %v675
  %v3086 = vunpack.c.h.b16 %v675
  %v3087 = vunpack.c.l.b16 %v676
  %v3088 = vunpack.c.h.b16 %v676
  %v3089 = vunpack.c.l.b16 %v677
  %v3090 = vunpack.c.h.b16 %v677
  %v3091 = vunpack.c.l.b16 %v678
  %v3092 = vunpack.c.h.b16 %v678
  %v3093 = vunpack.c.l.b16 %v679
  %v3094 = vunpack.c.h.b16 %v679
  %v3095 = vunpack.c.l.b16 %v680
  %v3096 = vunpack.c.h.b16 %v680
  %v3097 = vunpack.c.l.b16 %v681
  %v3098 = vunpack.c.h.b16 %v681
  %v3099 = vunpack.c.l.b16 %v682
  %v3100 = vunpack.c.h.b16 %v682
  %v3101 = vunpack.c.l.b16 %v683
  %v3102 = vunpack.c.h.b16 %v683
  %v3103 = vunpack.c.l.b16 %v684
  %v3104 = vunpack.c.h.b16 %v684
  %v3105 = vunpack.c.l.b16 %v685
  %v3106 = vunpack.c.h.b16 %v685
  %v3107 = vunpack.c.l.b16 %v686
  %v3108 = vunpack.c.h.b16 %v686
  %v3109 = vunpack.c.l.b16 %v687
  %v3110 = vunpack.c.h.b16 %v687
  %v3111 = vunpack.c.l.b16 %v688
  %v3112 = vunpack.c.h.b16 %v688
  %v3113 = vunpack.c.l.b16 %v689
  %v3114 = vunpack.c.h.b16 %v689
  %v3115 = vunpack.c.l.b16 %v690
  %v3116 = vunpack.c.h.b16 %v690
  %v3117 = vunpack.c.l.b16 %v691
  %v3118 = vunpack.c.h.b16 %v691
  %v3119 = vunpack.c.l.b16 %v692
  %v3120 = vunpack.c.h.b16 %v692
  %v3121 = vunpack.c.l.b16 %v693
  %v3122 = vunpack.c.h.b16 %v693
  %v3123 = vunpack.c.l.b16 %v694
  %v3124 = vunpack.c.h.b16 %v694
  %v3125 = vunpack.c.l.b16 %v695
  %v3126 = vunpack.c.h.b16 %v695
  %v3127 = vunpack.c.l.b16 %v696
  %v3128 = vunpack.c.h.b16 %v696
  %v3129 = vunpack.c.l.b16 %v697
  %v3130 = vunpack.c.h.b16 %v697
  %v3131 = vunpack.c.l.b16 %v698
  %v3132 = vunpack.c.h.b16 %v698
  %v3133 = vunpack.c.l.b16 %v699
  %v3134 = vunpack.c.h.b16 %v699
  %v3135 = vunpack.c.l.b16 %v700
  %v3136 = vunpack.c.h.b16 %v700
  %v3137 = vunpack.c.l.b16 %v701
  %v3138 = vunpack.c.h.b16 %v701
  %v3139 = vunpack.c.l.b16 %v702
  %v3140 = vunpack.c.h.b16 %v702
  %v3141 = vunpack.c.l.b16 %v703
  %v3142 = vunpack.c.h.b16 %v703
  %v3143 = vunpack.c.l.b16 %v704
  %v3144 = vunpack.c.h.b16 %v704
  %v3145 = vunpack.c.l.b16 %v705
  %v3146 = vunpack.c.h.b16 %v705
  %v3147 = vunpack.c.l.b16 %v706
  %v3148 = vunpack.c.h.b16 %v706
  %v3149 = vunpack.c.l.b16 %v707
  %v3150 = vunpack.c.h.b16 %v707
  %v3151 = vunpack.c.l.b16 %v708
  %v3152 = vunpack.c.h.b16 %v708
  %v3153 = vunpack.c.l.b16 %v709
  %v3154 = vunpack.c.h.b16 %v709
  %v3155 = vunpack.c.l.b16 %v710
  %v3156 = vunpack.c.h.b16 %v710
  %v3157 = vunpack.c.l.b16 %v711
  %v3158 = vunpack.c.h.b16 %v711
  %v3159 = vunpack.c.l.b16 %v712
  %v3160 = vunpack.c.h.b16 %v712
  %v3161 = vunpack.c.l.b16 %v713
  %v3162 = vunpack.c.h.b16 %v713
  %v3163 = vunpack.c.l.b16 %v714
  %v3164 = vunpack.c.h.b16 %v714
  %v3165 = vunpack.c.l.b16 %v715
  %v3166 = vunpack.c.h.b16 %v715
  %v3167 = vunpack.c.l.b16 %v716
  %v3168 = vunpack.c.h.b16 %v716
  %v3169 = vunpack.c.l.b16 %v717
  %v3170 = vunpack.c.h.b16 %v717
  %v3171 = vunpack.c.l.b16 %v718
  %v3172 = vunpack.c.h.b16 %v718
  %v3173 = vunpack.c.l.b16 %v719
  %v3174 = vunpack.c.h.b16 %v719
  %v3175 = vunpack.c.l.b16 %v720
  %v3176 = vunpack.c.h.b16 %v720
  %v3177 = vunpack.c.l.b16 %v721
  %v3178 = vunpack.c.h.b16 %v721
  %v3179 = vunpack.c.l.b16 %v722
  %v3180 = vunpack.c.h.b16 %v722
  %v3181 = vunpack.c.l.b16 %v723
  %v3182 = vunpack.c.h.b16 %v723
  %v3183 = vunpack.c.l.b16 %v724
  %v3184 = vunpack.c.h.b16 %v724
  %v3185 = vunpack.c.l.b16 %v725
  %v3186 = vunpack.c.h.b16 %v725
  %v3187 = vunpack.c.l.b16 %v726
  %v3188 = vunpack.c.h.b16 %v726
  %v3189 = vunpack.c.l.b16 %v727
  %v3190 = vunpack.c.h.b16 %v727
  %v3191 = vunpack.c.l.b16 %v728
  %v3192 = vunpack.c.h.b16 %v728
  %v3193 = vunpack.c.l.b16 %v729
  %v3194 = vunpack.c.h.b16 %v729
  %v3195 = vunpack.c.l.b16 %v730
  %v3196 = vunpack.c.h.b16 %v730
  %v3197 = vunpack.c.l.b16 %v731
  %v3198 = vunpack.c.h.b16 %v731
  %v3199 = vunpack.c.l.b16 %v732
  %v3200 = vunpack.c.h.b16 %v732
  %v3201 = vunpack.c.l.b16 %v733
  %v3202 = vunpack.c.h.b16 %v733
  %v3203 = vunpack.c.l.b16 %v734
  %v3204 = vunpack.c.h.b16 %v734
  %v3205 = vunpack.c.l.b16 %v735
  %v3206 = vunpack.c.h.b16 %v735
  %v3207 = vunpack.c.l.b16 %v736
  %v3208 = vunpack.c.h.b16 %v736
  %v3209 = vunpack.c.l.b16 %v737
  %v3210 = vunpack.c.h.b16 %v737
  %v3211 = vunpack.c.l.b16 %v738
  %v3212 = vunpack.c.h.b16 %v738
  %v3213 = vunpack.c.l.b16 %v739
  %v3214 = vunpack.c.h.b16 %v739
  %v3215 = vunpack.c.l.b16 %v740
  %v3216 = vunpack.c.h.b16 %v740
  %v3217 = vunpack.c.l.b16 %v741
  %v3218 = vunpack.c.h.b16 %v741
  %v3219 = vunpack.c.l.b16 %v742
  %v3220 = vunpack.c.h.b16 %v742
  %v3221 = vunpack.c.l.b16 %v743
  %v3222 = vunpack.c.h.b16 %v743
  %v3223 = vunpack.c.l.b16 %v744
  %v3224 = vunpack.c.h.b16 %v744
  %v3225 = vunpack.c.l.b16 %v745
  %v3226 = vunpack.c.h.b16 %v745
  %v3227 = vunpack.c.l.b16 %v746
  %v3228 = vunpack.c.h.b16 %v746
  %v3229 = vunpack.c.l.b16 %v747
  %v3230 = vunpack.c.h.b16 %v747
  %v3231 = vunpack.c.l.b16 %v748
  %v3232 = vunpack.c.h.b16 %v748
  %v3233 = vunpack.c.l.b16 %v749
  %v3234 = vunpack.c.h.b16 %v749
  %v3235 = vunpack.c.l.b16 %v750
  %v3236 = vunpack.c.h.b16 %v750
  %v3237 = vunpack.c.l.b16 %v751
  %v3238 = vunpack.c.h.b16 %v751
  %v3239 = vunpack.c.l.b16 %v752
  %v3240 = vunpack.c.h.b16 %v752
  %v3241 = vunpack.c.l.b16 %v753
  %v3242 = vunpack.c.h.b16 %v753
  %v3243 = vunpack.c.l.b16 %v754
  %v3244 = vunpack.c.h.b16 %v754
  %v3245 = vunpack.c.l.b16 %v755
  %v3246 = vunpack.c.h.b16 %v755
  %v3247 = vunpack.c.l.b16 %v756
  %v3248 = vunpack.c.h.b16 %v756
  %v3249 = vunpack.c.l.b16 %v757
  %v3250 = vunpack.c.h.b16 %v757
  %v3251 = vunpack.c.l.b16 %v758
  %v3252 = vunpack.c.h.b16 %v758
  %v3253 = vunpack.c.l.b16 %v759
  %v3254 = vunpack.c.h.b16 %v759
  %v3255 = vunpack.c.l.b16 %v760
  %v3256 = vunpack.c.h.b16 %v760
  %v3257 = vunpack.c.l.b16 %v761
  %v3258 = vunpack.c.h.b16 %v761
  %v3259 = vunpack.c.l.b16 %v762
  %v3260 = vunpack.c.h.b16 %v762
  %v3261 = vunpack.c.l.b16 %v763
  %v3262 = vunpack.c.h.b16 %v763
  %v3263 = vunpack.c.l.b16 %v764
  %v3264 = vunpack.c.h.b16 %v764
  %v3265 = vunpack.c.l.b16 %v765
  %v3266 = vunpack.c.h.b16 %v765
  %v3267 = vunpack.c.l.b16 %v766
  %v3268 = vunpack.c.h.b16 %v766
  %v3269 = vunpack.c.l.b16 %v767
  %v3270 = vunpack.c.h.b16 %v767
  %v3271 = vunpack.c.l.b16 %v768
  %v3272 = vunpack.c.h.b16 %v768
  %v3273 = vunpack.c.l.b16 %v769
  %v3274 = vunpack.c.h.b16 %v769
  %v3275 = vunpack.c.l.b16 %v770
  %v3276 = vunpack.c.h.b16 %v770
  %v3277 = vunpack.c.l.b16 %v771
  %v3278 = vunpack.c.h.b16 %v771
  %v3279 = vunpack.c.l.b16 %v772
  %v3280 = vunpack.c.h.b16 %v772
  %v3281 = vunpack.c.l.b16 %v773
  %v3282 = vunpack.c.h.b16 %v773
  %v3283 = vunpack.c.l.b16 %v774
  %v3284 = vunpack.c.h.b16 %v774
  %v3285 = vunpack.c.l.b16 %v775
  %v3286 = vunpack.c.h.b16 %v775
  %v3287 = vunpack.c.l.b16 %v776
  %v3288 = vunpack.c.h.b16 %v776
  %v3289 = vunpack.c.l.b16 %v777
  %v3290 = vunpack.c.h.b16 %v777
  %v3291 = vunpack.c.l.b16 %v778
  %v3292 = vunpack.c.h.b16 %v778
  %v3293 = vunpack.c.l.b16 %v779
  %v3294 = vunpack.c.h.b16 %v779
  %v3295 = vunpack.c.l.b16 %v780
  %v3296 = vunpack.c.h.b16 %v780
  %v3297 = vunpack.c.l.b16 %v781
  %v3298 = vunpack.c.h.b16 %v781
  %v3299 = vunpack.c.l.b16 %v782
  %v3300 = vunpack.c.h.b16 %v782
  %v3301 = vunpack.c.l.b16 %v783
  %v3302 = vunpack.c.h.b16 %v783
  %v3303 = vunpack.c.l.b16 %v784
  %v3304 = vunpack.c.h.b16 %v784
  %v3305 = vunpack.c.l.b16 %v785
  %v3306 = vunpack.c.h.b16 %v785
  %v3307 = vunpack.c.l.b16 %v786
  %v3308 = vunpack.c.h.b16 %v786
  %v3309 = vunpack.c.l.b16 %v787
  %v3310 = vunpack.c.h.b16 %v787
  %v3311 = vunpack.c.l.b16 %v788
  %v3312 = vunpack.c.h.b16 %v788
  %v3313 = vunpack.c.l.b16 %v789
  %v3314 = vunpack.c.h.b16 %v789
  %v3315 = vunpack.c.l.b16 %v790
  %v3316 = vunpack.c.h.b16 %v790
  %v3317 = vunpack.c.l.b16 %v791
  %v3318 = vunpack.c.h.b16 %v791
  %v3319 = vunpack.c.l.b16 %v792
  %v3320 = vunpack.c.h.b16 %v792
  %v3321 = vunpack.c.l.b16 %v793
  %v3322 = vunpack.c.h.b16 %v793
  %v3323 = vunpack.c.l.b16 %v794
  %v3324 = vunpack.c.h.b16 %v794
  %v3325 = vunpack.c.l.b16 %v795
  %v3326 = vunpack.c.h.b16 %v795
  %v3327 = vunpack.c.l.b16 %v796
  %v3328 = vunpack.c.h.b16 %v796
  %v3329 = vunpack.c.l.b16 %v797
  %v3330 = vunpack.c.h.b16 %v797
  %v3331 = vunpack.c.l.b16 %v798
  %v3332 = vunpack.c.h.b16 %v798
  %v3333 = vunpack.c.l.b16 %v799
  %v3334 = vunpack.c.h.b16 %v799
  %v3335 = vunpack.c.l.b16 %v800
  %v3336 = vunpack.c.h.b16 %v800
  %v3337 = vunpack.c.l.b16 %v801
  %v3338 = vunpack.c.h.b16 %v801
  %v3339 = vunpack.c.l.b16 %v802
  %v3340 = vunpack.c.h.b16 %v802
  %v3341 = vunpack.c.l.b16 %v803
  %v3342 = vunpack.c.h.b16 %v803
  %v3343 = vunpack.c.l.b16 %v804
  %v3344 = vunpack.c.h.b16 %v804
  %v3345 = vunpack.c.l.b16 %v805
  %v3346 = vunpack.c.h.b16 %v805
  %v3347 = vunpack.c.l.b16 %v806
  %v3348 = vunpack.c.h.b16 %v806
  %v3349 = vunpack.c.l.b16 %v807
  %v3350 = vunpack.c.h.b16 %v807
  %v3351 = vunpack.c.l.b16 %v808
  %v3352 = vunpack.c.h.b16 %v808
  %v3353 = vunpack.c.l.b16 %v809
  %v3354 = vunpack.c.h.b16 %v809
  %v3355 = vunpack.c.l.b16 %v810
  %v3356 = vunpack.c.h.b16 %v810
  %v3357 = vunpack.c.l.b16 %v811
  %v3358 = vunpack.c.h.b16 %v811
  %v3359 = vunpack.c.l.b16 %v812
  %v3360 = vunpack.c.h.b16 %v812
  %v3361 = vunpack.c.l.b16 %v813
  %v3362 = vunpack.c.h.b16 %v813
  %v3363 = vunpack.c.l.b16 %v814
  %v3364 = vunpack.c.h.b16 %v814
  %v3365 = vunpack.c.l.b16 %v815
  %v3366 = vunpack.c.h.b16 %v815
  %v3367 = vunpack.c.l.b16 %v816
  %v3368 = vunpack.c.h.b16 %v816
  %v3369 = vunpack.c.l.b16 %v817
  %v3370 = vunpack.c.h.b16 %v817
  %v3371 = vunpack.c.l.b16 %v818
  %v3372 = vunpack.c.h.b16 %v818
  %v3373 = vunpack.c.l.b16 %v819
  %v3374 = vunpack.c.h.b16 %v819
  %v3375 = vunpack.c.l.b16 %v820
  %v3376 = vunpack.c.h.b16 %v820
  %v3377 = vunpack.c.l.b16 %v821
  %v3378 = vunpack.c.h.b16 %v821
  %v3379 = vunpack.c.l.b16 %v822
  %v3380 = vunpack.c.h.b16 %v822
  %v3381 = vunpack.c.l.b16 %v823
  %v3382 = vunpack.c.h.b16 %v823
  %v3383 = vunpack.c.l.b16 %v824
  %v3384 = vunpack.c.h.b16 %v824
  %v3385 = vunpack.c.l.b16 %v825
  %v3386 = vunpack.c.h.b16 %v825
  %v3387 = vunpack.c.l.b16 %v826
  %v3388 = vunpack.c.h.b16 %v826
  %v3389 = vunpack.c.l.b16 %v827
  %v3390 = vunpack.c.h.b16 %v827
  %v3391 = vunpack.c.l.b16 %v828
  %v3392 = vunpack.c.h.b16 %v828
  %v3393 = vunpack.c.l.b16 %v829
  %v3394 = vunpack.c.h.b16 %v829
  %v3395 = vunpack.c.l.b16 %v830
  %v3396 = vunpack.c.h.b16 %v830
  %v3397 = vunpack.c.l.b16 %v831
  %v3398 = vunpack.c.h.b16 %v831
  %v3399 = vunpack.c.l.b16 %v832
  %v3400 = vunpack.c.h.b16 %v832
  %v3401 = vunpack.c.l.b16 %v833
  %v3402 = vunpack.c.h.b16 %v833
  %v3403 = vunpack.c.l.b16 %v834
  %v3404 = vunpack.c.h.b16 %v834
  %v3405 = vunpack.c.l.b16 %v835
  %v3406 = vunpack.c.h.b16 %v835
  %v3407 = vunpack.c.l.b16 %v836
  %v3408 = vunpack.c.h.b16 %v836
  %v3409 = vunpack.c.l.b16 %v837
  %v3410 = vunpack.c.h.b16 %v837
  %v3411 = vunpack.c.l.b16 %v838
  %v3412 = vunpack.c.h.b16 %v838
  %v3413 = vunpack.c.l.b16 %v839
  %v3414 = vunpack.c.h.b16 %v839
  %v3415 = vunpack.c.l.b16 %v840
  %v3416 = vunpack.c.h.b16 %v840
  %v3417 = vunpack.c.l.b16 %v841
  %v3418 = vunpack.c.h.b16 %v841
  %v3419 = vunpack.c.l.b16 %v842
  %v3420 = vunpack.c.h.b16 %v842
  %v3421 = vunpack.c.l.b16 %v843
  %v3422 = vunpack.c.h.b16 %v843
  %v3423 = vunpack.c.l.b16 %v844
  %v3424 = vunpack.c.h.b16 %v844
  %v3425 = vunpack.c.l.b16 %v845
  %v3426 = vunpack.c.h.b16 %v845
  %v3427 = vunpack.c.l.b16 %v846
  %v3428 = vunpack.c.h.b16 %v846
  %v3429 = vunpack.c.l.b16 %v847
  %v3430 = vunpack.c.h.b16 %v847
  %v3431 = vunpack.c.l.b16 %v848
  %v3432 = vunpack.c.h.b16 %v848
  %v3433 = vunpack.c.l.b16 %v849
  %v3434 = vunpack.c.h.b16 %v849
  %v3435 = vunpack.c.l.b16 %v850
  %v3436 = vunpack.c.h.b16 %v850
  %v3437 = vunpack.c.l.b16 %v851
  %v3438 = vunpack.c.h.b16 %v851
  %v3439 = vpack.c.b16 %v1841, %v1839
  %v3440 = vpack.c.b16 %v1842, %v1840
  %v3441 = vpack.c.b16 %v1845, %v1843
  %v3442 = vpack.c.b16 %v1846, %v1844
  %v3443 = vpack.c.b16 %v1849, %v1847
  %v3444 = vpack.c.b16 %v1850, %v1848
  %v3445 = vpack.c.b16 %v1853, %v1851
  %v3446 = vpack.c.b16 %v1854, %v1852
  %v3447 = vpack.c.b16 %v1857, %v1855
  %v3448 = vpack.c.b16 %v1858, %v1856
  %v3449 = vpack.c.b16 %v1861, %v1859
  %v3450 = vpack.c.b16 %v1862, %v1860
  %v3451 = vpack.c.b16 %v1865, %v1863
  %v3452 = vpack.c.b16 %v1866, %v1864
  %v3453 = vpack.c.b16 %v1869, %v1867
  %v3454 = vpack.c.b16 %v1870, %v1868
  %v3455 = vpack.c.b16 %v1873, %v1871
  %v3456 = vpack.c.b16 %v1874, %v1872
  %v3457 = vpack.c.b16 %v1877, %v1875
  %v3458 = vpack.c.b16 %v1878, %v1876
  %v3459 = vpack.c.b16 %v1881, %v1879
  %v3460 = vpack.c.b16 %v1882, %v1880
  %v3461 = vpack.c.b16 %v1885, %v1883
  %v3462 = vpack.c.b16 %v1886, %v1884
  %v3463 = vpack.c.b16 %v1889, %v1887
  %v3464 = vpack.c.b16 %v1890, %v1888
  %v3465 = vpack.c.b16 %v1893, %v1891
  %v3466 = vpack.c.b16 %v1894, %v1892
  %v3467 = vpack.c.b16 %v1897, %v1895
  %v3468 = vpack.c.b16 %v1898, %v1896
  %v3469 = vpack.c.b16 %v1901, %v1899
  %v3470 = vpack.c.b16 %v1902, %v1900
  %v3471 = vpack.c.b16 %v1905, %v1903
  %v3472 = vpack.c.b16 %v1906, %v1904
  %v3473 = vpack.c.b16 %v1909, %v1907
  %v3474 = vpack.c.b16 %v1910, %v1908
  %v3475 = vpack.c.b16 %v1913, %v1911
  %v3476 = vpack.c.b16 %v1914, %v1912
  %v3477 = vpack.c.b16 %v1917, %v1915
  %v3478 = vpack.c.b16 %v1918, %v1916
  %v3479 = vpack.c.b16 %v1921, %v1919
  %v3480 = vpack.c.b16 %v1922, %v1920
  %v3481 = vpack.c.b16 %v1925, %v1923
  %v3482 = vpack.c.b16 %v1926, %v1924
  %v3483 = vpack.c.b16 %v1929, %v1927
  %v3484 = vpack.c.b16 %v1930, %v1928
  %v3485 = vpack.c.b16 %v1933, %v1931
  %v3486 = vpack.c.b16 %v1934, %v1932
  %v3487 = vpack.c.b16 %v1937, %v1935
  %v3488 = vpack.c.b16 %v1938, %v1936
  %v3489 = vpack.c.b16 %v1941, %v1939
  %v3490 = vpack.c.b16 %v1942, %v1940
  %v3491 = vpack.c.b16 %v1945, %v1943
  %v3492 = vpack.c.b16 %v1946, %v1944
  %v3493 = vpack.c.b16 %v1949, %v1947
  %v3494 = vpack.c.b16 %v1950, %v1948
  %v3495 = vpack.c.b16 %v1953, %v1951
  %v3496 = vpack.c.b16 %v1954, %v1952
  %v3497 = vpack.c.b16 %v1957, %v1955
  %v3498 = vpack.c.b16 %v1958, %v1956
  %v3499 = vpack.c.b16 %v1961, %v1959
  %v3500 = vpack.c.b16 %v1962, %v1960
  %v3501 = vpack.c.b16 %v1965, %v1963
  %v3502 = vpack.c.b16 %v1966, %v1964
  %v3503 = vpack.c.b16 %v1969, %v1967
  %v3504 = vpack.c.b16 %v1970, %v1968
  %v3505 = vpack.c.b16 %v1973, %v1971
  %v3506 = vpack.c.b16 %v1974, %v1972
  %v3507 = vpack.c.b16 %v1977, %v1975
  %v3508 = vpack.c.b16 %v1978, %v1976
  %v3509 = vpack.c.b16 %v1981, %v1979
  %v3510 = vpack.c.b16 %v1982, %v1980
  %v3511 = vpack.c.b16 %v1985, %v1983
  %v3512 = vpack.c.b16 %v1986, %v1984
  %v3513 = vpack.c.b16 %v1989, %v1987
  %v3514 = vpack.c.b16 %v1990, %v1988
  %v3515 = vpack.c.b16 %v1993, %v1991
  %v3516 = vpack.c.b16 %v1994, %v1992
  %v3517 = vpack.c.b16 %v1997, %v1995
  %v3518 = vpack.c.b16 %v1998, %v1996
  %v3519 = vpack.c.b16 %v2001, %v1999
  %v3520 = vpack.c.b16 %v2002, %v2000
  %v3521 = vpack.c.b16 %v2005, %v2003
  %v3522 = vpack.c.b16 %v2006, %v2004
  %v3523 = vpack.c.b16 %v2009, %v2007
  %v3524 = vpack.c.b16 %v2010, %v2008
  %v3525 = vpack.c.b16 %v2013, %v2011
  %v3526 = vpack.c.b16 %v2014, %v2012
  %v3527 = vpack.c.b16 %v2017, %v2015
  %v3528 = vpack.c.b16 %v2018, %v2016
  %v3529 = vpack.c.b16 %v2021, %v2019
  %v3530 = vpack.c.b16 %v2022, %v2020
  %v3531 = vpack.c.b16 %v2025, %v2023
  %v3532 = vpack.c.b16 %v2026, %v2024
  %v3533 = vpack.c.b16 %v2029, %v2027
  %v3534 = vpack.c.b16 %v2030, %v2028
  %v3535 = vpack.c.b16 %v2033, %v2031
  %v3536 = vpack.c.b16 %v2034, %v2032
  %v3537 = vpack.c.b16 %v2037, %v2035
  %v3538 = vpack.c.b16 %v2038, %v2036
  %v3539 = vpack.c.b16 %v2041, %v2039
  %v3540 = vpack.c.b16 %v2042, %v2040
  %v3541 = vpack.c.b16 %v2045, %v2043
  %v3542 = vpack.c.b16 %v2046, %v2044
  %v3543 = vpack.c.b16 %v2049, %v2047
  %v3544 = vpack.c.b16 %v2050, %v2048
  %v3545 = vpack.c.b16 %v2053, %v2051
  %v3546 = vpack.c.b16 %v2054, %v2052
  %v3547 = vpack.c.b16 %v2057, %v2055
  %v3548 = vpack.c.b16 %v2058, %v2056
  %v3549 = vpack.c.b16 %v2061, %v2059
  %v3550 = vpack.c.b16 %v2062, %v2060
  %v3551 = vpack.c.b16 %v2065, %v2063
  %v3552 = vpack.c.b16 %v2066, %v2064
  %v3553 = vpack.c.b16 %v2069, %v2067
  %v3554 = vpack.c.b16 %v2070, %v2068
  %v3555 = vpack.c.b16 %v2073, %v2071
  %v3556 = vpack.c.b16 %v2074, %v2072
  %v3557 = vpack.c.b16 %v2077, %v2075
  %v3558 = vpack.c.b16 %v2078, %v2076
  %v3559 = vpack.c.b16 %v2081, %v2079
  %v3560 = vpack.c.b16 %v2082, %v2080
  %v3561 = vpack.c.b16 %v2085, %v2083
  %v3562 = vpack.c.b16 %v2086, %v2084
  %v3563 = vpack.c.b16 %v2089, %v2087
  %v3564 = vpack.c.b16 %v2090, %v2088
  %v3565 = vpack.c.b16 %v2093, %v2091
  %v3566 = vpack.c.b16 %v2094, %v2092
  %v3567 = vpack.c.b16 %v2097, %v2095
  %v3568 = vpack.c.b16 %v2098, %v2096
  %v3569 = vpack.c.b16 %v2101, %v2099
  %v3570 = vpack.c.b16 %v2102, %v2100
  %v3571 = vpack.c.b16 %v2105, %v2103
  %v3572 = vpack.c.b16 %v2106, %v2104
  %v3573 = vpack.c.b16 %v2109, %v2107
  %v3574 = vpack.c.b16 %v2110, %v2108
  %v3575 = vpack.c.b16 %v2113, %v2111
  %v3576 = vpack.c.b16 %v2114, %v2112
  %v3577 = vpack.c.b16 %v2117, %v2115
  %v3578 = vpack.c.b16 %v2118, %v2116
  %v3579 = vpack.c.b16 %v2121, %v2119
  %v3580 = vpack.c.b16 %v2122, %v2120
  %v3581 = vpack.c.b16 %v2125, %v2123
  %v3582 = vpack.c.b16 %v2126, %v2124
  %v3583 = vpack.c.b16 %v2129, %v2127
  %v3584 = vpack.c.b16 %v2130, %v2128
  %v3585 = vpack.c.b16 %v2133, %v2131
  %v3586 = vpack.c.b16 %v2134, %v2132
  %v3587 = vpack.c.b16 %v2137, %v2135
  %v3588 = vpack.c.b16 %v2138, %v2136
  %v3589 = vpack.c.b16 %v2141, %v2139
  %v3590 = vpack.c.b16 %v2142, %v2140
  %v3591 = vpack.c.b16 %v2145, %v2143
  %v3592 = vpack.c.b16 %v2146, %v2144
  %v3593 = vpack.c.b16 %v2149, %v2147
  %v3594 = vpack.c.b16 %v2150, %v2148
  %v3595 = vpack.c.b16 %v2153, %v2151
  %v3596 = vpack.c.b16 %v2154, %v2152
  %v3597 = vpack.c.b16 %v2157, %v2155
  %v3598 = vpack.c.b16 %v2158, %v2156
  %v3599 = vpack.c.b16 %v2161, %v2159
  %v3600 = vpack.c.b16 %v2162, %v2160
  %v3601 = vpack.c.b16 %v2165, %v2163
  %v3602 = vpack.c.b16 %v2166, %v2164
  %v3603 = vpack.c.b16 %v2169, %v2167
  %v3604 = vpack.c.b16 %v2170, %v2168
  %v3605 = vpack.c.b16 %v2173, %v2171
  %v3606 = vpack.c.b16 %v2174, %v2172
  %v3607 = vpack.c.b16 %v2177, %v2175
  %v3608 = vpack.c.b16 %v2178, %v2176
  %v3609 = vpack.c.b16 %v2181, %v2179
  %v3610 = vpack.c.b16 %v2182, %v2180
  %v3611 = vpack.c.b16 %v2185, %v2183
  %v3612 = vpack.c.b16 %v2186, %v2184
  %v3613 = vpack.c.b16 %v2189, %v2187
  %v3614 = vpack.c.b16 %v2190, %v2188
  %v3615 = vpack.c.b16 %v2193, %v2191
  %v3616 = vpack.c.b16 %v2194, %v2192
  %v3617 = vpack.c.b16 %v2197, %v2195
  %v3618 = vpack.c.b16 %v2198, %v2196
  %v3619 = vpack.c.b16 %v2201, %v2199
  %v3620 = vpack.c.b16 %v2202, %v2200
  %v3621 = vpack.c.b16 %v2205, %v2203
  %v3622 = vpack.c.b16 %v2206, %v2204
  %v3623 = vpack.c.b16 %v2209, %v2207
  %v3624 = vpack.c.b16 %v2210, %v2208
  %v3625 = vpack.c.b16 %v2213, %v2211
  %v3626 = vpack.c.b16 %v2214, %v2212
  %v3627 = vpack.c.b16 %v2217, %v2215
  %v3628 = vpack.c.b16 %v2218, %v2216
  %v3629 = vpack.c.b16 %v2221, %v2219
  %v3630 = vpack.c.b16 %v2222, %v2220
  %v3631 = vpack.c.b16 %v2225, %v2223
  %v3632 = vpack.c.b16 %v2226, %v2224
  %v3633 = vpack.c.b16 %v2229, %v2227
  %v3634 = vpack.c.b16 %v2230, %v2228
  %v3635 = vpack.c.b16 %v2233, %v2231
  %v3636 = vpack.c.b16 %v2234, %v2232
  %v3637 = vpack.c.b16 %v2237, %v2235
  %v3638 = vpack.c.b16 %v2238, %v2236
  %v3639 = vpack.c.b16 %v2241, %v2239
  %v3640 = vpack.c.b16 %v2242, %v2240
  %v3641 = vpack.c.b16 %v2245, %v2243
  %v3642 = vpack.c.b16 %v2246, %v2244
  %v3643 = vpack.c.b16 %v2249, %v2247
  %v3644 = vpack.c.b16 %v2250, %v2248
  %v3645 = vpack.c.b16 %v2253, %v2251
  %v3646 = vpack.c.b16 %v2254, %v2252
  %v3647 = vpack.c.b16 %v2257, %v2255
  %v3648 = vpack.c.b16 %v2258, %v2256
  %v3649 = vpack.c.b16 %v2261, %v2259
  %v3650 = vpack.c.b16 %v2262, %v2260
  %v3651 = vpack.c.b16 %v2265, %v2263
  %v3652 = vpack.c.b16 %v2266, %v2264
  %v3653 = vpack.c.b16 %v2269, %v2267
  %v3654 = vpack.c.b16 %v2270, %v2268
  %v3655 = vpack.c.b16 %v2273, %v2271
  %v3656 = vpack.c.b16 %v2274, %v2272
  %v3657 = vpack.c.b16 %v2277, %v2275
  %v3658 = vpack.c.b16 %v2278, %v2276
  %v3659 = vpack.c.b16 %v2281, %v2279
  %v3660 = vpack.c.b16 %v2282, %v2280
  %v3661 = vpack.c.b16 %v2285, %v2283
  %v3662 = vpack.c.b16 %v2286, %v2284
  %v3663 = vpack.c.b16 %v2289, %v2287
  %v3664 = vpack.c.b16 %v2290, %v2288
  %v3665 = vpack.c.b16 %v2293, %v2291
  %v3666 = vpack.c.b16 %v2294, %v2292
  %v3667 = vpack.c.b16 %v2297, %v2295
  %v3668 = vpack.c.b16 %v2298, %v2296
  %v3669 = vpack.c.b16 %v2301, %v2299
  %v3670 = vpack.c.b16 %v2302, %v2300
  %v3671 = vpack.c.b16 %v2305, %v2303
  %v3672 = vpack.c.b16 %v2306, %v2304
  %v3673 = vpack.c.b16 %v2309, %v2307
  %v3674 = vpack.c.b16 %v2310, %v2308
  %v3675 = vpack.c.b16 %v2313, %v2311
  %v3676 = vpack.c.b16 %v2314, %v2312
  %v3677 = vpack.c.b16 %v2317, %v2315
  %v3678 = vpack.c.b16 %v2318, %v2316
  %v3679 = vpack.c.b16 %v2321, %v2319
  %v3680 = vpack.c.b16 %v2322, %v2320
  %v3681 = vpack.c.b16 %v2325, %v2323
  %v3682 = vpack.c.b16 %v2326, %v2324
  %v3683 = vpack.c.b16 %v2329, %v2327
  %v3684 = vpack.c.b16 %v2330, %v2328
  %v3685 = vpack.c.b16 %v2333, %v2331
  %v3686 = vpack.c.b16 %v2334, %v2332
  %v3687 = vpack.c.b16 %v2337, %v2335
  %v3688 = vpack.c.b16 %v2338, %v2336
  %v3689 = vpack.c.b16 %v2341, %v2339
  %v3690 = vpack.c.b16 %v2342, %v2340
  %v3691 = vpack.c.b16 %v2345, %v2343
  %v3692 = vpack.c.b16 %v2346, %v2344
  %v3693 = vpack.c.b16 %v2349, %v2347
  %v3694 = vpack.c.b16 %v2350, %v2348
  %v3695 = vpack.c.b16 %v2353, %v2351
  %v3696 = vpack.c.b16 %v2354, %v2352
  %v3697 = vpack.c.b16 %v2357, %v2355
  %v3698 = vpack.c.b16 %v2358, %v2356
  %v3699 = vpack.c.b16 %v2361, %v2359
  %v3700 = vpack.c.b16 %v2362, %v2360
  %v3701 = vpack.c.b16 %v2365, %v2363
  %v3702 = vpack.c.b16 %v2366, %v2364
  %v3703 = vpack.c.b16 %v2369, %v2367
  %v3704 = vpack.c.b16 %v2370, %v2368
  %v3705 = vpack.c.b16 %v2373, %v2371
  %v3706 = vpack.c.b16 %v2374, %v2372
  %v3707 = vpack.c.b16 %v2377, %v2375
  %v3708 = vpack.c.b16 %v2378, %v2376
  %v3709 = vpack.c.b16 %v2381, %v2379
  %v3710 = vpack.c.b16 %v2382, %v2380
  %v3711 = vpack.c.b16 %v2385, %v2383
  %v3712 = vpack.c.b16 %v2386, %v2384
  %v3713 = vpack.c.b16 %v2389, %v2387
  %v3714 = vpack.c.b16 %v2390, %v2388
  %v3715 = vpack.c.b16 %v2393, %v2391
  %v3716 = vpack.c.b16 %v2394, %v2392
  %v3717 = vpack.c.b16 %v2397, %v2395
  %v3718 = vpack.c.b16 %v2398, %v2396
  %v3719 = vpack.c.b16 %v2401, %v2399
  %v3720 = vpack.c.b16 %v2402, %v2400
  %v3721 = vpack.c.b16 %v2405, %v2403
  %v3722 = vpack.c.b16 %v2406, %v2404
  %v3723 = vpack.c.b16 %v2409, %v2407
  %v3724 = vpack.c.b16 %v2410, %v2408
  %v3725 = vpack.c.b16 %v2413, %v2411
  %v3726 = vpack.c.b16 %v2414, %v2412
  %v3727 = vpack.c.b16 %v2417, %v2415
  %v3728 = vpack.c.b16 %v2418, %v2416
  %v3729 = vpack.c.b16 %v2421, %v2419
  %v3730 = vpack.c.b16 %v2422, %v2420
  %v3731 = vpack.c.b16 %v2425, %v2423
  %v3732 = vpack.c.b16 %v2426, %v2424
  %v3733 = vpack.c.b16 %v2429, %v2427
  %v3734 = vpack.c.b16 %v2430, %v2428
  %v3735 = vpack.c.b16 %v2433, %v2431
  %v3736 = vpack.c.b16 %v2434, %v2432
  %v3737 = vpack.c.b16 %v2437, %v2435
  %v3738 = vpack.c.b16 %v2438, %v2436
  %v3739 = vpack.c.b16 %v2441, %v2439
  %v3740 = vpack.c.b16 %v2442, %v2440
  %v3741 = vpack.c.b16 %v2445, %v2443
  %v3742 = vpack.c.b16 %v2446, %v2444
  %v3743 = vpack.c.b16 %v2449, %v2447
  %v3744 = vpack.c.b16 %v2450, %v2448
  %v3745 = vpack.c.b16 %v2453, %v2451
  %v3746 = vpack.c.b16 %v2454, %v2452
  %v3747 = vpack.c.b16 %v2457, %v2455
  %v3748 = vpack.c.b16 %v2458, %v2456
  %v3749 = vpack.c.b16 %v2461, %v2459
  %v3750 = vpack.c.b16 %v2462, %v2460
  %v3751 = vpack.c.b16 %v2465, %v2463
  %v3752 = vpack.c.b16 %v2466, %v2464
  %v3753 = vpack.c.b16 %v2469, %v2467
  %v3754 = vpack.c.b16 %v2470, %v2468
  %v3755 = vpack.c.b16 %v2473, %v2471
  %v3756 = vpack.c.b16 %v2474, %v2472
  %v3757 = vpack.c.b16 %v2477, %v2475
  %v3758 = vpack.c.b16 %v2478, %v2476
  %v3759 = vpack.c.b16 %v2481, %v2479
  %v3760 = vpack.c.b16 %v2482, %v2480
  %v3761 = vpack.c.b16 %v2485, %v2483
  %v3762 = vpack.c.b16 %v2486, %v2484
  %v3763 = vpack.c.b16 %v2489, %v2487
  %v3764 = vpack.c.b16 %v2490, %v2488
  %v3765 = vpack.c.b16 %v2493, %v2491
  %v3766 = vpack.c.b16 %v2494, %v2492
  %v3767 = vpack.c.b16 %v2497, %v2495
  %v3768 = vpack.c.b16 %v2498, %v2496
  %v3769 = vpack.c.b16 %v2501, %v2499
  %v3770 = vpack.c.b16 %v2502, %v2500
  %v3771 = vpack.c.b16 %v2505, %v2503
  %v3772 = vpack.c.b16 %v2506, %v2504
  %v3773 = vpack.c.b16 %v2509, %v2507
  %v3774 = vpack.c.b16 %v2510, %v2508
  %v3775 = vpack.c.b16 %v2513, %v2511
  %v3776 = vpack.c.b16 %v2514, %v2512
  %v3777 = vpack.c.b16 %v2517, %v2515
  %v3778 = vpack.c.b16 %v2518, %v2516
  %v3779 = vpack.c.b16 %v2521, %v2519
  %v3780 = vpack.c.b16 %v2522, %v2520
  %v3781 = vpack.c.b16 %v2525, %v2523
  %v3782 = vpack.c.b16 %v2526, %v2524
  %v3783 = vpack.c.b16 %v2529, %v2527
  %v3784 = vpack.c.b16 %v2530, %v2528
  %v3785 = vpack.c.b16 %v2533, %v2531
  %v3786 = vpack.c.b16 %v2534, %v2532
  %v3787 = vpack.c.b16 %v2537, %v2535
  %v3788 = vpack.c.b16 %v2538, %v2536
  %v3789 = vpack.c.b16 %v2541, %v2539
  %v3790 = vpack.c.b16 %v2542, %v2540
  %v3791 = vpack.c.b16 %v2545, %v2543
  %v3792 = vpack.c.b16 %v2546, %v2544
  %v3793 = vpack.c.b16 %v2549, %v2547
  %v3794 = vpack.c.b16 %v2550, %v2548
  %v3795 = vpack.c.b16 %v2553, %v2551
  %v3796 = vpack.c.b16 %v2554, %v2552
  %v3797 = vpack.c.b16 %v2557, %v2555
  %v3798 = vpack.c.b16 %v2558, %v2556
  %v3799 = vpack.c.b16 %v2561, %v2559
  %v3800 = vpack.c.b16 %v2562, %v2560
  %v3801 = vpack.c.b16 %v2565, %v2563
  %v3802 = vpack.c.b16 %v2566, %v2564
  %v3803 = vpack.c.b16 %v2569, %v2567
  %v3804 = vpack.c.b16 %v2570, %v2568
  %v3805 = vpack.c.b16 %v2573, %v2571
  %v3806 = vpack.c.b16 %v2574, %v2572
  %v3807 = vpack.c.b16 %v2577, %v2575
  %v3808 = vpack.c.b16 %v2578, %v2576
  %v3809 = vpack.c.b16 %v2581, %v2579
  %v3810 = vpack.c.b16 %v2582, %v2580
  %v3811 = vpack.c.b16 %v2585, %v2583
  %v3812 = vpack.c.b16 %v2586, %v2584
  %v3813 = vpack.c.b16 %v2589, %v2587
  %v3814 = vpack.c.b16 %v2590, %v2588
  %v3815 = vpack.c.b16 %v2593, %v2591
  %v3816 = vpack.c.b16 %v2594, %v2592
  %v3817 = vpack.c.b16 %v2597, %v2595
  %v3818 = vpack.c.b16 %v2598, %v2596
  %v3819 = vpack.c.b16 %v2601, %v2599
  %v3820 = vpack.c.b16 %v2602, %v2600
  %v3821 = vpack.c.b16 %v2605, %v2603
  %v3822 = vpack.c.b16 %v2606, %v2604
  %v3823 = vpack.c.b16 %v2609, %v2607
  %v3824 = vpack.c.b16 %v2610, %v2608
  %v3825 = vpack.c.b16 %v2613, %v2611
  %v3826 = vpack.c.b16 %v2614, %v2612
  %v3827 = vpack.c.b16 %v2617, %v2615
  %v3828 = vpack.c.b16 %v2618, %v2616
  %v3829 = vpack.c.b16 %v2621, %v2619
  %v3830 = vpack.c.b16 %v2622, %v2620
  %v3831 = vpack.c.b16 %v2625, %v2623
  %v3832 = vpack.c.b16 %v2626, %v2624
  %v3833 = vpack.c.b16 %v2629, %v2627
  %v3834 = vpack.c.b16 %v2630, %v2628
  %v3835 = vpack.c.b16 %v2633, %v2631
  %v3836 = vpack.c.b16 %v2634, %v2632
  %v3837 = vpack.c.b16 %v2637, %v2635
  %v3838 = vpack.c.b16 %v2638, %v2636
  %v3839 = vpack.c.b16 %v2641, %v2639
  %v3840 = vpack.c.b16 %v2642, %v2640
  %v3841 = vpack.c.b16 %v2645, %v2643
  %v3842 = vpack.c.b16 %v2646, %v2644
  %v3843 = vpack.c.b16 %v2649, %v2647
  %v3844 = vpack.c.b16 %v2650, %v2648
  %v3845 = vpack.c.b16 %v2653, %v2651
  %v3846 = vpack.c.b16 %v2654, %v2652
  %v3847 = vpack.c.b16 %v2657, %v2655
  %v3848 = vpack.c.b16 %v2658, %v2656
  %v3849 = vpack.c.b16 %v2661, %v2659
  %v3850 = vpack.c.b16 %v2662, %v2660
  %v3851 = vpack.c.b16 %v2665, %v2663
  %v3852 = vpack.c.b16 %v2666, %v2664
  %v3853 = vpack.c.b16 %v2669, %v2667
  %v3854 = vpack.c.b16 %v2670, %v2668
  %v3855 = vpack.c.b16 %v2673, %v2671
  %v3856 = vpack.c.b16 %v2674, %v2672
  %v3857 = vpack.c.b16 %v2677, %v2675
  %v3858 = vpack.c.b16 %v2678, %v2676
  %v3859 = vpack.c.b16 %v2681, %v2679
  %v3860 = vpack.c.b16 %v2682, %v2680
  %v3861 = vpack.c.b16 %v2685, %v2683
  %v3862 = vpack.c.b16 %v2686, %v2684
  %v3863 = vpack.c.b16 %v2689, %v2687
  %v3864 = vpack.c.b16 %v2690, %v2688
  %v3865 = vpack.c.b16 %v2693, %v2691
  %v3866 = vpack.c.b16 %v2694, %v2692
  %v3867 = vpack.c.b16 %v2697, %v2695
  %v3868 = vpack.c.b16 %v2698, %v2696
  %v3869 = vpack.c.b16 %v2701, %v2699
  %v3870 = vpack.c.b16 %v2702, %v2700
  %v3871 = vpack.c.b16 %v2705, %v2703
  %v3872 = vpack.c.b16 %v2706, %v2704
  %v3873 = vpack.c.b16 %v2709, %v2707
  %v3874 = vpack.c.b16 %v2710, %v2708
  %v3875 = vpack.c.b16 %v2713, %v2711
  %v3876 = vpack.c.b16 %v2714, %v2712
  %v3877 = vpack.c.b16 %v2717, %v2715
  %v3878 = vpack.c.b16 %v2718, %v2716
  %v3879 = vpack.c.b16 %v2721, %v2719
  %v3880 = vpack.c.b16 %v2722, %v2720
  %v3881 = vpack.c.b16 %v2725, %v2723
  %v3882 = vpack.c.b16 %v2726, %v2724
  %v3883 = vpack.c.b16 %v2729, %v2727
  %v3884 = vpack.c.b16 %v2730, %v2728
  %v3885 = vpack.c.b16 %v2733, %v2731
  %v3886 = vpack.c.b16 %v2734, %v2732
  %v3887 = vpack.c.b16 %v2737, %v2735
  %v3888 = vpack.c.b16 %v2738, %v2736
  %v3889 = vpack.c.b16 %v2741, %v2739
  %v3890 = vpack.c.b16 %v2742, %v2740
  %v3891 = vpack.c.b16 %v2745, %v2743
  %v3892 = vpack.c.b16 %v2746, %v2744
  %v3893 = vpack.c.b16 %v2749, %v2747
  %v3894 = vpack.c.b16 %v2750, %v2748
  %v3895 = vpack.c.b16 %v2753, %v2751
  %v3896 = vpack.c.b16 %v2754, %v2752
  %v3897 = vpack.c.b16 %v2757, %v2755
  %v3898 = vpack.c.b16 %v2758, %v2756
  %v3899 = vpack.c.b16 %v2761, %v2759
  %v3900 = vpack.c.b16 %v2762, %v2760
  %v3901 = vpack.c.b16 %v2765, %v2763
  %v3902 = vpack.c.b16 %v2766, %v2764
  %v3903 = vpack.c.b16 %v2769, %v2767
  %v3904 = vpack.c.b16 %v2770, %v2768
  %v3905 = vpack.c.b16 %v2773, %v2771
  %v3906 = vpack.c.b16 %v2774, %v2772
  %v3907 = vpack.c.b16 %v2777, %v2775
  %v3908 = vpack.c.b16 %v2778, %v2776
  %v3909 = vpack.c.b16 %v2781, %v2779
  %v3910 = vpack.c.b16 %v2782, %v2780
  %v3911 = vpack.c.b16 %v2785, %v2783
  %v3912 = vpack.c.b16 %v2786, %v2784
  %v3913 = vpack.c.b16 %v2789, %v2787
  %v3914 = vpack.c.b16 %v2790, %v2788
  %v3915 = vpack.c.b16 %v2793, %v2791
  %v3916 = vpack.c.b16 %v2794, %v2792
  %v3917 = vpack.c.b16 %v2797, %v2795
  %v3918 = vpack.c.b16 %v2798, %v2796
  %v3919 = vpack.c.b16 %v2801, %v2799
  %v3920 = vpack.c.b16 %v2802, %v2800
  %v3921 = vpack.c.b16 %v2805, %v2803
  %v3922 = vpack.c.b16 %v2806, %v2804
  %v3923 = vpack.c.b16 %v2809, %v2807
  %v3924 = vpack.c.b16 %v2810, %v2808
  %v3925 = vpack.c.b16 %v2813, %v2811
  %v3926 = vpack.c.b16 %v2814, %v2812
  %v3927 = vpack.c.b16 %v2817, %v2815
  %v3928 = vpack.c.b16 %v2818, %v2816
  %v3929 = vpack.c.b16 %v2821, %v2819
  %v3930 = vpack.c.b16 %v2822, %v2820
  %v3931 = vpack.c.b16 %v2825, %v2823
  %v3932 = vpack.c.b16 %v2826, %v2824
  %v3933 = vpack.c.b16 %v2829, %v2827
  %v3934 = vpack.c.b16 %v2830, %v2828
  %v3935 = vpack.c.b16 %v2833, %v2831
  %v3936 = vpack.c.b16 %v2834, %v2832
  %v3937 = vpack.c.b16 %v2837, %v2835
  %v3938 = vpack.c.b16 %v2838, %v2836
  %v3939 = vpack.c.b16 %v2841, %v2839
  %v3940 = vpack.c.b16 %v2842, %v2840
  %v3941 = vpack.c.b16 %v2845, %v2843
  %v3942 = vpack.c.b16 %v2846, %v2844
  %v3943 = vpack.c.b16 %v2849, %v2847
  %v3944 = vpack.c.b16 %v2850, %v2848
  %v3945 = vpack.c.b16 %v2853, %v2851
  %v3946 = vpack.c.b16 %v2854, %v2852
  %v3947 = vpack.c.b16 %v2857, %v2855
  %v3948 = vpack.c.b16 %v2858, %v2856
  %v3949 = vpack.c.b16 %v2861, %v2859
  %v3950 = vpack.c.b16 %v2862, %v2860
  %v3951 = vpack.c.b16 %v2865, %v2863
  %v3952 = vpack.c.b16 %v2866, %v2864
  %v3953 = vpack.c.b16 %v2869, %v2867
  %v3954 = vpack.c.b16 %v2870, %v2868
  %v3955 = vpack.c.b16 %v2873, %v2871
  %v3956 = vpack.c.b16 %v2874, %v2872
  %v3957 = vpack.c.b16 %v2877, %v2875
  %v3958 = vpack.c.b16 %v2878, %v2876
  %v3959 = vpack.c.b16 %v2881, %v2879
  %v3960 = vpack.c.b16 %v2882, %v2880
  %v3961 = vpack.c.b16 %v2885, %v2883
  %v3962 = vpack.c.b16 %v2886, %v2884
  %v3963 = vpack.c.b16 %v2889, %v2887
  %v3964 = vpack.c.b16 %v2890, %v2888
  %v3965 = vpack.c.b16 %v2893, %v2891
  %v3966 = vpack.c.b16 %v2894, %v2892
  %v3967 = vpack.c.b16 %v2897, %v2895
  %v3968 = vpack.c.b16 %v2898, %v2896
  %v3969 = vpack.c.b16 %v2901, %v2899
  %v3970 = vpack.c.b16 %v2902, %v2900
  %v3971 = vpack.c.b16 %v2905, %v2903
  %v3972 = vpack.c.b16 %v2906, %v2904
  %v3973 = vpack.c.b16 %v2909, %v2907
  %v3974 = vpack.c.b16 %v2910, %v2908
  %v3975 = vpack.c.b16 %v2913, %v2911
  %v3976 = vpack.c.b16 %v2914, %v2912
  %v3977 = vpack.c.b16 %v2917, %v2915
  %v3978 = vpack.c.b16 %v2918, %v2916
  %v3979 = vpack.c.b16 %v2921, %v2919
  %v3980 = vpack.c.b16 %v2922, %v2920
  %v3981 = vpack.c.b16 %v2925, %v2923
  %v3982 = vpack.c.b16 %v2926, %v2924
  %v3983 = vpack.c.b16 %v2929, %v2927
  %v3984 = vpack.c.b16 %v2930, %v2928
  %v3985 = vpack.c.b16 %v2933, %v2931
  %v3986 = vpack.c.b16 %v2934, %v2932
  %v3987 = vpack.c.b16 %v2937, %v2935
  %v3988 = vpack.c.b16 %v2938, %v2936
  %v3989 = vpack.c.b16 %v2941, %v2939
  %v3990 = vpack.c.b16 %v2942, %v2940
  %v3991 = vpack.c.b16 %v2945, %v2943
  %v3992 = vpack.c.b16 %v2946, %v2944
  %v3993 = vpack.c.b16 %v2949, %v2947
  %v3994 = vpack.c.b16 %v2950, %v2948
  %v3995 = vpack.c.b16 %v2953, %v2951
  %v3996 = vpack.c.b16 %v2954, %v2952
  %v3997 = vpack.c.b16 %v2957, %v2955
  %v3998 = vpack.c.b16 %v2958, %v2956
  %v3999 = vpack.c.b16 %v2961, %v2959
  %v4000 = vpack.c.b16 %v2962, %v2960
  %v4001 = vpack.c.b16 %v2965, %v2963
  %v4002 = vpack.c.b16 %v2966, %v2964
  %v4003 = vpack.c.b16 %v2969, %v2967
  %v4004 = vpack.c.b16 %v2970, %v2968
  %v4005 = vpack.c.b16 %v2973, %v2971
  %v4006 = vpack.c.b16 %v2974, %v2972
  %v4007 = vpack.c.b16 %v2977, %v2975
  %v4008 = vpack.c.b16 %v2978, %v2976
  %v4009 = vpack.c.b16 %v2981, %v2979
  %v4010 = vpack.c.b16 %v2982, %v2980
  %v4011 = vpack.c.b16 %v2985, %v2983
  %v4012 = vpack.c.b16 %v2986, %v2984
  %v4013 = vpack.c.b16 %v2989, %v2987
  %v4014 = vpack.c.b16 %v2990, %v2988
  %v4015 = vpack.c.b16 %v2993, %v2991
  %v4016 = vpack.c.b16 %v2994, %v2992
  %v4017 = vpack.c.b16 %v2997, %v2995
  %v4018 = vpack.c.b16 %v2998, %v2996
  %v4019 = vpack.c.b16 %v3001, %v2999
  %v4020 = vpack.c.b16 %v3002, %v3000
  %v4021 = vpack.c.b16 %v3005, %v3003
  %v4022 = vpack.c.b16 %v3006, %v3004
  %v4023 = vpack.c.b16 %v3009, %v3007
  %v4024 = vpack.c.b16 %v3010, %v3008
  %v4025 = vpack.c.b16 %v3013, %v3011
  %v4026 = vpack.c.b16 %v3014, %v3012
  %v4027 = vpack.c.b16 %v3017, %v3015
  %v4028 = vpack.c.b16 %v3018, %v3016
  %v4029 = vpack.c.b16 %v3021, %v3019
  %v4030 = vpack.c.b16 %v3022, %v3020
  %v4031 = vpack.c.b16 %v3025, %v3023
  %v4032 = vpack.c.b16 %v3026, %v3024
  %v4033 = vpack.c.b16 %v3029, %v3027
  %v4034 = vpack.c.b16 %v3030, %v3028
  %v4035 = vpack.c.b16 %v3033, %v3031
  %v4036 = vpack.c.b16 %v3034, %v3032
  %v4037 = vpack.c.b16 %v3037, %v3035
  %v4038 = vpack.c.b16 %v3038, %v3036
  %v4039 = vpack.c.b16 %v3041, %v3039
  %v4040 = vpack.c.b16 %v3042, %v3040
  %v4041 = vpack.c.b16 %v3045, %v3043
  %v4042 = vpack.c.b16 %v3046, %v3044
  %v4043 = vpack.c.b16 %v3049, %v3047
  %v4044 = vpack.c.b16 %v3050, %v3048
  %v4045 = vpack.c.b16 %v3053, %v3051
  %v4046 = vpack.c.b16 %v3054, %v3052
  %v4047 = vpack.c.b16 %v3057, %v3055
  %v4048 = vpack.c.b16 %v3058, %v3056
  %v4049 = vpack.c.b16 %v3061, %v3059
  %v4050 = vpack.c.b16 %v3062, %v3060
  %v4051 = vpack.c.b16 %v3065, %v3063
  %v4052 = vpack.c.b16 %v3066, %v3064
  %v4053 = vpack.c.b16 %v3069, %v3067
  %v4054 = vpack.c.b16 %v3070, %v3068
  %v4055 = vpack.c.b16 %v3073, %v3071
  %v4056 = vpack.c.b16 %v3074, %v3072
  %v4057 = vpack.c.b16 %v3077, %v3075
  %v4058 = vpack.c.b16 %v3078, %v3076
  %v4059 = vpack.c.b16 %v3081, %v3079
  %v4060 = vpack.c.b16 %v3082, %v3080
  %v4061 = vpack.c.b16 %v3085, %v3083
  %v4062 = vpack.c.b16 %v3086, %v3084
  %v4063 = vpack.c.b16 %v3089, %v3087
  %v4064 = vpack.c.b16 %v3090, %v3088
  %v4065 = vpack.c.b16 %v3093, %v3091
  %v4066 = vpack.c.b16 %v3094, %v3092
  %v4067 = vpack.c.b16 %v3097, %v3095
  %v4068 = vpack.c.b16 %v3098, %v3096
  %v4069 = vpack.c.b16 %v3101, %v3099
  %v4070 = vpack.c.b16 %v3102, %v3100
  %v4071 = vpack.c.b16 %v3105, %v3103
  %v4072 = vpack.c.b16 %v3106, %v3104
  %v4073 = vpack.c.b16 %v3109, %v3107
  %v4074 = vpack.c.b16 %v3110, %v3108
  %v4075 = vpack.c.b16 %v3113, %v3111
  %v4076 = vpack.c.b16 %v3114, %v3112
  %v4077 = vpack.c.b16 %v3117, %v3115
  %v4078 = vpack.c.b16 %v3118, %v3116
  %v4079 = vpack.c.b16 %v3121, %v3119
  %v4080 = vpack.c.b16 %v3122, %v3120
  %v4081 = vpack.c.b16 %v3125, %v3123
  %v4082 = vpack.c.b16 %v3126, %v3124
  %v4083 = vpack.c.b16 %v3129, %v3127
  %v4084 = vpack.c.b16 %v3130, %v3128
  %v4085 = vpack.c.b16 %v3133, %v3131
  %v4086 = vpack.c.b16 %v3134, %v3132
  %v4087 = vpack.c.b16 %v3137, %v3135
  %v4088 = vpack.c.b16 %v3138, %v3136
  %v4089 = vpack.c.b16 %v3141, %v3139
  %v4090 = vpack.c.b16 %v3142, %v3140
  %v4091 = vpack.c.b16 %v3145, %v3143
  %v4092 = vpack.c.b16 %v3146, %v3144
  %v4093 = vpack.c.b16 %v3149, %v3147
  %v4094 = vpack.c.b16 %v3150, %v3148
  %v4095 = vpack.c.b16 %v3153, %v3151
  %v4096 = vpack.c.b16 %v3154, %v3152
  %v4097 = vpack.c.b16 %v3157, %v3155
  %v4098 = vpack.c.b16 %v3158, %v3156
  %v4099 = vpack.c.b16 %v3161, %v3159
  %v4100 = vpack.c.b16 %v3162, %v3160
  %v4101 = vpack.c.b16 %v3165, %v3163
  %v4102 = vpack.c.b16 %v3166, %v3164
  %v4103 = vpack.c.b16 %v3169, %v3167
  %v4104 = vpack.c.b16 %v3170, %v3168
  %v4105 = vpack.c.b16 %v3173, %v3171
  %v4106 = vpack.c.b16 %v3174, %v3172
  %v4107 = vpack.c.b16 %v3177, %v3175
  %v4108 = vpack.c.b16 %v3178, %v3176
  %v4109 = vpack.c.b16 %v3181, %v3179
  %v4110 = vpack.c.b16 %v3182, %v3180
  %v4111 = vpack.c.b16 %v3185, %v3183
  %v4112 = vpack.c.b16 %v3186, %v3184
  %v4113 = vpack.c.b16 %v3189, %v3187
  %v4114 = vpack.c.b16 %v3190, %v3188
  %v4115 = vpack.c.b16 %v3193, %v3191
  %v4116 = vpack.c.b16 %v3194, %v3192
  %v4117 = vpack.c.b16 %v3197, %v3195
  %v4118 = vpack.c.b16 %v3198, %v3196
  %v4119 = vpack.c.b16 %v3201, %v3199
  %v4120 = vpack.c.b16 %v3202, %v3200
  %v4121 = vpack.c.b16 %v3205, %v3203
  %v4122 = vpack.c.b16 %v3206, %v3204
  %v4123 = vpack.c.b16 %v3209, %v3207
  %v4124 = vpack.c.b16 %v3210, %v3208
  %v4125 = vpack.c.b16 %v3213, %v3211
  %v4126 = vpack.c.b16 %v3214, %v3212
  %v4127 = vpack.c.b16 %v3217, %v3215
  %v4128 = vpack.c.b16 %v3218, %v3216
  %v4129 = vpack.c.b16 %v3221, %v3219
  %v4130 = vpack.c.b16 %v3222, %v3220
  %v4131 = vpack.c.b16 %v3225, %v3223
  %v4132 = vpack.c.b16 %v3226, %v3224
  %v4133 = vpack.c.b16 %v3229, %v3227
  %v4134 = vpack.c.b16 %v3230, %v3228
  %v4135 = vpack.c.b16 %v3233, %v3231
  %v4136 = vpack.c.b16 %v3234, %v3232
  %v4137 = vpack.c.b16 %v3237, %v3235
  %v4138 = vpack.c.b16 %v3238, %v3236
  %v4139 = vpack.c.b16 %v3241, %v3239
  %v4140 = vpack.c.b16 %v3242, %v3240
  %v4141 = vpack.c.b16 %v3245, %v3243
  %v4142 = vpack.c.b16 %v3246, %v3244
  %v4143 = vpack.c.b16 %v3249, %v3247
  %v4144 = vpack.c.b16 %v3250, %v3248
  %v4145 = vpack.c.b16 %v3253, %v3251
  %v4146 = vpack.c.b16 %v3254, %v3252
  %v4147 = vpack.c.b16 %v3257, %v3255
  %v4148 = vpack.c.b16 %v3258, %v3256
  %v4149 = vpack.c.b16 %v3261, %v3259
  %v4150 = vpack.c.b16 %v3262, %v3260
  %v4151 = vpack.c.b16 %v3265, %v3263
  %v4152 = vpack.c.b16 %v3266, %v3264
  %v4153 = vpack.c.b16 %v3269, %v3267
  %v4154 = vpack.c.b16 %v3270, %v3268
  %v4155 = vpack.c.b16 %v3273, %v3271
  %v4156 = vpack.c.b16 %v3274, %v3272
  %v4157 = vpack.c.b16 %v3277, %v3275
  %v4158 = vpack.c.b16 %v3278, %v3276
  %v4159 = vpack.c.b16 %v3281, %v3279
  %v4160 = vpack.c.b16 %v3282, %v3280
  %v4161 = vpack.c.b16 %v3285, %v3283
  %v4162 = vpack.c.b16 %v3286, %v3284
  %v4163 = vpack.c.b16 %v3289, %v3287
  %v4164 = vpack.c.b16 %v3290, %v3288
  %v4165 = vpack.c.b16 %v3293, %v3291
  %v4166 = vpack.c.b16 %v3294, %v3292
  %v4167 = vpack.c.b16 %v3297, %v3295
  %v4168 = vpack.c.b16 %v3298, %v3296
  %v4169 = vpack.c.b16 %v3301, %v3299
  %v4170 = vpack.c.b16 %v3302, %v3300
  %v4171 = vpack.c.b16 %v3305, %v3303
  %v4172 = vpack.c.b16 %v3306, %v3304
  %v4173 = vpack.c.b16 %v3309, %v3307
  %v4174 = vpack.c.b16 %v3310, %v3308
  %v4175 = vpack.c.b16 %v3313, %v3311
  %v4176 = vpack.c.b16 %v3314, %v3312
  %v4177 = vpack.c.b16 %v3317, %v3315
  %v4178 = vpack.c.b16 %v3318, %v3316
  %v4179 = vpack.c.b16 %v3321, %v3319
  %v4180 = vpack.c.b16 %v3322, %v3320
  %v4181 = vpack.c.b16 %v3325, %v3323
  %v4182 = vpack.c.b16 %v3326, %v3324
  %v4183 = vpack.c.b16 %v3329, %v3327
  %v4184 = vpack.c.b16 %v3330, %v3328
  %v4185 = vpack.c.b16 %v3333, %v3331
  %v4186 = vpack.c.b16 %v3334, %v3332
  %v4187 = vpack.c.b16 %v3337, %v3335
  %v4188 = vpack.c.b16 %v3338, %v3336
  %v4189 = vpack.c.b16 %v3341, %v3339
  %v4190 = vpack.c.b16 %v3342, %v3340
  %v4191 = vpack.c.b16 %v3345, %v3343
  %v4192 = vpack.c.b16 %v3346, %v3344
  %v4193 = vpack.c.b16 %v3349, %v3347
  %v4194 = vpack.c.b16 %v3350, %v3348
  %v4195 = vpack.c.b16 %v3353, %v3351
  %v4196 = vpack.c.b16 %v3354, %v3352
  %v4197 = vpack.c.b16 %v3357, %v3355
  %v4198 = vpack.c.b16 %v3358, %v3356
  %v4199 = vpack.c.b16 %v3361, %v3359
  %v4200 = vpack.c.b16 %v3362, %v3360
  %v4201 = vpack.c.b16 %v3365, %v3363
  %v4202 = vpack.c.b16 %v3366, %v3364
  %v4203 = vpack.c.b16 %v3369, %v3367
  %v4204 = vpack.c.b16 %v3370, %v3368
  %v4205 = vpack.c.b16 %v3373, %v3371
  %v4206 = vpack.c.b16 %v3374, %v3372
  %v4207 = vpack.c.b16 %v3377, %v3375
  %v4208 = vpack.c.b16 %v3378, %v3376
  %v4209 = vpack.c.b16 %v3381, %v3379
  %v4210 = vpack.c.b16 %v3382, %v3380
  %v4211 = vpack.c.b16 %v3385, %v3383
  %v4212 = vpack.c.b16 %v3386, %v3384
  %v4213 = vpack.c.b16 %v3389, %v3387
  %v4214 = vpack.c.b16 %v3390, %v3388
  %v4215 = vpack.c.b16 %v3393, %v3391
  %v4216 = vpack.c.b16 %v3394, %v3392
  %v4217 = vpack.c.b16 %v3397, %v3395
  %v4218 = vpack.c.b16 %v3398, %v3396
  %v4219 = vpack.c.b16 %v3401, %v3399
  %v4220 = vpack.c.b16 %v3402, %v3400
  %v4221 = vpack.c.b16 %v3405, %v3403
  %v4222 = vpack.c.b16 %v3406, %v3404
  %v4223 = vpack.c.b16 %v3409, %v3407
  %v4224 = vpack.c.b16 %v3410, %v3408
  %v4225 = vpack.c.b16 %v3413, %v3411
  %v4226 = vpack.c.b16 %v3414, %v3412
  %v4227 = vpack.c.b16 %v3417, %v3415
  %v4228 = vpack.c.b16 %v3418, %v3416
  %v4229 = vpack.c.b16 %v3421, %v3419
  %v4230 = vpack.c.b16 %v3422, %v3420
  %v4231 = vpack.c.b16 %v3425, %v3423
  %v4232 = vpack.c.b16 %v3426, %v3424
  %v4233 = vpack.c.b16 %v3429, %v3427
  %v4234 = vpack.c.b16 %v3430, %v3428
  %v4235 = vpack.c.b16 %v3433, %v3431
  %v4236 = vpack.c.b16 %v3434, %v3432
  %v4237 = vpack.c.b16 %v3437, %v3435
  %v4238 = vpack.c.b16 %v3438, %v3436
  %5039 = vmatprep.subr.bf16.mxu0 %v3440
  %5040 = vmatpush1.bf16.msra.mxu0 %v3439
  %5041 = vmatprep.subr.bf16.mxu0 %v3442
  %5042 = vmatpush1.bf16.msra.mxu0 %v3441
  %5043 = vmatprep.subr.bf16.mxu0 %v3444
  %5044 = vmatpush1.bf16.msra.mxu0 %v3443
  %5045 = vmatprep.subr.bf16.mxu0 %v3446
  %5046 = vmatpush1.bf16.msra.mxu0 %v3445
  %5047 = vmatprep.subr.bf16.mxu0 %v3448
  %5048 = vmatpush1.bf16.msra.mxu0 %v3447
  %5049 = vmatprep.subr.bf16.mxu0 %v3450
  %5050 = vmatpush1.bf16.msra.mxu0 %v3449
  %5051 = vmatprep.subr.bf16.mxu0 %v3452
  %5052 = vmatpush1.bf16.msra.mxu0 %v3451
  %5053 = vmatprep.subr.bf16.mxu0 %v3454
  %5054 = vmatpush1.bf16.msra.mxu0 %v3453
  %5055 = vmatprep.subr.bf16.mxu0 %v3456
  %5056 = vmatpush1.bf16.msra.mxu0 %v3455
  %5057 = vmatprep.subr.bf16.mxu0 %v3458
  %5058 = vmatpush1.bf16.msra.mxu0 %v3457
  %5059 = vmatprep.subr.bf16.mxu0 %v3460
  %5060 = vmatpush1.bf16.msra.mxu0 %v3459
  %5061 = vmatprep.subr.bf16.mxu0 %v3462
  %5062 = vmatpush1.bf16.msra.mxu0 %v3461
  %5063 = vmatprep.subr.bf16.mxu0 %v3464
  %5064 = vmatpush1.bf16.msra.mxu0 %v3463
  %5065 = vmatprep.subr.bf16.mxu0 %v3466
  %5066 = vmatpush1.bf16.msra.mxu0 %v3465
  %5067 = vmatprep.subr.bf16.mxu0 %v3468
  %5068 = vmatpush1.bf16.msra.mxu0 %v3467
  %5069 = vmatprep.subr.bf16.mxu0 %v3470
  %5070 = vmatpush1.bf16.msra.mxu0 %v3469
  %5071 = vmatprep.mubr.bf16.mxu0 %v940
  %5072 = vmatmul.mubr.bf16.gmra.mrb[0].mxu0 %v939
  %v5073 = vpop.f32.mrb[0].mxu0
  %v5074 = vadd.f32 %v857, %v5073
  %v5075 = vpop.f32.mrb[0].mxu0
  %v5076 = vadd.f32 %v861, %v5075
  %v5077 = vpop.f32.mrb[0].mxu0
  %v5078 = vpop.f32.mrb[0].mxu0
  %5079 = vdwg.mxu0
  %5080 = vmatprep.subr.bf16.mxu0 %v3472
  %5081 = vmatpush1.bf16.msra.mxu0 %v3471
  %5082 = vmatprep.subr.bf16.mxu0 %v3474
  %5083 = vmatpush1.bf16.msra.mxu0 %v3473
  %5084 = vmatprep.subr.bf16.mxu0 %v3476
  %5085 = vmatpush1.bf16.msra.mxu0 %v3475
  %5086 = vmatprep.subr.bf16.mxu0 %v3478
  %5087 = vmatpush1.bf16.msra.mxu0 %v3477
  %5088 = vmatprep.subr.bf16.mxu0 %v3480
  %5089 = vmatpush1.bf16.msra.mxu0 %v3479
  %5090 = vmatprep.subr.bf16.mxu0 %v3482
  %5091 = vmatpush1.bf16.msra.mxu0 %v3481
  %5092 = vmatprep.subr.bf16.mxu0 %v3484
  %5093 = vmatpush1.bf16.msra.mxu0 %v3483
  %5094 = vmatprep.subr.bf16.mxu0 %v3486
  %5095 = vmatpush1.bf16.msra.mxu0 %v3485
  %5096 = vmatprep.subr.bf16.mxu0 %v3488
  %5097 = vmatpush1.bf16.msra.mxu0 %v3487
  %5098 = vmatprep.subr.bf16.mxu0 %v3490
  %5099 = vmatpush1.bf16.msra.mxu0 %v3489
  %5100 = vmatprep.subr.bf16.mxu0 %v3492
  %5101 = vmatpush1.bf16.msra.mxu0 %v3491
  %5102 = vmatprep.subr.bf16.mxu0 %v3494
  %5103 = vmatpush1.bf16.msra.mxu0 %v3493
  %5104 = vmatprep.subr.bf16.mxu0 %v3496
  %5105 = vmatpush1.bf16.msra.mxu0 %v3495
  %5106 = vmatprep.subr.bf16.mxu0 %v3498
  %5107 = vmatpush1.bf16.msra.mxu0 %v3497
  %5108 = vmatprep.subr.bf16.mxu0 %v3500
  %5109 = vmatpush1.bf16.msra.mxu0 %v3499
  %5110 = vmatprep.subr.bf16.mxu0 %v3502
  %5111 = vmatpush1.bf16.msra.mxu0 %v3501
  %5112 = vmatprep.mubr.bf16.mxu0 %v942
  %5113 = vmatmul.mubr.bf16.gmra.mrb[0].mxu0 %v941
  %v5114 = vpop.f32.mrb[0].mxu0
  %v5115 = vadd.f32 %v5074, %v5114
  %v5116 = vpop.f32.mrb[0].mxu0
  %v5117 = vadd.f32 %v5076, %v5116
  %v5118 = vpop.f32.mrb[0].mxu0
  %v5119 = vpop.f32.mrb[0].mxu0
  %5120 = vdwg.mxu0
  %5121 = vmatprep.subr.bf16.mxu0 %v3504
  %5122 = vmatpush1.bf16.msra.mxu0 %v3503
  %5123 = vmatprep.subr.bf16.mxu0 %v3506
  %5124 = vmatpush1.bf16.msra.mxu0 %v3505
  %5125 = vmatprep.subr.bf16.mxu0 %v3508
  %5126 = vmatpush1.bf16.msra.mxu0 %v3507
  %5127 = vmatprep.subr.bf16.mxu0 %v3510
  %5128 = vmatpush1.bf16.msra.mxu0 %v3509
  %5129 = vmatprep.subr.bf16.mxu0 %v3512
  %5130 = vmatpush1.bf16.msra.mxu0 %v3511
  %5131 = vmatprep.subr.bf16.mxu0 %v3514
  %5132 = vmatpush1.bf16.msra.mxu0 %v3513
  %5133 = vmatprep.subr.bf16.mxu0 %v3516
  %5134 = vmatpush1.bf16.msra.mxu0 %v3515
  %5135 = vmatprep.subr.bf16.mxu0 %v3518
  %5136 = vmatpush1.bf16.msra.mxu0 %v3517
  %5137 = vmatprep.subr.bf16.mxu0 %v3520
  %5138 = vmatpush1.bf16.msra.mxu0 %v3519
  %5139 = vmatprep.subr.bf16.mxu0 %v3522
  %5140 = vmatpush1.bf16.msra.mxu0 %v3521
  %5141 = vmatprep.subr.bf16.mxu0 %v3524
  %5142 = vmatpush1.bf16.msra.mxu0 %v3523
  %5143 = vmatprep.subr.bf16.mxu0 %v3526
  %5144 = vmatpush1.bf16.msra.mxu0 %v3525
  %5145 = vmatprep.subr.bf16.mxu0 %v3528
  %5146 = vmatpush1.bf16.msra.mxu0 %v3527
  %5147 = vmatprep.subr.bf16.mxu0 %v3530
  %5148 = vmatpush1.bf16.msra.mxu0 %v3529
  %5149 = vmatprep.subr.bf16.mxu0 %v3532
  %5150 = vmatpush1.bf16.msra.mxu0 %v3531
  %5151 = vmatprep.subr.bf16.mxu0 %v3534
  %5152 = vmatpush1.bf16.msra.mxu0 %v3533
  %5153 = vmatprep.mubr.bf16.mxu0 %v944
  %5154 = vmatmul.mubr.bf16.gmra.mrb[0].mxu0 %v943
  %v5155 = vpop.f32.mrb[0].mxu0
  %v5156 = vadd.f32 %v5115, %v5155
  %v5157 = vpop.f32.mrb[0].mxu0
  %v5158 = vadd.f32 %v5117, %v5157
  %v5159 = vpop.f32.mrb[0].mxu0
  %v5160 = vpop.f32.mrb[0].mxu0
  %5161 = vdwg.mxu0
  %5162 = vmatprep.subr.bf16.mxu0 %v3536
  %5163 = vmatpush1.bf16.msra.mxu0 %v3535
  %5164 = vmatprep.subr.bf16.mxu0 %v3538
  %5165 = vmatpush1.bf16.msra.mxu0 %v3537
  %5166 = vmatprep.subr.bf16.mxu0 %v3540
  %5167 = vmatpush1.bf16.msra.mxu0 %v3539
  %5168 = vmatprep.subr.bf16.mxu0 %v3542
  %5169 = vmatpush1.bf16.msra.mxu0 %v3541
  %5170 = vmatprep.subr.bf16.mxu0 %v3544
  %5171 = vmatpush1.bf16.msra.mxu0 %v3543
  %5172 = vmatprep.subr.bf16.mxu0 %v3546
  %5173 = vmatpush1.bf16.msra.mxu0 %v3545
  %5174 = vmatprep.subr.bf16.mxu0 %v3548
  %5175 = vmatpush1.bf16.msra.mxu0 %v3547
  %5176 = vmatprep.subr.bf16.mxu0 %v3550
  %5177 = vmatpush1.bf16.msra.mxu0 %v3549
  %5178 = vmatprep.subr.bf16.mxu0 %v3552
  %5179 = vmatpush1.bf16.msra.mxu0 %v3551
  %5180 = vmatprep.subr.bf16.mxu0 %v3554
  %5181 = vmatpush1.bf16.msra.mxu0 %v3553
  %5182 = vmatprep.subr.bf16.mxu0 %v3556
  %5183 = vmatpush1.bf16.msra.mxu0 %v3555
  %5184 = vmatprep.subr.bf16.mxu0 %v3558
  %5185 = vmatpush1.bf16.msra.mxu0 %v3557
  %5186 = vmatprep.subr.bf16.mxu0 %v3560
  %5187 = vmatpush1.bf16.msra.mxu0 %v3559
  %5188 = vmatprep.subr.bf16.mxu0 %v3562
  %5189 = vmatpush1.bf16.msra.mxu0 %v3561
  %5190 = vmatprep.subr.bf16.mxu0 %v3564
  %5191 = vmatpush1.bf16.msra.mxu0 %v3563
  %5192 = vmatprep.subr.bf16.mxu0 %v3566
  %5193 = vmatpush1.bf16.msra.mxu0 %v3565
  %5194 = vmatprep.mubr.bf16.mxu0 %v946
  %5195 = vmatmul.mubr.bf16.gmra.mrb[0].mxu0 %v945
  %v5196 = vpop.f32.mrb[0].mxu0
  %v5197 = vadd.f32 %v5156, %v5196
  %v5198 = vpop.f32.mrb[0].mxu0
  %v5199 = vadd.f32 %v5158, %v5198
  %v5200 = vpop.f32.mrb[0].mxu0
  %v5201 = vpop.f32.mrb[0].mxu0
  %5202 = vdwg.mxu0
  %5203 = vmatprep.subr.bf16.mxu0 %v3568
  %5204 = vmatpush1.bf16.msra.mxu0 %v3567
  %5205 = vmatprep.subr.bf16.mxu0 %v3570
  %5206 = vmatpush1.bf16.msra.mxu0 %v3569
  %5207 = vmatprep.subr.bf16.mxu0 %v3572
  %5208 = vmatpush1.bf16.msra.mxu0 %v3571
  %5209 = vmatprep.subr.bf16.mxu0 %v3574
  %5210 = vmatpush1.bf16.msra.mxu0 %v3573
  %5211 = vmatprep.subr.bf16.mxu0 %v3576
  %5212 = vmatpush1.bf16.msra.mxu0 %v3575
  %5213 = vmatprep.subr.bf16.mxu0 %v3578
  %5214 = vmatpush1.bf16.msra.mxu0 %v3577
  %5215 = vmatprep.subr.bf16.mxu0 %v3580
  %5216 = vmatpush1.bf16.msra.mxu0 %v3579
  %5217 = vmatprep.subr.bf16.mxu0 %v3582
  %5218 = vmatpush1.bf16.msra.mxu0 %v3581
  %5219 = vmatprep.subr.bf16.mxu0 %v3584
  %5220 = vmatpush1.bf16.msra.mxu0 %v3583
  %5221 = vmatprep.subr.bf16.mxu0 %v3586
  %5222 = vmatpush1.bf16.msra.mxu0 %v3585
  %5223 = vmatprep.subr.bf16.mxu0 %v3588
  %5224 = vmatpush1.bf16.msra.mxu0 %v3587
  %5225 = vmatprep.subr.bf16.mxu0 %v3590
  %5226 = vmatpush1.bf16.msra.mxu0 %v3589
  %5227 = vmatprep.subr.bf16.mxu0 %v3592
  %5228 = vmatpush1.bf16.msra.mxu0 %v3591
  %5229 = vmatprep.subr.bf16.mxu0 %v3594
  %5230 = vmatpush1.bf16.msra.mxu0 %v3593
  %5231 = vmatprep.subr.bf16.mxu0 %v3596
  %5232 = vmatpush1.bf16.msra.mxu0 %v3595
  %5233 = vmatprep.subr.bf16.mxu0 %v3598
  %5234 = vmatpush1.bf16.msra.mxu0 %v3597
  %5235 = vmatprep.mubr.bf16.mxu0 %v948
  %5236 = vmatmul.mubr.bf16.gmra.mrb[0].mxu0 %v947
  %v5237 = vpop.f32.mrb[0].mxu0
  %v5238 = vadd.f32 %v5197, %v5237
  %v5239 = vpop.f32.mrb[0].mxu0
  %v5240 = vadd.f32 %v5199, %v5239
  %v5241 = vpop.f32.mrb[0].mxu0
  %v5242 = vpop.f32.mrb[0].mxu0
  %5243 = vdwg.mxu0
  %5244 = vmatprep.subr.bf16.mxu0 %v3600
  %5245 = vmatpush1.bf16.msra.mxu0 %v3599
  %5246 = vmatprep.subr.bf16.mxu0 %v3602
  %5247 = vmatpush1.bf16.msra.mxu0 %v3601
  %5248 = vmatprep.subr.bf16.mxu0 %v3604
  %5249 = vmatpush1.bf16.msra.mxu0 %v3603
  %5250 = vmatprep.subr.bf16.mxu0 %v3606
  %5251 = vmatpush1.bf16.msra.mxu0 %v3605
  %5252 = vmatprep.subr.bf16.mxu0 %v3608
  %5253 = vmatpush1.bf16.msra.mxu0 %v3607
  %5254 = vmatprep.subr.bf16.mxu0 %v3610
  %5255 = vmatpush1.bf16.msra.mxu0 %v3609
  %5256 = vmatprep.subr.bf16.mxu0 %v3612
  %5257 = vmatpush1.bf16.msra.mxu0 %v3611
  %5258 = vmatprep.subr.bf16.mxu0 %v3614
  %5259 = vmatpush1.bf16.msra.mxu0 %v3613
  %5260 = vmatprep.subr.bf16.mxu0 %v3616
  %5261 = vmatpush1.bf16.msra.mxu0 %v3615
  %5262 = vmatprep.subr.bf16.mxu0 %v3618
  %5263 = vmatpush1.bf16.msra.mxu0 %v3617
  %5264 = vmatprep.subr.bf16.mxu0 %v3620
  %5265 = vmatpush1.bf16.msra.mxu0 %v3619
  %5266 = vmatprep.subr.bf16.mxu0 %v3622
  %5267 = vmatpush1.bf16.msra.mxu0 %v3621
  %5268 = vmatprep.subr.bf16.mxu0 %v3624
  %5269 = vmatpush1.bf16.msra.mxu0 %v3623
  %5270 = vmatprep.subr.bf16.mxu0 %v3626
  %5271 = vmatpush1.bf16.msra.mxu0 %v3625
  %5272 = vmatprep.subr.bf16.mxu0 %v3628
  %5273 = vmatpush1.bf16.msra.mxu0 %v3627
  %5274 = vmatprep.subr.bf16.mxu0 %v3630
  %5275 = vmatpush1.bf16.msra.mxu0 %v3629
  %5276 = vmatprep.mubr.bf16.mxu0 %v950
  %5277 = vmatmul.mubr.bf16.gmra.mrb[0].mxu0 %v949
  %v5278 = vpop.f32.mrb[0].mxu0
  %v5279 = vadd.f32 %v5238, %v5278
  %v5280 = vpop.f32.mrb[0].mxu0
  %v5281 = vadd.f32 %v5240, %v5280
  %v5282 = vpop.f32.mrb[0].mxu0
  %v5283 = vpop.f32.mrb[0].mxu0
  %5284 = vdwg.mxu0
  %5285 = vmatprep.subr.bf16.mxu0 %v3632
  %5286 = vmatpush1.bf16.msra.mxu0 %v3631
  %5287 = vmatprep.subr.bf16.mxu0 %v3634
  %5288 = vmatpush1.bf16.msra.mxu0 %v3633
  %5289 = vmatprep.subr.bf16.mxu0 %v3636
  %5290 = vmatpush1.bf16.msra.mxu0 %v3635
  %5291 = vmatprep.subr.bf16.mxu0 %v3638
  %5292 = vmatpush1.bf16.msra.mxu0 %v3637
  %5293 = vmatprep.subr.bf16.mxu0 %v3640
  %5294 = vmatpush1.bf16.msra.mxu0 %v3639
  %5295 = vmatprep.subr.bf16.mxu0 %v3642
  %5296 = vmatpush1.bf16.msra.mxu0 %v3641
  %5297 = vmatprep.subr.bf16.mxu0 %v3644
  %5298 = vmatpush1.bf16.msra.mxu0 %v3643
  %5299 = vmatprep.subr.bf16.mxu0 %v3646
  %5300 = vmatpush1.bf16.msra.mxu0 %v3645
  %5301 = vmatprep.subr.bf16.mxu0 %v3648
  %5302 = vmatpush1.bf16.msra.mxu0 %v3647
  %5303 = vmatprep.subr.bf16.mxu0 %v3650
  %5304 = vmatpush1.bf16.msra.mxu0 %v3649
  %5305 = vmatprep.subr.bf16.mxu0 %v3652
  %5306 = vmatpush1.bf16.msra.mxu0 %v3651
  %5307 = vmatprep.subr.bf16.mxu0 %v3654
  %5308 = vmatpush1.bf16.msra.mxu0 %v3653
  %5309 = vmatprep.subr.bf16.mxu0 %v3656
  %5310 = vmatpush1.bf16.msra.mxu0 %v3655
  %5311 = vmatprep.subr.bf16.mxu0 %v3658
  %5312 = vmatpush1.bf16.msra.mxu0 %v3657
  %5313 = vmatprep.subr.bf16.mxu0 %v3660
  %5314 = vmatpush1.bf16.msra.mxu0 %v3659
  %5315 = vmatprep.subr.bf16.mxu0 %v3662
  %5316 = vmatpush1.bf16.msra.mxu0 %v3661
  %5317 = vmatprep.mubr.bf16.mxu0 %v952
  %5318 = vmatmul.mubr.bf16.gmra.mrb[0].mxu0 %v951
  %v5319 = vpop.f32.mrb[0].mxu0
  %v5320 = vadd.f32 %v5279, %v5319
  %v5321 = vpop.f32.mrb[0].mxu0
  %v5322 = vadd.f32 %v5281, %v5321
  %v5323 = vpop.f32.mrb[0].mxu0
  %v5324 = vpop.f32.mrb[0].mxu0
  %5325 = vdwg.mxu0
  %5326 = vmatprep.subr.bf16.mxu0 %v3664
  %5327 = vmatpush1.bf16.msra.mxu0 %v3663
  %5328 = vmatprep.subr.bf16.mxu0 %v3666
  %5329 = vmatpush1.bf16.msra.mxu0 %v3665
  %5330 = vmatprep.subr.bf16.mxu0 %v3668
  %5331 = vmatpush1.bf16.msra.mxu0 %v3667
  %5332 = vmatprep.subr.bf16.mxu0 %v3670
  %5333 = vmatpush1.bf16.msra.mxu0 %v3669
  %5334 = vmatprep.subr.bf16.mxu0 %v3672
  %5335 = vmatpush1.bf16.msra.mxu0 %v3671
  %5336 = vmatprep.subr.bf16.mxu0 %v3674
  %5337 = vmatpush1.bf16.msra.mxu0 %v3673
  %5338 = vmatprep.subr.bf16.mxu0 %v3676
  %5339 = vmatpush1.bf16.msra.mxu0 %v3675
  %5340 = vmatprep.subr.bf16.mxu0 %v3678
  %5341 = vmatpush1.bf16.msra.mxu0 %v3677
  %5342 = vmatprep.subr.bf16.mxu0 %v3680
  %5343 = vmatpush1.bf16.msra.mxu0 %v3679
  %5344 = vmatprep.subr.bf16.mxu0 %v3682
  %5345 = vmatpush1.bf16.msra.mxu0 %v3681
  %5346 = vmatprep.subr.bf16.mxu0 %v3684
  %5347 = vmatpush1.bf16.msra.mxu0 %v3683
  %5348 = vmatprep.subr.bf16.mxu0 %v3686
  %5349 = vmatpush1.bf16.msra.mxu0 %v3685
  %5350 = vmatprep.subr.bf16.mxu0 %v3688
  %5351 = vmatpush1.bf16.msra.mxu0 %v3687
  %5352 = vmatprep.subr.bf16.mxu0 %v3690
  %5353 = vmatpush1.bf16.msra.mxu0 %v3689
  %5354 = vmatprep.subr.bf16.mxu0 %v3692
  %5355 = vmatpush1.bf16.msra.mxu0 %v3691
  %5356 = vmatprep.subr.bf16.mxu0 %v3694
  %5357 = vmatpush1.bf16.msra.mxu0 %v3693
  %5358 = vmatprep.mubr.bf16.mxu0 %v954
  %5359 = vmatmul.mubr.bf16.gmra.mrb[0].mxu0 %v953
  %v5360 = vpop.f32.mrb[0].mxu0
  %v5361 = vadd.f32 %v5320, %v5360
  %v5362 = vpop.f32.mrb[0].mxu0
  %v5363 = vadd.f32 %v5322, %v5362
  %v5364 = vpop.f32.mrb[0].mxu0
  %v5365 = vpop.f32.mrb[0].mxu0
  %5366 = vdwg.mxu0
  %5367 = vmatprep.subr.bf16.mxu0 %v3696
  %5368 = vmatpush1.bf16.msra.mxu0 %v3695
  %5369 = vmatprep.subr.bf16.mxu0 %v3698
  %5370 = vmatpush1.bf16.msra.mxu0 %v3697
  %5371 = vmatprep.subr.bf16.mxu0 %v3700
  %5372 = vmatpush1.bf16.msra.mxu0 %v3699
  %5373 = vmatprep.subr.bf16.mxu0 %v3702
  %5374 = vmatpush1.bf16.msra.mxu0 %v3701
  %5375 = vmatprep.subr.bf16.mxu0 %v3704
  %5376 = vmatpush1.bf16.msra.mxu0 %v3703
  %5377 = vmatprep.subr.bf16.mxu0 %v3706
  %5378 = vmatpush1.bf16.msra.mxu0 %v3705
  %5379 = vmatprep.subr.bf16.mxu0 %v3708
  %5380 = vmatpush1.bf16.msra.mxu0 %v3707
  %5381 = vmatprep.subr.bf16.mxu0 %v3710
  %5382 = vmatpush1.bf16.msra.mxu0 %v3709
  %5383 = vmatprep.subr.bf16.mxu0 %v3712
  %5384 = vmatpush1.bf16.msra.mxu0 %v3711
  %5385 = vmatprep.subr.bf16.mxu0 %v3714
  %5386 = vmatpush1.bf16.msra.mxu0 %v3713
  %5387 = vmatprep.subr.bf16.mxu0 %v3716
  %5388 = vmatpush1.bf16.msra.mxu0 %v3715
  %5389 = vmatprep.subr.bf16.mxu0 %v3718
  %5390 = vmatpush1.bf16.msra.mxu0 %v3717
  %5391 = vmatprep.subr.bf16.mxu0 %v3720
  %5392 = vmatpush1.bf16.msra.mxu0 %v3719
  %5393 = vmatprep.subr.bf16.mxu0 %v3722
  %5394 = vmatpush1.bf16.msra.mxu0 %v3721
  %5395 = vmatprep.subr.bf16.mxu0 %v3724
  %5396 = vmatpush1.bf16.msra.mxu0 %v3723
  %5397 = vmatprep.subr.bf16.mxu0 %v3726
  %5398 = vmatpush1.bf16.msra.mxu0 %v3725
  %5399 = vmatprep.mubr.bf16.mxu0 %v956
  %5400 = vmatmul.mubr.bf16.gmra.mrb[0].mxu0 %v955
  %v5401 = vpop.f32.mrb[0].mxu0
  %v5402 = vadd.f32 %v5361, %v5401
  %v5403 = vpop.f32.mrb[0].mxu0
  %v5404 = vadd.f32 %v5363, %v5403
  %v5405 = vpop.f32.mrb[0].mxu0
  %v5406 = vpop.f32.mrb[0].mxu0
  %5407 = vdwg.mxu0
  %5408 = vmatprep.subr.bf16.mxu0 %v3728
  %5409 = vmatpush1.bf16.msra.mxu0 %v3727
  %5410 = vmatprep.subr.bf16.mxu0 %v3730
  %5411 = vmatpush1.bf16.msra.mxu0 %v3729
  %5412 = vmatprep.subr.bf16.mxu0 %v3732
  %5413 = vmatpush1.bf16.msra.mxu0 %v3731
  %5414 = vmatprep.subr.bf16.mxu0 %v3734
  %5415 = vmatpush1.bf16.msra.mxu0 %v3733
  %5416 = vmatprep.subr.bf16.mxu0 %v3736
  %5417 = vmatpush1.bf16.msra.mxu0 %v3735
  %5418 = vmatprep.subr.bf16.mxu0 %v3738
  %5419 = vmatpush1.bf16.msra.mxu0 %v3737
  %5420 = vmatprep.subr.bf16.mxu0 %v3740
  %5421 = vmatpush1.bf16.msra.mxu0 %v3739
  %5422 = vmatprep.subr.bf16.mxu0 %v3742
  %5423 = vmatpush1.bf16.msra.mxu0 %v3741
  %5424 = vmatprep.subr.bf16.mxu0 %v3744
  %5425 = vmatpush1.bf16.msra.mxu0 %v3743
  %5426 = vmatprep.subr.bf16.mxu0 %v3746
  %5427 = vmatpush1.bf16.msra.mxu0 %v3745
  %5428 = vmatprep.subr.bf16.mxu0 %v3748
  %5429 = vmatpush1.bf16.msra.mxu0 %v3747
  %5430 = vmatprep.subr.bf16.mxu0 %v3750
  %5431 = vmatpush1.bf16.msra.mxu0 %v3749
  %5432 = vmatprep.subr.bf16.mxu0 %v3752
  %5433 = vmatpush1.bf16.msra.mxu0 %v3751
  %5434 = vmatprep.subr.bf16.mxu0 %v3754
  %5435 = vmatpush1.bf16.msra.mxu0 %v3753
  %5436 = vmatprep.subr.bf16.mxu0 %v3756
  %5437 = vmatpush1.bf16.msra.mxu0 %v3755
  %5438 = vmatprep.subr.bf16.mxu0 %v3758
  %5439 = vmatpush1.bf16.msra.mxu0 %v3757
  %5440 = vmatprep.mubr.bf16.mxu0 %v958
  %5441 = vmatmul.mubr.bf16.gmra.mrb[0].mxu0 %v957
  %v5442 = vpop.f32.mrb[0].mxu0
  %v5443 = vadd.f32 %v5402, %v5442
  %v5444 = vpop.f32.mrb[0].mxu0
  %v5445 = vadd.f32 %v5404, %v5444
  %v5446 = vpop.f32.mrb[0].mxu0
  %v5447 = vpop.f32.mrb[0].mxu0
  %5448 = vdwg.mxu0
  %5449 = vmatprep.subr.bf16.mxu0 %v3760
  %5450 = vmatpush1.bf16.msra.mxu0 %v3759
  %5451 = vmatprep.subr.bf16.mxu0 %v3762
  %5452 = vmatpush1.bf16.msra.mxu0 %v3761
  %5453 = vmatprep.subr.bf16.mxu0 %v3764
  %5454 = vmatpush1.bf16.msra.mxu0 %v3763
  %5455 = vmatprep.subr.bf16.mxu0 %v3766
  %5456 = vmatpush1.bf16.msra.mxu0 %v3765
  %5457 = vmatprep.subr.bf16.mxu0 %v3768
  %5458 = vmatpush1.bf16.msra.mxu0 %v3767
  %5459 = vmatprep.subr.bf16.mxu0 %v3770
  %5460 = vmatpush1.bf16.msra.mxu0 %v3769
  %5461 = vmatprep.subr.bf16.mxu0 %v3772
  %5462 = vmatpush1.bf16.msra.mxu0 %v3771
  %5463 = vmatprep.subr.bf16.mxu0 %v3774
  %5464 = vmatpush1.bf16.msra.mxu0 %v3773
  %5465 = vmatprep.subr.bf16.mxu0 %v3776
  %5466 = vmatpush1.bf16.msra.mxu0 %v3775
  %5467 = vmatprep.subr.bf16.mxu0 %v3778
  %5468 = vmatpush1.bf16.msra.mxu0 %v3777
  %5469 = vmatprep.subr.bf16.mxu0 %v3780
  %5470 = vmatpush1.bf16.msra.mxu0 %v3779
  %5471 = vmatprep.subr.bf16.mxu0 %v3782
  %5472 = vmatpush1.bf16.msra.mxu0 %v3781
  %5473 = vmatprep.subr.bf16.mxu0 %v3784
  %5474 = vmatpush1.bf16.msra.mxu0 %v3783
  %5475 = vmatprep.subr.bf16.mxu0 %v3786
  %5476 = vmatpush1.bf16.msra.mxu0 %v3785
  %5477 = vmatprep.subr.bf16.mxu0 %v3788
  %5478 = vmatpush1.bf16.msra.mxu0 %v3787
  %5479 = vmatprep.subr.bf16.mxu0 %v3790
  %5480 = vmatpush1.bf16.msra.mxu0 %v3789
  %5481 = vmatprep.mubr.bf16.mxu0 %v960
  %5482 = vmatmul.mubr.bf16.gmra.mrb[0].mxu0 %v959
  %v5483 = vpop.f32.mrb[0].mxu0
  %v5484 = vadd.f32 %v5443, %v5483
  %v5485 = vpop.f32.mrb[0].mxu0
  %v5486 = vadd.f32 %v5445, %v5485
  %v5487 = vpop.f32.mrb[0].mxu0
  %v5488 = vpop.f32.mrb[0].mxu0
  %5489 = vdwg.mxu0
  %5490 = vmatprep.subr.bf16.mxu0 %v3792
  %5491 = vmatpush1.bf16.msra.mxu0 %v3791
  %5492 = vmatprep.subr.bf16.mxu0 %v3794
  %5493 = vmatpush1.bf16.msra.mxu0 %v3793
  %5494 = vmatprep.subr.bf16.mxu0 %v3796
  %5495 = vmatpush1.bf16.msra.mxu0 %v3795
  %5496 = vmatprep.subr.bf16.mxu0 %v3798
  %5497 = vmatpush1.bf16.msra.mxu0 %v3797
  %5498 = vmatprep.subr.bf16.mxu0 %v3800
  %5499 = vmatpush1.bf16.msra.mxu0 %v3799
  %5500 = vmatprep.subr.bf16.mxu0 %v3802
  %5501 = vmatpush1.bf16.msra.mxu0 %v3801
  %5502 = vmatprep.subr.bf16.mxu0 %v3804
  %5503 = vmatpush1.bf16.msra.mxu0 %v3803
  %5504 = vmatprep.subr.bf16.mxu0 %v3806
  %5505 = vmatpush1.bf16.msra.mxu0 %v3805
  %5506 = vmatprep.subr.bf16.mxu0 %v3808
  %5507 = vmatpush1.bf16.msra.mxu0 %v3807
  %5508 = vmatprep.subr.bf16.mxu0 %v3810
  %5509 = vmatpush1.bf16.msra.mxu0 %v3809
  %5510 = vmatprep.subr.bf16.mxu0 %v3812
  %5511 = vmatpush1.bf16.msra.mxu0 %v3811
  %5512 = vmatprep.subr.bf16.mxu0 %v3814
  %5513 = vmatpush1.bf16.msra.mxu0 %v3813
  %5514 = vmatprep.subr.bf16.mxu0 %v3816
  %5515 = vmatpush1.bf16.msra.mxu0 %v3815
  %5516 = vmatprep.subr.bf16.mxu0 %v3818
  %5517 = vmatpush1.bf16.msra.mxu0 %v3817
  %5518 = vmatprep.subr.bf16.mxu0 %v3820
  %5519 = vmatpush1.bf16.msra.mxu0 %v3819
  %5520 = vmatprep.subr.bf16.mxu0 %v3822
  %5521 = vmatpush1.bf16.msra.mxu0 %v3821
  %5522 = vmatprep.mubr.bf16.mxu0 %v962
  %5523 = vmatmul.mubr.bf16.gmra.mrb[0].mxu0 %v961
  %v5524 = vpop.f32.mrb[0].mxu0
  %v5525 = vadd.f32 %v5484, %v5524
  %v5526 = vpop.f32.mrb[0].mxu0
  %v5527 = vadd.f32 %v5486, %v5526
  %v5528 = vpop.f32.mrb[0].mxu0
  %v5529 = vpop.f32.mrb[0].mxu0
  %5530 = vdwg.mxu0
  %5531 = vmatprep.subr.bf16.mxu0 %v3824
  %5532 = vmatpush1.bf16.msra.mxu0 %v3823
  %5533 = vmatprep.subr.bf16.mxu0 %v3826
  %5534 = vmatpush1.bf16.msra.mxu0 %v3825
  %5535 = vmatprep.subr.bf16.mxu0 %v3828
  %5536 = vmatpush1.bf16.msra.mxu0 %v3827
  %5537 = vmatprep.subr.bf16.mxu0 %v3830
  %5538 = vmatpush1.bf16.msra.mxu0 %v3829
  %5539 = vmatprep.subr.bf16.mxu0 %v3832
  %5540 = vmatpush1.bf16.msra.mxu0 %v3831
  %5541 = vmatprep.subr.bf16.mxu0 %v3834
  %5542 = vmatpush1.bf16.msra.mxu0 %v3833
  %5543 = vmatprep.subr.bf16.mxu0 %v3836
  %5544 = vmatpush1.bf16.msra.mxu0 %v3835
  %5545 = vmatprep.subr.bf16.mxu0 %v3838
  %5546 = vmatpush1.bf16.msra.mxu0 %v3837
  %5547 = vmatprep.subr.bf16.mxu0 %v3840
  %5548 = vmatpush1.bf16.msra.mxu0 %v3839
  %5549 = vmatprep.subr.bf16.mxu0 %v3842
  %5550 = vmatpush1.bf16.msra.mxu0 %v3841
  %5551 = vmatprep.subr.bf16.mxu0 %v3844
  %5552 = vmatpush1.bf16.msra.mxu0 %v3843
  %5553 = vmatprep.subr.bf16.mxu0 %v3846
  %5554 = vmatpush1.bf16.msra.mxu0 %v3845
  %5555 = vmatprep.subr.bf16.mxu0 %v3848
  %5556 = vmatpush1.bf16.msra.mxu0 %v3847
  %5557 = vmatprep.subr.bf16.mxu0 %v3850
  %5558 = vmatpush1.bf16.msra.mxu0 %v3849
  %5559 = vmatprep.subr.bf16.mxu0 %v3852
  %5560 = vmatpush1.bf16.msra.mxu0 %v3851
  %5561 = vmatprep.subr.bf16.mxu0 %v3854
  %5562 = vmatpush1.bf16.msra.mxu0 %v3853
  %5563 = vmatprep.mubr.bf16.mxu0 %v964
  %5564 = vmatmul.mubr.bf16.gmra.mrb[0].mxu0 %v963
  %v5565 = vpop.f32.mrb[0].mxu0
  %v5566 = vadd.f32 %v5525, %v5565
  %v5567 = vpop.f32.mrb[0].mxu0
  %v5568 = vadd.f32 %v5527, %v5567
  %v5569 = vpop.f32.mrb[0].mxu0
  %v5570 = vpop.f32.mrb[0].mxu0
  %5571 = vdwg.mxu0
  %5572 = vmatprep.subr.bf16.mxu0 %v3856
  %5573 = vmatpush1.bf16.msra.mxu0 %v3855
  %5574 = vmatprep.subr.bf16.mxu0 %v3858
  %5575 = vmatpush1.bf16.msra.mxu0 %v3857
  %5576 = vmatprep.subr.bf16.mxu0 %v3860
  %5577 = vmatpush1.bf16.msra.mxu0 %v3859
  %5578 = vmatprep.subr.bf16.mxu0 %v3862
  %5579 = vmatpush1.bf16.msra.mxu0 %v3861
  %5580 = vmatprep.subr.bf16.mxu0 %v3864
  %5581 = vmatpush1.bf16.msra.mxu0 %v3863
  %5582 = vmatprep.subr.bf16.mxu0 %v3866
  %5583 = vmatpush1.bf16.msra.mxu0 %v3865
  %5584 = vmatprep.subr.bf16.mxu0 %v3868
  %5585 = vmatpush1.bf16.msra.mxu0 %v3867
  %5586 = vmatprep.subr.bf16.mxu0 %v3870
  %5587 = vmatpush1.bf16.msra.mxu0 %v3869
  %5588 = vmatprep.subr.bf16.mxu0 %v3872
  %5589 = vmatpush1.bf16.msra.mxu0 %v3871
  %5590 = vmatprep.subr.bf16.mxu0 %v3874
  %5591 = vmatpush1.bf16.msra.mxu0 %v3873
  %5592 = vmatprep.subr.bf16.mxu0 %v3876
  %5593 = vmatpush1.bf16.msra.mxu0 %v3875
  %5594 = vmatprep.subr.bf16.mxu0 %v3878
  %5595 = vmatpush1.bf16.msra.mxu0 %v3877
  %5596 = vmatprep.subr.bf16.mxu0 %v3880
  %5597 = vmatpush1.bf16.msra.mxu0 %v3879
  %5598 = vmatprep.subr.bf16.mxu0 %v3882
  %5599 = vmatpush1.bf16.msra.mxu0 %v3881
  %5600 = vmatprep.subr.bf16.mxu0 %v3884
  %5601 = vmatpush1.bf16.msra.mxu0 %v3883
  %5602 = vmatprep.subr.bf16.mxu0 %v3886
  %5603 = vmatpush1.bf16.msra.mxu0 %v3885
  %5604 = vmatprep.mubr.bf16.mxu0 %v966
  %5605 = vmatmul.mubr.bf16.gmra.mrb[0].mxu0 %v965
  %v5606 = vpop.f32.mrb[0].mxu0
  %v5607 = vadd.f32 %v5566, %v5606
  %v5608 = vpop.f32.mrb[0].mxu0
  %v5609 = vadd.f32 %v5568, %v5608
  %v5610 = vpop.f32.mrb[0].mxu0
  %v5611 = vpop.f32.mrb[0].mxu0
  %5612 = vdwg.mxu0
  %5613 = vmatprep.subr.bf16.mxu0 %v3888
  %5614 = vmatpush1.bf16.msra.mxu0 %v3887
  %5615 = vmatprep.subr.bf16.mxu0 %v3890
  %5616 = vmatpush1.bf16.msra.mxu0 %v3889
  %5617 = vmatprep.subr.bf16.mxu0 %v3892
  %5618 = vmatpush1.bf16.msra.mxu0 %v3891
  %5619 = vmatprep.subr.bf16.mxu0 %v3894
  %5620 = vmatpush1.bf16.msra.mxu0 %v3893
  %5621 = vmatprep.subr.bf16.mxu0 %v3896
  %5622 = vmatpush1.bf16.msra.mxu0 %v3895
  %5623 = vmatprep.subr.bf16.mxu0 %v3898
  %5624 = vmatpush1.bf16.msra.mxu0 %v3897
  %5625 = vmatprep.subr.bf16.mxu0 %v3900
  %5626 = vmatpush1.bf16.msra.mxu0 %v3899
  %5627 = vmatprep.subr.bf16.mxu0 %v3902
  %5628 = vmatpush1.bf16.msra.mxu0 %v3901
  %5629 = vmatprep.subr.bf16.mxu0 %v3904
  %5630 = vmatpush1.bf16.msra.mxu0 %v3903
  %5631 = vmatprep.subr.bf16.mxu0 %v3906
  %5632 = vmatpush1.bf16.msra.mxu0 %v3905
  %5633 = vmatprep.subr.bf16.mxu0 %v3908
  %5634 = vmatpush1.bf16.msra.mxu0 %v3907
  %5635 = vmatprep.subr.bf16.mxu0 %v3910
  %5636 = vmatpush1.bf16.msra.mxu0 %v3909
  %5637 = vmatprep.subr.bf16.mxu0 %v3912
  %5638 = vmatpush1.bf16.msra.mxu0 %v3911
  %5639 = vmatprep.subr.bf16.mxu0 %v3914
  %5640 = vmatpush1.bf16.msra.mxu0 %v3913
  %5641 = vmatprep.subr.bf16.mxu0 %v3916
  %5642 = vmatpush1.bf16.msra.mxu0 %v3915
  %5643 = vmatprep.subr.bf16.mxu0 %v3918
  %5644 = vmatpush1.bf16.msra.mxu0 %v3917
  %5645 = vmatprep.mubr.bf16.mxu0 %v968
  %5646 = vmatmul.mubr.bf16.gmra.mrb[0].mxu0 %v967
  %v5647 = vpop.f32.mrb[0].mxu0
  %v5648 = vadd.f32 %v5607, %v5647
  %v5649 = vpop.f32.mrb[0].mxu0
  %v5650 = vadd.f32 %v5609, %v5649
  %v5651 = vpop.f32.mrb[0].mxu0
  %v5652 = vpop.f32.mrb[0].mxu0
  %5653 = vdwg.mxu0
  %5654 = vmatprep.subr.bf16.mxu0 %v3920
  %5655 = vmatpush1.bf16.msra.mxu0 %v3919
  %5656 = vmatprep.subr.bf16.mxu0 %v3922
  %5657 = vmatpush1.bf16.msra.mxu0 %v3921
  %5658 = vmatprep.subr.bf16.mxu0 %v3924
  %5659 = vmatpush1.bf16.msra.mxu0 %v3923
  %5660 = vmatprep.subr.bf16.mxu0 %v3926
  %5661 = vmatpush1.bf16.msra.mxu0 %v3925
  %5662 = vmatprep.subr.bf16.mxu0 %v3928
  %5663 = vmatpush1.bf16.msra.mxu0 %v3927
  %5664 = vmatprep.subr.bf16.mxu0 %v3930
  %5665 = vmatpush1.bf16.msra.mxu0 %v3929
  %5666 = vmatprep.subr.bf16.mxu0 %v3932
  %5667 = vmatpush1.bf16.msra.mxu0 %v3931
  %5668 = vmatprep.subr.bf16.mxu0 %v3934
  %5669 = vmatpush1.bf16.msra.mxu0 %v3933
  %5670 = vmatprep.subr.bf16.mxu0 %v3936
  %5671 = vmatpush1.bf16.msra.mxu0 %v3935
  %5672 = vmatprep.subr.bf16.mxu0 %v3938
  %5673 = vmatpush1.bf16.msra.mxu0 %v3937
  %5674 = vmatprep.subr.bf16.mxu0 %v3940
  %5675 = vmatpush1.bf16.msra.mxu0 %v3939
  %5676 = vmatprep.subr.bf16.mxu0 %v3942
  %5677 = vmatpush1.bf16.msra.mxu0 %v3941
  %5678 = vmatprep.subr.bf16.mxu0 %v3944
  %5679 = vmatpush1.bf16.msra.mxu0 %v3943
  %5680 = vmatprep.subr.bf16.mxu0 %v3946
  %5681 = vmatpush1.bf16.msra.mxu0 %v3945
  %5682 = vmatprep.subr.bf16.mxu0 %v3948
  %5683 = vmatpush1.bf16.msra.mxu0 %v3947
  %5684 = vmatprep.subr.bf16.mxu0 %v3950
  %5685 = vmatpush1.bf16.msra.mxu0 %v3949
  %5686 = vmatprep.mubr.bf16.mxu0 %v970
  %5687 = vmatmul.mubr.bf16.gmra.mrb[0].mxu0 %v969
  %v5688 = vpop.f32.mrb[0].mxu0
  %v5689 = vadd.f32 %v5648, %v5688
  %v5690 = vpop.f32.mrb[0].mxu0
  %v5691 = vadd.f32 %v5650, %v5690
  %v5692 = vpop.f32.mrb[0].mxu0
  %v5693 = vpop.f32.mrb[0].mxu0
  %5694 = vdwg.mxu0
  %5695 = vmatprep.subr.bf16.mxu0 %v3952
  %5696 = vmatpush1.bf16.msra.mxu0 %v3951
  %5697 = vmatprep.subr.bf16.mxu0 %v3954
  %5698 = vmatpush1.bf16.msra.mxu0 %v3953
  %5699 = vmatprep.subr.bf16.mxu0 %v3956
  %5700 = vmatpush1.bf16.msra.mxu0 %v3955
  %5701 = vmatprep.subr.bf16.mxu0 %v3958
  %5702 = vmatpush1.bf16.msra.mxu0 %v3957
  %5703 = vmatprep.subr.bf16.mxu0 %v3960
  %5704 = vmatpush1.bf16.msra.mxu0 %v3959
  %5705 = vmatprep.subr.bf16.mxu0 %v3962
  %5706 = vmatpush1.bf16.msra.mxu0 %v3961
  %5707 = vmatprep.subr.bf16.mxu0 %v3964
  %5708 = vmatpush1.bf16.msra.mxu0 %v3963
  %5709 = vmatprep.subr.bf16.mxu0 %v3966
  %5710 = vmatpush1.bf16.msra.mxu0 %v3965
  %5711 = vmatprep.subr.bf16.mxu0 %v3968
  %5712 = vmatpush1.bf16.msra.mxu0 %v3967
  %5713 = vmatprep.subr.bf16.mxu0 %v3970
  %5714 = vmatpush1.bf16.msra.mxu0 %v3969
  %5715 = vmatprep.subr.bf16.mxu0 %v3972
  %5716 = vmatpush1.bf16.msra.mxu0 %v3971
  %5717 = vmatprep.subr.bf16.mxu0 %v3974
  %5718 = vmatpush1.bf16.msra.mxu0 %v3973
  %5719 = vmatprep.subr.bf16.mxu0 %v3976
  %5720 = vmatpush1.bf16.msra.mxu0 %v3975
  %5721 = vmatprep.subr.bf16.mxu0 %v3978
  %5722 = vmatpush1.bf16.msra.mxu0 %v3977
  %5723 = vmatprep.subr.bf16.mxu0 %v3980
  %5724 = vmatpush1.bf16.msra.mxu0 %v3979
  %5725 = vmatprep.subr.bf16.mxu0 %v3982
  %5726 = vmatpush1.bf16.msra.mxu0 %v3981
  %5727 = vmatprep.mubr.bf16.mxu0 %v972
  %5728 = vmatmul.mubr.bf16.gmra.mrb[0].mxu0 %v971
  %v5729 = vpop.f32.mrb[0].mxu0
  %v5730 = vadd.f32 %v5689, %v5729
  %v5731 = vpop.f32.mrb[0].mxu0
  %v5732 = vadd.f32 %v5691, %v5731
  %v5733 = vpop.f32.mrb[0].mxu0
  %v5734 = vpop.f32.mrb[0].mxu0
  %5735 = vdwg.mxu0
  %5736 = vmatprep.subr.bf16.mxu0 %v3984
  %5737 = vmatpush1.bf16.msra.mxu0 %v3983
  %5738 = vmatprep.subr.bf16.mxu0 %v3986
  %5739 = vmatpush1.bf16.msra.mxu0 %v3985
  %5740 = vmatprep.subr.bf16.mxu0 %v3988
  %5741 = vmatpush1.bf16.msra.mxu0 %v3987
  %5742 = vmatprep.subr.bf16.mxu0 %v3990
  %5743 = vmatpush1.bf16.msra.mxu0 %v3989
  %5744 = vmatprep.subr.bf16.mxu0 %v3992
  %5745 = vmatpush1.bf16.msra.mxu0 %v3991
  %5746 = vmatprep.subr.bf16.mxu0 %v3994
  %5747 = vmatpush1.bf16.msra.mxu0 %v3993
  %5748 = vmatprep.subr.bf16.mxu0 %v3996
  %5749 = vmatpush1.bf16.msra.mxu0 %v3995
  %5750 = vmatprep.subr.bf16.mxu0 %v3998
  %5751 = vmatpush1.bf16.msra.mxu0 %v3997
  %5752 = vmatprep.subr.bf16.mxu0 %v4000
  %5753 = vmatpush1.bf16.msra.mxu0 %v3999
  %5754 = vmatprep.subr.bf16.mxu0 %v4002
  %5755 = vmatpush1.bf16.msra.mxu0 %v4001
  %5756 = vmatprep.subr.bf16.mxu0 %v4004
  %5757 = vmatpush1.bf16.msra.mxu0 %v4003
  %5758 = vmatprep.subr.bf16.mxu0 %v4006
  %5759 = vmatpush1.bf16.msra.mxu0 %v4005
  %5760 = vmatprep.subr.bf16.mxu0 %v4008
  %5761 = vmatpush1.bf16.msra.mxu0 %v4007
  %5762 = vmatprep.subr.bf16.mxu0 %v4010
  %5763 = vmatpush1.bf16.msra.mxu0 %v4009
  %5764 = vmatprep.subr.bf16.mxu0 %v4012
  %5765 = vmatpush1.bf16.msra.mxu0 %v4011
  %5766 = vmatprep.subr.bf16.mxu0 %v4014
  %5767 = vmatpush1.bf16.msra.mxu0 %v4013
  %5768 = vmatprep.mubr.bf16.mxu0 %v974
  %5769 = vmatmul.mubr.bf16.gmra.mrb[0].mxu0 %v973
  %v5770 = vpop.f32.mrb[0].mxu0
  %v5771 = vadd.f32 %v5730, %v5770
  %v5772 = vpop.f32.mrb[0].mxu0
  %v5773 = vadd.f32 %v5732, %v5772
  %v5774 = vpop.f32.mrb[0].mxu0
  %v5775 = vpop.f32.mrb[0].mxu0
  %5776 = vdwg.mxu0
  %5777 = vmatprep.subr.bf16.mxu0 %v4016
  %5778 = vmatpush1.bf16.msra.mxu0 %v4015
  %5779 = vmatprep.subr.bf16.mxu0 %v4018
  %5780 = vmatpush1.bf16.msra.mxu0 %v4017
  %5781 = vmatprep.subr.bf16.mxu0 %v4020
  %5782 = vmatpush1.bf16.msra.mxu0 %v4019
  %5783 = vmatprep.subr.bf16.mxu0 %v4022
  %5784 = vmatpush1.bf16.msra.mxu0 %v4021
  %5785 = vmatprep.subr.bf16.mxu0 %v4024
  %5786 = vmatpush1.bf16.msra.mxu0 %v4023
  %5787 = vmatprep.subr.bf16.mxu0 %v4026
  %5788 = vmatpush1.bf16.msra.mxu0 %v4025
  %5789 = vmatprep.subr.bf16.mxu0 %v4028
  %5790 = vmatpush1.bf16.msra.mxu0 %v4027
  %5791 = vmatprep.subr.bf16.mxu0 %v4030
  %5792 = vmatpush1.bf16.msra.mxu0 %v4029
  %5793 = vmatprep.subr.bf16.mxu0 %v4032
  %5794 = vmatpush1.bf16.msra.mxu0 %v4031
  %5795 = vmatprep.subr.bf16.mxu0 %v4034
  %5796 = vmatpush1.bf16.msra.mxu0 %v4033
  %5797 = vmatprep.subr.bf16.mxu0 %v4036
  %5798 = vmatpush1.bf16.msra.mxu0 %v4035
  %5799 = vmatprep.subr.bf16.mxu0 %v4038
  %5800 = vmatpush1.bf16.msra.mxu0 %v4037
  %5801 = vmatprep.subr.bf16.mxu0 %v4040
  %5802 = vmatpush1.bf16.msra.mxu0 %v4039
  %5803 = vmatprep.subr.bf16.mxu0 %v4042
  %5804 = vmatpush1.bf16.msra.mxu0 %v4041
  %5805 = vmatprep.subr.bf16.mxu0 %v4044
  %5806 = vmatpush1.bf16.msra.mxu0 %v4043
  %5807 = vmatprep.subr.bf16.mxu0 %v4046
  %5808 = vmatpush1.bf16.msra.mxu0 %v4045
  %5809 = vmatprep.mubr.bf16.mxu0 %v976
  %5810 = vmatmul.mubr.bf16.gmra.mrb[0].mxu0 %v975
  %v5811 = vpop.f32.mrb[0].mxu0
  %v5812 = vadd.f32 %v5771, %v5811
  %v5813 = vpop.f32.mrb[0].mxu0
  %v5814 = vadd.f32 %v5773, %v5813
  %v5815 = vpop.f32.mrb[0].mxu0
  %v5816 = vpop.f32.mrb[0].mxu0
  %5817 = vdwg.mxu0
  %5818 = vmatprep.subr.bf16.mxu0 %v4048
  %5819 = vmatpush1.bf16.msra.mxu0 %v4047
  %5820 = vmatprep.subr.bf16.mxu0 %v4050
  %5821 = vmatpush1.bf16.msra.mxu0 %v4049
  %5822 = vmatprep.subr.bf16.mxu0 %v4052
  %5823 = vmatpush1.bf16.msra.mxu0 %v4051
  %5824 = vmatprep.subr.bf16.mxu0 %v4054
  %5825 = vmatpush1.bf16.msra.mxu0 %v4053
  %5826 = vmatprep.subr.bf16.mxu0 %v4056
  %5827 = vmatpush1.bf16.msra.mxu0 %v4055
  %5828 = vmatprep.subr.bf16.mxu0 %v4058
  %5829 = vmatpush1.bf16.msra.mxu0 %v4057
  %5830 = vmatprep.subr.bf16.mxu0 %v4060
  %5831 = vmatpush1.bf16.msra.mxu0 %v4059
  %5832 = vmatprep.subr.bf16.mxu0 %v4062
  %5833 = vmatpush1.bf16.msra.mxu0 %v4061
  %5834 = vmatprep.subr.bf16.mxu0 %v4064
  %5835 = vmatpush1.bf16.msra.mxu0 %v4063
  %5836 = vmatprep.subr.bf16.mxu0 %v4066
  %5837 = vmatpush1.bf16.msra.mxu0 %v4065
  %5838 = vmatprep.subr.bf16.mxu0 %v4068
  %5839 = vmatpush1.bf16.msra.mxu0 %v4067
  %5840 = vmatprep.subr.bf16.mxu0 %v4070
  %5841 = vmatpush1.bf16.msra.mxu0 %v4069
  %5842 = vmatprep.subr.bf16.mxu0 %v4072
  %5843 = vmatpush1.bf16.msra.mxu0 %v4071
  %5844 = vmatprep.subr.bf16.mxu0 %v4074
  %5845 = vmatpush1.bf16.msra.mxu0 %v4073
  %5846 = vmatprep.subr.bf16.mxu0 %v4076
  %5847 = vmatpush1.bf16.msra.mxu0 %v4075
  %5848 = vmatprep.subr.bf16.mxu0 %v4078
  %5849 = vmatpush1.bf16.msra.mxu0 %v4077
  %5850 = vmatprep.mubr.bf16.mxu0 %v978
  %5851 = vmatmul.mubr.bf16.gmra.mrb[0].mxu0 %v977
  %v5852 = vpop.f32.mrb[0].mxu0
  %v5853 = vadd.f32 %v5812, %v5852
  %v5854 = vpop.f32.mrb[0].mxu0
  %v5855 = vadd.f32 %v5814, %v5854
  %v5856 = vpop.f32.mrb[0].mxu0
  %v5857 = vpop.f32.mrb[0].mxu0
  %5858 = vdwg.mxu0
  %5859 = vmatprep.subr.bf16.mxu0 %v4080
  %5860 = vmatpush1.bf16.msra.mxu0 %v4079
  %5861 = vmatprep.subr.bf16.mxu0 %v4082
  %5862 = vmatpush1.bf16.msra.mxu0 %v4081
  %5863 = vmatprep.subr.bf16.mxu0 %v4084
  %5864 = vmatpush1.bf16.msra.mxu0 %v4083
  %5865 = vmatprep.subr.bf16.mxu0 %v4086
  %5866 = vmatpush1.bf16.msra.mxu0 %v4085
  %5867 = vmatprep.subr.bf16.mxu0 %v4088
  %5868 = vmatpush1.bf16.msra.mxu0 %v4087
  %5869 = vmatprep.subr.bf16.mxu0 %v4090
  %5870 = vmatpush1.bf16.msra.mxu0 %v4089
  %5871 = vmatprep.subr.bf16.mxu0 %v4092
  %5872 = vmatpush1.bf16.msra.mxu0 %v4091
  %5873 = vmatprep.subr.bf16.mxu0 %v4094
  %5874 = vmatpush1.bf16.msra.mxu0 %v4093
  %5875 = vmatprep.subr.bf16.mxu0 %v4096
  %5876 = vmatpush1.bf16.msra.mxu0 %v4095
  %5877 = vmatprep.subr.bf16.mxu0 %v4098
  %5878 = vmatpush1.bf16.msra.mxu0 %v4097
  %5879 = vmatprep.subr.bf16.mxu0 %v4100
  %5880 = vmatpush1.bf16.msra.mxu0 %v4099
  %5881 = vmatprep.subr.bf16.mxu0 %v4102
  %5882 = vmatpush1.bf16.msra.mxu0 %v4101
  %5883 = vmatprep.subr.bf16.mxu0 %v4104
  %5884 = vmatpush1.bf16.msra.mxu0 %v4103
  %5885 = vmatprep.subr.bf16.mxu0 %v4106
  %5886 = vmatpush1.bf16.msra.mxu0 %v4105
  %5887 = vmatprep.subr.bf16.mxu0 %v4108
  %5888 = vmatpush1.bf16.msra.mxu0 %v4107
  %5889 = vmatprep.subr.bf16.mxu0 %v4110
  %5890 = vmatpush1.bf16.msra.mxu0 %v4109
  %5891 = vmatprep.mubr.bf16.mxu0 %v980
  %5892 = vmatmul.mubr.bf16.gmra.mrb[0].mxu0 %v979
  %v5893 = vpop.f32.mrb[0].mxu0
  %v5894 = vadd.f32 %v5853, %v5893
  %v5895 = vpop.f32.mrb[0].mxu0
  %v5896 = vadd.f32 %v5855, %v5895
  %v5897 = vpop.f32.mrb[0].mxu0
  %v5898 = vpop.f32.mrb[0].mxu0
  %5899 = vdwg.mxu0
  %5900 = vmatprep.subr.bf16.mxu0 %v4112
  %5901 = vmatpush1.bf16.msra.mxu0 %v4111
  %5902 = vmatprep.subr.bf16.mxu0 %v4114
  %5903 = vmatpush1.bf16.msra.mxu0 %v4113
  %5904 = vmatprep.subr.bf16.mxu0 %v4116
  %5905 = vmatpush1.bf16.msra.mxu0 %v4115
  %5906 = vmatprep.subr.bf16.mxu0 %v4118
  %5907 = vmatpush1.bf16.msra.mxu0 %v4117
  %5908 = vmatprep.subr.bf16.mxu0 %v4120
  %5909 = vmatpush1.bf16.msra.mxu0 %v4119
  %5910 = vmatprep.subr.bf16.mxu0 %v4122
  %5911 = vmatpush1.bf16.msra.mxu0 %v4121
  %5912 = vmatprep.subr.bf16.mxu0 %v4124
  %5913 = vmatpush1.bf16.msra.mxu0 %v4123
  %5914 = vmatprep.subr.bf16.mxu0 %v4126
  %5915 = vmatpush1.bf16.msra.mxu0 %v4125
  %5916 = vmatprep.subr.bf16.mxu0 %v4128
  %5917 = vmatpush1.bf16.msra.mxu0 %v4127
  %5918 = vmatprep.subr.bf16.mxu0 %v4130
  %5919 = vmatpush1.bf16.msra.mxu0 %v4129
  %5920 = vmatprep.subr.bf16.mxu0 %v4132
  %5921 = vmatpush1.bf16.msra.mxu0 %v4131
  %5922 = vmatprep.subr.bf16.mxu0 %v4134
  %5923 = vmatpush1.bf16.msra.mxu0 %v4133
  %5924 = vmatprep.subr.bf16.mxu0 %v4136
  %5925 = vmatpush1.bf16.msra.mxu0 %v4135
  %5926 = vmatprep.subr.bf16.mxu0 %v4138
  %5927 = vmatpush1.bf16.msra.mxu0 %v4137
  %5928 = vmatprep.subr.bf16.mxu0 %v4140
  %5929 = vmatpush1.bf16.msra.mxu0 %v4139
  %5930 = vmatprep.subr.bf16.mxu0 %v4142
  %5931 = vmatpush1.bf16.msra.mxu0 %v4141
  %5932 = vmatprep.mubr.bf16.mxu0 %v982
  %5933 = vmatmul.mubr.bf16.gmra.mrb[0].mxu0 %v981
  %v5934 = vpop.f32.mrb[0].mxu0
  %v5935 = vadd.f32 %v5894, %v5934
  %v5936 = vpop.f32.mrb[0].mxu0
  %v5937 = vadd.f32 %v5896, %v5936
  %v5938 = vpop.f32.mrb[0].mxu0
  %v5939 = vpop.f32.mrb[0].mxu0
  %5940 = vdwg.mxu0
  %5941 = vmatprep.subr.bf16.mxu0 %v4144
  %5942 = vmatpush1.bf16.msra.mxu0 %v4143
  %5943 = vmatprep.subr.bf16.mxu0 %v4146
  %5944 = vmatpush1.bf16.msra.mxu0 %v4145
  %5945 = vmatprep.subr.bf16.mxu0 %v4148
  %5946 = vmatpush1.bf16.msra.mxu0 %v4147
  %5947 = vmatprep.subr.bf16.mxu0 %v4150
  %5948 = vmatpush1.bf16.msra.mxu0 %v4149
  %5949 = vmatprep.subr.bf16.mxu0 %v4152
  %5950 = vmatpush1.bf16.msra.mxu0 %v4151
  %5951 = vmatprep.subr.bf16.mxu0 %v4154
  %5952 = vmatpush1.bf16.msra.mxu0 %v4153
  %5953 = vmatprep.subr.bf16.mxu0 %v4156
  %5954 = vmatpush1.bf16.msra.mxu0 %v4155
  %5955 = vmatprep.subr.bf16.mxu0 %v4158
  %5956 = vmatpush1.bf16.msra.mxu0 %v4157
  %5957 = vmatprep.subr.bf16.mxu0 %v4160
  %5958 = vmatpush1.bf16.msra.mxu0 %v4159
  %5959 = vmatprep.subr.bf16.mxu0 %v4162
  %5960 = vmatpush1.bf16.msra.mxu0 %v4161
  %5961 = vmatprep.subr.bf16.mxu0 %v4164
  %5962 = vmatpush1.bf16.msra.mxu0 %v4163
  %5963 = vmatprep.subr.bf16.mxu0 %v4166
  %5964 = vmatpush1.bf16.msra.mxu0 %v4165
  %5965 = vmatprep.subr.bf16.mxu0 %v4168
  %5966 = vmatpush1.bf16.msra.mxu0 %v4167
  %5967 = vmatprep.subr.bf16.mxu0 %v4170
  %5968 = vmatpush1.bf16.msra.mxu0 %v4169
  %5969 = vmatprep.subr.bf16.mxu0 %v4172
  %5970 = vmatpush1.bf16.msra.mxu0 %v4171
  %5971 = vmatprep.subr.bf16.mxu0 %v4174
  %5972 = vmatpush1.bf16.msra.mxu0 %v4173
  %5973 = vmatprep.mubr.bf16.mxu0 %v984
  %5974 = vmatmul.mubr.bf16.gmra.mrb[0].mxu0 %v983
  %v5975 = vpop.f32.mrb[0].mxu0
  %v5976 = vadd.f32 %v5935, %v5975
  %v5977 = vpop.f32.mrb[0].mxu0
  %v5978 = vadd.f32 %v5937, %v5977
  %v5979 = vpop.f32.mrb[0].mxu0
  %v5980 = vpop.f32.mrb[0].mxu0
  %5981 = vdwg.mxu0
  %5982 = vmatprep.subr.bf16.mxu0 %v4176
  %5983 = vmatpush1.bf16.msra.mxu0 %v4175
  %5984 = vmatprep.subr.bf16.mxu0 %v4178
  %5985 = vmatpush1.bf16.msra.mxu0 %v4177
  %5986 = vmatprep.subr.bf16.mxu0 %v4180
  %5987 = vmatpush1.bf16.msra.mxu0 %v4179
  %5988 = vmatprep.subr.bf16.mxu0 %v4182
  %5989 = vmatpush1.bf16.msra.mxu0 %v4181
  %5990 = vmatprep.subr.bf16.mxu0 %v4184
  %5991 = vmatpush1.bf16.msra.mxu0 %v4183
  %5992 = vmatprep.subr.bf16.mxu0 %v4186
  %5993 = vmatpush1.bf16.msra.mxu0 %v4185
  %5994 = vmatprep.subr.bf16.mxu0 %v4188
  %5995 = vmatpush1.bf16.msra.mxu0 %v4187
  %5996 = vmatprep.subr.bf16.mxu0 %v4190
  %5997 = vmatpush1.bf16.msra.mxu0 %v4189
  %5998 = vmatprep.subr.bf16.mxu0 %v4192
  %5999 = vmatpush1.bf16.msra.mxu0 %v4191
  %6000 = vmatprep.subr.bf16.mxu0 %v4194
  %6001 = vmatpush1.bf16.msra.mxu0 %v4193
  %6002 = vmatprep.subr.bf16.mxu0 %v4196
  %6003 = vmatpush1.bf16.msra.mxu0 %v4195
  %6004 = vmatprep.subr.bf16.mxu0 %v4198
  %6005 = vmatpush1.bf16.msra.mxu0 %v4197
  %6006 = vmatprep.subr.bf16.mxu0 %v4200
  %6007 = vmatpush1.bf16.msra.mxu0 %v4199
  %6008 = vmatprep.subr.bf16.mxu0 %v4202
  %6009 = vmatpush1.bf16.msra.mxu0 %v4201
  %6010 = vmatprep.subr.bf16.mxu0 %v4204
  %6011 = vmatpush1.bf16.msra.mxu0 %v4203
  %6012 = vmatprep.subr.bf16.mxu0 %v4206
  %6013 = vmatpush1.bf16.msra.mxu0 %v4205
  %6014 = vmatprep.mubr.bf16.mxu0 %v986
  %6015 = vmatmul.mubr.bf16.gmra.mrb[0].mxu0 %v985
  %v6016 = vpop.f32.mrb[0].mxu0
  %v6017 = vadd.f32 %v5976, %v6016
  %v6018 = vpop.f32.mrb[0].mxu0
  %v6019 = vadd.f32 %v5978, %v6018
  %v6020 = vpop.f32.mrb[0].mxu0
  %v6021 = vpop.f32.mrb[0].mxu0
  %6022 = vdwg.mxu0
  %6023 = vmatprep.subr.bf16.mxu0 %v4208
  %6024 = vmatpush1.bf16.msra.mxu0 %v4207
  %6025 = vmatprep.subr.bf16.mxu0 %v4210
  %6026 = vmatpush1.bf16.msra.mxu0 %v4209
  %6027 = vmatprep.subr.bf16.mxu0 %v4212
  %6028 = vmatpush1.bf16.msra.mxu0 %v4211
  %6029 = vmatprep.subr.bf16.mxu0 %v4214
  %6030 = vmatpush1.bf16.msra.mxu0 %v4213
  %6031 = vmatprep.subr.bf16.mxu0 %v4216
  %6032 = vmatpush1.bf16.msra.mxu0 %v4215
  %6033 = vmatprep.subr.bf16.mxu0 %v4218
  %6034 = vmatpush1.bf16.msra.mxu0 %v4217
  %6035 = vmatprep.subr.bf16.mxu0 %v4220
  %6036 = vmatpush1.bf16.msra.mxu0 %v4219
  %6037 = vmatprep.subr.bf16.mxu0 %v4222
  %6038 = vmatpush1.bf16.msra.mxu0 %v4221
  %6039 = vmatprep.subr.bf16.mxu0 %v4224
  %6040 = vmatpush1.bf16.msra.mxu0 %v4223
  %6041 = vmatprep.subr.bf16.mxu0 %v4226
  %6042 = vmatpush1.bf16.msra.mxu0 %v4225
  %6043 = vmatprep.subr.bf16.mxu0 %v4228
  %6044 = vmatpush1.bf16.msra.mxu0 %v4227
  %6045 = vmatprep.subr.bf16.mxu0 %v4230
  %6046 = vmatpush1.bf16.msra.mxu0 %v4229
  %6047 = vmatprep.subr.bf16.mxu0 %v4232
  %6048 = vmatpush1.bf16.msra.mxu0 %v4231
  %6049 = vmatprep.subr.bf16.mxu0 %v4234
  %6050 = vmatpush1.bf16.msra.mxu0 %v4233
  %6051 = vmatprep.subr.bf16.mxu0 %v4236
  %6052 = vmatpush1.bf16.msra.mxu0 %v4235
  %6053 = vmatprep.subr.bf16.mxu0 %v4238
  %6054 = vmatpush1.bf16.msra.mxu0 %v4237
  %6055 = vmatprep.mubr.bf16.mxu0 %v988
  %6056 = vmatmul.mubr.bf16.gmra.mrb[0].mxu0 %v987
  %v6057 = vpop.f32.mrb[0].mxu0
  %v6058 = vadd.f32 %v6017, %v6057
  %v6059 = vpop.f32.mrb[0].mxu0
  %v6060 = vadd.f32 %v6019, %v6059
  %v6061 = vpop.f32.mrb[0].mxu0
  %v6062 = vpop.f32.mrb[0].mxu0
  %6063 = vdwg.mxu0
  %v6064 = vmax.f32 %v6058, 0.0
  %v6065 = vmax.f32 %v6060, 0.0
  %v6066 = vpack.c.bf16 %v6064, %v6064
  %v6067 = vpack.c.bf16 %v6065, %v6065
  %v6068 = vld [vmem:[%s3] sm:$0xf]
  %v6069 = vld [vmem:[%s3 + $0x4] sm:$0xf]
  %v6070 = vld [vmem:[%s3 + $0x8] sm:$0xf]
  %v6071 = vld [vmem:[%s3 + $0xc] sm:$0xf]
  %v6072 = vld [vmem:[%s3 + $0x10] sm:$0xf]
  %v6073 = vld [vmem:[%s3 + $0x14] sm:$0xf]
  %v6074 = vld [vmem:[%s3 + $0x18] sm:$0xf]
  %v6075 = vld [vmem:[%s3 + $0x1c] sm:$0xf]
  %v6076 = vld [vmem:[%s3 + $0x20] sm:$0xf]
  %v6077 = vld [vmem:[%s3 + $0x24] sm:$0xf]
  %v6078 = vld [vmem:[%s3 + $0x28] sm:$0xf]
  %v6079 = vld [vmem:[%s3 + $0x2c] sm:$0xf]
  %v6080 = vld [vmem:[%s3 + $0x30] sm:$0xf]
  %v6081 = vld [vmem:[%s3 + $0x34] sm:$0xf]
  %v6082 = vld [vmem:[%s3 + $0x38] sm:$0xf]
  %v6083 = vld [vmem:[%s3 + $0x3c] sm:$0xf]
  %v6084 = vld [vmem:[%s3 + $0x40] sm:$0xf]
  %v6085 = vld [vmem:[%s3 + $0x44] sm:$0xf]
  %v6086 = vld [vmem:[%s3 + $0x48] sm:$0xf]
  %v6087 = vld [vmem:[%s3 + $0x4c] sm:$0xf]
  %v6088 = vld [vmem:[%s3 + $0x50] sm:$0xf]
  %v6089 = vld [vmem:[%s3 + $0x54] sm:$0xf]
  %v6090 = vld [vmem:[%s3 + $0x58] sm:$0xf]
  %v6091 = vld [vmem:[%s3 + $0x5c] sm:$0xf]
  %v6092 = vld [vmem:[%s3 + $0x60] sm:$0xf]
  %v6093 = vld [vmem:[%s3 + $0x64] sm:$0xf]
  %v6094 = vld [vmem:[%s3 + $0x68] sm:$0xf]
  %v6095 = vld [vmem:[%s3 + $0x6c] sm:$0xf]
  %v6096 = vld [vmem:[%s3 + $0x70] sm:$0xf]
  %v6097 = vld [vmem:[%s3 + $0x74] sm:$0xf]
  %v6098 = vld [vmem:[%s3 + $0x78] sm:$0xf]
  %v6099 = vld [vmem:[%s3 + $0x7c] sm:$0xf]
  %v6100 = vld [vmem:[%s4] sm:$0x1]
  %v6102 = vlaneseq
  %v6103 = vshrl.u32 %v6102, 7
  %v6104 = vsub.s32 0, %v6103
  %v6105 = vrot.slane %v6100, %v6104
  %v6139 = vunpack.c.l.b16 %v6068
  %v6140 = vunpack.c.l.b16 %v6069
  %v6141 = vunpack.c.l.b16 %v6070
  %v6142 = vunpack.c.l.b16 %v6071
  %v6143 = vunpack.c.l.b16 %v6072
  %v6144 = vunpack.c.l.b16 %v6073
  %v6145 = vunpack.c.l.b16 %v6074
  %v6146 = vunpack.c.l.b16 %v6075
  %v6147 = vunpack.c.l.b16 %v6076
  %v6148 = vunpack.c.l.b16 %v6077
  %v6149 = vunpack.c.l.b16 %v6078
  %v6150 = vunpack.c.l.b16 %v6079
  %v6151 = vunpack.c.l.b16 %v6080
  %v6152 = vunpack.c.l.b16 %v6081
  %v6153 = vunpack.c.l.b16 %v6082
  %v6154 = vunpack.c.l.b16 %v6083
  %v6155 = vunpack.c.l.b16 %v6084
  %v6156 = vunpack.c.l.b16 %v6085
  %v6157 = vunpack.c.l.b16 %v6086
  %v6158 = vunpack.c.l.b16 %v6087
  %v6159 = vunpack.c.l.b16 %v6088
  %v6160 = vunpack.c.l.b16 %v6089
  %v6161 = vunpack.c.l.b16 %v6090
  %v6162 = vunpack.c.l.b16 %v6091
  %v6163 = vunpack.c.l.b16 %v6092
  %v6164 = vunpack.c.l.b16 %v6093
  %v6165 = vunpack.c.l.b16 %v6094
  %v6166 = vunpack.c.l.b16 %v6095
  %v6167 = vunpack.c.l.b16 %v6096
  %v6168 = vunpack.c.l.b16 %v6097
  %v6169 = vunpack.c.l.b16 %v6098
  %v6170 = vunpack.c.l.b16 %v6099
  %v6171 = vpack.c.b16 %v6140, %v6139
  %v6172 = vpack.c.b16 %v6142, %v6141
  %v6173 = vpack.c.b16 %v6144, %v6143
  %v6174 = vpack.c.b16 %v6146, %v6145
  %v6175 = vpack.c.b16 %v6148, %v6147
  %v6176 = vpack.c.b16 %v6150, %v6149
  %v6177 = vpack.c.b16 %v6152, %v6151
  %v6178 = vpack.c.b16 %v6154, %v6153
  %v6179 = vpack.c.b16 %v6156, %v6155
  %v6180 = vpack.c.b16 %v6158, %v6157
  %v6181 = vpack.c.b16 %v6160, %v6159
  %v6182 = vpack.c.b16 %v6162, %v6161
  %v6183 = vpack.c.b16 %v6164, %v6163
  %v6184 = vpack.c.b16 %v6166, %v6165
  %v6185 = vpack.c.b16 %v6168, %v6167
  %v6186 = vpack.c.b16 %v6170, %v6169
  %6203 = vmatprep.subr.bf16.mxu0 0
  %6204 = vmatpush1.bf16.msra.mxu0 %v6171
  %6205 = vmatprep.subr.bf16.mxu0 0
  %6206 = vmatpush1.bf16.msra.mxu0 %v6172
  %6207 = vmatprep.subr.bf16.mxu0 0
  %6208 = vmatpush1.bf16.msra.mxu0 %v6173
  %6209 = vmatprep.subr.bf16.mxu0 0
  %6210 = vmatpush1.bf16.msra.mxu0 %v6174
  %6211 = vmatprep.subr.bf16.mxu0 0
  %6212 = vmatpush1.bf16.msra.mxu0 %v6175
  %6213 = vmatprep.subr.bf16.mxu0 0
  %6214 = vmatpush1.bf16.msra.mxu0 %v6176
  %6215 = vmatprep.subr.bf16.mxu0 0
  %6216 = vmatpush1.bf16.msra.mxu0 %v6177
  %6217 = vmatprep.subr.bf16.mxu0 0
  %6218 = vmatpush1.bf16.msra.mxu0 %v6178
  %6219 = vmatprep.subr.bf16.mxu0 0
  %6220 = vmatpush1.bf16.msra.mxu0 %v6179
  %6221 = vmatprep.subr.bf16.mxu0 0
  %6222 = vmatpush1.bf16.msra.mxu0 %v6180
  %6223 = vmatprep.subr.bf16.mxu0 0
  %6224 = vmatpush1.bf16.msra.mxu0 %v6181
  %6225 = vmatprep.subr.bf16.mxu0 0
  %6226 = vmatpush1.bf16.msra.mxu0 %v6182
  %6227 = vmatprep.subr.bf16.mxu0 0
  %6228 = vmatpush1.bf16.msra.mxu0 %v6183
  %6229 = vmatprep.subr.bf16.mxu0 0
  %6230 = vmatpush1.bf16.msra.mxu0 %v6184
  %6231 = vmatprep.subr.bf16.mxu0 0
  %6232 = vmatpush1.bf16.msra.mxu0 %v6185
  %6233 = vmatprep.subr.bf16.mxu0 0
  %6234 = vmatpush1.bf16.msra.mxu0 %v6186
  %6235 = vmatprep.mubr.bf16.mxu0 %v6067
  %6236 = vmatmul.mubr.bf16.gmra.mrb[0].mxu0 %v6066
  %v6237 = vpop.f32.mrb[0].mxu0
  %v6238 = vadd.f32 %v6105, %v6237
  %v6239 = vpop.f32.mrb[0].mxu0
  %v6240 = vpop.f32.mrb[0].mxu0
  %v6241 = vpop.f32.mrb[0].mxu0
  %6242 = vdwg.mxu0
  %v6243 = vmax.f32 %v6238, 0.0
  %v6244 = vpack.c.bf16 %v6243, %v6243
  %v6245 = vld [vmem:[%s5] sm:$0xf]
  %v6246 = vld [vmem:[%s5 + $0x4] sm:$0xf]
  %v6247 = vld [vmem:[%s5 + $0x8] sm:$0xf]
  %v6248 = vld [vmem:[%s5 + $0xc] sm:$0xf]
  %v6249 = vld [vmem:[%s5 + $0x10] sm:$0xf]
  %v6250 = vld [vmem:[%s5 + $0x14] sm:$0xf]
  %v6251 = vld [vmem:[%s5 + $0x18] sm:$0xf]
  %v6252 = vld [vmem:[%s5 + $0x1c] sm:$0xf]
  %v6253 = vld [vmem:[%s5 + $0x20] sm:$0xf]
  %v6254 = vld [vmem:[%s5 + $0x24] sm:$0xf]
  %v6255 = vld [vmem:[%s5 + $0x28] sm:$0xf]
  %v6256 = vld [vmem:[%s5 + $0x2c] sm:$0xf]
  %v6257 = vld [vmem:[%s5 + $0x30] sm:$0xf]
  %v6258 = vld [vmem:[%s5 + $0x34] sm:$0xf]
  %v6259 = vld [vmem:[%s5 + $0x38] sm:$0xf]
  %v6260 = vld [vmem:[%s5 + $0x3c] sm:$0xf]
  %v6261 = vld [vmem:[%s6] sm:$0x1]
  %v6263 = vlaneseq
  %v6264 = vshrl.u32 %v6263, 7
  %v6265 = vsub.s32 0, %v6264
  %v6266 = vrot.slane %v6261, %v6265
  %v6284 = vunpack.c.l.b16 %v6245
  %v6285 = vunpack.c.l.b16 %v6246
  %v6286 = vunpack.c.l.b16 %v6247
  %v6287 = vunpack.c.l.b16 %v6248
  %v6288 = vunpack.c.l.b16 %v6249
  %v6289 = vunpack.c.l.b16 %v6250
  %v6290 = vunpack.c.l.b16 %v6251
  %v6291 = vunpack.c.l.b16 %v6252
  %v6292 = vunpack.c.l.b16 %v6253
  %v6293 = vunpack.c.l.b16 %v6254
  %v6294 = vunpack.c.l.b16 %v6255
  %v6295 = vunpack.c.l.b16 %v6256
  %v6296 = vunpack.c.l.b16 %v6257
  %v6297 = vunpack.c.l.b16 %v6258
  %v6298 = vunpack.c.l.b16 %v6259
  %v6299 = vunpack.c.l.b16 %v6260
  %v6300 = vpack.c.b16 %v6285, %v6284
  %v6301 = vpack.c.b16 %v6287, %v6286
  %v6302 = vpack.c.b16 %v6289, %v6288
  %v6303 = vpack.c.b16 %v6291, %v6290
  %v6304 = vpack.c.b16 %v6293, %v6292
  %v6305 = vpack.c.b16 %v6295, %v6294
  %v6306 = vpack.c.b16 %v6297, %v6296
  %v6307 = vpack.c.b16 %v6299, %v6298
  %6316 = vmatprep.subr.bf16.mxu0 0
  %6317 = vmatpush1.bf16.msra.mxu0 %v6300
  %6318 = vmatprep.subr.bf16.mxu0 0
  %6319 = vmatpush1.bf16.msra.mxu0 %v6301
  %6320 = vmatprep.subr.bf16.mxu0 0
  %6321 = vmatpush1.bf16.msra.mxu0 %v6302
  %6322 = vmatprep.subr.bf16.mxu0 0
  %6323 = vmatpush1.bf16.msra.mxu0 %v6303
  %6324 = vmatprep.subr.bf16.mxu0 0
  %6325 = vmatpush1.bf16.msra.mxu0 %v6304
  %6326 = vmatprep.subr.bf16.mxu0 0
  %6327 = vmatpush1.bf16.msra.mxu0 %v6305
  %6328 = vmatprep.subr.bf16.mxu0 0
  %6329 = vmatpush1.bf16.msra.mxu0 %v6306
  %6330 = vmatprep.subr.bf16.mxu0 0
  %6331 = vmatpush1.bf16.msra.mxu0 %v6307
  %6332 = vmatprep.subr.bf16.mxu0 0
  %6333 = vmatpush1.bf16.msra.mxu0 0
  %6334 = vmatprep.subr.bf16.mxu0 0
  %6335 = vmatpush1.bf16.msra.mxu0 0
  %6336 = vmatprep.subr.bf16.mxu0 0
  %6337 = vmatpush1.bf16.msra.mxu0 0
  %6338 = vmatprep.subr.bf16.mxu0 0
  %6339 = vmatpush1.bf16.msra.mxu0 0
  %6340 = vmatprep.subr.bf16.mxu0 0
  %6341 = vmatpush1.bf16.msra.mxu0 0
  %6342 = vmatprep.subr.bf16.mxu0 0
  %6343 = vmatpush1.bf16.msra.mxu0 0
  %6344 = vmatprep.subr.bf16.mxu0 0
  %6345 = vmatpush1.bf16.msra.mxu0 0
  %6346 = vmatprep.subr.bf16.mxu0 0
  %6347 = vmatpush1.bf16.msra.mxu0 0
  %6348 = vmatprep.mubr.bf16.mxu0 0
  %6349 = vmatmul.mubr.bf16.gmra.mrb[0].mxu0 %v6244
  %v6350 = vpop.f32.mrb[0].mxu0
  %v6351 = vadd.f32 %v6266, %v6350
  %v6352 = vpop.f32.mrb[0].mxu0
  %v6353 = vpop.f32.mrb[0].mxu0
  %v6354 = vpop.f32.mrb[0].mxu0
  %6355 = vdwg.mxu0
  %6356 = vst [vmem:[%s7] sm:$0xff] %v6351
  // Predicated region
  $region30: #{classifier_net_forward.5} parent=0 // pred_check
    _
  $region31: #{classifier_net_forward.5} parent=0 // pred_check_branch
    %6358 = sbr.rel (0) target = $region33
  $region32: #{classifier_net_forward.5} parent=0 // pred_region
    _
  $region33: #{classifier_net_forward.5} parent=0 // pred_fallthru
    _
  // Predicated region
  $region34: #{classifier_net_forward.5} parent=0 // pred_check
    _
  $region35: #{classifier_net_forward.5} parent=0 // pred_check_branch
    %6360 = sbr.rel (0) target = $region37
  $region36: #{classifier_net_forward.5} parent=0 // pred_region
    _
  $region37: #{classifier_net_forward.5} parent=0 // pred_fallthru
    _

</llo_original>
